<compile_context>
chip_gen: v7x
topology: tpu7x:2x2x1
jax: 0.10.0
libtpu: 0.0.40
codegen_flags: <defaults>
</compile_context>

<pallas_src>
import numpy as np
import jax
import jax.numpy as jnp
from jax.experimental import pallas as pl
from jax.experimental.pallas import tpu as pltpu


def _round_up(x, m):
    return (x + m - 1) // m * m


# ---------------------------------------------------------------------------
# Fused conv kernel: conv1+BN+PReLU+pool -> VMEM scratch -> conv2+BN+PReLU+pool
# One sample per grid step.
# ---------------------------------------------------------------------------
def _conv_block_kernel(p_ref, w1_ref, b1_ref, a1_ref, w2_ref, b2_ref, a2_ref,
                       sel_ref, o_ref, xh_ref):
    # p_ref  : (1, 896, 16) bf16 conv1 patches [ph(14), corner(4), pw_pad(16), k(16)]
    # w1_ref : (16, 64)  bf16 folded conv1 weight [kh*4+kw, cout]
    # w2_ref : (4, 256, 64) bf16 folded conv2 weight [kh, kw*64+cin, cout]
    # sel_ref: (144, 256) bf16 0/1 pool-2 selection / lane-packing matrix
    # o_ref  : (1, 18, 128) bf16 flattened NHWC features (lane-dense)
    # xh_ref : (320, 64) bf16 scratch = halo-padded conv1 output, row = r*16 + c

    # ---- clear scratch (halo ring + overflow rows must be zero) -------------
    xh_ref[...] = jnp.zeros_like(xh_ref)

    # ---- conv1 (BN folded) + PReLU + 2x2 maxpool -> scratch -----------------
    b1 = b1_ref[...]
    a1 = a1_ref[...]
    for c in range(2):                                     # 2 chunks x 7 pooled rows
        pc = p_ref[0, c * 448:(c + 1) * 448, :]            # (448, 16) bf16
        y = jnp.dot(pc, w1_ref[...], preferred_element_type=jnp.float32)  # (448,64)
        y = y + b1
        y = jnp.where(y >= 0.0, y, a1 * y)                 # PReLU (single alpha)
        for lp in range(7):                                # pooled row within chunk
            blk = y[lp * 64:(lp + 1) * 64]                 # (64,64): 4 corners x 16 rows
            m = jnp.maximum(jnp.maximum(blk[0:16], blk[16:32]),
                            jnp.maximum(blk[32:48], blk[48:64]))   # (16, 64)
            ph = c * 7 + lp
            base = (ph + 1) * 16                           # halo pad = 1 row / 1 col
            xh_ref[base + 1: base + 15, :] = m[0:14].astype(jnp.bfloat16)

    # ---- conv2 (BN folded) + PReLU ------------------------------------------
    # window rows = flat spatial index h*16+w; shift by kh*16+kw is a plain
    # contiguous slice of the flattened scratch.
    acc = jnp.zeros((256, 64), jnp.float32)
    for kh in range(4):
        base = kh * 16
        win = jnp.concatenate(
            [xh_ref[base + kw: base + kw + 256, :] for kw in range(4)],
            axis=-1)                                       # (256, 256) bf16
        acc = acc + jnp.dot(win, w2_ref[kh], preferred_element_type=jnp.float32)
    z = acc + b2_ref[...]
    z = jnp.where(z >= 0.0, z, a2_ref[...] * z)            # PReLU
    zb = z.astype(jnp.bfloat16)                            # (256, 64), rows = h*16+w

    # ---- 2x2 maxpool + NHWC flatten + lane-dense (18,128) packing ----------
    g = jnp.dot(sel_ref[...], zb, preferred_element_type=jnp.float32)   # (144, 64)
    left = jnp.maximum(jnp.maximum(g[0:18], g[18:36]),
                       jnp.maximum(g[36:54], g[54:72]))                 # p = 2r
    right = jnp.maximum(jnp.maximum(g[72:90], g[90:108]),
                        jnp.maximum(g[108:126], g[126:144]))            # p = 2r+1
    o_ref[0] = jnp.concatenate([left, right], axis=-1).astype(o_ref.dtype)


def conv_block(patches, w1, b1, a1, w2, b2, a2, sel):
    n = patches.shape[0]
    return pl.pallas_call(
        _conv_block_kernel,
        out_shape=jax.ShapeDtypeStruct((n, 18, 128), jnp.bfloat16),
        grid=(n,),
        in_specs=[
            pl.BlockSpec((1, 896, 16), lambda i: (i, 0, 0)),
            pl.BlockSpec((16, 64), lambda i: (0, 0)),        # resident weights
            pl.BlockSpec((1, 64), lambda i: (0, 0)),
            pl.BlockSpec((1, 1), lambda i: (0, 0)),
            pl.BlockSpec((4, 256, 64), lambda i: (0, 0, 0)),
            pl.BlockSpec((1, 64), lambda i: (0, 0)),
            pl.BlockSpec((1, 1), lambda i: (0, 0)),
            pl.BlockSpec((144, 256), lambda i: (0, 0)),
        ],
        out_specs=pl.BlockSpec((1, 18, 128), lambda i: (i, 0, 0)),
        scratch_shapes=[pltpu.VMEM((320, 64), jnp.bfloat16)],
        compiler_params=pltpu.CompilerParams(
            dimension_semantics=("parallel",)),
    )(patches, w1, b1, a1, w2, b2, a2, sel)


# ---------------------------------------------------------------------------
# FC head: ReLU -> Linear+PReLU -> Linear+PReLU -> Linear -> log_softmax
# ---------------------------------------------------------------------------
def _fc_head_kernel(x_ref, w1_ref, b1_ref, a1_ref, w2_ref, b2_ref, a2_ref,
                    w3_ref, b3_ref, o_ref):
    x = jnp.maximum(x_ref[...], 0.0)                     # F.relu on flattened features
    h = jnp.dot(x, w1_ref[...], preferred_element_type=jnp.float32) + b1_ref[...]
    h = jnp.where(h >= 0.0, h, a1_ref[...] * h)          # PReLU
    h = jnp.dot(h.astype(jnp.bfloat16), w2_ref[...],
                preferred_element_type=jnp.float32) + b2_ref[...]
    h = jnp.where(h >= 0.0, h, a2_ref[...] * h)          # PReLU
    z = jnp.dot(h.astype(jnp.bfloat16), w3_ref[...],
                preferred_element_type=jnp.float32) + b3_ref[...]
    s = z - jnp.max(z, axis=1, keepdims=True)            # log_softmax(dim=1)
    o_ref[...] = s - jnp.log(jnp.sum(jnp.exp(s), axis=1, keepdims=True))


def fc_head(feat, w1, b1, a1, w2, b2, a2, w3, b3):
    n = feat.shape[0]
    # bn capped at 256: resident fc1 weight + double-buffered blocks stay well
    # under v5e's 16 MiB scoped-VMEM default.
    bn = min(256, _round_up(n, 8))
    n_pad = _round_up(n, bn)
    if n_pad != n:
        feat = jnp.pad(feat, ((0, n_pad - n), (0, 0)))
    out = pl.pallas_call(
        _fc_head_kernel,
        out_shape=jax.ShapeDtypeStruct((n_pad, 10), jnp.float32),
        grid=(n_pad // bn,),
        in_specs=[
            pl.BlockSpec((bn, 2304), lambda i: (i, 0)),
            pl.BlockSpec((2304, 512), lambda i: (0, 0)),   # resident weights
            pl.BlockSpec((1, 512), lambda i: (0, 0)),
            pl.BlockSpec((1, 1), lambda i: (0, 0)),
            pl.BlockSpec((512, 64), lambda i: (0, 0)),
            pl.BlockSpec((1, 64), lambda i: (0, 0)),
            pl.BlockSpec((1, 1), lambda i: (0, 0)),
            pl.BlockSpec((64, 10), lambda i: (0, 0)),
            pl.BlockSpec((1, 10), lambda i: (0, 0)),
        ],
        out_specs=pl.BlockSpec((bn, 10), lambda i: (i, 0)),
        compiler_params=pltpu.CompilerParams(
            dimension_semantics=("parallel",)),
    )(feat, w1, b1, a1, w2, b2, a2, w3, b3)
    return out[:n]


# ---------------------------------------------------------------------------
# Trace-time helpers (patch extraction, selection matrix, parameters)
# ---------------------------------------------------------------------------
def _conv1_patches(x):
    """(N,1,28,28) -> (N, 896, 16) bf16 patches, [ph, corner(di*2+dj), pw_pad(16), k]."""
    n = x.shape[0]
    xp = jnp.pad(x[:, 0], ((0, 0), (2, 2), (2, 2)))                   # (N, 32, 32)
    shifts = [xp[:, i:i + 29, j:j + 29] for i in range(4) for j in range(4)]
    p = jnp.stack(shifts, axis=-1)[:, :28, :28, :]                    # (N, 28, 28, 16)
    p = p.reshape(n, 14, 2, 14, 2, 16).transpose(0, 1, 2, 4, 3, 5)    # (n,ph,di,dj,pw,k)
    p = p.reshape(n, 14, 4, 14, 16)
    # pad each pool-corner group 14 -> 16 rows; pad rows are sliced off in-kernel
    p = jnp.pad(p, ((0, 0), (0, 0), (0, 0), (0, 2), (0, 0)))
    return p.reshape(n, 896, 16).astype(jnp.bfloat16)


def _pool2_select_matrix():
    """(144,256) 0/1 matrix: 2x2 pool of the 13x13 conv2 grid + (18,128) packing."""
    s = np.zeros((2, 4, 18, 256), np.float32)
    for dj in range(2):
        for dh in range(2):
            for dw in range(2):
                for r in range(18):
                    p = 2 * r + dj
                    ph, pw = p // 6, p % 6
                    row = (2 * ph + dh) * 16 + (2 * pw + dw)
                    s[dj, dh * 2 + dw, r, row] = 1.0
    return jnp.asarray(s.reshape(144, 256), jnp.bfloat16)


def init_params(key):
    keys = jax.random.split(key, 10)

    def unif(k, shape, fan_in):
        bound = 1.0 / float(fan_in) ** 0.5
        return jax.random.uniform(k, shape, jnp.float32, -bound, bound)

    params = {
        "conv1_w": unif(keys[0], (64, 1, 4, 4), 1 * 4 * 4),
        "conv1_b": unif(keys[1], (64,), 1 * 4 * 4),
        "conv2_w": unif(keys[2], (64, 64, 4, 4), 64 * 4 * 4),
        "conv2_b": unif(keys[3], (64,), 64 * 4 * 4),
        "fc1_w": unif(keys[4], (512, 2304), 2304),
        "fc1_b": unif(keys[5], (512,), 2304),
        "fc2_w": unif(keys[6], (64, 512), 512),
        "fc2_b": unif(keys[7], (64,), 512),
        "fc3_w": unif(keys[8], (10, 64), 64),
        "fc3_b": unif(keys[9], (10,), 64),
    }
    # BatchNorm2d default running stats (eval mode)
    for nm in ("bn1", "bn2"):
        params[nm + "_gamma"] = jnp.ones((64,), jnp.float32)
        params[nm + "_beta"] = jnp.zeros((64,), jnp.float32)
        params[nm + "_mean"] = jnp.zeros((64,), jnp.float32)
        params[nm + "_var"] = jnp.ones((64,), jnp.float32)
    # PReLU() default: single alpha = 0.25
    for nm in ("prelu1", "prelu2", "prelu_fc1", "prelu_fc2"):
        params[nm] = jnp.full((1,), 0.25, jnp.float32)
    return params


def mynet3_forward(params, x):
    """x: (N, 1, 28, 28) float32 NCHW (PyTorch convention)."""
    n = x.shape[0]
    eps = 1e-5

    def bn_fold(prefix):
        scale = params[prefix + "_gamma"] * jax.lax.rsqrt(params[prefix + "_var"] + eps)
        shift = params[prefix + "_beta"] - params[prefix + "_mean"] * scale
        return scale, shift

    # ---- fold BN into conv weights / biases --------------------------------
    s1, t1 = bn_fold("bn1")
    w1 = (params["conv1_w"] * s1[:, None, None, None]).reshape(64, 16).T    # (16, 64)
    w1 = w1.astype(jnp.bfloat16)
    b1 = (params["conv1_b"] * s1 + t1).reshape(1, 64)
    a1 = params["prelu1"].reshape(1, 1)

    s2, t2 = bn_fold("bn2")
    w2 = (params["conv2_w"] * s2[:, None, None, None]).transpose(2, 3, 1, 0)  # (kh,kw,ci,co)
    w2 = w2.reshape(4, 256, 64).astype(jnp.bfloat16)
    b2 = (params["conv2_b"] * s2 + t2).reshape(1, 64)
    a2 = params["prelu2"].reshape(1, 1)

    # ---- fused conv1 -> conv2 -> pooled NHWC features -----------------------
    patches = _conv1_patches(x)                             # (N, 896, 16) bf16
    sel = _pool2_select_matrix()                            # (144, 256) bf16
    feat = conv_block(patches, w1, b1, a1, w2, b2, a2, sel) # (N, 18, 128) bf16
    feat = feat.reshape(n, 2304)                            # order: (h*6+w)*64 + c

    # ---- FC head ------------------------------------------------------------
    # permute fc1 rows from NCHW flatten (c,h,w) to our NHWC flatten (h,w,c)
    w_fc1 = params["fc1_w"].reshape(512, 64, 6, 6).transpose(0, 2, 3, 1).reshape(512, 2304)
    w_fc1 = w_fc1.T.astype(jnp.bfloat16)                    # (2304, 512)
    w_fc2 = params["fc2_w"].T.astype(jnp.bfloat16)          # (512, 64)
    w_fc3 = params["fc3_w"].T.astype(jnp.bfloat16)          # (64, 10)
    return fc_head(feat,
                   w_fc1, params["fc1_b"].reshape(1, 512), params["prelu_fc1"].reshape(1, 1),
                   w_fc2, params["fc2_b"].reshape(1, 64), params["prelu_fc2"].reshape(1, 1),
                   w_fc3, params["fc3_b"].reshape(1, 10))


if __name__ == "__main__":
    key = jax.random.PRNGKey(0)
    pkey, xkey = jax.random.split(key)
    params = init_params(pkey)
    # 28x28 spatial is required by the module (6*6*64 flatten); batch = 2.
    x = jax.random.normal(xkey, (2, 1, 28, 28), jnp.float32)

    fwd = jax.jit(mynet3_forward)
    out = jax.block_until_ready(fwd(params, x))

    assert out.shape == (2, 10), out.shape
    assert bool(jnp.all(jnp.isfinite(out)))
    # rows of log_softmax must exponentiate-and-sum to 1
    assert jnp.allclose(jnp.exp(out).sum(axis=1), 1.0, atol=1e-4)
    print("KERNEL_OK")
</pallas_src>

<mosaic_0001>
module attributes {stable_mosaic.version = 11 : i64} {
  func.func @_conv_block_kernel(%arg0: i32, %arg1: memref<1x896x16xbf16, #tpu.memory_space<vmem>>, %arg2: memref<16x64xbf16, #tpu.memory_space<vmem>>, %arg3: memref<1x64xf32, #tpu.memory_space<vmem>>, %arg4: memref<1x1xf32, #tpu.memory_space<vmem>>, %arg5: memref<4x256x64xbf16, #tpu.memory_space<vmem>>, %arg6: memref<1x64xf32, #tpu.memory_space<vmem>>, %arg7: memref<1x1xf32, #tpu.memory_space<vmem>>, %arg8: memref<144x256xbf16, #tpu.memory_space<vmem>>, %arg9: memref<1x18x128xbf16, #tpu.memory_space<vmem>>, %arg10: memref<320x64xbf16, #tpu.memory_space<vmem>>) attributes {dimension_semantics = [#tpu.dimension_semantics<parallel>], iteration_bounds = array<i64: 2>, scalar_prefetch = 0 : i64, scratch_operands = 1 : i64, tpu.core_type = #tpu.core_type<tc>, window_params = [{transform_indices = @transform_0, window_bounds = array<i64: 1, 896, 16>}, {pipeline_mode = #tpu.pipeline_mode<synchronous>, transform_indices = @transform_1, window_bounds = array<i64: 16, 64>}, {pipeline_mode = #tpu.pipeline_mode<synchronous>, transform_indices = @transform_2, window_bounds = array<i64: 1, 64>}, {pipeline_mode = #tpu.pipeline_mode<synchronous>, transform_indices = @transform_3, window_bounds = array<i64: 1, 1>}, {pipeline_mode = #tpu.pipeline_mode<synchronous>, transform_indices = @transform_4, window_bounds = array<i64: 4, 256, 64>}, {pipeline_mode = #tpu.pipeline_mode<synchronous>, transform_indices = @transform_5, window_bounds = array<i64: 1, 64>}, {pipeline_mode = #tpu.pipeline_mode<synchronous>, transform_indices = @transform_6, window_bounds = array<i64: 1, 1>}, {pipeline_mode = #tpu.pipeline_mode<synchronous>, transform_indices = @transform_7, window_bounds = array<i64: 144, 256>}, {transform_indices = @transform_8, window_bounds = array<i64: 1, 18, 128>}]} {
    %cst = arith.constant 0.000000e+00 : bf16
    %0 = vector.broadcast %cst : bf16 to vector<320x64xbf16>
    %c0 = arith.constant 0 : index
    %c0_0 = arith.constant 0 : index
    %1 = vector.load %arg10[%c0, %c0_0] : memref<320x64xbf16, #tpu.memory_space<vmem>>, vector<320x64xbf16>
    tpu.vector_store %arg10[%c0, %c0_0], %0 {strides = array<i32>} : memref<320x64xbf16, #tpu.memory_space<vmem>>, vector<320x64xbf16>,
    %c0_1 = arith.constant 0 : index
    %c0_2 = arith.constant 0 : index
    %2 = vector.load %arg3[%c0_1, %c0_2] : memref<1x64xf32, #tpu.memory_space<vmem>>, vector<1x64xf32>
    %c0_3 = arith.constant 0 : index
    %c0_4 = arith.constant 0 : index
    %3 = vector.load %arg4[%c0_3, %c0_4] : memref<1x1xf32, #tpu.memory_space<vmem>>, vector<1x1xf32>
    %c0_5 = arith.constant 0 : index
    %c0_6 = arith.constant 0 : index
    %c0_7 = arith.constant 0 : index
    %4 = vector.load %arg1[%c0_5, %c0_6, %c0_7] : memref<1x896x16xbf16, #tpu.memory_space<vmem>>, vector<1x448x16xbf16>
    %5 = vector.shape_cast %4 : vector<1x448x16xbf16> to vector<448x16xbf16>
    %c0_8 = arith.constant 0 : index
    %c0_9 = arith.constant 0 : index
    %6 = vector.load %arg2[%c0_8, %c0_9] : memref<16x64xbf16, #tpu.memory_space<vmem>>, vector<16x64xbf16>
    %cst_10 = arith.constant dense<0.000000e+00> : vector<448x64xf32>
    %7 = tpu.matmul %5, %6, %cst_10 {dimension_numbers = #tpu.dot_dimension_numbers<[1], [0], [0], [1], [0, 0, 1, 1], [], []>} : vector<448x16xbf16>, vector<16x64xbf16>, vector<448x64xf32> -> vector<448x64xf32>
    %8 = vector.broadcast %2 : vector<1x64xf32> to vector<448x64xf32>
    %9 = arith.addf %7, %8 : vector<448x64xf32>
    %cst_11 = arith.constant 0.000000e+00 : f32
    %10 = vector.broadcast %cst_11 : f32 to vector<448x64xf32>
    %11 = arith.cmpf oge, %9, %10 : vector<448x64xf32>
    %12 = vector.broadcast %3 : vector<1x1xf32> to vector<448x64xf32>
    %13 = arith.mulf %12, %9 : vector<448x64xf32>
    %14 = arith.select %11, %9, %13 : vector<448x64xi1>, vector<448x64xf32>
    %15 = vector.extract_strided_slice %14 {offsets = [0, 0], sizes = [64, 64], strides = [1, 1]} : vector<448x64xf32> to vector<64x64xf32>
    %16 = vector.extract_strided_slice %15 {offsets = [0, 0], sizes = [16, 64], strides = [1, 1]} : vector<64x64xf32> to vector<16x64xf32>
    %17 = vector.extract_strided_slice %15 {offsets = [16, 0], sizes = [16, 64], strides = [1, 1]} : vector<64x64xf32> to vector<16x64xf32>
    %18 = arith.maximumf %16, %17 : vector<16x64xf32>
    %19 = vector.extract_strided_slice %15 {offsets = [32, 0], sizes = [16, 64], strides = [1, 1]} : vector<64x64xf32> to vector<16x64xf32>
    %20 = vector.extract_strided_slice %15 {offsets = [48, 0], sizes = [16, 64], strides = [1, 1]} : vector<64x64xf32> to vector<16x64xf32>
    %21 = arith.maximumf %19, %20 : vector<16x64xf32>
    %22 = arith.maximumf %18, %21 : vector<16x64xf32>
    %23 = vector.extract_strided_slice %22 {offsets = [0, 0], sizes = [14, 64], strides = [1, 1]} : vector<16x64xf32> to vector<14x64xf32>
    %24 = arith.truncf %23 : vector<14x64xf32> to vector<14x64xbf16>
    %c17 = arith.constant 17 : index
    %c0_12 = arith.constant 0 : index
    %25 = vector.load %arg10[%c17, %c0_12] : memref<320x64xbf16, #tpu.memory_space<vmem>>, vector<14x64xbf16>
    tpu.vector_store %arg10[%c17, %c0_12], %24 {strides = array<i32>} : memref<320x64xbf16, #tpu.memory_space<vmem>>, vector<14x64xbf16>,
    %26 = vector.extract_strided_slice %14 {offsets = [64, 0], sizes = [64, 64], strides = [1, 1]} : vector<448x64xf32> to vector<64x64xf32>
    %27 = vector.extract_strided_slice %26 {offsets = [0, 0], sizes = [16, 64], strides = [1, 1]} : vector<64x64xf32> to vector<16x64xf32>
    %28 = vector.extract_strided_slice %26 {offsets = [16, 0], sizes = [16, 64], strides = [1, 1]} : vector<64x64xf32> to vector<16x64xf32>
    %29 = arith.maximumf %27, %28 : vector<16x64xf32>
    %30 = vector.extract_strided_slice %26 {offsets = [32, 0], sizes = [16, 64], strides = [1, 1]} : vector<64x64xf32> to vector<16x64xf32>
    %31 = vector.extract_strided_slice %26 {offsets = [48, 0], sizes = [16, 64], strides = [1, 1]} : vector<64x64xf32> to vector<16x64xf32>
    %32 = arith.maximumf %30, %31 : vector<16x64xf32>
    %33 = arith.maximumf %29, %32 : vector<16x64xf32>
    %34 = vector.extract_strided_slice %33 {offsets = [0, 0], sizes = [14, 64], strides = [1, 1]} : vector<16x64xf32> to vector<14x64xf32>
    %35 = arith.truncf %34 : vector<14x64xf32> to vector<14x64xbf16>
    %c33 = arith.constant 33 : index
    %c0_13 = arith.constant 0 : index
    %36 = vector.load %arg10[%c33, %c0_13] : memref<320x64xbf16, #tpu.memory_space<vmem>>, vector<14x64xbf16>
    tpu.vector_store %arg10[%c33, %c0_13], %35 {strides = array<i32>} : memref<320x64xbf16, #tpu.memory_space<vmem>>, vector<14x64xbf16>,
    %37 = vector.extract_strided_slice %14 {offsets = [128, 0], sizes = [64, 64], strides = [1, 1]} : vector<448x64xf32> to vector<64x64xf32>
    %38 = vector.extract_strided_slice %37 {offsets = [0, 0], sizes = [16, 64], strides = [1, 1]} : vector<64x64xf32> to vector<16x64xf32>
    %39 = vector.extract_strided_slice %37 {offsets = [16, 0], sizes = [16, 64], strides = [1, 1]} : vector<64x64xf32> to vector<16x64xf32>
    %40 = arith.maximumf %38, %39 : vector<16x64xf32>
    %41 = vector.extract_strided_slice %37 {offsets = [32, 0], sizes = [16, 64], strides = [1, 1]} : vector<64x64xf32> to vector<16x64xf32>
    %42 = vector.extract_strided_slice %37 {offsets = [48, 0], sizes = [16, 64], strides = [1, 1]} : vector<64x64xf32> to vector<16x64xf32>
    %43 = arith.maximumf %41, %42 : vector<16x64xf32>
    %44 = arith.maximumf %40, %43 : vector<16x64xf32>
    %45 = vector.extract_strided_slice %44 {offsets = [0, 0], sizes = [14, 64], strides = [1, 1]} : vector<16x64xf32> to vector<14x64xf32>
    %46 = arith.truncf %45 : vector<14x64xf32> to vector<14x64xbf16>
    %c49 = arith.constant 49 : index
    %c0_14 = arith.constant 0 : index
    %47 = vector.load %arg10[%c49, %c0_14] : memref<320x64xbf16, #tpu.memory_space<vmem>>, vector<14x64xbf16>
    tpu.vector_store %arg10[%c49, %c0_14], %46 {strides = array<i32>} : memref<320x64xbf16, #tpu.memory_space<vmem>>, vector<14x64xbf16>,
    %48 = vector.extract_strided_slice %14 {offsets = [192, 0], sizes = [64, 64], strides = [1, 1]} : vector<448x64xf32> to vector<64x64xf32>
    %49 = vector.extract_strided_slice %48 {offsets = [0, 0], sizes = [16, 64], strides = [1, 1]} : vector<64x64xf32> to vector<16x64xf32>
    %50 = vector.extract_strided_slice %48 {offsets = [16, 0], sizes = [16, 64], strides = [1, 1]} : vector<64x64xf32> to vector<16x64xf32>
    %51 = arith.maximumf %49, %50 : vector<16x64xf32>
    %52 = vector.extract_strided_slice %48 {offsets = [32, 0], sizes = [16, 64], strides = [1, 1]} : vector<64x64xf32> to vector<16x64xf32>
    %53 = vector.extract_strided_slice %48 {offsets = [48, 0], sizes = [16, 64], strides = [1, 1]} : vector<64x64xf32> to vector<16x64xf32>
    %54 = arith.maximumf %52, %53 : vector<16x64xf32>
    %55 = arith.maximumf %51, %54 : vector<16x64xf32>
    %56 = vector.extract_strided_slice %55 {offsets = [0, 0], sizes = [14, 64], strides = [1, 1]} : vector<16x64xf32> to vector<14x64xf32>
    %57 = arith.truncf %56 : vector<14x64xf32> to vector<14x64xbf16>
    %c65 = arith.constant 65 : index
    %c0_15 = arith.constant 0 : index
    %58 = vector.load %arg10[%c65, %c0_15] : memref<320x64xbf16, #tpu.memory_space<vmem>>, vector<14x64xbf16>
    tpu.vector_store %arg10[%c65, %c0_15], %57 {strides = array<i32>} : memref<320x64xbf16, #tpu.memory_space<vmem>>, vector<14x64xbf16>,
    %59 = vector.extract_strided_slice %14 {offsets = [256, 0], sizes = [64, 64], strides = [1, 1]} : vector<448x64xf32> to vector<64x64xf32>
    %60 = vector.extract_strided_slice %59 {offsets = [0, 0], sizes = [16, 64], strides = [1, 1]} : vector<64x64xf32> to vector<16x64xf32>
    %61 = vector.extract_strided_slice %59 {offsets = [16, 0], sizes = [16, 64], strides = [1, 1]} : vector<64x64xf32> to vector<16x64xf32>
    %62 = arith.maximumf %60, %61 : vector<16x64xf32>
    %63 = vector.extract_strided_slice %59 {offsets = [32, 0], sizes = [16, 64], strides = [1, 1]} : vector<64x64xf32> to vector<16x64xf32>
    %64 = vector.extract_strided_slice %59 {offsets = [48, 0], sizes = [16, 64], strides = [1, 1]} : vector<64x64xf32> to vector<16x64xf32>
    %65 = arith.maximumf %63, %64 : vector<16x64xf32>
    %66 = arith.maximumf %62, %65 : vector<16x64xf32>
    %67 = vector.extract_strided_slice %66 {offsets = [0, 0], sizes = [14, 64], strides = [1, 1]} : vector<16x64xf32> to vector<14x64xf32>
    %68 = arith.truncf %67 : vector<14x64xf32> to vector<14x64xbf16>
    %c81 = arith.constant 81 : index
    %c0_16 = arith.constant 0 : index
    %69 = vector.load %arg10[%c81, %c0_16] : memref<320x64xbf16, #tpu.memory_space<vmem>>, vector<14x64xbf16>
    tpu.vector_store %arg10[%c81, %c0_16], %68 {strides = array<i32>} : memref<320x64xbf16, #tpu.memory_space<vmem>>, vector<14x64xbf16>,
    %70 = vector.extract_strided_slice %14 {offsets = [320, 0], sizes = [64, 64], strides = [1, 1]} : vector<448x64xf32> to vector<64x64xf32>
    %71 = vector.extract_strided_slice %70 {offsets = [0, 0], sizes = [16, 64], strides = [1, 1]} : vector<64x64xf32> to vector<16x64xf32>
    %72 = vector.extract_strided_slice %70 {offsets = [16, 0], sizes = [16, 64], strides = [1, 1]} : vector<64x64xf32> to vector<16x64xf32>
    %73 = arith.maximumf %71, %72 : vector<16x64xf32>
    %74 = vector.extract_strided_slice %70 {offsets = [32, 0], sizes = [16, 64], strides = [1, 1]} : vector<64x64xf32> to vector<16x64xf32>
    %75 = vector.extract_strided_slice %70 {offsets = [48, 0], sizes = [16, 64], strides = [1, 1]} : vector<64x64xf32> to vector<16x64xf32>
    %76 = arith.maximumf %74, %75 : vector<16x64xf32>
    %77 = arith.maximumf %73, %76 : vector<16x64xf32>
    %78 = vector.extract_strided_slice %77 {offsets = [0, 0], sizes = [14, 64], strides = [1, 1]} : vector<16x64xf32> to vector<14x64xf32>
    %79 = arith.truncf %78 : vector<14x64xf32> to vector<14x64xbf16>
    %c97 = arith.constant 97 : index
    %c0_17 = arith.constant 0 : index
    %80 = vector.load %arg10[%c97, %c0_17] : memref<320x64xbf16, #tpu.memory_space<vmem>>, vector<14x64xbf16>
    tpu.vector_store %arg10[%c97, %c0_17], %79 {strides = array<i32>} : memref<320x64xbf16, #tpu.memory_space<vmem>>, vector<14x64xbf16>,
    %81 = vector.extract_strided_slice %14 {offsets = [384, 0], sizes = [64, 64], strides = [1, 1]} : vector<448x64xf32> to vector<64x64xf32>
    %82 = vector.extract_strided_slice %81 {offsets = [0, 0], sizes = [16, 64], strides = [1, 1]} : vector<64x64xf32> to vector<16x64xf32>
    %83 = vector.extract_strided_slice %81 {offsets = [16, 0], sizes = [16, 64], strides = [1, 1]} : vector<64x64xf32> to vector<16x64xf32>
    %84 = arith.maximumf %82, %83 : vector<16x64xf32>
    %85 = vector.extract_strided_slice %81 {offsets = [32, 0], sizes = [16, 64], strides = [1, 1]} : vector<64x64xf32> to vector<16x64xf32>
    %86 = vector.extract_strided_slice %81 {offsets = [48, 0], sizes = [16, 64], strides = [1, 1]} : vector<64x64xf32> to vector<16x64xf32>
    %87 = arith.maximumf %85, %86 : vector<16x64xf32>
    %88 = arith.maximumf %84, %87 : vector<16x64xf32>
    %89 = vector.extract_strided_slice %88 {offsets = [0, 0], sizes = [14, 64], strides = [1, 1]} : vector<16x64xf32> to vector<14x64xf32>
    %90 = arith.truncf %89 : vector<14x64xf32> to vector<14x64xbf16>
    %c113 = arith.constant 113 : index
    %c0_18 = arith.constant 0 : index
    %91 = vector.load %arg10[%c113, %c0_18] : memref<320x64xbf16, #tpu.memory_space<vmem>>, vector<14x64xbf16>
    tpu.vector_store %arg10[%c113, %c0_18], %90 {strides = array<i32>} : memref<320x64xbf16, #tpu.memory_space<vmem>>, vector<14x64xbf16>,
    %c0_19 = arith.constant 0 : index
    %c448 = arith.constant 448 : index
    %c0_20 = arith.constant 0 : index
    %92 = vector.load %arg1[%c0_19, %c448, %c0_20] : memref<1x896x16xbf16, #tpu.memory_space<vmem>>, vector<1x448x16xbf16>
    %93 = vector.shape_cast %92 : vector<1x448x16xbf16> to vector<448x16xbf16>
    %c0_21 = arith.constant 0 : index
    %c0_22 = arith.constant 0 : index
    %94 = vector.load %arg2[%c0_21, %c0_22] : memref<16x64xbf16, #tpu.memory_space<vmem>>, vector<16x64xbf16>
    %cst_23 = arith.constant dense<0.000000e+00> : vector<448x64xf32>
    %95 = tpu.matmul %93, %94, %cst_23 {dimension_numbers = #tpu.dot_dimension_numbers<[1], [0], [0], [1], [0, 0, 1, 1], [], []>} : vector<448x16xbf16>, vector<16x64xbf16>, vector<448x64xf32> -> vector<448x64xf32>
    %96 = vector.broadcast %2 : vector<1x64xf32> to vector<448x64xf32>
    %97 = arith.addf %95, %96 : vector<448x64xf32>
    %cst_24 = arith.constant 0.000000e+00 : f32
    %98 = vector.broadcast %cst_24 : f32 to vector<448x64xf32>
    %99 = arith.cmpf oge, %97, %98 : vector<448x64xf32>
    %100 = vector.broadcast %3 : vector<1x1xf32> to vector<448x64xf32>
    %101 = arith.mulf %100, %97 : vector<448x64xf32>
    %102 = arith.select %99, %97, %101 : vector<448x64xi1>, vector<448x64xf32>
    %103 = vector.extract_strided_slice %102 {offsets = [0, 0], sizes = [64, 64], strides = [1, 1]} : vector<448x64xf32> to vector<64x64xf32>
    %104 = vector.extract_strided_slice %103 {offsets = [0, 0], sizes = [16, 64], strides = [1, 1]} : vector<64x64xf32> to vector<16x64xf32>
    %105 = vector.extract_strided_slice %103 {offsets = [16, 0], sizes = [16, 64], strides = [1, 1]} : vector<64x64xf32> to vector<16x64xf32>
    %106 = arith.maximumf %104, %105 : vector<16x64xf32>
    %107 = vector.extract_strided_slice %103 {offsets = [32, 0], sizes = [16, 64], strides = [1, 1]} : vector<64x64xf32> to vector<16x64xf32>
    %108 = vector.extract_strided_slice %103 {offsets = [48, 0], sizes = [16, 64], strides = [1, 1]} : vector<64x64xf32> to vector<16x64xf32>
    %109 = arith.maximumf %107, %108 : vector<16x64xf32>
    %110 = arith.maximumf %106, %109 : vector<16x64xf32>
    %111 = vector.extract_strided_slice %110 {offsets = [0, 0], sizes = [14, 64], strides = [1, 1]} : vector<16x64xf32> to vector<14x64xf32>
    %112 = arith.truncf %111 : vector<14x64xf32> to vector<14x64xbf16>
    %c129 = arith.constant 129 : index
    %c0_25 = arith.constant 0 : index
    %113 = vector.load %arg10[%c129, %c0_25] : memref<320x64xbf16, #tpu.memory_space<vmem>>, vector<14x64xbf16>
    tpu.vector_store %arg10[%c129, %c0_25], %112 {strides = array<i32>} : memref<320x64xbf16, #tpu.memory_space<vmem>>, vector<14x64xbf16>,
    %114 = vector.extract_strided_slice %102 {offsets = [64, 0], sizes = [64, 64], strides = [1, 1]} : vector<448x64xf32> to vector<64x64xf32>
    %115 = vector.extract_strided_slice %114 {offsets = [0, 0], sizes = [16, 64], strides = [1, 1]} : vector<64x64xf32> to vector<16x64xf32>
    %116 = vector.extract_strided_slice %114 {offsets = [16, 0], sizes = [16, 64], strides = [1, 1]} : vector<64x64xf32> to vector<16x64xf32>
    %117 = arith.maximumf %115, %116 : vector<16x64xf32>
    %118 = vector.extract_strided_slice %114 {offsets = [32, 0], sizes = [16, 64], strides = [1, 1]} : vector<64x64xf32> to vector<16x64xf32>
    %119 = vector.extract_strided_slice %114 {offsets = [48, 0], sizes = [16, 64], strides = [1, 1]} : vector<64x64xf32> to vector<16x64xf32>
    %120 = arith.maximumf %118, %119 : vector<16x64xf32>
    %121 = arith.maximumf %117, %120 : vector<16x64xf32>
    %122 = vector.extract_strided_slice %121 {offsets = [0, 0], sizes = [14, 64], strides = [1, 1]} : vector<16x64xf32> to vector<14x64xf32>
    %123 = arith.truncf %122 : vector<14x64xf32> to vector<14x64xbf16>
    %c145 = arith.constant 145 : index
    %c0_26 = arith.constant 0 : index
    %124 = vector.load %arg10[%c145, %c0_26] : memref<320x64xbf16, #tpu.memory_space<vmem>>, vector<14x64xbf16>
    tpu.vector_store %arg10[%c145, %c0_26], %123 {strides = array<i32>} : memref<320x64xbf16, #tpu.memory_space<vmem>>, vector<14x64xbf16>,
    %125 = vector.extract_strided_slice %102 {offsets = [128, 0], sizes = [64, 64], strides = [1, 1]} : vector<448x64xf32> to vector<64x64xf32>
    %126 = vector.extract_strided_slice %125 {offsets = [0, 0], sizes = [16, 64], strides = [1, 1]} : vector<64x64xf32> to vector<16x64xf32>
    %127 = vector.extract_strided_slice %125 {offsets = [16, 0], sizes = [16, 64], strides = [1, 1]} : vector<64x64xf32> to vector<16x64xf32>
    %128 = arith.maximumf %126, %127 : vector<16x64xf32>
    %129 = vector.extract_strided_slice %125 {offsets = [32, 0], sizes = [16, 64], strides = [1, 1]} : vector<64x64xf32> to vector<16x64xf32>
    %130 = vector.extract_strided_slice %125 {offsets = [48, 0], sizes = [16, 64], strides = [1, 1]} : vector<64x64xf32> to vector<16x64xf32>
    %131 = arith.maximumf %129, %130 : vector<16x64xf32>
    %132 = arith.maximumf %128, %131 : vector<16x64xf32>
    %133 = vector.extract_strided_slice %132 {offsets = [0, 0], sizes = [14, 64], strides = [1, 1]} : vector<16x64xf32> to vector<14x64xf32>
    %134 = arith.truncf %133 : vector<14x64xf32> to vector<14x64xbf16>
    %c161 = arith.constant 161 : index
    %c0_27 = arith.constant 0 : index
    %135 = vector.load %arg10[%c161, %c0_27] : memref<320x64xbf16, #tpu.memory_space<vmem>>, vector<14x64xbf16>
    tpu.vector_store %arg10[%c161, %c0_27], %134 {strides = array<i32>} : memref<320x64xbf16, #tpu.memory_space<vmem>>, vector<14x64xbf16>,
    %136 = vector.extract_strided_slice %102 {offsets = [192, 0], sizes = [64, 64], strides = [1, 1]} : vector<448x64xf32> to vector<64x64xf32>
    %137 = vector.extract_strided_slice %136 {offsets = [0, 0], sizes = [16, 64], strides = [1, 1]} : vector<64x64xf32> to vector<16x64xf32>
    %138 = vector.extract_strided_slice %136 {offsets = [16, 0], sizes = [16, 64], strides = [1, 1]} : vector<64x64xf32> to vector<16x64xf32>
    %139 = arith.maximumf %137, %138 : vector<16x64xf32>
    %140 = vector.extract_strided_slice %136 {offsets = [32, 0], sizes = [16, 64], strides = [1, 1]} : vector<64x64xf32> to vector<16x64xf32>
    %141 = vector.extract_strided_slice %136 {offsets = [48, 0], sizes = [16, 64], strides = [1, 1]} : vector<64x64xf32> to vector<16x64xf32>
    %142 = arith.maximumf %140, %141 : vector<16x64xf32>
    %143 = arith.maximumf %139, %142 : vector<16x64xf32>
    %144 = vector.extract_strided_slice %143 {offsets = [0, 0], sizes = [14, 64], strides = [1, 1]} : vector<16x64xf32> to vector<14x64xf32>
    %145 = arith.truncf %144 : vector<14x64xf32> to vector<14x64xbf16>
    %c177 = arith.constant 177 : index
    %c0_28 = arith.constant 0 : index
    %146 = vector.load %arg10[%c177, %c0_28] : memref<320x64xbf16, #tpu.memory_space<vmem>>, vector<14x64xbf16>
    tpu.vector_store %arg10[%c177, %c0_28], %145 {strides = array<i32>} : memref<320x64xbf16, #tpu.memory_space<vmem>>, vector<14x64xbf16>,
    %147 = vector.extract_strided_slice %102 {offsets = [256, 0], sizes = [64, 64], strides = [1, 1]} : vector<448x64xf32> to vector<64x64xf32>
    %148 = vector.extract_strided_slice %147 {offsets = [0, 0], sizes = [16, 64], strides = [1, 1]} : vector<64x64xf32> to vector<16x64xf32>
    %149 = vector.extract_strided_slice %147 {offsets = [16, 0], sizes = [16, 64], strides = [1, 1]} : vector<64x64xf32> to vector<16x64xf32>
    %150 = arith.maximumf %148, %149 : vector<16x64xf32>
    %151 = vector.extract_strided_slice %147 {offsets = [32, 0], sizes = [16, 64], strides = [1, 1]} : vector<64x64xf32> to vector<16x64xf32>
    %152 = vector.extract_strided_slice %147 {offsets = [48, 0], sizes = [16, 64], strides = [1, 1]} : vector<64x64xf32> to vector<16x64xf32>
    %153 = arith.maximumf %151, %152 : vector<16x64xf32>
    %154 = arith.maximumf %150, %153 : vector<16x64xf32>
    %155 = vector.extract_strided_slice %154 {offsets = [0, 0], sizes = [14, 64], strides = [1, 1]} : vector<16x64xf32> to vector<14x64xf32>
    %156 = arith.truncf %155 : vector<14x64xf32> to vector<14x64xbf16>
    %c193 = arith.constant 193 : index
    %c0_29 = arith.constant 0 : index
    %157 = vector.load %arg10[%c193, %c0_29] : memref<320x64xbf16, #tpu.memory_space<vmem>>, vector<14x64xbf16>
    tpu.vector_store %arg10[%c193, %c0_29], %156 {strides = array<i32>} : memref<320x64xbf16, #tpu.memory_space<vmem>>, vector<14x64xbf16>,
    %158 = vector.extract_strided_slice %102 {offsets = [320, 0], sizes = [64, 64], strides = [1, 1]} : vector<448x64xf32> to vector<64x64xf32>
    %159 = vector.extract_strided_slice %158 {offsets = [0, 0], sizes = [16, 64], strides = [1, 1]} : vector<64x64xf32> to vector<16x64xf32>
    %160 = vector.extract_strided_slice %158 {offsets = [16, 0], sizes = [16, 64], strides = [1, 1]} : vector<64x64xf32> to vector<16x64xf32>
    %161 = arith.maximumf %159, %160 : vector<16x64xf32>
    %162 = vector.extract_strided_slice %158 {offsets = [32, 0], sizes = [16, 64], strides = [1, 1]} : vector<64x64xf32> to vector<16x64xf32>
    %163 = vector.extract_strided_slice %158 {offsets = [48, 0], sizes = [16, 64], strides = [1, 1]} : vector<64x64xf32> to vector<16x64xf32>
    %164 = arith.maximumf %162, %163 : vector<16x64xf32>
    %165 = arith.maximumf %161, %164 : vector<16x64xf32>
    %166 = vector.extract_strided_slice %165 {offsets = [0, 0], sizes = [14, 64], strides = [1, 1]} : vector<16x64xf32> to vector<14x64xf32>
    %167 = arith.truncf %166 : vector<14x64xf32> to vector<14x64xbf16>
    %c209 = arith.constant 209 : index
    %c0_30 = arith.constant 0 : index
    %168 = vector.load %arg10[%c209, %c0_30] : memref<320x64xbf16, #tpu.memory_space<vmem>>, vector<14x64xbf16>
    tpu.vector_store %arg10[%c209, %c0_30], %167 {strides = array<i32>} : memref<320x64xbf16, #tpu.memory_space<vmem>>, vector<14x64xbf16>,
    %169 = vector.extract_strided_slice %102 {offsets = [384, 0], sizes = [64, 64], strides = [1, 1]} : vector<448x64xf32> to vector<64x64xf32>
    %170 = vector.extract_strided_slice %169 {offsets = [0, 0], sizes = [16, 64], strides = [1, 1]} : vector<64x64xf32> to vector<16x64xf32>
    %171 = vector.extract_strided_slice %169 {offsets = [16, 0], sizes = [16, 64], strides = [1, 1]} : vector<64x64xf32> to vector<16x64xf32>
    %172 = arith.maximumf %170, %171 : vector<16x64xf32>
    %173 = vector.extract_strided_slice %169 {offsets = [32, 0], sizes = [16, 64], strides = [1, 1]} : vector<64x64xf32> to vector<16x64xf32>
    %174 = vector.extract_strided_slice %169 {offsets = [48, 0], sizes = [16, 64], strides = [1, 1]} : vector<64x64xf32> to vector<16x64xf32>
    %175 = arith.maximumf %173, %174 : vector<16x64xf32>
    %176 = arith.maximumf %172, %175 : vector<16x64xf32>
    %177 = vector.extract_strided_slice %176 {offsets = [0, 0], sizes = [14, 64], strides = [1, 1]} : vector<16x64xf32> to vector<14x64xf32>
    %178 = arith.truncf %177 : vector<14x64xf32> to vector<14x64xbf16>
    %c225 = arith.constant 225 : index
    %c0_31 = arith.constant 0 : index
    %179 = vector.load %arg10[%c225, %c0_31] : memref<320x64xbf16, #tpu.memory_space<vmem>>, vector<14x64xbf16>
    tpu.vector_store %arg10[%c225, %c0_31], %178 {strides = array<i32>} : memref<320x64xbf16, #tpu.memory_space<vmem>>, vector<14x64xbf16>,
    %cst_32 = arith.constant 0.000000e+00 : f32
    %180 = vector.broadcast %cst_32 : f32 to vector<256x64xf32>
    %c0_33 = arith.constant 0 : index
    %c0_34 = arith.constant 0 : index
    %181 = vector.load %arg10[%c0_33, %c0_34] : memref<320x64xbf16, #tpu.memory_space<vmem>>, vector<256x64xbf16>
    %c1 = arith.constant 1 : index
    %c0_35 = arith.constant 0 : index
    %182 = vector.load %arg10[%c1, %c0_35] : memref<320x64xbf16, #tpu.memory_space<vmem>>, vector<256x64xbf16>
    %c2 = arith.constant 2 : index
    %c0_36 = arith.constant 0 : index
    %183 = vector.load %arg10[%c2, %c0_36] : memref<320x64xbf16, #tpu.memory_space<vmem>>, vector<256x64xbf16>
    %c3 = arith.constant 3 : index
    %c0_37 = arith.constant 0 : index
    %184 = vector.load %arg10[%c3, %c0_37] : memref<320x64xbf16, #tpu.memory_space<vmem>>, vector<256x64xbf16>
    %185 = tpu.concatenate %181, %182, %183, %184 in 1 : vector<256x64xbf16>, vector<256x64xbf16>, vector<256x64xbf16>, vector<256x64xbf16> -> vector<256x256xbf16>
    %c0_38 = arith.constant 0 : index
    %c0_39 = arith.constant 0 : index
    %c0_40 = arith.constant 0 : index
    %186 = vector.load %arg5[%c0_38, %c0_39, %c0_40] : memref<4x256x64xbf16, #tpu.memory_space<vmem>>, vector<1x256x64xbf16>
    %187 = vector.shape_cast %186 : vector<1x256x64xbf16> to vector<256x64xbf16>
    %cst_41 = arith.constant dense<0.000000e+00> : vector<256x64xf32>
    %188 = tpu.matmul %185, %187, %cst_41 {dimension_numbers = #tpu.dot_dimension_numbers<[1], [0], [0], [1], [0, 0, 1, 1], [], []>} : vector<256x256xbf16>, vector<256x64xbf16>, vector<256x64xf32> -> vector<256x64xf32>
    %189 = arith.addf %180, %188 : vector<256x64xf32>
    %c16 = arith.constant 16 : index
    %c0_42 = arith.constant 0 : index
    %190 = vector.load %arg10[%c16, %c0_42] : memref<320x64xbf16, #tpu.memory_space<vmem>>, vector<256x64xbf16>
    %c17_43 = arith.constant 17 : index
    %c0_44 = arith.constant 0 : index
    %191 = vector.load %arg10[%c17_43, %c0_44] : memref<320x64xbf16, #tpu.memory_space<vmem>>, vector<256x64xbf16>
    %c18 = arith.constant 18 : index
    %c0_45 = arith.constant 0 : index
    %192 = vector.load %arg10[%c18, %c0_45] : memref<320x64xbf16, #tpu.memory_space<vmem>>, vector<256x64xbf16>
    %c19 = arith.constant 19 : index
    %c0_46 = arith.constant 0 : index
    %193 = vector.load %arg10[%c19, %c0_46] : memref<320x64xbf16, #tpu.memory_space<vmem>>, vector<256x64xbf16>
    %194 = tpu.concatenate %190, %191, %192, %193 in 1 : vector<256x64xbf16>, vector<256x64xbf16>, vector<256x64xbf16>, vector<256x64xbf16> -> vector<256x256xbf16>
    %c1_47 = arith.constant 1 : index
    %c0_48 = arith.constant 0 : index
    %c0_49 = arith.constant 0 : index
    %195 = vector.load %arg5[%c1_47, %c0_48, %c0_49] : memref<4x256x64xbf16, #tpu.memory_space<vmem>>, vector<1x256x64xbf16>
    %196 = vector.shape_cast %195 : vector<1x256x64xbf16> to vector<256x64xbf16>
    %cst_50 = arith.constant dense<0.000000e+00> : vector<256x64xf32>
    %197 = tpu.matmul %194, %196, %cst_50 {dimension_numbers = #tpu.dot_dimension_numbers<[1], [0], [0], [1], [0, 0, 1, 1], [], []>} : vector<256x256xbf16>, vector<256x64xbf16>, vector<256x64xf32> -> vector<256x64xf32>
    %198 = arith.addf %189, %197 : vector<256x64xf32>
    %c32 = arith.constant 32 : index
    %c0_51 = arith.constant 0 : index
    %199 = vector.load %arg10[%c32, %c0_51] : memref<320x64xbf16, #tpu.memory_space<vmem>>, vector<256x64xbf16>
    %c33_52 = arith.constant 33 : index
    %c0_53 = arith.constant 0 : index
    %200 = vector.load %arg10[%c33_52, %c0_53] : memref<320x64xbf16, #tpu.memory_space<vmem>>, vector<256x64xbf16>
    %c34 = arith.constant 34 : index
    %c0_54 = arith.constant 0 : index
    %201 = vector.load %arg10[%c34, %c0_54] : memref<320x64xbf16, #tpu.memory_space<vmem>>, vector<256x64xbf16>
    %c35 = arith.constant 35 : index
    %c0_55 = arith.constant 0 : index
    %202 = vector.load %arg10[%c35, %c0_55] : memref<320x64xbf16, #tpu.memory_space<vmem>>, vector<256x64xbf16>
    %203 = tpu.concatenate %199, %200, %201, %202 in 1 : vector<256x64xbf16>, vector<256x64xbf16>, vector<256x64xbf16>, vector<256x64xbf16> -> vector<256x256xbf16>
    %c2_56 = arith.constant 2 : index
    %c0_57 = arith.constant 0 : index
    %c0_58 = arith.constant 0 : index
    %204 = vector.load %arg5[%c2_56, %c0_57, %c0_58] : memref<4x256x64xbf16, #tpu.memory_space<vmem>>, vector<1x256x64xbf16>
    %205 = vector.shape_cast %204 : vector<1x256x64xbf16> to vector<256x64xbf16>
    %cst_59 = arith.constant dense<0.000000e+00> : vector<256x64xf32>
    %206 = tpu.matmul %203, %205, %cst_59 {dimension_numbers = #tpu.dot_dimension_numbers<[1], [0], [0], [1], [0, 0, 1, 1], [], []>} : vector<256x256xbf16>, vector<256x64xbf16>, vector<256x64xf32> -> vector<256x64xf32>
    %207 = arith.addf %198, %206 : vector<256x64xf32>
    %c48 = arith.constant 48 : index
    %c0_60 = arith.constant 0 : index
    %208 = vector.load %arg10[%c48, %c0_60] : memref<320x64xbf16, #tpu.memory_space<vmem>>, vector<256x64xbf16>
    %c49_61 = arith.constant 49 : index
    %c0_62 = arith.constant 0 : index
    %209 = vector.load %arg10[%c49_61, %c0_62] : memref<320x64xbf16, #tpu.memory_space<vmem>>, vector<256x64xbf16>
    %c50 = arith.constant 50 : index
    %c0_63 = arith.constant 0 : index
    %210 = vector.load %arg10[%c50, %c0_63] : memref<320x64xbf16, #tpu.memory_space<vmem>>, vector<256x64xbf16>
    %c51 = arith.constant 51 : index
    %c0_64 = arith.constant 0 : index
    %211 = vector.load %arg10[%c51, %c0_64] : memref<320x64xbf16, #tpu.memory_space<vmem>>, vector<256x64xbf16>
    %212 = tpu.concatenate %208, %209, %210, %211 in 1 : vector<256x64xbf16>, vector<256x64xbf16>, vector<256x64xbf16>, vector<256x64xbf16> -> vector<256x256xbf16>
    %c3_65 = arith.constant 3 : index
    %c0_66 = arith.constant 0 : index
    %c0_67 = arith.constant 0 : index
    %213 = vector.load %arg5[%c3_65, %c0_66, %c0_67] : memref<4x256x64xbf16, #tpu.memory_space<vmem>>, vector<1x256x64xbf16>
    %214 = vector.shape_cast %213 : vector<1x256x64xbf16> to vector<256x64xbf16>
    %cst_68 = arith.constant dense<0.000000e+00> : vector<256x64xf32>
    %215 = tpu.matmul %212, %214, %cst_68 {dimension_numbers = #tpu.dot_dimension_numbers<[1], [0], [0], [1], [0, 0, 1, 1], [], []>} : vector<256x256xbf16>, vector<256x64xbf16>, vector<256x64xf32> -> vector<256x64xf32>
    %216 = arith.addf %207, %215 : vector<256x64xf32>
    %c0_69 = arith.constant 0 : index
    %c0_70 = arith.constant 0 : index
    %217 = vector.load %arg6[%c0_69, %c0_70] : memref<1x64xf32, #tpu.memory_space<vmem>>, vector<1x64xf32>
    %218 = vector.broadcast %217 : vector<1x64xf32> to vector<256x64xf32>
    %219 = arith.addf %216, %218 : vector<256x64xf32>
    %cst_71 = arith.constant 0.000000e+00 : f32
    %220 = vector.broadcast %cst_71 : f32 to vector<256x64xf32>
    %221 = arith.cmpf oge, %219, %220 : vector<256x64xf32>
    %c0_72 = arith.constant 0 : index
    %c0_73 = arith.constant 0 : index
    %222 = vector.load %arg7[%c0_72, %c0_73] : memref<1x1xf32, #tpu.memory_space<vmem>>, vector<1x1xf32>
    %223 = vector.broadcast %222 : vector<1x1xf32> to vector<256x64xf32>
    %224 = arith.mulf %223, %219 : vector<256x64xf32>
    %225 = arith.select %221, %219, %224 : vector<256x64xi1>, vector<256x64xf32>
    %226 = arith.truncf %225 : vector<256x64xf32> to vector<256x64xbf16>
    %c0_74 = arith.constant 0 : index
    %c0_75 = arith.constant 0 : index
    %227 = vector.load %arg8[%c0_74, %c0_75] : memref<144x256xbf16, #tpu.memory_space<vmem>>, vector<144x256xbf16>
    %cst_76 = arith.constant dense<0.000000e+00> : vector<144x64xf32>
    %228 = tpu.matmul %227, %226, %cst_76 {dimension_numbers = #tpu.dot_dimension_numbers<[1], [0], [0], [1], [0, 0, 1, 1], [], []>} : vector<144x256xbf16>, vector<256x64xbf16>, vector<144x64xf32> -> vector<144x64xf32>
    %229 = vector.extract_strided_slice %228 {offsets = [0, 0], sizes = [18, 64], strides = [1, 1]} : vector<144x64xf32> to vector<18x64xf32>
    %230 = vector.extract_strided_slice %228 {offsets = [18, 0], sizes = [18, 64], strides = [1, 1]} : vector<144x64xf32> to vector<18x64xf32>
    %231 = arith.maximumf %229, %230 : vector<18x64xf32>
    %232 = vector.extract_strided_slice %228 {offsets = [36, 0], sizes = [18, 64], strides = [1, 1]} : vector<144x64xf32> to vector<18x64xf32>
    %233 = vector.extract_strided_slice %228 {offsets = [54, 0], sizes = [18, 64], strides = [1, 1]} : vector<144x64xf32> to vector<18x64xf32>
    %234 = arith.maximumf %232, %233 : vector<18x64xf32>
    %235 = arith.maximumf %231, %234 : vector<18x64xf32>
    %236 = vector.extract_strided_slice %228 {offsets = [72, 0], sizes = [18, 64], strides = [1, 1]} : vector<144x64xf32> to vector<18x64xf32>
    %237 = vector.extract_strided_slice %228 {offsets = [90, 0], sizes = [18, 64], strides = [1, 1]} : vector<144x64xf32> to vector<18x64xf32>
    %238 = arith.maximumf %236, %237 : vector<18x64xf32>
    %239 = vector.extract_strided_slice %228 {offsets = [108, 0], sizes = [18, 64], strides = [1, 1]} : vector<144x64xf32> to vector<18x64xf32>
    %240 = vector.extract_strided_slice %228 {offsets = [126, 0], sizes = [18, 64], strides = [1, 1]} : vector<144x64xf32> to vector<18x64xf32>
    %241 = arith.maximumf %239, %240 : vector<18x64xf32>
    %242 = arith.maximumf %238, %241 : vector<18x64xf32>
    %243 = tpu.concatenate %235, %242 in 1 : vector<18x64xf32>, vector<18x64xf32> -> vector<18x128xf32>
    %244 = arith.truncf %243 : vector<18x128xf32> to vector<18x128xbf16>
    %c0_77 = arith.constant 0 : index
    %c0_78 = arith.constant 0 : index
    %c0_79 = arith.constant 0 : index
    %245 = vector.load %arg9[%c0_77, %c0_78, %c0_79] : memref<1x18x128xbf16, #tpu.memory_space<vmem>>, vector<1x18x128xbf16>
    %246 = vector.shape_cast %245 : vector<1x18x128xbf16> to vector<18x128xbf16>
    %247 = vector.shape_cast %244 : vector<18x128xbf16> to vector<1x18x128xbf16>
    tpu.vector_store %arg9[%c0_77, %c0_78, %c0_79], %247 {strides = array<i32>} : memref<1x18x128xbf16, #tpu.memory_space<vmem>>, vector<1x18x128xbf16>,
    return
  }
  func.func @transform_0(%arg0: i32) -> (i32, i32, i32) {
    %c0_i32 = arith.constant 0 : i32
    %c0_i32_0 = arith.constant 0 : i32
    %c0_i32_1 = arith.constant 0 : i32
    return %arg0, %c0_i32, %c0_i32_0 : i32, i32, i32
  }
  func.func @transform_1(%arg0: i32) -> (i32, i32) {
    %c0_i32 = arith.constant 0 : i32
    %c0_i32_0 = arith.constant 0 : i32
    %c0_i32_1 = arith.constant 0 : i32
    return %c0_i32, %c0_i32_0 : i32, i32
  }
  func.func @transform_2(%arg0: i32) -> (i32, i32) {
    %c0_i32 = arith.constant 0 : i32
    %c0_i32_0 = arith.constant 0 : i32
    %c0_i32_1 = arith.constant 0 : i32
    return %c0_i32, %c0_i32_0 : i32, i32
  }
  func.func @transform_3(%arg0: i32) -> (i32, i32) {
    %c0_i32 = arith.constant 0 : i32
    %c0_i32_0 = arith.constant 0 : i32
    %c0_i32_1 = arith.constant 0 : i32
    return %c0_i32, %c0_i32_0 : i32, i32
  }
  func.func @transform_4(%arg0: i32) -> (i32, i32, i32) {
    %c0_i32 = arith.constant 0 : i32
    %c0_i32_0 = arith.constant 0 : i32
    %c0_i32_1 = arith.constant 0 : i32
    %c0_i32_2 = arith.constant 0 : i32
    return %c0_i32, %c0_i32_0, %c0_i32_1 : i32, i32, i32
  }
  func.func @transform_5(%arg0: i32) -> (i32, i32) {
    %c0_i32 = arith.constant 0 : i32
    %c0_i32_0 = arith.constant 0 : i32
    %c0_i32_1 = arith.constant 0 : i32
    return %c0_i32, %c0_i32_0 : i32, i32
  }
  func.func @transform_6(%arg0: i32) -> (i32, i32) {
    %c0_i32 = arith.constant 0 : i32
    %c0_i32_0 = arith.constant 0 : i32
    %c0_i32_1 = arith.constant 0 : i32
    return %c0_i32, %c0_i32_0 : i32, i32
  }
  func.func @transform_7(%arg0: i32) -> (i32, i32) {
    %c0_i32 = arith.constant 0 : i32
    %c0_i32_0 = arith.constant 0 : i32
    %c0_i32_1 = arith.constant 0 : i32
    return %c0_i32, %c0_i32_0 : i32, i32
  }
  func.func @transform_8(%arg0: i32) -> (i32, i32, i32) {
    %c0_i32 = arith.constant 0 : i32
    %c0_i32_0 = arith.constant 0 : i32
    %c0_i32_1 = arith.constant 0 : i32
    return %arg0, %c0_i32, %c0_i32_0 : i32, i32, i32
  }
}

module attributes {stable_mosaic.version = 11 : i64} {
  func.func @_fc_head_kernel(%arg0: i32, %arg1: memref<8x2304xbf16, #tpu.memory_space<vmem>>, %arg2: memref<2304x512xbf16, #tpu.memory_space<vmem>>, %arg3: memref<1x512xf32, #tpu.memory_space<vmem>>, %arg4: memref<1x1xf32, #tpu.memory_space<vmem>>, %arg5: memref<512x64xbf16, #tpu.memory_space<vmem>>, %arg6: memref<1x64xf32, #tpu.memory_space<vmem>>, %arg7: memref<1x1xf32, #tpu.memory_space<vmem>>, %arg8: memref<64x10xbf16, #tpu.memory_space<vmem>>, %arg9: memref<1x10xf32, #tpu.memory_space<vmem>>, %arg10: memref<8x10xf32, #tpu.memory_space<vmem>>) attributes {dimension_semantics = [#tpu.dimension_semantics<parallel>], iteration_bounds = array<i64: 1>, scalar_prefetch = 0 : i64, scratch_operands = 0 : i64, tpu.core_type = #tpu.core_type<tc>, window_params = [{transform_indices = @transform_0, window_bounds = array<i64: 8, 2304>}, {pipeline_mode = #tpu.pipeline_mode<synchronous>, transform_indices = @transform_1, window_bounds = array<i64: 2304, 512>}, {pipeline_mode = #tpu.pipeline_mode<synchronous>, transform_indices = @transform_2, window_bounds = array<i64: 1, 512>}, {pipeline_mode = #tpu.pipeline_mode<synchronous>, transform_indices = @transform_3, window_bounds = array<i64: 1, 1>}, {pipeline_mode = #tpu.pipeline_mode<synchronous>, transform_indices = @transform_4, window_bounds = array<i64: 512, 64>}, {pipeline_mode = #tpu.pipeline_mode<synchronous>, transform_indices = @transform_5, window_bounds = array<i64: 1, 64>}, {pipeline_mode = #tpu.pipeline_mode<synchronous>, transform_indices = @transform_6, window_bounds = array<i64: 1, 1>}, {pipeline_mode = #tpu.pipeline_mode<synchronous>, transform_indices = @transform_7, window_bounds = array<i64: 64, 10>}, {pipeline_mode = #tpu.pipeline_mode<synchronous>, transform_indices = @transform_8, window_bounds = array<i64: 1, 10>}, {transform_indices = @transform_9, window_bounds = array<i64: 8, 10>}]} {
    %c0 = arith.constant 0 : index
    %c0_0 = arith.constant 0 : index
    %0 = vector.load %arg1[%c0, %c0_0] : memref<8x2304xbf16, #tpu.memory_space<vmem>>, vector<8x2304xbf16>
    %cst = arith.constant 0.000000e+00 : bf16
    %1 = vector.broadcast %cst : bf16 to vector<8x2304xbf16>
    %2 = arith.maximumf %0, %1 : vector<8x2304xbf16>
    %c0_1 = arith.constant 0 : index
    %c0_2 = arith.constant 0 : index
    %3 = vector.load %arg2[%c0_1, %c0_2] : memref<2304x512xbf16, #tpu.memory_space<vmem>>, vector<2304x512xbf16>
    %cst_3 = arith.constant dense<0.000000e+00> : vector<8x512xf32>
    %4 = tpu.matmul %2, %3, %cst_3 {dimension_numbers = #tpu.dot_dimension_numbers<[1], [0], [0], [1], [0, 0, 1, 1], [], []>} : vector<8x2304xbf16>, vector<2304x512xbf16>, vector<8x512xf32> -> vector<8x512xf32>
    %c0_4 = arith.constant 0 : index
    %c0_5 = arith.constant 0 : index
    %5 = vector.load %arg3[%c0_4, %c0_5] : memref<1x512xf32, #tpu.memory_space<vmem>>, vector<1x512xf32>
    %6 = vector.broadcast %5 : vector<1x512xf32> to vector<8x512xf32>
    %7 = arith.addf %4, %6 : vector<8x512xf32>
    %cst_6 = arith.constant 0.000000e+00 : f32
    %8 = vector.broadcast %cst_6 : f32 to vector<8x512xf32>
    %9 = arith.cmpf oge, %7, %8 : vector<8x512xf32>
    %c0_7 = arith.constant 0 : index
    %c0_8 = arith.constant 0 : index
    %10 = vector.load %arg4[%c0_7, %c0_8] : memref<1x1xf32, #tpu.memory_space<vmem>>, vector<1x1xf32>
    %11 = vector.broadcast %10 : vector<1x1xf32> to vector<8x512xf32>
    %12 = arith.mulf %11, %7 : vector<8x512xf32>
    %13 = arith.select %9, %7, %12 : vector<8x512xi1>, vector<8x512xf32>
    %14 = arith.truncf %13 : vector<8x512xf32> to vector<8x512xbf16>
    %c0_9 = arith.constant 0 : index
    %c0_10 = arith.constant 0 : index
    %15 = vector.load %arg5[%c0_9, %c0_10] : memref<512x64xbf16, #tpu.memory_space<vmem>>, vector<512x64xbf16>
    %cst_11 = arith.constant dense<0.000000e+00> : vector<8x64xf32>
    %16 = tpu.matmul %14, %15, %cst_11 {dimension_numbers = #tpu.dot_dimension_numbers<[1], [0], [0], [1], [0, 0, 1, 1], [], []>} : vector<8x512xbf16>, vector<512x64xbf16>, vector<8x64xf32> -> vector<8x64xf32>
    %c0_12 = arith.constant 0 : index
    %c0_13 = arith.constant 0 : index
    %17 = vector.load %arg6[%c0_12, %c0_13] : memref<1x64xf32, #tpu.memory_space<vmem>>, vector<1x64xf32>
    %18 = vector.broadcast %17 : vector<1x64xf32> to vector<8x64xf32>
    %19 = arith.addf %16, %18 : vector<8x64xf32>
    %cst_14 = arith.constant 0.000000e+00 : f32
    %20 = vector.broadcast %cst_14 : f32 to vector<8x64xf32>
    %21 = arith.cmpf oge, %19, %20 : vector<8x64xf32>
    %c0_15 = arith.constant 0 : index
    %c0_16 = arith.constant 0 : index
    %22 = vector.load %arg7[%c0_15, %c0_16] : memref<1x1xf32, #tpu.memory_space<vmem>>, vector<1x1xf32>
    %23 = vector.broadcast %22 : vector<1x1xf32> to vector<8x64xf32>
    %24 = arith.mulf %23, %19 : vector<8x64xf32>
    %25 = arith.select %21, %19, %24 : vector<8x64xi1>, vector<8x64xf32>
    %26 = arith.truncf %25 : vector<8x64xf32> to vector<8x64xbf16>
    %c0_17 = arith.constant 0 : index
    %c0_18 = arith.constant 0 : index
    %27 = vector.load %arg8[%c0_17, %c0_18] : memref<64x10xbf16, #tpu.memory_space<vmem>>, vector<64x10xbf16>
    %cst_19 = arith.constant dense<0.000000e+00> : vector<8x10xf32>
    %28 = tpu.matmul %26, %27, %cst_19 {dimension_numbers = #tpu.dot_dimension_numbers<[1], [0], [0], [1], [0, 0, 1, 1], [], []>} : vector<8x64xbf16>, vector<64x10xbf16>, vector<8x10xf32> -> vector<8x10xf32>
    %c0_20 = arith.constant 0 : index
    %c0_21 = arith.constant 0 : index
    %29 = vector.load %arg9[%c0_20, %c0_21] : memref<1x10xf32, #tpu.memory_space<vmem>>, vector<1x10xf32>
    %30 = vector.broadcast %29 : vector<1x10xf32> to vector<8x10xf32>
    %31 = arith.addf %28, %30 : vector<8x10xf32>
    %cst_22 = arith.constant dense<0xFF800000> : vector<8xf32>
    %32 = vector.multi_reduction <maximumf>, %31, %cst_22 [1] : vector<8x10xf32> to vector<8xf32>
    %33 = vector.shape_cast %32 : vector<8xf32> to vector<8x1xf32>
    %34 = vector.broadcast %33 : vector<8x1xf32> to vector<8x10xf32>
    %35 = arith.subf %31, %34 : vector<8x10xf32>
    %36 = math.exp %35 : vector<8x10xf32>
    %cst_23 = arith.constant dense<0.000000e+00> : vector<8xf32>
    %37 = vector.multi_reduction <add>, %36, %cst_23 [1] : vector<8x10xf32> to vector<8xf32>
    %38 = vector.shape_cast %37 : vector<8xf32> to vector<8x1xf32>
    %39 = math.log %38 : vector<8x1xf32>
    %40 = vector.broadcast %39 : vector<8x1xf32> to vector<8x10xf32>
    %41 = arith.subf %35, %40 : vector<8x10xf32>
    %c0_24 = arith.constant 0 : index
    %c0_25 = arith.constant 0 : index
    %42 = vector.load %arg10[%c0_24, %c0_25] : memref<8x10xf32, #tpu.memory_space<vmem>>, vector<8x10xf32>
    tpu.vector_store %arg10[%c0_24, %c0_25], %41 {strides = array<i32>} : memref<8x10xf32, #tpu.memory_space<vmem>>, vector<8x10xf32>,
    return
  }
  func.func @transform_0(%arg0: i32) -> (i32, i32) {
    %c0_i32 = arith.constant 0 : i32
    %c0_i32_0 = arith.constant 0 : i32
    return %arg0, %c0_i32 : i32, i32
  }
  func.func @transform_1(%arg0: i32) -> (i32, i32) {
    %c0_i32 = arith.constant 0 : i32
    %c0_i32_0 = arith.constant 0 : i32
    %c0_i32_1 = arith.constant 0 : i32
    return %c0_i32, %c0_i32_0 : i32, i32
  }
  func.func @transform_2(%arg0: i32) -> (i32, i32) {
    %c0_i32 = arith.constant 0 : i32
    %c0_i32_0 = arith.constant 0 : i32
    %c0_i32_1 = arith.constant 0 : i32
    return %c0_i32, %c0_i32_0 : i32, i32
  }
  func.func @transform_3(%arg0: i32) -> (i32, i32) {
    %c0_i32 = arith.constant 0 : i32
    %c0_i32_0 = arith.constant 0 : i32
    %c0_i32_1 = arith.constant 0 : i32
    return %c0_i32, %c0_i32_0 : i32, i32
  }
  func.func @transform_4(%arg0: i32) -> (i32, i32) {
    %c0_i32 = arith.constant 0 : i32
    %c0_i32_0 = arith.constant 0 : i32
    %c0_i32_1 = arith.constant 0 : i32
    return %c0_i32, %c0_i32_0 : i32, i32
  }
  func.func @transform_5(%arg0: i32) -> (i32, i32) {
    %c0_i32 = arith.constant 0 : i32
    %c0_i32_0 = arith.constant 0 : i32
    %c0_i32_1 = arith.constant 0 : i32
    return %c0_i32, %c0_i32_0 : i32, i32
  }
  func.func @transform_6(%arg0: i32) -> (i32, i32) {
    %c0_i32 = arith.constant 0 : i32
    %c0_i32_0 = arith.constant 0 : i32
    %c0_i32_1 = arith.constant 0 : i32
    return %c0_i32, %c0_i32_0 : i32, i32
  }
  func.func @transform_7(%arg0: i32) -> (i32, i32) {
    %c0_i32 = arith.constant 0 : i32
    %c0_i32_0 = arith.constant 0 : i32
    %c0_i32_1 = arith.constant 0 : i32
    return %c0_i32, %c0_i32_0 : i32, i32
  }
  func.func @transform_8(%arg0: i32) -> (i32, i32) {
    %c0_i32 = arith.constant 0 : i32
    %c0_i32_0 = arith.constant 0 : i32
    %c0_i32_1 = arith.constant 0 : i32
    return %c0_i32, %c0_i32_0 : i32, i32
  }
  func.func @transform_9(%arg0: i32) -> (i32, i32) {
    %c0_i32 = arith.constant 0 : i32
    %c0_i32_0 = arith.constant 0 : i32
    return %arg0, %c0_i32 : i32, i32
  }
}

</mosaic_0001>

<llo_original>
// kernel: mynet3_forward.2
$region0: #{mynet3_forward.2}
  #allocation0 [shape = 'u32[]', space=smem, size = 0x4, offset = 0x4, fixed_abs, tag = 'smem constant byte address 0x4 - core index']
  #allocation1 [shape = 'u32[144,128]{1,0:T(1,128)}', space=vmem, size = 0x12000, scoped, tag = 'internal scratch']
  #allocation2 [shape = 'bf16[320,64]{1,0:T(16,128)(2,1)}', space=vmem, size = 0x14000, scoped, tag = 'scratch operand']
  #allocation3 [shape = 'f32[1,1]{1,0:T(1,128)S(1)}', space=vmem, size = 0x200, scoped, tag = 'scoped memory for mynet3_forward.2']
  #allocation4 [shape = 'f32[1,1]{1,0:T(1,128)S(1)}', space=vmem, size = 0x200, scoped, tag = 'scoped memory for mynet3_forward.2']
  %s0 = inlined_call_operand.vmem [shape: bf16[2,896,16], index: 0, kind: input, shape index: {}]
  %s1 = inlined_call_operand.vmem [shape: bf16[16,64], index: 1, kind: input, shape index: {}]
  %s2 = inlined_call_operand.vmem [shape: f32[1,64], index: 2, kind: input, shape index: {}]
  %s3 = inlined_call_operand.<no memory space> [shape: f32[1,1], index: 3, kind: input, shape index: {}]
  %s4 = inlined_call_operand.vmem [shape: bf16[4,256,64], index: 4, kind: input, shape index: {}]
  %s5 = inlined_call_operand.vmem [shape: f32[1,64], index: 5, kind: input, shape index: {}]
  %s6 = inlined_call_operand.<no memory space> [shape: f32[1,1], index: 6, kind: input, shape index: {}]
  %s7 = inlined_call_operand.vmem [shape: bf16[144,256], index: 7, kind: input, shape index: {}]
  %s8 = inlined_call_operand.vmem [shape: bf16[2,18,128], index: 8, kind: output, shape index: {}]
  %s9 = sld [smem:[#allocation0]]
  $region65: #{mynet3_forward.2} parent=0
    _
  %s11 = ssub.s32 1, %s9
  %s12 = scalar_select 0, %s11, %s9
  %v13 = vstv %s3
  %14 = vst [vmem:[#allocation3] sm:$0x1] %v13
  %v15 = vstv %s6
  %16 = vst [vmem:[#allocation4] sm:$0x1] %v15
  loop: start=0, step=1, limit=4
  $region2: #{mynet3_forward.2} parent=0 // loop_pre_header
    _
  $region3: #{mynet3_forward.2} parent=0 // loop_header
    %s18 = sphi 0, %s22
    %p19 = scmp.ge.s32.totalorder %s18, 4
    %s28 = sphi 0, %s30
    %s31 = sphi 0, %s28
    %s32 = sphi 0, %s31
    %s48 = sphi 0, %s32
    %s52 = sphi 0, %s52
    %s54 = sphi 0, %s52
    %s55 = sphi 0, %s54
    %s69 = sphi 0, %s55
    %s73 = sphi 0, %s73
    %s75 = sphi 0, %s73
    %s76 = sphi 0, %s75
    %s90 = sphi 0, %s76
    %s94 = sphi 0, %s94
    %s96 = sphi 0, %s94
    %s97 = sphi 0, %s96
    %s111 = sphi 0, %s97
    %s115 = sphi 0, %s115
    %s117 = sphi 0, %s115
    %s118 = sphi 0, %s117
    %s132 = sphi 0, %s118
    %s136 = sphi 0, %s136
    %s138 = sphi 0, %s136
    %s139 = sphi 0, %s138
    %s153 = sphi 0, %s139
    %s157 = sphi 0, %s157
    %s159 = sphi 0, %s157
    %s160 = sphi 0, %s159
    %s174 = sphi 0, %s160
    %s178 = sphi 0, %s178
    %s180 = sphi 0, %s178
    %s181 = sphi 0, %s180
    %s195 = sphi 0, %s181
    %s201 = sphi 0, %s203
    %s204 = sphi 0, %s201
    %s205 = sphi 0, %s204
    %s221 = sphi 0, %s205
  $region4: #{mynet3_forward.2} parent=0 // loop_header_branch
    %21 = sbr.rel (%p19) target = $region8
  $region5: #{mynet3_forward.2} parent=0 // loop_body
    %s23 = ssub.s32 %s18, 1
    %s24 = ssub.s32 %s18, 2
    %s25 = sadd.s32 %s18, 1
    %s26 = ssub.s32 %s18, %s25
    %p27 = scmp.eq.s32.totalorder %s26, 0
    %s29 = sadd.s32 %s28, 1
    %s30 = scalar_select %p27, %s28, %s29
    %p33 = pneg %p27
    %p34 = scmp.eq.s32.totalorder %s18, 1
    %p35 = por %p33, %p34
    %p36 = scmp.ne.s32.totalorder %s28, %s31
    %p37 = scmp.eq.s32.totalorder %s18, 0
    %p38 = por %p36, %p37
    %p39 = scmp.ne.s32.totalorder %s28, %s31
    %p40 = scmp.eq.s32.totalorder %s23, 1
    %p41 = por %p39, %p40
    %p42 = scmp.ne.s32.totalorder %s31, %s32
    %p43 = scmp.eq.s32.totalorder %s23, 0
    %p44 = por %p42, %p43
    %p45 = scmp.ne.s32.totalorder %s31, %s32
    %p46 = scmp.eq.s32.totalorder %s24, 1
    %p47 = por %p45, %p46
    %p49 = scmp.ne.s32.totalorder %s32, %s48
    %p50 = scmp.eq.s32.totalorder %s24, 0
    %p51 = por %p49, %p50
    %s53 = sadd.s32 %s52, 1
    %p56 = scmp.eq.s32.totalorder %s18, 1
    %p57 = scmp.ne.s32.totalorder %s52, %s54
    %p58 = scmp.eq.s32.totalorder %s18, 0
    %p59 = por %p57, %p58
    %p60 = scmp.ne.s32.totalorder %s52, %s54
    %p61 = scmp.eq.s32.totalorder %s23, 1
    %p62 = por %p60, %p61
    %p63 = scmp.ne.s32.totalorder %s54, %s55
    %p64 = scmp.eq.s32.totalorder %s23, 0
    %p65 = por %p63, %p64
    %p66 = scmp.ne.s32.totalorder %s54, %s55
    %p67 = scmp.eq.s32.totalorder %s24, 1
    %p68 = por %p66, %p67
    %p70 = scmp.ne.s32.totalorder %s55, %s69
    %p71 = scmp.eq.s32.totalorder %s24, 0
    %p72 = por %p70, %p71
    %s74 = sadd.s32 %s73, 1
    %p77 = scmp.eq.s32.totalorder %s18, 1
    %p78 = scmp.ne.s32.totalorder %s73, %s75
    %p79 = scmp.eq.s32.totalorder %s18, 0
    %p80 = por %p78, %p79
    %p81 = scmp.ne.s32.totalorder %s73, %s75
    %p82 = scmp.eq.s32.totalorder %s23, 1
    %p83 = por %p81, %p82
    %p84 = scmp.ne.s32.totalorder %s75, %s76
    %p85 = scmp.eq.s32.totalorder %s23, 0
    %p86 = por %p84, %p85
    %p87 = scmp.ne.s32.totalorder %s75, %s76
    %p88 = scmp.eq.s32.totalorder %s24, 1
    %p89 = por %p87, %p88
    %p91 = scmp.ne.s32.totalorder %s76, %s90
    %p92 = scmp.eq.s32.totalorder %s24, 0
    %p93 = por %p91, %p92
    %s95 = sadd.s32 %s94, 1
    %p98 = scmp.eq.s32.totalorder %s18, 1
    %p99 = scmp.ne.s32.totalorder %s94, %s96
    %p100 = scmp.eq.s32.totalorder %s18, 0
    %p101 = por %p99, %p100
    %p102 = scmp.ne.s32.totalorder %s94, %s96
    %p103 = scmp.eq.s32.totalorder %s23, 1
    %p104 = por %p102, %p103
    %p105 = scmp.ne.s32.totalorder %s96, %s97
    %p106 = scmp.eq.s32.totalorder %s23, 0
    %p107 = por %p105, %p106
    %p108 = scmp.ne.s32.totalorder %s96, %s97
    %p109 = scmp.eq.s32.totalorder %s24, 1
    %p110 = por %p108, %p109
    %p112 = scmp.ne.s32.totalorder %s97, %s111
    %p113 = scmp.eq.s32.totalorder %s24, 0
    %p114 = por %p112, %p113
    %s116 = sadd.s32 %s115, 1
    %p119 = scmp.eq.s32.totalorder %s18, 1
    %p120 = scmp.ne.s32.totalorder %s115, %s117
    %p121 = scmp.eq.s32.totalorder %s18, 0
    %p122 = por %p120, %p121
    %p123 = scmp.ne.s32.totalorder %s115, %s117
    %p124 = scmp.eq.s32.totalorder %s23, 1
    %p125 = por %p123, %p124
    %p126 = scmp.ne.s32.totalorder %s117, %s118
    %p127 = scmp.eq.s32.totalorder %s23, 0
    %p128 = por %p126, %p127
    %p129 = scmp.ne.s32.totalorder %s117, %s118
    %p130 = scmp.eq.s32.totalorder %s24, 1
    %p131 = por %p129, %p130
    %p133 = scmp.ne.s32.totalorder %s118, %s132
    %p134 = scmp.eq.s32.totalorder %s24, 0
    %p135 = por %p133, %p134
    %s137 = sadd.s32 %s136, 1
    %p140 = scmp.eq.s32.totalorder %s18, 1
    %p141 = scmp.ne.s32.totalorder %s136, %s138
    %p142 = scmp.eq.s32.totalorder %s18, 0
    %p143 = por %p141, %p142
    %p144 = scmp.ne.s32.totalorder %s136, %s138
    %p145 = scmp.eq.s32.totalorder %s23, 1
    %p146 = por %p144, %p145
    %p147 = scmp.ne.s32.totalorder %s138, %s139
    %p148 = scmp.eq.s32.totalorder %s23, 0
    %p149 = por %p147, %p148
    %p150 = scmp.ne.s32.totalorder %s138, %s139
    %p151 = scmp.eq.s32.totalorder %s24, 1
    %p152 = por %p150, %p151
    %p154 = scmp.ne.s32.totalorder %s139, %s153
    %p155 = scmp.eq.s32.totalorder %s24, 0
    %p156 = por %p154, %p155
    %s158 = sadd.s32 %s157, 1
    %p161 = scmp.eq.s32.totalorder %s18, 1
    %p162 = scmp.ne.s32.totalorder %s157, %s159
    %p163 = scmp.eq.s32.totalorder %s18, 0
    %p164 = por %p162, %p163
    %p165 = scmp.ne.s32.totalorder %s157, %s159
    %p166 = scmp.eq.s32.totalorder %s23, 1
    %p167 = por %p165, %p166
    %p168 = scmp.ne.s32.totalorder %s159, %s160
    %p169 = scmp.eq.s32.totalorder %s23, 0
    %p170 = por %p168, %p169
    %p171 = scmp.ne.s32.totalorder %s159, %s160
    %p172 = scmp.eq.s32.totalorder %s24, 1
    %p173 = por %p171, %p172
    %p175 = scmp.ne.s32.totalorder %s160, %s174
    %p176 = scmp.eq.s32.totalorder %s24, 0
    %p177 = por %p175, %p176
    %s179 = sadd.s32 %s178, 1
    %p182 = scmp.eq.s32.totalorder %s18, 1
    %p183 = scmp.ne.s32.totalorder %s178, %s180
    %p184 = scmp.eq.s32.totalorder %s18, 0
    %p185 = por %p183, %p184
    %p186 = scmp.ne.s32.totalorder %s178, %s180
    %p187 = scmp.eq.s32.totalorder %s23, 1
    %p188 = por %p186, %p187
    %p189 = scmp.ne.s32.totalorder %s180, %s181
    %p190 = scmp.eq.s32.totalorder %s23, 0
    %p191 = por %p189, %p190
    %p192 = scmp.ne.s32.totalorder %s180, %s181
    %p193 = scmp.eq.s32.totalorder %s24, 1
    %p194 = por %p192, %p193
    %p196 = scmp.ne.s32.totalorder %s181, %s195
    %p197 = scmp.eq.s32.totalorder %s24, 0
    %p198 = por %p196, %p197
    %s199 = ssub.s32 %s18, %s25
    %p200 = scmp.eq.s32.totalorder %s199, 0
    %s202 = sadd.s32 %s201, 1
    %s203 = scalar_select %p200, %s201, %s202
    %p206 = pneg %p200
    %p207 = scmp.eq.s32.totalorder %s18, 1
    %p208 = por %p206, %p207
    %p209 = scmp.ne.s32.totalorder %s201, %s204
    %p210 = scmp.eq.s32.totalorder %s18, 0
    %p211 = por %p209, %p210
    %p212 = scmp.ne.s32.totalorder %s201, %s204
    %p213 = scmp.eq.s32.totalorder %s23, 1
    %p214 = por %p212, %p213
    %p215 = scmp.ne.s32.totalorder %s204, %s205
    %p216 = scmp.eq.s32.totalorder %s23, 0
    %p217 = por %p215, %p216
    %p218 = scmp.ne.s32.totalorder %s204, %s205
    %p219 = scmp.eq.s32.totalorder %s24, 1
    %p220 = por %p218, %p219
    %p222 = scmp.ne.s32.totalorder %s205, %s221
    %p223 = scmp.eq.s32.totalorder %s24, 0
    %p224 = por %p222, %p223
    %p225 = scmp.le.s32.totalorder 1, %s18
    %p226 = scmp.lt.s32.totalorder %s18, 3
    %p227 = pnand %p225, %p226
    %p228 = pneg %p227
    // Predicated region
    $region9: #{mynet3_forward.2} parent=5 // pred_check
      _
    $region10: #{mynet3_forward.2} parent=5 // pred_check_branch
      %230 = sbr.rel (%p227) target = $region12
    $region11: #{mynet3_forward.2} parent=5 // pred_region
      %s231 = ssub.s32 %s18, 1
      // Predicated region
      $region13: #{mynet3_forward.2} parent=11 // pred_check
        %p232 = pneg %p65
      $region14: #{mynet3_forward.2} parent=11 // pred_check_branch
        %234 = sbr.rel (%p232) target = $region16
      $region15: #{mynet3_forward.2} parent=11 // pred_region
        _
      $region16: #{mynet3_forward.2} parent=11 // pred_fallthru
        _
      // Predicated region
      $region17: #{mynet3_forward.2} parent=11 // pred_check
        %p235 = pneg %p86
      $region18: #{mynet3_forward.2} parent=11 // pred_check_branch
        %237 = sbr.rel (%p235) target = $region20
      $region19: #{mynet3_forward.2} parent=11 // pred_region
        _
      $region20: #{mynet3_forward.2} parent=11 // pred_fallthru
        _
      // Predicated region
      $region21: #{mynet3_forward.2} parent=11 // pred_check
        %p238 = pneg %p107
      $region22: #{mynet3_forward.2} parent=11 // pred_check_branch
        %240 = sbr.rel (%p238) target = $region24
      $region23: #{mynet3_forward.2} parent=11 // pred_region
        _
      $region24: #{mynet3_forward.2} parent=11 // pred_fallthru
        _
      // Predicated region
      $region25: #{mynet3_forward.2} parent=11 // pred_check
        %p241 = pneg %p128
      $region26: #{mynet3_forward.2} parent=11 // pred_check_branch
        %243 = sbr.rel (%p241) target = $region28
      $region27: #{mynet3_forward.2} parent=11 // pred_region
        _
      $region28: #{mynet3_forward.2} parent=11 // pred_fallthru
        _
      // Predicated region
      $region29: #{mynet3_forward.2} parent=11 // pred_check
        %p244 = pneg %p149
      $region30: #{mynet3_forward.2} parent=11 // pred_check_branch
        %246 = sbr.rel (%p244) target = $region32
      $region31: #{mynet3_forward.2} parent=11 // pred_region
        _
      $region32: #{mynet3_forward.2} parent=11 // pred_fallthru
        _
      // Predicated region
      $region33: #{mynet3_forward.2} parent=11 // pred_check
        %p247 = pneg %p170
      $region34: #{mynet3_forward.2} parent=11 // pred_check_branch
        %249 = sbr.rel (%p247) target = $region36
      $region35: #{mynet3_forward.2} parent=11 // pred_region
        _
      $region36: #{mynet3_forward.2} parent=11 // pred_fallthru
        _
      // Predicated region
      $region37: #{mynet3_forward.2} parent=11 // pred_check
        %p250 = pneg %p191
      $region38: #{mynet3_forward.2} parent=11 // pred_check_branch
        %252 = sbr.rel (%p250) target = $region40
      $region39: #{mynet3_forward.2} parent=11 // pred_region
        _
      $region40: #{mynet3_forward.2} parent=11 // pred_fallthru
        _
    $region12: #{mynet3_forward.2} parent=5 // pred_fallthru
      _
    %p253 = scmp.lt.s32.totalorder %s18, 2
    // Predicated region
    $region41: #{mynet3_forward.2} parent=5 // pred_check
      %p254 = pneg %p253
    $region42: #{mynet3_forward.2} parent=5 // pred_check_branch
      %256 = sbr.rel (%p254) target = $region44
    $region43: #{mynet3_forward.2} parent=5 // pred_region
      // Predicated region
      $region45: #{mynet3_forward.2} parent=43 // pred_check
        %p257 = pneg %p38
      $region46: #{mynet3_forward.2} parent=43 // pred_check_branch
        %259 = sbr.rel (%p257) target = $region48
      $region47: #{mynet3_forward.2} parent=43 // pred_region
        %p260 = scmp.lt.s32.totalorder %s18, 1
        %s261 = scalar_select %p260, %s18, 1
        %s262 = smul.addr %s261, 112
        %s263 = smul.addr %s262, 4
        %s264 = scalar_lea.vmem %s0, %s263
      $region48: #{mynet3_forward.2} parent=43 // pred_fallthru
        _
    $region44: #{mynet3_forward.2} parent=5 // pred_fallthru
      _
    %p265 = scmp.le.s32.totalorder 1, %s18
    %p266 = scmp.lt.s32.totalorder %s18, 3
    %p267 = pnand %p265, %p266
    %p268 = pneg %p267
    // Predicated region
    $region49: #{mynet3_forward.2} parent=5 // pred_check
      _
    $region50: #{mynet3_forward.2} parent=5 // pred_check_branch
      %270 = sbr.rel (%p267) target = $region52
    $region51: #{mynet3_forward.2} parent=5 // pred_region
      %s271 = ssub.s32 %s18, 1
      %p272 = scmp.lt.s32.totalorder %s23, 1
      %s273 = scalar_select %p272, %s23, 1
      %s274 = smul.addr %s273, 112
      %s275 = smul.addr %s274, 4
      %s276 = scalar_lea.vmem %s0, %s275
      %p277 = pneg %p44
      %p278 = pneg %p41
      %p279 = pneg %p65
      %p280 = pneg %p62
      %p281 = pneg %p86
      %p282 = pneg %p83
      %p283 = pneg %p107
      %p284 = pneg %p104
      %p285 = pneg %p128
      %p286 = pneg %p125
      %p287 = pneg %p149
      %p288 = pneg %p146
      %p289 = pneg %p170
      %p290 = pneg %p167
      %p291 = pneg %p191
      %p292 = pneg %p188
      %p293 = pneg %p217
      %p294 = pneg %p214
      %p295 = scmp.lt.s32.totalorder %s23, 1
      %s296 = scalar_select %p295, %s23, 1
      %s297 = smul.addr %s296, 3
      %s298 = smul.addr %s297, 4
      %s299 = scalar_lea.vmem %s8, %s298
      %p300 = scmp.lt.s32.totalorder %s23, 1
      %s301 = scalar_select %p300, %s23, 1
      %s302 = smul.addr %s301, 112
      %s303 = smul.addr %s302, 4
      %s304 = scalar_lea.vmem %s0, %s303
      %p305 = scmp.lt.s32.totalorder %s23, 1
      %s306 = scalar_select %p305, %s23, 1
      %s307 = smul.addr %s306, 3
      %s308 = smul.addr %s307, 4
      %s309 = scalar_lea.vmem %s8, %s308
      %vm311 = vcmask 523264
      %312 = vst.msk [vmem:[#allocation2] sm:$0xff] %vm311, 0
      %313 = vst.msk [vmem:[#allocation2 + $0x8] sm:$0xff] %vm311, 0
      %314 = vst.msk [vmem:[#allocation2 + $0x10] sm:$0xff] %vm311, 0
      %315 = vst.msk [vmem:[#allocation2 + $0x18] sm:$0xff] %vm311, 0
      %316 = vst.msk [vmem:[#allocation2 + $0x20] sm:$0xff] %vm311, 0
      %317 = vst.msk [vmem:[#allocation2 + $0x28] sm:$0xff] %vm311, 0
      %318 = vst.msk [vmem:[#allocation2 + $0x30] sm:$0xff] %vm311, 0
      %319 = vst.msk [vmem:[#allocation2 + $0x38] sm:$0xff] %vm311, 0
      %320 = vst.msk [vmem:[#allocation2 + $0x40] sm:$0xff] %vm311, 0
      %321 = vst.msk [vmem:[#allocation2 + $0x48] sm:$0xff] %vm311, 0
      %322 = vst.msk [vmem:[#allocation2 + $0x50] sm:$0xff] %vm311, 0
      %323 = vst.msk [vmem:[#allocation2 + $0x58] sm:$0xff] %vm311, 0
      %324 = vst.msk [vmem:[#allocation2 + $0x60] sm:$0xff] %vm311, 0
      %325 = vst.msk [vmem:[#allocation2 + $0x68] sm:$0xff] %vm311, 0
      %326 = vst.msk [vmem:[#allocation2 + $0x70] sm:$0xff] %vm311, 0
      %327 = vst.msk [vmem:[#allocation2 + $0x78] sm:$0xff] %vm311, 0
      %328 = vst.msk [vmem:[#allocation2 + $0x80] sm:$0xff] %vm311, 0
      %329 = vst.msk [vmem:[#allocation2 + $0x88] sm:$0xff] %vm311, 0
      %330 = vst.msk [vmem:[#allocation2 + $0x90] sm:$0xff] %vm311, 0
      %331 = vst.msk [vmem:[#allocation2 + $0x98] sm:$0xff] %vm311, 0
      %v332 = vld [vmem:[%s2] sm:$0x1]
      %v333 = vld [vmem:[#allocation3] sm:$0x1]
      %v334 = vld [vmem:[%s304] sm:$0xf]
      %v335 = vld [vmem:[%s304 + $0x4] sm:$0xf]
      %v336 = vld [vmem:[%s304 + $0x8] sm:$0xf]
      %v337 = vld [vmem:[%s304 + $0xc] sm:$0xf]
      %v338 = vld [vmem:[%s304 + $0x10] sm:$0xf]
      %v339 = vld [vmem:[%s304 + $0x14] sm:$0xf]
      %v340 = vld [vmem:[%s304 + $0x18] sm:$0xf]
      %v341 = vld [vmem:[%s304 + $0x1c] sm:$0xf]
      %v342 = vld [vmem:[%s304 + $0x20] sm:$0xf]
      %v343 = vld [vmem:[%s304 + $0x24] sm:$0xf]
      %v344 = vld [vmem:[%s304 + $0x28] sm:$0xf]
      %v345 = vld [vmem:[%s304 + $0x2c] sm:$0xf]
      %v346 = vld [vmem:[%s304 + $0x30] sm:$0xf]
      %v347 = vld [vmem:[%s304 + $0x34] sm:$0xf]
      %v348 = vld [vmem:[%s304 + $0x38] sm:$0xf]
      %v349 = vld [vmem:[%s304 + $0x3c] sm:$0xf]
      %v350 = vld [vmem:[%s304 + $0x40] sm:$0xf]
      %v351 = vld [vmem:[%s304 + $0x44] sm:$0xf]
      %v352 = vld [vmem:[%s304 + $0x48] sm:$0xf]
      %v353 = vld [vmem:[%s304 + $0x4c] sm:$0xf]
      %v354 = vld [vmem:[%s304 + $0x50] sm:$0xf]
      %v355 = vld [vmem:[%s304 + $0x54] sm:$0xf]
      %v356 = vld [vmem:[%s304 + $0x58] sm:$0xf]
      %v357 = vld [vmem:[%s304 + $0x5c] sm:$0xf]
      %v358 = vld [vmem:[%s304 + $0x60] sm:$0xf]
      %v359 = vld [vmem:[%s304 + $0x64] sm:$0xf]
      %v360 = vld [vmem:[%s304 + $0x68] sm:$0xf]
      %v361 = vld [vmem:[%s304 + $0x6c] sm:$0xf]
      %v362 = vld [vmem:[%s304 + $0x70] sm:$0xf]
      %v363 = vld [vmem:[%s304 + $0x74] sm:$0xf]
      %v364 = vld [vmem:[%s304 + $0x78] sm:$0xf]
      %v365 = vld [vmem:[%s304 + $0x7c] sm:$0xf]
      %v366 = vld [vmem:[%s304 + $0x80] sm:$0xf]
      %v367 = vld [vmem:[%s304 + $0x84] sm:$0xf]
      %v368 = vld [vmem:[%s304 + $0x88] sm:$0xf]
      %v369 = vld [vmem:[%s304 + $0x8c] sm:$0xf]
      %v370 = vld [vmem:[%s304 + $0x90] sm:$0xf]
      %v371 = vld [vmem:[%s304 + $0x94] sm:$0xf]
      %v372 = vld [vmem:[%s304 + $0x98] sm:$0xf]
      %v373 = vld [vmem:[%s304 + $0x9c] sm:$0xf]
      %v374 = vld [vmem:[%s304 + $0xa0] sm:$0xf]
      %v375 = vld [vmem:[%s304 + $0xa4] sm:$0xf]
      %v376 = vld [vmem:[%s304 + $0xa8] sm:$0xf]
      %v377 = vld [vmem:[%s304 + $0xac] sm:$0xf]
      %v378 = vld [vmem:[%s304 + $0xb0] sm:$0xf]
      %v379 = vld [vmem:[%s304 + $0xb4] sm:$0xf]
      %v380 = vld [vmem:[%s304 + $0xb8] sm:$0xf]
      %v381 = vld [vmem:[%s304 + $0xbc] sm:$0xf]
      %v382 = vld [vmem:[%s304 + $0xc0] sm:$0xf]
      %v383 = vld [vmem:[%s304 + $0xc4] sm:$0xf]
      %v384 = vld [vmem:[%s304 + $0xc8] sm:$0xf]
      %v385 = vld [vmem:[%s304 + $0xcc] sm:$0xf]
      %v386 = vld [vmem:[%s304 + $0xd0] sm:$0xf]
      %v387 = vld [vmem:[%s304 + $0xd4] sm:$0xf]
      %v388 = vld [vmem:[%s304 + $0xd8] sm:$0xf]
      %v389 = vld [vmem:[%s304 + $0xdc] sm:$0xf]
      %v390 = vld [vmem:[%s1] sm:$0xf]
      %v391 = vld [vmem:[%s1 + $0x4] sm:$0xf]
      %v393 = vlaneseq
      %v394 = vshrl.u32 %v393, 7
      %v395 = vsub.s32 0, %v394
      %v396 = vrot.slane %v332, %v395
      %v454 = vunpack.c.l.b16 %v334
      %v455 = vunpack.c.l.b16 %v335
      %v456 = vunpack.c.l.b16 %v336
      %v457 = vunpack.c.l.b16 %v337
      %v458 = vunpack.c.l.b16 %v338
      %v459 = vunpack.c.l.b16 %v339
      %v460 = vunpack.c.l.b16 %v340
      %v461 = vunpack.c.l.b16 %v341
      %v462 = vunpack.c.l.b16 %v342
      %v463 = vunpack.c.l.b16 %v343
      %v464 = vunpack.c.l.b16 %v344
      %v465 = vunpack.c.l.b16 %v345
      %v466 = vunpack.c.l.b16 %v346
      %v467 = vunpack.c.l.b16 %v347
      %v468 = vunpack.c.l.b16 %v348
      %v469 = vunpack.c.l.b16 %v349
      %v470 = vunpack.c.l.b16 %v350
      %v471 = vunpack.c.l.b16 %v351
      %v472 = vunpack.c.l.b16 %v352
      %v473 = vunpack.c.l.b16 %v353
      %v474 = vunpack.c.l.b16 %v354
      %v475 = vunpack.c.l.b16 %v355
      %v476 = vunpack.c.l.b16 %v356
      %v477 = vunpack.c.l.b16 %v357
      %v478 = vunpack.c.l.b16 %v358
      %v479 = vunpack.c.l.b16 %v359
      %v480 = vunpack.c.l.b16 %v360
      %v481 = vunpack.c.l.b16 %v361
      %v482 = vunpack.c.l.b16 %v362
      %v483 = vunpack.c.l.b16 %v363
      %v484 = vunpack.c.l.b16 %v364
      %v485 = vunpack.c.l.b16 %v365
      %v486 = vunpack.c.l.b16 %v366
      %v487 = vunpack.c.l.b16 %v367
      %v488 = vunpack.c.l.b16 %v368
      %v489 = vunpack.c.l.b16 %v369
      %v490 = vunpack.c.l.b16 %v370
      %v491 = vunpack.c.l.b16 %v371
      %v492 = vunpack.c.l.b16 %v372
      %v493 = vunpack.c.l.b16 %v373
      %v494 = vunpack.c.l.b16 %v374
      %v495 = vunpack.c.l.b16 %v375
      %v496 = vunpack.c.l.b16 %v376
      %v497 = vunpack.c.l.b16 %v377
      %v498 = vunpack.c.l.b16 %v378
      %v499 = vunpack.c.l.b16 %v379
      %v500 = vunpack.c.l.b16 %v380
      %v501 = vunpack.c.l.b16 %v381
      %v502 = vunpack.c.l.b16 %v382
      %v503 = vunpack.c.l.b16 %v383
      %v504 = vunpack.c.l.b16 %v384
      %v505 = vunpack.c.l.b16 %v385
      %v506 = vunpack.c.l.b16 %v386
      %v507 = vunpack.c.l.b16 %v387
      %v508 = vunpack.c.l.b16 %v388
      %v509 = vunpack.c.l.b16 %v389
      %v510 = vpack.c.b16 %v455, %v454
      %v511 = vpack.c.b16 %v457, %v456
      %v512 = vpack.c.b16 %v459, %v458
      %v513 = vpack.c.b16 %v461, %v460
      %v514 = vpack.c.b16 %v463, %v462
      %v515 = vpack.c.b16 %v465, %v464
      %v516 = vpack.c.b16 %v467, %v466
      %v517 = vpack.c.b16 %v469, %v468
      %v518 = vpack.c.b16 %v471, %v470
      %v519 = vpack.c.b16 %v473, %v472
      %v520 = vpack.c.b16 %v475, %v474
      %v521 = vpack.c.b16 %v477, %v476
      %v522 = vpack.c.b16 %v479, %v478
      %v523 = vpack.c.b16 %v481, %v480
      %v524 = vpack.c.b16 %v483, %v482
      %v525 = vpack.c.b16 %v485, %v484
      %v526 = vpack.c.b16 %v487, %v486
      %v527 = vpack.c.b16 %v489, %v488
      %v528 = vpack.c.b16 %v491, %v490
      %v529 = vpack.c.b16 %v493, %v492
      %v530 = vpack.c.b16 %v495, %v494
      %v531 = vpack.c.b16 %v497, %v496
      %v532 = vpack.c.b16 %v499, %v498
      %v533 = vpack.c.b16 %v501, %v500
      %v534 = vpack.c.b16 %v503, %v502
      %v535 = vpack.c.b16 %v505, %v504
      %v536 = vpack.c.b16 %v507, %v506
      %v537 = vpack.c.b16 %v509, %v508
      %v540 = vunpack.c.l.b16 %v390
      %v541 = vunpack.c.l.b16 %v391
      %v542 = vpack.c.b16 %v541, %v540
      %vm544 = vcmask 130048
      %v546 = vsel %vm544, %v510, 0
      %v549 = vsel %vm544, %v511, 0
      %v552 = vsel %vm544, %v512, 0
      %v555 = vsel %vm544, %v513, 0
      %v558 = vsel %vm544, %v514, 0
      %v561 = vsel %vm544, %v515, 0
      %v564 = vsel %vm544, %v516, 0
      %v567 = vsel %vm544, %v517, 0
      %v570 = vsel %vm544, %v518, 0
      %v573 = vsel %vm544, %v519, 0
      %v576 = vsel %vm544, %v520, 0
      %v579 = vsel %vm544, %v521, 0
      %v582 = vsel %vm544, %v522, 0
      %v585 = vsel %vm544, %v523, 0
      %v588 = vsel %vm544, %v524, 0
      %v591 = vsel %vm544, %v525, 0
      %v594 = vsel %vm544, %v526, 0
      %v597 = vsel %vm544, %v527, 0
      %v600 = vsel %vm544, %v528, 0
      %v603 = vsel %vm544, %v529, 0
      %v606 = vsel %vm544, %v530, 0
      %v609 = vsel %vm544, %v531, 0
      %v612 = vsel %vm544, %v532, 0
      %v615 = vsel %vm544, %v533, 0
      %v618 = vsel %vm544, %v534, 0
      %v621 = vsel %vm544, %v535, 0
      %v624 = vsel %vm544, %v536, 0
      %v627 = vsel %vm544, %v537, 0
      %629 = vmatprep.subr.bf16.mxu0 0
      %630 = vmatpush1.bf16.msra.mxu0 %v542
      %631 = vmatprep.subr.bf16.mxu0 0
      %632 = vmatpush1.bf16.msra.mxu0 0
      %633 = vmatprep.subr.bf16.mxu0 0
      %634 = vmatpush1.bf16.msra.mxu0 0
      %635 = vmatprep.subr.bf16.mxu0 0
      %636 = vmatpush1.bf16.msra.mxu0 0
      %637 = vmatprep.subr.bf16.mxu0 0
      %638 = vmatpush1.bf16.msra.mxu0 0
      %639 = vmatprep.subr.bf16.mxu0 0
      %640 = vmatpush1.bf16.msra.mxu0 0
      %641 = vmatprep.subr.bf16.mxu0 0
      %642 = vmatpush1.bf16.msra.mxu0 0
      %643 = vmatprep.subr.bf16.mxu0 0
      %644 = vmatpush1.bf16.msra.mxu0 0
      %645 = vmatprep.subr.bf16.mxu0 0
      %646 = vmatpush1.bf16.msra.mxu0 0
      %647 = vmatprep.subr.bf16.mxu0 0
      %648 = vmatpush1.bf16.msra.mxu0 0
      %649 = vmatprep.subr.bf16.mxu0 0
      %650 = vmatpush1.bf16.msra.mxu0 0
      %651 = vmatprep.subr.bf16.mxu0 0
      %652 = vmatpush1.bf16.msra.mxu0 0
      %653 = vmatprep.subr.bf16.mxu0 0
      %654 = vmatpush1.bf16.msra.mxu0 0
      %655 = vmatprep.subr.bf16.mxu0 0
      %656 = vmatpush1.bf16.msra.mxu0 0
      %657 = vmatprep.subr.bf16.mxu0 0
      %658 = vmatpush1.bf16.msra.mxu0 0
      %659 = vmatprep.subr.bf16.mxu0 0
      %660 = vmatpush1.bf16.msra.mxu0 0
      %661 = vmatprep.mubr.bf16.mxu0 0
      %662 = vmatmul.mubr.bf16.gmra.mrb[0].mxu0 %v546
      %v663 = vpop.f32.mrb[0].mxu0
      %v664 = vadd.f32 %v396, %v663
      %v665 = vpop.f32.mrb[0].mxu0
      %v666 = vpop.f32.mrb[0].mxu0
      %v667 = vadd.f32 %v396, %v666
      %v668 = vpop.f32.mrb[0].mxu0
      %669 = vmatprep.mubr.bf16.mxu0 0
      %670 = vmatmul.mubr.bf16.gmra.mrb[0].mxu0 %v549
      %v671 = vpop.f32.mrb[0].mxu0
      %v672 = vadd.f32 %v396, %v671
      %v673 = vpop.f32.mrb[0].mxu0
      %v674 = vpop.f32.mrb[0].mxu0
      %v675 = vadd.f32 %v396, %v674
      %v676 = vpop.f32.mrb[0].mxu0
      %677 = vmatprep.mubr.bf16.mxu0 0
      %678 = vmatmul.mubr.bf16.gmra.mrb[0].mxu0 %v552
      %v679 = vpop.f32.mrb[0].mxu0
      %v680 = vadd.f32 %v396, %v679
      %v681 = vpop.f32.mrb[0].mxu0
      %v682 = vpop.f32.mrb[0].mxu0
      %v683 = vadd.f32 %v396, %v682
      %v684 = vpop.f32.mrb[0].mxu0
      %685 = vmatprep.mubr.bf16.mxu0 0
      %686 = vmatmul.mubr.bf16.gmra.mrb[0].mxu0 %v555
      %v687 = vpop.f32.mrb[0].mxu0
      %v688 = vadd.f32 %v396, %v687
      %v689 = vpop.f32.mrb[0].mxu0
      %v690 = vpop.f32.mrb[0].mxu0
      %v691 = vadd.f32 %v396, %v690
      %v692 = vpop.f32.mrb[0].mxu0
      %693 = vmatprep.mubr.bf16.mxu0 0
      %694 = vmatmul.mubr.bf16.gmra.mrb[0].mxu0 %v558
      %v695 = vpop.f32.mrb[0].mxu0
      %v696 = vadd.f32 %v396, %v695
      %v697 = vpop.f32.mrb[0].mxu0
      %v698 = vpop.f32.mrb[0].mxu0
      %v699 = vadd.f32 %v396, %v698
      %v700 = vpop.f32.mrb[0].mxu0
      %701 = vmatprep.mubr.bf16.mxu0 0
      %702 = vmatmul.mubr.bf16.gmra.mrb[0].mxu0 %v561
      %v703 = vpop.f32.mrb[0].mxu0
      %v704 = vadd.f32 %v396, %v703
      %v705 = vpop.f32.mrb[0].mxu0
      %v706 = vpop.f32.mrb[0].mxu0
      %v707 = vadd.f32 %v396, %v706
      %v708 = vpop.f32.mrb[0].mxu0
      %709 = vmatprep.mubr.bf16.mxu0 0
      %710 = vmatmul.mubr.bf16.gmra.mrb[0].mxu0 %v564
      %v711 = vpop.f32.mrb[0].mxu0
      %v712 = vadd.f32 %v396, %v711
      %v713 = vpop.f32.mrb[0].mxu0
      %v714 = vpop.f32.mrb[0].mxu0
      %v715 = vadd.f32 %v396, %v714
      %v716 = vpop.f32.mrb[0].mxu0
      %717 = vmatprep.mubr.bf16.mxu0 0
      %718 = vmatmul.mubr.bf16.gmra.mrb[0].mxu0 %v567
      %v719 = vpop.f32.mrb[0].mxu0
      %v720 = vadd.f32 %v396, %v719
      %v721 = vpop.f32.mrb[0].mxu0
      %v722 = vpop.f32.mrb[0].mxu0
      %v723 = vadd.f32 %v396, %v722
      %v724 = vpop.f32.mrb[0].mxu0
      %725 = vmatprep.mubr.bf16.mxu0 0
      %726 = vmatmul.mubr.bf16.gmra.mrb[0].mxu0 %v570
      %v727 = vpop.f32.mrb[0].mxu0
      %v728 = vadd.f32 %v396, %v727
      %v729 = vpop.f32.mrb[0].mxu0
      %v730 = vpop.f32.mrb[0].mxu0
      %v731 = vadd.f32 %v396, %v730
      %v732 = vpop.f32.mrb[0].mxu0
      %733 = vmatprep.mubr.bf16.mxu0 0
      %734 = vmatmul.mubr.bf16.gmra.mrb[0].mxu0 %v573
      %v735 = vpop.f32.mrb[0].mxu0
      %v736 = vadd.f32 %v396, %v735
      %v737 = vpop.f32.mrb[0].mxu0
      %v738 = vpop.f32.mrb[0].mxu0
      %v739 = vadd.f32 %v396, %v738
      %v740 = vpop.f32.mrb[0].mxu0
      %741 = vmatprep.mubr.bf16.mxu0 0
      %742 = vmatmul.mubr.bf16.gmra.mrb[0].mxu0 %v576
      %v743 = vpop.f32.mrb[0].mxu0
      %v744 = vadd.f32 %v396, %v743
      %v745 = vpop.f32.mrb[0].mxu0
      %v746 = vpop.f32.mrb[0].mxu0
      %v747 = vadd.f32 %v396, %v746
      %v748 = vpop.f32.mrb[0].mxu0
      %749 = vmatprep.mubr.bf16.mxu0 0
      %750 = vmatmul.mubr.bf16.gmra.mrb[0].mxu0 %v579
      %v751 = vpop.f32.mrb[0].mxu0
      %v752 = vadd.f32 %v396, %v751
      %v753 = vpop.f32.mrb[0].mxu0
      %v754 = vpop.f32.mrb[0].mxu0
      %v755 = vadd.f32 %v396, %v754
      %v756 = vpop.f32.mrb[0].mxu0
      %757 = vmatprep.mubr.bf16.mxu0 0
      %758 = vmatmul.mubr.bf16.gmra.mrb[0].mxu0 %v582
      %v759 = vpop.f32.mrb[0].mxu0
      %v760 = vadd.f32 %v396, %v759
      %v761 = vpop.f32.mrb[0].mxu0
      %v762 = vpop.f32.mrb[0].mxu0
      %v763 = vadd.f32 %v396, %v762
      %v764 = vpop.f32.mrb[0].mxu0
      %765 = vmatprep.mubr.bf16.mxu0 0
      %766 = vmatmul.mubr.bf16.gmra.mrb[0].mxu0 %v585
      %v767 = vpop.f32.mrb[0].mxu0
      %v768 = vadd.f32 %v396, %v767
      %v769 = vpop.f32.mrb[0].mxu0
      %v770 = vpop.f32.mrb[0].mxu0
      %v771 = vadd.f32 %v396, %v770
      %v772 = vpop.f32.mrb[0].mxu0
      %773 = vmatprep.mubr.bf16.mxu0 0
      %774 = vmatmul.mubr.bf16.gmra.mrb[0].mxu0 %v588
      %v775 = vpop.f32.mrb[0].mxu0
      %v776 = vadd.f32 %v396, %v775
      %v777 = vpop.f32.mrb[0].mxu0
      %v778 = vpop.f32.mrb[0].mxu0
      %v779 = vadd.f32 %v396, %v778
      %v780 = vpop.f32.mrb[0].mxu0
      %781 = vmatprep.mubr.bf16.mxu0 0
      %782 = vmatmul.mubr.bf16.gmra.mrb[0].mxu0 %v591
      %v783 = vpop.f32.mrb[0].mxu0
      %v784 = vadd.f32 %v396, %v783
      %v785 = vpop.f32.mrb[0].mxu0
      %v786 = vpop.f32.mrb[0].mxu0
      %v787 = vadd.f32 %v396, %v786
      %v788 = vpop.f32.mrb[0].mxu0
      %789 = vmatprep.mubr.bf16.mxu0 0
      %790 = vmatmul.mubr.bf16.gmra.mrb[0].mxu0 %v594
      %v791 = vpop.f32.mrb[0].mxu0
      %v792 = vadd.f32 %v396, %v791
      %v793 = vpop.f32.mrb[0].mxu0
      %v794 = vpop.f32.mrb[0].mxu0
      %v795 = vadd.f32 %v396, %v794
      %v796 = vpop.f32.mrb[0].mxu0
      %797 = vmatprep.mubr.bf16.mxu0 0
      %798 = vmatmul.mubr.bf16.gmra.mrb[0].mxu0 %v597
      %v799 = vpop.f32.mrb[0].mxu0
      %v800 = vadd.f32 %v396, %v799
      %v801 = vpop.f32.mrb[0].mxu0
      %v802 = vpop.f32.mrb[0].mxu0
      %v803 = vadd.f32 %v396, %v802
      %v804 = vpop.f32.mrb[0].mxu0
      %805 = vmatprep.mubr.bf16.mxu0 0
      %806 = vmatmul.mubr.bf16.gmra.mrb[0].mxu0 %v600
      %v807 = vpop.f32.mrb[0].mxu0
      %v808 = vadd.f32 %v396, %v807
      %v809 = vpop.f32.mrb[0].mxu0
      %v810 = vpop.f32.mrb[0].mxu0
      %v811 = vadd.f32 %v396, %v810
      %v812 = vpop.f32.mrb[0].mxu0
      %813 = vmatprep.mubr.bf16.mxu0 0
      %814 = vmatmul.mubr.bf16.gmra.mrb[0].mxu0 %v603
      %v815 = vpop.f32.mrb[0].mxu0
      %v816 = vadd.f32 %v396, %v815
      %v817 = vpop.f32.mrb[0].mxu0
      %v818 = vpop.f32.mrb[0].mxu0
      %v819 = vadd.f32 %v396, %v818
      %v820 = vpop.f32.mrb[0].mxu0
      %821 = vmatprep.mubr.bf16.mxu0 0
      %822 = vmatmul.mubr.bf16.gmra.mrb[0].mxu0 %v606
      %v823 = vpop.f32.mrb[0].mxu0
      %v824 = vadd.f32 %v396, %v823
      %v825 = vpop.f32.mrb[0].mxu0
      %v826 = vpop.f32.mrb[0].mxu0
      %v827 = vadd.f32 %v396, %v826
      %v828 = vpop.f32.mrb[0].mxu0
      %829 = vmatprep.mubr.bf16.mxu0 0
      %830 = vmatmul.mubr.bf16.gmra.mrb[0].mxu0 %v609
      %v831 = vpop.f32.mrb[0].mxu0
      %v832 = vadd.f32 %v396, %v831
      %v833 = vpop.f32.mrb[0].mxu0
      %v834 = vpop.f32.mrb[0].mxu0
      %v835 = vadd.f32 %v396, %v834
      %v836 = vpop.f32.mrb[0].mxu0
      %837 = vmatprep.mubr.bf16.mxu0 0
      %838 = vmatmul.mubr.bf16.gmra.mrb[0].mxu0 %v612
      %v839 = vpop.f32.mrb[0].mxu0
      %v840 = vadd.f32 %v396, %v839
      %v841 = vpop.f32.mrb[0].mxu0
      %v842 = vpop.f32.mrb[0].mxu0
      %v843 = vadd.f32 %v396, %v842
      %v844 = vpop.f32.mrb[0].mxu0
      %845 = vmatprep.mubr.bf16.mxu0 0
      %846 = vmatmul.mubr.bf16.gmra.mrb[0].mxu0 %v615
      %v847 = vpop.f32.mrb[0].mxu0
      %v848 = vadd.f32 %v396, %v847
      %v849 = vpop.f32.mrb[0].mxu0
      %v850 = vpop.f32.mrb[0].mxu0
      %v851 = vadd.f32 %v396, %v850
      %v852 = vpop.f32.mrb[0].mxu0
      %853 = vmatprep.mubr.bf16.mxu0 0
      %854 = vmatmul.mubr.bf16.gmra.mrb[0].mxu0 %v618
      %v855 = vpop.f32.mrb[0].mxu0
      %v856 = vadd.f32 %v396, %v855
      %v857 = vpop.f32.mrb[0].mxu0
      %v858 = vpop.f32.mrb[0].mxu0
      %v859 = vadd.f32 %v396, %v858
      %v860 = vpop.f32.mrb[0].mxu0
      %861 = vmatprep.mubr.bf16.mxu0 0
      %862 = vmatmul.mubr.bf16.gmra.mrb[0].mxu0 %v621
      %v863 = vpop.f32.mrb[0].mxu0
      %v864 = vadd.f32 %v396, %v863
      %v865 = vpop.f32.mrb[0].mxu0
      %v866 = vpop.f32.mrb[0].mxu0
      %v867 = vadd.f32 %v396, %v866
      %v868 = vpop.f32.mrb[0].mxu0
      %869 = vmatprep.mubr.bf16.mxu0 0
      %870 = vmatmul.mubr.bf16.gmra.mrb[0].mxu0 %v624
      %v871 = vpop.f32.mrb[0].mxu0
      %v872 = vadd.f32 %v396, %v871
      %v873 = vpop.f32.mrb[0].mxu0
      %v874 = vpop.f32.mrb[0].mxu0
      %v875 = vadd.f32 %v396, %v874
      %v876 = vpop.f32.mrb[0].mxu0
      %877 = vmatprep.mubr.bf16.mxu0 0
      %878 = vmatmul.mubr.bf16.gmra.mrb[0].mxu0 %v627
      %v879 = vpop.f32.mrb[0].mxu0
      %v880 = vadd.f32 %v396, %v879
      %v881 = vpop.f32.mrb[0].mxu0
      %v882 = vpop.f32.mrb[0].mxu0
      %v883 = vadd.f32 %v396, %v882
      %v884 = vpop.f32.mrb[0].mxu0
      %885 = vdwg.mxu0
      %vm886 = vcmp.ge.f32.partialorder %v664, 0.0
      %vm887 = vcmp.ge.f32.partialorder %v667, 0.0
      %vm888 = vcmp.ge.f32.partialorder %v672, 0.0
      %vm889 = vcmp.ge.f32.partialorder %v675, 0.0
      %vm890 = vcmp.ge.f32.partialorder %v680, 0.0
      %vm891 = vcmp.ge.f32.partialorder %v683, 0.0
      %vm892 = vcmp.ge.f32.partialorder %v688, 0.0
      %vm893 = vcmp.ge.f32.partialorder %v691, 0.0
      %vm894 = vcmp.ge.f32.partialorder %v696, 0.0
      %vm895 = vcmp.ge.f32.partialorder %v699, 0.0
      %vm896 = vcmp.ge.f32.partialorder %v704, 0.0
      %vm897 = vcmp.ge.f32.partialorder %v707, 0.0
      %vm898 = vcmp.ge.f32.partialorder %v712, 0.0
      %vm899 = vcmp.ge.f32.partialorder %v715, 0.0
      %vm900 = vcmp.ge.f32.partialorder %v720, 0.0
      %vm901 = vcmp.ge.f32.partialorder %v723, 0.0
      %vm902 = vcmp.ge.f32.partialorder %v728, 0.0
      %vm903 = vcmp.ge.f32.partialorder %v731, 0.0
      %vm904 = vcmp.ge.f32.partialorder %v736, 0.0
      %vm905 = vcmp.ge.f32.partialorder %v739, 0.0
      %vm906 = vcmp.ge.f32.partialorder %v744, 0.0
      %vm907 = vcmp.ge.f32.partialorder %v747, 0.0
      %vm908 = vcmp.ge.f32.partialorder %v752, 0.0
      %vm909 = vcmp.ge.f32.partialorder %v755, 0.0
      %vm910 = vcmp.ge.f32.partialorder %v760, 0.0
      %vm911 = vcmp.ge.f32.partialorder %v763, 0.0
      %vm912 = vcmp.ge.f32.partialorder %v768, 0.0
      %vm913 = vcmp.ge.f32.partialorder %v771, 0.0
      %vm914 = vcmp.ge.f32.partialorder %v776, 0.0
      %vm915 = vcmp.ge.f32.partialorder %v779, 0.0
      %vm916 = vcmp.ge.f32.partialorder %v784, 0.0
      %vm917 = vcmp.ge.f32.partialorder %v787, 0.0
      %vm918 = vcmp.ge.f32.partialorder %v792, 0.0
      %vm919 = vcmp.ge.f32.partialorder %v795, 0.0
      %vm920 = vcmp.ge.f32.partialorder %v800, 0.0
      %vm921 = vcmp.ge.f32.partialorder %v803, 0.0
      %vm922 = vcmp.ge.f32.partialorder %v808, 0.0
      %vm923 = vcmp.ge.f32.partialorder %v811, 0.0
      %vm924 = vcmp.ge.f32.partialorder %v816, 0.0
      %vm925 = vcmp.ge.f32.partialorder %v819, 0.0
      %vm926 = vcmp.ge.f32.partialorder %v824, 0.0
      %vm927 = vcmp.ge.f32.partialorder %v827, 0.0
      %vm928 = vcmp.ge.f32.partialorder %v832, 0.0
      %vm929 = vcmp.ge.f32.partialorder %v835, 0.0
      %vm930 = vcmp.ge.f32.partialorder %v840, 0.0
      %vm931 = vcmp.ge.f32.partialorder %v843, 0.0
      %vm932 = vcmp.ge.f32.partialorder %v848, 0.0
      %vm933 = vcmp.ge.f32.partialorder %v851, 0.0
      %vm934 = vcmp.ge.f32.partialorder %v856, 0.0
      %vm935 = vcmp.ge.f32.partialorder %v859, 0.0
      %vm936 = vcmp.ge.f32.partialorder %v864, 0.0
      %vm937 = vcmp.ge.f32.partialorder %v867, 0.0
      %vm938 = vcmp.ge.f32.partialorder %v872, 0.0
      %vm939 = vcmp.ge.f32.partialorder %v875, 0.0
      %vm940 = vcmp.ge.f32.partialorder %v880, 0.0
      %vm941 = vcmp.ge.f32.partialorder %v883, 0.0
      %v943 = vlaneseq
      %v944 = vshrl.u32 %v943, 7
      %v945 = vsub.s32 0, %v944
      %v946 = vrot.slane %v333, %v945
      %947 = vset.pattern.permute.xlu0 0
      %948 = vperm.xlu0 %947, %v946
      %v949 = vpop.permute.xlu0 %948
      %v951 = vmul.f32 %v949, %v664
      %v952 = vmul.f32 %v949, %v667
      %v953 = vmul.f32 %v949, %v672
      %v954 = vmul.f32 %v949, %v675
      %v955 = vmul.f32 %v949, %v680
      %v956 = vmul.f32 %v949, %v683
      %v957 = vmul.f32 %v949, %v688
      %v958 = vmul.f32 %v949, %v691
      %v959 = vmul.f32 %v949, %v696
      %v960 = vmul.f32 %v949, %v699
      %v961 = vmul.f32 %v949, %v704
      %v962 = vmul.f32 %v949, %v707
      %v963 = vmul.f32 %v949, %v712
      %v964 = vmul.f32 %v949, %v715
      %v965 = vmul.f32 %v949, %v720
      %v966 = vmul.f32 %v949, %v723
      %v967 = vmul.f32 %v949, %v728
      %v968 = vmul.f32 %v949, %v731
      %v969 = vmul.f32 %v949, %v736
      %v970 = vmul.f32 %v949, %v739
      %v971 = vmul.f32 %v949, %v744
      %v972 = vmul.f32 %v949, %v747
      %v973 = vmul.f32 %v949, %v752
      %v974 = vmul.f32 %v949, %v755
      %v975 = vmul.f32 %v949, %v760
      %v976 = vmul.f32 %v949, %v763
      %v977 = vmul.f32 %v949, %v768
      %v978 = vmul.f32 %v949, %v771
      %v979 = vmul.f32 %v949, %v776
      %v980 = vmul.f32 %v949, %v779
      %v981 = vmul.f32 %v949, %v784
      %v982 = vmul.f32 %v949, %v787
      %v983 = vmul.f32 %v949, %v792
      %v984 = vmul.f32 %v949, %v795
      %v985 = vmul.f32 %v949, %v800
      %v986 = vmul.f32 %v949, %v803
      %v987 = vmul.f32 %v949, %v808
      %v988 = vmul.f32 %v949, %v811
      %v989 = vmul.f32 %v949, %v816
      %v990 = vmul.f32 %v949, %v819
      %v991 = vmul.f32 %v949, %v824
      %v992 = vmul.f32 %v949, %v827
      %v993 = vmul.f32 %v949, %v832
      %v994 = vmul.f32 %v949, %v835
      %v995 = vmul.f32 %v949, %v840
      %v996 = vmul.f32 %v949, %v843
      %v997 = vmul.f32 %v949, %v848
      %v998 = vmul.f32 %v949, %v851
      %v999 = vmul.f32 %v949, %v856
      %v1000 = vmul.f32 %v949, %v859
      %v1001 = vmul.f32 %v949, %v864
      %v1002 = vmul.f32 %v949, %v867
      %v1003 = vmul.f32 %v949, %v872
      %v1004 = vmul.f32 %v949, %v875
      %v1005 = vmul.f32 %v949, %v880
      %v1006 = vmul.f32 %v949, %v883
      %v1007 = vsel %vm886, %v664, %v951
      %v1008 = vsel %vm887, %v667, %v952
      %v1009 = vsel %vm888, %v672, %v953
      %v1010 = vsel %vm889, %v675, %v954
      %v1011 = vsel %vm890, %v680, %v955
      %v1012 = vsel %vm891, %v683, %v956
      %v1013 = vsel %vm892, %v688, %v957
      %v1014 = vsel %vm893, %v691, %v958
      %v1015 = vsel %vm894, %v696, %v959
      %v1016 = vsel %vm895, %v699, %v960
      %v1017 = vsel %vm896, %v704, %v961
      %v1018 = vsel %vm897, %v707, %v962
      %v1019 = vsel %vm898, %v712, %v963
      %v1020 = vsel %vm899, %v715, %v964
      %v1021 = vsel %vm900, %v720, %v965
      %v1022 = vsel %vm901, %v723, %v966
      %v1023 = vsel %vm902, %v728, %v967
      %v1024 = vsel %vm903, %v731, %v968
      %v1025 = vsel %vm904, %v736, %v969
      %v1026 = vsel %vm905, %v739, %v970
      %v1027 = vsel %vm906, %v744, %v971
      %v1028 = vsel %vm907, %v747, %v972
      %v1029 = vsel %vm908, %v752, %v973
      %v1030 = vsel %vm909, %v755, %v974
      %v1031 = vsel %vm910, %v760, %v975
      %v1032 = vsel %vm911, %v763, %v976
      %v1033 = vsel %vm912, %v768, %v977
      %v1034 = vsel %vm913, %v771, %v978
      %v1035 = vsel %vm914, %v776, %v979
      %v1036 = vsel %vm915, %v779, %v980
      %v1037 = vsel %vm916, %v784, %v981
      %v1038 = vsel %vm917, %v787, %v982
      %v1039 = vsel %vm918, %v792, %v983
      %v1040 = vsel %vm919, %v795, %v984
      %v1041 = vsel %vm920, %v800, %v985
      %v1042 = vsel %vm921, %v803, %v986
      %v1043 = vsel %vm922, %v808, %v987
      %v1044 = vsel %vm923, %v811, %v988
      %v1045 = vsel %vm924, %v816, %v989
      %v1046 = vsel %vm925, %v819, %v990
      %v1047 = vsel %vm926, %v824, %v991
      %v1048 = vsel %vm927, %v827, %v992
      %v1049 = vsel %vm928, %v832, %v993
      %v1050 = vsel %vm929, %v835, %v994
      %v1051 = vsel %vm930, %v840, %v995
      %v1052 = vsel %vm931, %v843, %v996
      %v1053 = vsel %vm932, %v848, %v997
      %v1054 = vsel %vm933, %v851, %v998
      %v1055 = vsel %vm934, %v856, %v999
      %v1056 = vsel %vm935, %v859, %v1000
      %v1057 = vsel %vm936, %v864, %v1001
      %v1058 = vsel %vm937, %v867, %v1002
      %v1059 = vsel %vm938, %v872, %v1003
      %v1060 = vsel %vm939, %v875, %v1004
      %v1061 = vsel %vm940, %v880, %v1005
      %v1062 = vsel %vm941, %v883, %v1006
      %v1063 = vmax.f32 %v1007, %v1009
      %v1064 = vmax.f32 %v1008, %v1010
      %v1065 = vmax.f32 %v1011, %v1013
      %v1066 = vmax.f32 %v1012, %v1014
      %v1067 = vmax.f32 %v1063, %v1065
      %v1068 = vmax.f32 %v1064, %v1066
      %v1069 = vpack.c.bf16 %v1068, %v1067
      %v1071 = vshrl.u32 %v1069, 16
      %v1073 = vrot.slane %v1071, 7
      %v1074 = vshll.u32 %v1069, 16
      %v1076 = vor.u32 %v1073, %v1074
      %vm1078 = vcmask 523264
      %vm1079 = vsmask.f32 7426
      %vm1080 = vmand %vm1078, %vm1079
      %v1081 = vld [vmem:[#allocation2 + $0x8] sm:$0xff]
      %v1082 = vsel %vm1080, %v1076, %v1081
      %1083 = vst [vmem:[#allocation2 + $0x8] sm:$0xff] %v1082
      %v1084 = vmax.f32 %v1015, %v1017
      %v1085 = vmax.f32 %v1016, %v1018
      %v1086 = vmax.f32 %v1019, %v1021
      %v1087 = vmax.f32 %v1020, %v1022
      %v1088 = vmax.f32 %v1084, %v1086
      %v1089 = vmax.f32 %v1085, %v1087
      %v1090 = vpack.c.bf16 %v1089, %v1088
      %v1092 = vshrl.u32 %v1090, 16
      %v1094 = vrot.slane %v1092, 7
      %v1095 = vshll.u32 %v1090, 16
      %v1097 = vor.u32 %v1094, %v1095
      %v1099 = vld [vmem:[#allocation2 + $0x10] sm:$0xff]
      %v1100 = vsel %vm1080, %v1097, %v1099
      %1101 = vst [vmem:[#allocation2 + $0x10] sm:$0xff] %v1100
      %v1102 = vmax.f32 %v1023, %v1025
      %v1103 = vmax.f32 %v1024, %v1026
      %v1104 = vmax.f32 %v1027, %v1029
      %v1105 = vmax.f32 %v1028, %v1030
      %v1106 = vmax.f32 %v1102, %v1104
      %v1107 = vmax.f32 %v1103, %v1105
      %v1108 = vpack.c.bf16 %v1107, %v1106
      %v1110 = vshrl.u32 %v1108, 16
      %v1112 = vrot.slane %v1110, 7
      %v1113 = vshll.u32 %v1108, 16
      %v1115 = vor.u32 %v1112, %v1113
      %v1117 = vld [vmem:[#allocation2 + $0x18] sm:$0xff]
      %v1118 = vsel %vm1080, %v1115, %v1117
      %1119 = vst [vmem:[#allocation2 + $0x18] sm:$0xff] %v1118
      %v1120 = vmax.f32 %v1031, %v1033
      %v1121 = vmax.f32 %v1032, %v1034
      %v1122 = vmax.f32 %v1035, %v1037
      %v1123 = vmax.f32 %v1036, %v1038
      %v1124 = vmax.f32 %v1120, %v1122
      %v1125 = vmax.f32 %v1121, %v1123
      %v1126 = vpack.c.bf16 %v1125, %v1124
      %v1128 = vshrl.u32 %v1126, 16
      %v1130 = vrot.slane %v1128, 7
      %v1131 = vshll.u32 %v1126, 16
      %v1133 = vor.u32 %v1130, %v1131
      %v1135 = vld [vmem:[#allocation2 + $0x20] sm:$0xff]
      %v1136 = vsel %vm1080, %v1133, %v1135
      %1137 = vst [vmem:[#allocation2 + $0x20] sm:$0xff] %v1136
      %v1138 = vmax.f32 %v1039, %v1041
      %v1139 = vmax.f32 %v1040, %v1042
      %v1140 = vmax.f32 %v1043, %v1045
      %v1141 = vmax.f32 %v1044, %v1046
      %v1142 = vmax.f32 %v1138, %v1140
      %v1143 = vmax.f32 %v1139, %v1141
      %v1144 = vpack.c.bf16 %v1143, %v1142
      %v1146 = vshrl.u32 %v1144, 16
      %v1148 = vrot.slane %v1146, 7
      %v1149 = vshll.u32 %v1144, 16
      %v1151 = vor.u32 %v1148, %v1149
      %v1153 = vld [vmem:[#allocation2 + $0x28] sm:$0xff]
      %v1154 = vsel %vm1080, %v1151, %v1153
      %1155 = vst [vmem:[#allocation2 + $0x28] sm:$0xff] %v1154
      %v1156 = vmax.f32 %v1047, %v1049
      %v1157 = vmax.f32 %v1048, %v1050
      %v1158 = vmax.f32 %v1051, %v1053
      %v1159 = vmax.f32 %v1052, %v1054
      %v1160 = vmax.f32 %v1156, %v1158
      %v1161 = vmax.f32 %v1157, %v1159
      %v1162 = vpack.c.bf16 %v1161, %v1160
      %v1164 = vshrl.u32 %v1162, 16
      %v1166 = vrot.slane %v1164, 7
      %v1167 = vshll.u32 %v1162, 16
      %v1169 = vor.u32 %v1166, %v1167
      %v1171 = vld [vmem:[#allocation2 + $0x30] sm:$0xff]
      %v1172 = vsel %vm1080, %v1169, %v1171
      %1173 = vst [vmem:[#allocation2 + $0x30] sm:$0xff] %v1172
      %v1174 = vmax.f32 %v1055, %v1057
      %v1175 = vmax.f32 %v1056, %v1058
      %v1176 = vmax.f32 %v1059, %v1061
      %v1177 = vmax.f32 %v1060, %v1062
      %v1178 = vmax.f32 %v1174, %v1176
      %v1179 = vmax.f32 %v1175, %v1177
      %v1180 = vpack.c.bf16 %v1179, %v1178
      %v1182 = vshrl.u32 %v1180, 16
      %v1184 = vrot.slane %v1182, 7
      %v1185 = vshll.u32 %v1180, 16
      %v1187 = vor.u32 %v1184, %v1185
      %v1189 = vld [vmem:[#allocation2 + $0x38] sm:$0xff]
      %v1190 = vsel %vm1080, %v1187, %v1189
      %1191 = vst [vmem:[#allocation2 + $0x38] sm:$0xff] %v1190
      %v1192 = vld [vmem:[%s304 + $0xe0] sm:$0xf]
      %v1193 = vld [vmem:[%s304 + $0xe4] sm:$0xf]
      %v1194 = vld [vmem:[%s304 + $0xe8] sm:$0xf]
      %v1195 = vld [vmem:[%s304 + $0xec] sm:$0xf]
      %v1196 = vld [vmem:[%s304 + $0xf0] sm:$0xf]
      %v1197 = vld [vmem:[%s304 + $0xf4] sm:$0xf]
      %v1198 = vld [vmem:[%s304 + $0xf8] sm:$0xf]
      %v1199 = vld [vmem:[%s304 + $0xfc] sm:$0xf]
      %v1200 = vld [vmem:[%s304 + $0x100] sm:$0xf]
      %v1201 = vld [vmem:[%s304 + $0x104] sm:$0xf]
      %v1202 = vld [vmem:[%s304 + $0x108] sm:$0xf]
      %v1203 = vld [vmem:[%s304 + $0x10c] sm:$0xf]
      %v1204 = vld [vmem:[%s304 + $0x110] sm:$0xf]
      %v1205 = vld [vmem:[%s304 + $0x114] sm:$0xf]
      %v1206 = vld [vmem:[%s304 + $0x118] sm:$0xf]
      %v1207 = vld [vmem:[%s304 + $0x11c] sm:$0xf]
      %v1208 = vld [vmem:[%s304 + $0x120] sm:$0xf]
      %v1209 = vld [vmem:[%s304 + $0x124] sm:$0xf]
      %v1210 = vld [vmem:[%s304 + $0x128] sm:$0xf]
      %v1211 = vld [vmem:[%s304 + $0x12c] sm:$0xf]
      %v1212 = vld [vmem:[%s304 + $0x130] sm:$0xf]
      %v1213 = vld [vmem:[%s304 + $0x134] sm:$0xf]
      %v1214 = vld [vmem:[%s304 + $0x138] sm:$0xf]
      %v1215 = vld [vmem:[%s304 + $0x13c] sm:$0xf]
      %v1216 = vld [vmem:[%s304 + $0x140] sm:$0xf]
      %v1217 = vld [vmem:[%s304 + $0x144] sm:$0xf]
      %v1218 = vld [vmem:[%s304 + $0x148] sm:$0xf]
      %v1219 = vld [vmem:[%s304 + $0x14c] sm:$0xf]
      %v1220 = vld [vmem:[%s304 + $0x150] sm:$0xf]
      %v1221 = vld [vmem:[%s304 + $0x154] sm:$0xf]
      %v1222 = vld [vmem:[%s304 + $0x158] sm:$0xf]
      %v1223 = vld [vmem:[%s304 + $0x15c] sm:$0xf]
      %v1224 = vld [vmem:[%s304 + $0x160] sm:$0xf]
      %v1225 = vld [vmem:[%s304 + $0x164] sm:$0xf]
      %v1226 = vld [vmem:[%s304 + $0x168] sm:$0xf]
      %v1227 = vld [vmem:[%s304 + $0x16c] sm:$0xf]
      %v1228 = vld [vmem:[%s304 + $0x170] sm:$0xf]
      %v1229 = vld [vmem:[%s304 + $0x174] sm:$0xf]
      %v1230 = vld [vmem:[%s304 + $0x178] sm:$0xf]
      %v1231 = vld [vmem:[%s304 + $0x17c] sm:$0xf]
      %v1232 = vld [vmem:[%s304 + $0x180] sm:$0xf]
      %v1233 = vld [vmem:[%s304 + $0x184] sm:$0xf]
      %v1234 = vld [vmem:[%s304 + $0x188] sm:$0xf]
      %v1235 = vld [vmem:[%s304 + $0x18c] sm:$0xf]
      %v1236 = vld [vmem:[%s304 + $0x190] sm:$0xf]
      %v1237 = vld [vmem:[%s304 + $0x194] sm:$0xf]
      %v1238 = vld [vmem:[%s304 + $0x198] sm:$0xf]
      %v1239 = vld [vmem:[%s304 + $0x19c] sm:$0xf]
      %v1240 = vld [vmem:[%s304 + $0x1a0] sm:$0xf]
      %v1241 = vld [vmem:[%s304 + $0x1a4] sm:$0xf]
      %v1242 = vld [vmem:[%s304 + $0x1a8] sm:$0xf]
      %v1243 = vld [vmem:[%s304 + $0x1ac] sm:$0xf]
      %v1244 = vld [vmem:[%s304 + $0x1b0] sm:$0xf]
      %v1245 = vld [vmem:[%s304 + $0x1b4] sm:$0xf]
      %v1246 = vld [vmem:[%s304 + $0x1b8] sm:$0xf]
      %v1247 = vld [vmem:[%s304 + $0x1bc] sm:$0xf]
      %v1248 = vld [vmem:[%s1] sm:$0xf]
      %v1249 = vld [vmem:[%s1 + $0x4] sm:$0xf]
      %v1306 = vunpack.c.l.b16 %v1192
      %v1307 = vunpack.c.l.b16 %v1193
      %v1308 = vunpack.c.l.b16 %v1194
      %v1309 = vunpack.c.l.b16 %v1195
      %v1310 = vunpack.c.l.b16 %v1196
      %v1311 = vunpack.c.l.b16 %v1197
      %v1312 = vunpack.c.l.b16 %v1198
      %v1313 = vunpack.c.l.b16 %v1199
      %v1314 = vunpack.c.l.b16 %v1200
      %v1315 = vunpack.c.l.b16 %v1201
      %v1316 = vunpack.c.l.b16 %v1202
      %v1317 = vunpack.c.l.b16 %v1203
      %v1318 = vunpack.c.l.b16 %v1204
      %v1319 = vunpack.c.l.b16 %v1205
      %v1320 = vunpack.c.l.b16 %v1206
      %v1321 = vunpack.c.l.b16 %v1207
      %v1322 = vunpack.c.l.b16 %v1208
      %v1323 = vunpack.c.l.b16 %v1209
      %v1324 = vunpack.c.l.b16 %v1210
      %v1325 = vunpack.c.l.b16 %v1211
      %v1326 = vunpack.c.l.b16 %v1212
      %v1327 = vunpack.c.l.b16 %v1213
      %v1328 = vunpack.c.l.b16 %v1214
      %v1329 = vunpack.c.l.b16 %v1215
      %v1330 = vunpack.c.l.b16 %v1216
      %v1331 = vunpack.c.l.b16 %v1217
      %v1332 = vunpack.c.l.b16 %v1218
      %v1333 = vunpack.c.l.b16 %v1219
      %v1334 = vunpack.c.l.b16 %v1220
      %v1335 = vunpack.c.l.b16 %v1221
      %v1336 = vunpack.c.l.b16 %v1222
      %v1337 = vunpack.c.l.b16 %v1223
      %v1338 = vunpack.c.l.b16 %v1224
      %v1339 = vunpack.c.l.b16 %v1225
      %v1340 = vunpack.c.l.b16 %v1226
      %v1341 = vunpack.c.l.b16 %v1227
      %v1342 = vunpack.c.l.b16 %v1228
      %v1343 = vunpack.c.l.b16 %v1229
      %v1344 = vunpack.c.l.b16 %v1230
      %v1345 = vunpack.c.l.b16 %v1231
      %v1346 = vunpack.c.l.b16 %v1232
      %v1347 = vunpack.c.l.b16 %v1233
      %v1348 = vunpack.c.l.b16 %v1234
      %v1349 = vunpack.c.l.b16 %v1235
      %v1350 = vunpack.c.l.b16 %v1236
      %v1351 = vunpack.c.l.b16 %v1237
      %v1352 = vunpack.c.l.b16 %v1238
      %v1353 = vunpack.c.l.b16 %v1239
      %v1354 = vunpack.c.l.b16 %v1240
      %v1355 = vunpack.c.l.b16 %v1241
      %v1356 = vunpack.c.l.b16 %v1242
      %v1357 = vunpack.c.l.b16 %v1243
      %v1358 = vunpack.c.l.b16 %v1244
      %v1359 = vunpack.c.l.b16 %v1245
      %v1360 = vunpack.c.l.b16 %v1246
      %v1361 = vunpack.c.l.b16 %v1247
      %v1362 = vpack.c.b16 %v1307, %v1306
      %v1363 = vpack.c.b16 %v1309, %v1308
      %v1364 = vpack.c.b16 %v1311, %v1310
      %v1365 = vpack.c.b16 %v1313, %v1312
      %v1366 = vpack.c.b16 %v1315, %v1314
      %v1367 = vpack.c.b16 %v1317, %v1316
      %v1368 = vpack.c.b16 %v1319, %v1318
      %v1369 = vpack.c.b16 %v1321, %v1320
      %v1370 = vpack.c.b16 %v1323, %v1322
      %v1371 = vpack.c.b16 %v1325, %v1324
      %v1372 = vpack.c.b16 %v1327, %v1326
      %v1373 = vpack.c.b16 %v1329, %v1328
      %v1374 = vpack.c.b16 %v1331, %v1330
      %v1375 = vpack.c.b16 %v1333, %v1332
      %v1376 = vpack.c.b16 %v1335, %v1334
      %v1377 = vpack.c.b16 %v1337, %v1336
      %v1378 = vpack.c.b16 %v1339, %v1338
      %v1379 = vpack.c.b16 %v1341, %v1340
      %v1380 = vpack.c.b16 %v1343, %v1342
      %v1381 = vpack.c.b16 %v1345, %v1344
      %v1382 = vpack.c.b16 %v1347, %v1346
      %v1383 = vpack.c.b16 %v1349, %v1348
      %v1384 = vpack.c.b16 %v1351, %v1350
      %v1385 = vpack.c.b16 %v1353, %v1352
      %v1386 = vpack.c.b16 %v1355, %v1354
      %v1387 = vpack.c.b16 %v1357, %v1356
      %v1388 = vpack.c.b16 %v1359, %v1358
      %v1389 = vpack.c.b16 %v1361, %v1360
      %v1392 = vunpack.c.l.b16 %v1248
      %v1393 = vunpack.c.l.b16 %v1249
      %v1394 = vpack.c.b16 %v1393, %v1392
      %v1397 = vsel %vm544, %v1362, 0
      %v1400 = vsel %vm544, %v1363, 0
      %v1403 = vsel %vm544, %v1364, 0
      %v1406 = vsel %vm544, %v1365, 0
      %v1409 = vsel %vm544, %v1366, 0
      %v1412 = vsel %vm544, %v1367, 0
      %v1415 = vsel %vm544, %v1368, 0
      %v1418 = vsel %vm544, %v1369, 0
      %v1421 = vsel %vm544, %v1370, 0
      %v1424 = vsel %vm544, %v1371, 0
      %v1427 = vsel %vm544, %v1372, 0
      %v1430 = vsel %vm544, %v1373, 0
      %v1433 = vsel %vm544, %v1374, 0
      %v1436 = vsel %vm544, %v1375, 0
      %v1439 = vsel %vm544, %v1376, 0
      %v1442 = vsel %vm544, %v1377, 0
      %v1445 = vsel %vm544, %v1378, 0
      %v1448 = vsel %vm544, %v1379, 0
      %v1451 = vsel %vm544, %v1380, 0
      %v1454 = vsel %vm544, %v1381, 0
      %v1457 = vsel %vm544, %v1382, 0
      %v1460 = vsel %vm544, %v1383, 0
      %v1463 = vsel %vm544, %v1384, 0
      %v1466 = vsel %vm544, %v1385, 0
      %v1469 = vsel %vm544, %v1386, 0
      %v1472 = vsel %vm544, %v1387, 0
      %v1475 = vsel %vm544, %v1388, 0
      %v1478 = vsel %vm544, %v1389, 0
      %1480 = vmatprep.subr.bf16.mxu0 0
      %1481 = vmatpush1.bf16.msra.mxu0 %v1394
      %1482 = vmatprep.subr.bf16.mxu0 0
      %1483 = vmatpush1.bf16.msra.mxu0 0
      %1484 = vmatprep.subr.bf16.mxu0 0
      %1485 = vmatpush1.bf16.msra.mxu0 0
      %1486 = vmatprep.subr.bf16.mxu0 0
      %1487 = vmatpush1.bf16.msra.mxu0 0
      %1488 = vmatprep.subr.bf16.mxu0 0
      %1489 = vmatpush1.bf16.msra.mxu0 0
      %1490 = vmatprep.subr.bf16.mxu0 0
      %1491 = vmatpush1.bf16.msra.mxu0 0
      %1492 = vmatprep.subr.bf16.mxu0 0
      %1493 = vmatpush1.bf16.msra.mxu0 0
      %1494 = vmatprep.subr.bf16.mxu0 0
      %1495 = vmatpush1.bf16.msra.mxu0 0
      %1496 = vmatprep.subr.bf16.mxu0 0
      %1497 = vmatpush1.bf16.msra.mxu0 0
      %1498 = vmatprep.subr.bf16.mxu0 0
      %1499 = vmatpush1.bf16.msra.mxu0 0
      %1500 = vmatprep.subr.bf16.mxu0 0
      %1501 = vmatpush1.bf16.msra.mxu0 0
      %1502 = vmatprep.subr.bf16.mxu0 0
      %1503 = vmatpush1.bf16.msra.mxu0 0
      %1504 = vmatprep.subr.bf16.mxu0 0
      %1505 = vmatpush1.bf16.msra.mxu0 0
      %1506 = vmatprep.subr.bf16.mxu0 0
      %1507 = vmatpush1.bf16.msra.mxu0 0
      %1508 = vmatprep.subr.bf16.mxu0 0
      %1509 = vmatpush1.bf16.msra.mxu0 0
      %1510 = vmatprep.subr.bf16.mxu0 0
      %1511 = vmatpush1.bf16.msra.mxu0 0
      %1512 = vmatprep.mubr.bf16.mxu0 0
      %1513 = vmatmul.mubr.bf16.gmra.mrb[0].mxu0 %v1397
      %v1514 = vpop.f32.mrb[0].mxu0
      %v1515 = vadd.f32 %v396, %v1514
      %v1516 = vpop.f32.mrb[0].mxu0
      %v1517 = vpop.f32.mrb[0].mxu0
      %v1518 = vadd.f32 %v396, %v1517
      %v1519 = vpop.f32.mrb[0].mxu0
      %1520 = vmatprep.mubr.bf16.mxu0 0
      %1521 = vmatmul.mubr.bf16.gmra.mrb[0].mxu0 %v1400
      %v1522 = vpop.f32.mrb[0].mxu0
      %v1523 = vadd.f32 %v396, %v1522
      %v1524 = vpop.f32.mrb[0].mxu0
      %v1525 = vpop.f32.mrb[0].mxu0
      %v1526 = vadd.f32 %v396, %v1525
      %v1527 = vpop.f32.mrb[0].mxu0
      %1528 = vmatprep.mubr.bf16.mxu0 0
      %1529 = vmatmul.mubr.bf16.gmra.mrb[0].mxu0 %v1403
      %v1530 = vpop.f32.mrb[0].mxu0
      %v1531 = vadd.f32 %v396, %v1530
      %v1532 = vpop.f32.mrb[0].mxu0
      %v1533 = vpop.f32.mrb[0].mxu0
      %v1534 = vadd.f32 %v396, %v1533
      %v1535 = vpop.f32.mrb[0].mxu0
      %1536 = vmatprep.mubr.bf16.mxu0 0
      %1537 = vmatmul.mubr.bf16.gmra.mrb[0].mxu0 %v1406
      %v1538 = vpop.f32.mrb[0].mxu0
      %v1539 = vadd.f32 %v396, %v1538
      %v1540 = vpop.f32.mrb[0].mxu0
      %v1541 = vpop.f32.mrb[0].mxu0
      %v1542 = vadd.f32 %v396, %v1541
      %v1543 = vpop.f32.mrb[0].mxu0
      %1544 = vmatprep.mubr.bf16.mxu0 0
      %1545 = vmatmul.mubr.bf16.gmra.mrb[0].mxu0 %v1409
      %v1546 = vpop.f32.mrb[0].mxu0
      %v1547 = vadd.f32 %v396, %v1546
      %v1548 = vpop.f32.mrb[0].mxu0
      %v1549 = vpop.f32.mrb[0].mxu0
      %v1550 = vadd.f32 %v396, %v1549
      %v1551 = vpop.f32.mrb[0].mxu0
      %1552 = vmatprep.mubr.bf16.mxu0 0
      %1553 = vmatmul.mubr.bf16.gmra.mrb[0].mxu0 %v1412
      %v1554 = vpop.f32.mrb[0].mxu0
      %v1555 = vadd.f32 %v396, %v1554
      %v1556 = vpop.f32.mrb[0].mxu0
      %v1557 = vpop.f32.mrb[0].mxu0
      %v1558 = vadd.f32 %v396, %v1557
      %v1559 = vpop.f32.mrb[0].mxu0
      %1560 = vmatprep.mubr.bf16.mxu0 0
      %1561 = vmatmul.mubr.bf16.gmra.mrb[0].mxu0 %v1415
      %v1562 = vpop.f32.mrb[0].mxu0
      %v1563 = vadd.f32 %v396, %v1562
      %v1564 = vpop.f32.mrb[0].mxu0
      %v1565 = vpop.f32.mrb[0].mxu0
      %v1566 = vadd.f32 %v396, %v1565
      %v1567 = vpop.f32.mrb[0].mxu0
      %1568 = vmatprep.mubr.bf16.mxu0 0
      %1569 = vmatmul.mubr.bf16.gmra.mrb[0].mxu0 %v1418
      %v1570 = vpop.f32.mrb[0].mxu0
      %v1571 = vadd.f32 %v396, %v1570
      %v1572 = vpop.f32.mrb[0].mxu0
      %v1573 = vpop.f32.mrb[0].mxu0
      %v1574 = vadd.f32 %v396, %v1573
      %v1575 = vpop.f32.mrb[0].mxu0
      %1576 = vmatprep.mubr.bf16.mxu0 0
      %1577 = vmatmul.mubr.bf16.gmra.mrb[0].mxu0 %v1421
      %v1578 = vpop.f32.mrb[0].mxu0
      %v1579 = vadd.f32 %v396, %v1578
      %v1580 = vpop.f32.mrb[0].mxu0
      %v1581 = vpop.f32.mrb[0].mxu0
      %v1582 = vadd.f32 %v396, %v1581
      %v1583 = vpop.f32.mrb[0].mxu0
      %1584 = vmatprep.mubr.bf16.mxu0 0
      %1585 = vmatmul.mubr.bf16.gmra.mrb[0].mxu0 %v1424
      %v1586 = vpop.f32.mrb[0].mxu0
      %v1587 = vadd.f32 %v396, %v1586
      %v1588 = vpop.f32.mrb[0].mxu0
      %v1589 = vpop.f32.mrb[0].mxu0
      %v1590 = vadd.f32 %v396, %v1589
      %v1591 = vpop.f32.mrb[0].mxu0
      %1592 = vmatprep.mubr.bf16.mxu0 0
      %1593 = vmatmul.mubr.bf16.gmra.mrb[0].mxu0 %v1427
      %v1594 = vpop.f32.mrb[0].mxu0
      %v1595 = vadd.f32 %v396, %v1594
      %v1596 = vpop.f32.mrb[0].mxu0
      %v1597 = vpop.f32.mrb[0].mxu0
      %v1598 = vadd.f32 %v396, %v1597
      %v1599 = vpop.f32.mrb[0].mxu0
      %1600 = vmatprep.mubr.bf16.mxu0 0
      %1601 = vmatmul.mubr.bf16.gmra.mrb[0].mxu0 %v1430
      %v1602 = vpop.f32.mrb[0].mxu0
      %v1603 = vadd.f32 %v396, %v1602
      %v1604 = vpop.f32.mrb[0].mxu0
      %v1605 = vpop.f32.mrb[0].mxu0
      %v1606 = vadd.f32 %v396, %v1605
      %v1607 = vpop.f32.mrb[0].mxu0
      %1608 = vmatprep.mubr.bf16.mxu0 0
      %1609 = vmatmul.mubr.bf16.gmra.mrb[0].mxu0 %v1433
      %v1610 = vpop.f32.mrb[0].mxu0
      %v1611 = vadd.f32 %v396, %v1610
      %v1612 = vpop.f32.mrb[0].mxu0
      %v1613 = vpop.f32.mrb[0].mxu0
      %v1614 = vadd.f32 %v396, %v1613
      %v1615 = vpop.f32.mrb[0].mxu0
      %1616 = vmatprep.mubr.bf16.mxu0 0
      %1617 = vmatmul.mubr.bf16.gmra.mrb[0].mxu0 %v1436
      %v1618 = vpop.f32.mrb[0].mxu0
      %v1619 = vadd.f32 %v396, %v1618
      %v1620 = vpop.f32.mrb[0].mxu0
      %v1621 = vpop.f32.mrb[0].mxu0
      %v1622 = vadd.f32 %v396, %v1621
      %v1623 = vpop.f32.mrb[0].mxu0
      %1624 = vmatprep.mubr.bf16.mxu0 0
      %1625 = vmatmul.mubr.bf16.gmra.mrb[0].mxu0 %v1439
      %v1626 = vpop.f32.mrb[0].mxu0
      %v1627 = vadd.f32 %v396, %v1626
      %v1628 = vpop.f32.mrb[0].mxu0
      %v1629 = vpop.f32.mrb[0].mxu0
      %v1630 = vadd.f32 %v396, %v1629
      %v1631 = vpop.f32.mrb[0].mxu0
      %1632 = vmatprep.mubr.bf16.mxu0 0
      %1633 = vmatmul.mubr.bf16.gmra.mrb[0].mxu0 %v1442
      %v1634 = vpop.f32.mrb[0].mxu0
      %v1635 = vadd.f32 %v396, %v1634
      %v1636 = vpop.f32.mrb[0].mxu0
      %v1637 = vpop.f32.mrb[0].mxu0
      %v1638 = vadd.f32 %v396, %v1637
      %v1639 = vpop.f32.mrb[0].mxu0
      %1640 = vmatprep.mubr.bf16.mxu0 0
      %1641 = vmatmul.mubr.bf16.gmra.mrb[0].mxu0 %v1445
      %v1642 = vpop.f32.mrb[0].mxu0
      %v1643 = vadd.f32 %v396, %v1642
      %v1644 = vpop.f32.mrb[0].mxu0
      %v1645 = vpop.f32.mrb[0].mxu0
      %v1646 = vadd.f32 %v396, %v1645
      %v1647 = vpop.f32.mrb[0].mxu0
      %1648 = vmatprep.mubr.bf16.mxu0 0
      %1649 = vmatmul.mubr.bf16.gmra.mrb[0].mxu0 %v1448
      %v1650 = vpop.f32.mrb[0].mxu0
      %v1651 = vadd.f32 %v396, %v1650
      %v1652 = vpop.f32.mrb[0].mxu0
      %v1653 = vpop.f32.mrb[0].mxu0
      %v1654 = vadd.f32 %v396, %v1653
      %v1655 = vpop.f32.mrb[0].mxu0
      %1656 = vmatprep.mubr.bf16.mxu0 0
      %1657 = vmatmul.mubr.bf16.gmra.mrb[0].mxu0 %v1451
      %v1658 = vpop.f32.mrb[0].mxu0
      %v1659 = vadd.f32 %v396, %v1658
      %v1660 = vpop.f32.mrb[0].mxu0
      %v1661 = vpop.f32.mrb[0].mxu0
      %v1662 = vadd.f32 %v396, %v1661
      %v1663 = vpop.f32.mrb[0].mxu0
      %1664 = vmatprep.mubr.bf16.mxu0 0
      %1665 = vmatmul.mubr.bf16.gmra.mrb[0].mxu0 %v1454
      %v1666 = vpop.f32.mrb[0].mxu0
      %v1667 = vadd.f32 %v396, %v1666
      %v1668 = vpop.f32.mrb[0].mxu0
      %v1669 = vpop.f32.mrb[0].mxu0
      %v1670 = vadd.f32 %v396, %v1669
      %v1671 = vpop.f32.mrb[0].mxu0
      %1672 = vmatprep.mubr.bf16.mxu0 0
      %1673 = vmatmul.mubr.bf16.gmra.mrb[0].mxu0 %v1457
      %v1674 = vpop.f32.mrb[0].mxu0
      %v1675 = vadd.f32 %v396, %v1674
      %v1676 = vpop.f32.mrb[0].mxu0
      %v1677 = vpop.f32.mrb[0].mxu0
      %v1678 = vadd.f32 %v396, %v1677
      %v1679 = vpop.f32.mrb[0].mxu0
      %1680 = vmatprep.mubr.bf16.mxu0 0
      %1681 = vmatmul.mubr.bf16.gmra.mrb[0].mxu0 %v1460
      %v1682 = vpop.f32.mrb[0].mxu0
      %v1683 = vadd.f32 %v396, %v1682
      %v1684 = vpop.f32.mrb[0].mxu0
      %v1685 = vpop.f32.mrb[0].mxu0
      %v1686 = vadd.f32 %v396, %v1685
      %v1687 = vpop.f32.mrb[0].mxu0
      %1688 = vmatprep.mubr.bf16.mxu0 0
      %1689 = vmatmul.mubr.bf16.gmra.mrb[0].mxu0 %v1463
      %v1690 = vpop.f32.mrb[0].mxu0
      %v1691 = vadd.f32 %v396, %v1690
      %v1692 = vpop.f32.mrb[0].mxu0
      %v1693 = vpop.f32.mrb[0].mxu0
      %v1694 = vadd.f32 %v396, %v1693
      %v1695 = vpop.f32.mrb[0].mxu0
      %1696 = vmatprep.mubr.bf16.mxu0 0
      %1697 = vmatmul.mubr.bf16.gmra.mrb[0].mxu0 %v1466
      %v1698 = vpop.f32.mrb[0].mxu0
      %v1699 = vadd.f32 %v396, %v1698
      %v1700 = vpop.f32.mrb[0].mxu0
      %v1701 = vpop.f32.mrb[0].mxu0
      %v1702 = vadd.f32 %v396, %v1701
      %v1703 = vpop.f32.mrb[0].mxu0
      %1704 = vmatprep.mubr.bf16.mxu0 0
      %1705 = vmatmul.mubr.bf16.gmra.mrb[0].mxu0 %v1469
      %v1706 = vpop.f32.mrb[0].mxu0
      %v1707 = vadd.f32 %v396, %v1706
      %v1708 = vpop.f32.mrb[0].mxu0
      %v1709 = vpop.f32.mrb[0].mxu0
      %v1710 = vadd.f32 %v396, %v1709
      %v1711 = vpop.f32.mrb[0].mxu0
      %1712 = vmatprep.mubr.bf16.mxu0 0
      %1713 = vmatmul.mubr.bf16.gmra.mrb[0].mxu0 %v1472
      %v1714 = vpop.f32.mrb[0].mxu0
      %v1715 = vadd.f32 %v396, %v1714
      %v1716 = vpop.f32.mrb[0].mxu0
      %v1717 = vpop.f32.mrb[0].mxu0
      %v1718 = vadd.f32 %v396, %v1717
      %v1719 = vpop.f32.mrb[0].mxu0
      %1720 = vmatprep.mubr.bf16.mxu0 0
      %1721 = vmatmul.mubr.bf16.gmra.mrb[0].mxu0 %v1475
      %v1722 = vpop.f32.mrb[0].mxu0
      %v1723 = vadd.f32 %v396, %v1722
      %v1724 = vpop.f32.mrb[0].mxu0
      %v1725 = vpop.f32.mrb[0].mxu0
      %v1726 = vadd.f32 %v396, %v1725
      %v1727 = vpop.f32.mrb[0].mxu0
      %1728 = vmatprep.mubr.bf16.mxu0 0
      %1729 = vmatmul.mubr.bf16.gmra.mrb[0].mxu0 %v1478
      %v1730 = vpop.f32.mrb[0].mxu0
      %v1731 = vadd.f32 %v396, %v1730
      %v1732 = vpop.f32.mrb[0].mxu0
      %v1733 = vpop.f32.mrb[0].mxu0
      %v1734 = vadd.f32 %v396, %v1733
      %v1735 = vpop.f32.mrb[0].mxu0
      %1736 = vdwg.mxu0
      %vm1737 = vcmp.ge.f32.partialorder %v1515, 0.0
      %vm1738 = vcmp.ge.f32.partialorder %v1518, 0.0
      %vm1739 = vcmp.ge.f32.partialorder %v1523, 0.0
      %vm1740 = vcmp.ge.f32.partialorder %v1526, 0.0
      %vm1741 = vcmp.ge.f32.partialorder %v1531, 0.0
      %vm1742 = vcmp.ge.f32.partialorder %v1534, 0.0
      %vm1743 = vcmp.ge.f32.partialorder %v1539, 0.0
      %vm1744 = vcmp.ge.f32.partialorder %v1542, 0.0
      %vm1745 = vcmp.ge.f32.partialorder %v1547, 0.0
      %vm1746 = vcmp.ge.f32.partialorder %v1550, 0.0
      %vm1747 = vcmp.ge.f32.partialorder %v1555, 0.0
      %vm1748 = vcmp.ge.f32.partialorder %v1558, 0.0
      %vm1749 = vcmp.ge.f32.partialorder %v1563, 0.0
      %vm1750 = vcmp.ge.f32.partialorder %v1566, 0.0
      %vm1751 = vcmp.ge.f32.partialorder %v1571, 0.0
      %vm1752 = vcmp.ge.f32.partialorder %v1574, 0.0
      %vm1753 = vcmp.ge.f32.partialorder %v1579, 0.0
      %vm1754 = vcmp.ge.f32.partialorder %v1582, 0.0
      %vm1755 = vcmp.ge.f32.partialorder %v1587, 0.0
      %vm1756 = vcmp.ge.f32.partialorder %v1590, 0.0
      %vm1757 = vcmp.ge.f32.partialorder %v1595, 0.0
      %vm1758 = vcmp.ge.f32.partialorder %v1598, 0.0
      %vm1759 = vcmp.ge.f32.partialorder %v1603, 0.0
      %vm1760 = vcmp.ge.f32.partialorder %v1606, 0.0
      %vm1761 = vcmp.ge.f32.partialorder %v1611, 0.0
      %vm1762 = vcmp.ge.f32.partialorder %v1614, 0.0
      %vm1763 = vcmp.ge.f32.partialorder %v1619, 0.0
      %vm1764 = vcmp.ge.f32.partialorder %v1622, 0.0
      %vm1765 = vcmp.ge.f32.partialorder %v1627, 0.0
      %vm1766 = vcmp.ge.f32.partialorder %v1630, 0.0
      %vm1767 = vcmp.ge.f32.partialorder %v1635, 0.0
      %vm1768 = vcmp.ge.f32.partialorder %v1638, 0.0
      %vm1769 = vcmp.ge.f32.partialorder %v1643, 0.0
      %vm1770 = vcmp.ge.f32.partialorder %v1646, 0.0
      %vm1771 = vcmp.ge.f32.partialorder %v1651, 0.0
      %vm1772 = vcmp.ge.f32.partialorder %v1654, 0.0
      %vm1773 = vcmp.ge.f32.partialorder %v1659, 0.0
      %vm1774 = vcmp.ge.f32.partialorder %v1662, 0.0
      %vm1775 = vcmp.ge.f32.partialorder %v1667, 0.0
      %vm1776 = vcmp.ge.f32.partialorder %v1670, 0.0
      %vm1777 = vcmp.ge.f32.partialorder %v1675, 0.0
      %vm1778 = vcmp.ge.f32.partialorder %v1678, 0.0
      %vm1779 = vcmp.ge.f32.partialorder %v1683, 0.0
      %vm1780 = vcmp.ge.f32.partialorder %v1686, 0.0
      %vm1781 = vcmp.ge.f32.partialorder %v1691, 0.0
      %vm1782 = vcmp.ge.f32.partialorder %v1694, 0.0
      %vm1783 = vcmp.ge.f32.partialorder %v1699, 0.0
      %vm1784 = vcmp.ge.f32.partialorder %v1702, 0.0
      %vm1785 = vcmp.ge.f32.partialorder %v1707, 0.0
      %vm1786 = vcmp.ge.f32.partialorder %v1710, 0.0
      %vm1787 = vcmp.ge.f32.partialorder %v1715, 0.0
      %vm1788 = vcmp.ge.f32.partialorder %v1718, 0.0
      %vm1789 = vcmp.ge.f32.partialorder %v1723, 0.0
      %vm1790 = vcmp.ge.f32.partialorder %v1726, 0.0
      %vm1791 = vcmp.ge.f32.partialorder %v1731, 0.0
      %vm1792 = vcmp.ge.f32.partialorder %v1734, 0.0
      %v1793 = vmul.f32 %v949, %v1515
      %v1794 = vmul.f32 %v949, %v1518
      %v1795 = vmul.f32 %v949, %v1523
      %v1796 = vmul.f32 %v949, %v1526
      %v1797 = vmul.f32 %v949, %v1531
      %v1798 = vmul.f32 %v949, %v1534
      %v1799 = vmul.f32 %v949, %v1539
      %v1800 = vmul.f32 %v949, %v1542
      %v1801 = vmul.f32 %v949, %v1547
      %v1802 = vmul.f32 %v949, %v1550
      %v1803 = vmul.f32 %v949, %v1555
      %v1804 = vmul.f32 %v949, %v1558
      %v1805 = vmul.f32 %v949, %v1563
      %v1806 = vmul.f32 %v949, %v1566
      %v1807 = vmul.f32 %v949, %v1571
      %v1808 = vmul.f32 %v949, %v1574
      %v1809 = vmul.f32 %v949, %v1579
      %v1810 = vmul.f32 %v949, %v1582
      %v1811 = vmul.f32 %v949, %v1587
      %v1812 = vmul.f32 %v949, %v1590
      %v1813 = vmul.f32 %v949, %v1595
      %v1814 = vmul.f32 %v949, %v1598
      %v1815 = vmul.f32 %v949, %v1603
      %v1816 = vmul.f32 %v949, %v1606
      %v1817 = vmul.f32 %v949, %v1611
      %v1818 = vmul.f32 %v949, %v1614
      %v1819 = vmul.f32 %v949, %v1619
      %v1820 = vmul.f32 %v949, %v1622
      %v1821 = vmul.f32 %v949, %v1627
      %v1822 = vmul.f32 %v949, %v1630
      %v1823 = vmul.f32 %v949, %v1635
      %v1824 = vmul.f32 %v949, %v1638
      %v1825 = vmul.f32 %v949, %v1643
      %v1826 = vmul.f32 %v949, %v1646
      %v1827 = vmul.f32 %v949, %v1651
      %v1828 = vmul.f32 %v949, %v1654
      %v1829 = vmul.f32 %v949, %v1659
      %v1830 = vmul.f32 %v949, %v1662
      %v1831 = vmul.f32 %v949, %v1667
      %v1832 = vmul.f32 %v949, %v1670
      %v1833 = vmul.f32 %v949, %v1675
      %v1834 = vmul.f32 %v949, %v1678
      %v1835 = vmul.f32 %v949, %v1683
      %v1836 = vmul.f32 %v949, %v1686
      %v1837 = vmul.f32 %v949, %v1691
      %v1838 = vmul.f32 %v949, %v1694
      %v1839 = vmul.f32 %v949, %v1699
      %v1840 = vmul.f32 %v949, %v1702
      %v1841 = vmul.f32 %v949, %v1707
      %v1842 = vmul.f32 %v949, %v1710
      %v1843 = vmul.f32 %v949, %v1715
      %v1844 = vmul.f32 %v949, %v1718
      %v1845 = vmul.f32 %v949, %v1723
      %v1846 = vmul.f32 %v949, %v1726
      %v1847 = vmul.f32 %v949, %v1731
      %v1848 = vmul.f32 %v949, %v1734
      %v1849 = vsel %vm1737, %v1515, %v1793
      %v1850 = vsel %vm1738, %v1518, %v1794
      %v1851 = vsel %vm1739, %v1523, %v1795
      %v1852 = vsel %vm1740, %v1526, %v1796
      %v1853 = vsel %vm1741, %v1531, %v1797
      %v1854 = vsel %vm1742, %v1534, %v1798
      %v1855 = vsel %vm1743, %v1539, %v1799
      %v1856 = vsel %vm1744, %v1542, %v1800
      %v1857 = vsel %vm1745, %v1547, %v1801
      %v1858 = vsel %vm1746, %v1550, %v1802
      %v1859 = vsel %vm1747, %v1555, %v1803
      %v1860 = vsel %vm1748, %v1558, %v1804
      %v1861 = vsel %vm1749, %v1563, %v1805
      %v1862 = vsel %vm1750, %v1566, %v1806
      %v1863 = vsel %vm1751, %v1571, %v1807
      %v1864 = vsel %vm1752, %v1574, %v1808
      %v1865 = vsel %vm1753, %v1579, %v1809
      %v1866 = vsel %vm1754, %v1582, %v1810
      %v1867 = vsel %vm1755, %v1587, %v1811
      %v1868 = vsel %vm1756, %v1590, %v1812
      %v1869 = vsel %vm1757, %v1595, %v1813
      %v1870 = vsel %vm1758, %v1598, %v1814
      %v1871 = vsel %vm1759, %v1603, %v1815
      %v1872 = vsel %vm1760, %v1606, %v1816
      %v1873 = vsel %vm1761, %v1611, %v1817
      %v1874 = vsel %vm1762, %v1614, %v1818
      %v1875 = vsel %vm1763, %v1619, %v1819
      %v1876 = vsel %vm1764, %v1622, %v1820
      %v1877 = vsel %vm1765, %v1627, %v1821
      %v1878 = vsel %vm1766, %v1630, %v1822
      %v1879 = vsel %vm1767, %v1635, %v1823
      %v1880 = vsel %vm1768, %v1638, %v1824
      %v1881 = vsel %vm1769, %v1643, %v1825
      %v1882 = vsel %vm1770, %v1646, %v1826
      %v1883 = vsel %vm1771, %v1651, %v1827
      %v1884 = vsel %vm1772, %v1654, %v1828
      %v1885 = vsel %vm1773, %v1659, %v1829
      %v1886 = vsel %vm1774, %v1662, %v1830
      %v1887 = vsel %vm1775, %v1667, %v1831
      %v1888 = vsel %vm1776, %v1670, %v1832
      %v1889 = vsel %vm1777, %v1675, %v1833
      %v1890 = vsel %vm1778, %v1678, %v1834
      %v1891 = vsel %vm1779, %v1683, %v1835
      %v1892 = vsel %vm1780, %v1686, %v1836
      %v1893 = vsel %vm1781, %v1691, %v1837
      %v1894 = vsel %vm1782, %v1694, %v1838
      %v1895 = vsel %vm1783, %v1699, %v1839
      %v1896 = vsel %vm1784, %v1702, %v1840
      %v1897 = vsel %vm1785, %v1707, %v1841
      %v1898 = vsel %vm1786, %v1710, %v1842
      %v1899 = vsel %vm1787, %v1715, %v1843
      %v1900 = vsel %vm1788, %v1718, %v1844
      %v1901 = vsel %vm1789, %v1723, %v1845
      %v1902 = vsel %vm1790, %v1726, %v1846
      %v1903 = vsel %vm1791, %v1731, %v1847
      %v1904 = vsel %vm1792, %v1734, %v1848
      %v1905 = vmax.f32 %v1849, %v1851
      %v1906 = vmax.f32 %v1850, %v1852
      %v1907 = vmax.f32 %v1853, %v1855
      %v1908 = vmax.f32 %v1854, %v1856
      %v1909 = vmax.f32 %v1905, %v1907
      %v1910 = vmax.f32 %v1906, %v1908
      %v1911 = vpack.c.bf16 %v1910, %v1909
      %v1913 = vshrl.u32 %v1911, 16
      %v1915 = vrot.slane %v1913, 7
      %v1916 = vshll.u32 %v1911, 16
      %v1918 = vor.u32 %v1915, %v1916
      %v1920 = vld [vmem:[#allocation2 + $0x40] sm:$0xff]
      %v1921 = vsel %vm1080, %v1918, %v1920
      %1922 = vst [vmem:[#allocation2 + $0x40] sm:$0xff] %v1921
      %v1923 = vmax.f32 %v1857, %v1859
      %v1924 = vmax.f32 %v1858, %v1860
      %v1925 = vmax.f32 %v1861, %v1863
      %v1926 = vmax.f32 %v1862, %v1864
      %v1927 = vmax.f32 %v1923, %v1925
      %v1928 = vmax.f32 %v1924, %v1926
      %v1929 = vpack.c.bf16 %v1928, %v1927
      %v1931 = vshrl.u32 %v1929, 16
      %v1933 = vrot.slane %v1931, 7
      %v1934 = vshll.u32 %v1929, 16
      %v1936 = vor.u32 %v1933, %v1934
      %v1938 = vld [vmem:[#allocation2 + $0x48] sm:$0xff]
      %v1939 = vsel %vm1080, %v1936, %v1938
      %1940 = vst [vmem:[#allocation2 + $0x48] sm:$0xff] %v1939
      %v1941 = vmax.f32 %v1865, %v1867
      %v1942 = vmax.f32 %v1866, %v1868
      %v1943 = vmax.f32 %v1869, %v1871
      %v1944 = vmax.f32 %v1870, %v1872
      %v1945 = vmax.f32 %v1941, %v1943
      %v1946 = vmax.f32 %v1942, %v1944
      %v1947 = vpack.c.bf16 %v1946, %v1945
      %v1949 = vshrl.u32 %v1947, 16
      %v1951 = vrot.slane %v1949, 7
      %v1952 = vshll.u32 %v1947, 16
      %v1954 = vor.u32 %v1951, %v1952
      %v1956 = vld [vmem:[#allocation2 + $0x50] sm:$0xff]
      %v1957 = vsel %vm1080, %v1954, %v1956
      %1958 = vst [vmem:[#allocation2 + $0x50] sm:$0xff] %v1957
      %v1959 = vmax.f32 %v1873, %v1875
      %v1960 = vmax.f32 %v1874, %v1876
      %v1961 = vmax.f32 %v1877, %v1879
      %v1962 = vmax.f32 %v1878, %v1880
      %v1963 = vmax.f32 %v1959, %v1961
      %v1964 = vmax.f32 %v1960, %v1962
      %v1965 = vpack.c.bf16 %v1964, %v1963
      %v1967 = vshrl.u32 %v1965, 16
      %v1969 = vrot.slane %v1967, 7
      %v1970 = vshll.u32 %v1965, 16
      %v1972 = vor.u32 %v1969, %v1970
      %v1974 = vld [vmem:[#allocation2 + $0x58] sm:$0xff]
      %v1975 = vsel %vm1080, %v1972, %v1974
      %1976 = vst [vmem:[#allocation2 + $0x58] sm:$0xff] %v1975
      %v1977 = vmax.f32 %v1881, %v1883
      %v1978 = vmax.f32 %v1882, %v1884
      %v1979 = vmax.f32 %v1885, %v1887
      %v1980 = vmax.f32 %v1886, %v1888
      %v1981 = vmax.f32 %v1977, %v1979
      %v1982 = vmax.f32 %v1978, %v1980
      %v1983 = vpack.c.bf16 %v1982, %v1981
      %v1985 = vshrl.u32 %v1983, 16
      %v1987 = vrot.slane %v1985, 7
      %v1988 = vshll.u32 %v1983, 16
      %v1990 = vor.u32 %v1987, %v1988
      %v1992 = vld [vmem:[#allocation2 + $0x60] sm:$0xff]
      %v1993 = vsel %vm1080, %v1990, %v1992
      %1994 = vst [vmem:[#allocation2 + $0x60] sm:$0xff] %v1993
      %v1995 = vmax.f32 %v1889, %v1891
      %v1996 = vmax.f32 %v1890, %v1892
      %v1997 = vmax.f32 %v1893, %v1895
      %v1998 = vmax.f32 %v1894, %v1896
      %v1999 = vmax.f32 %v1995, %v1997
      %v2000 = vmax.f32 %v1996, %v1998
      %v2001 = vpack.c.bf16 %v2000, %v1999
      %v2003 = vshrl.u32 %v2001, 16
      %v2005 = vrot.slane %v2003, 7
      %v2006 = vshll.u32 %v2001, 16
      %v2008 = vor.u32 %v2005, %v2006
      %v2010 = vld [vmem:[#allocation2 + $0x68] sm:$0xff]
      %v2011 = vsel %vm1080, %v2008, %v2010
      %2012 = vst [vmem:[#allocation2 + $0x68] sm:$0xff] %v2011
      %v2013 = vmax.f32 %v1897, %v1899
      %v2014 = vmax.f32 %v1898, %v1900
      %v2015 = vmax.f32 %v1901, %v1903
      %v2016 = vmax.f32 %v1902, %v1904
      %v2017 = vmax.f32 %v2013, %v2015
      %v2018 = vmax.f32 %v2014, %v2016
      %v2019 = vpack.c.bf16 %v2018, %v2017
      %v2021 = vshrl.u32 %v2019, 16
      %v2023 = vrot.slane %v2021, 7
      %v2024 = vshll.u32 %v2019, 16
      %v2026 = vor.u32 %v2023, %v2024
      %v2028 = vld [vmem:[#allocation2 + $0x70] sm:$0xff]
      %v2029 = vsel %vm1080, %v2026, %v2028
      %2030 = vst [vmem:[#allocation2 + $0x70] sm:$0xff] %v2029
      %v2031 = vld [vmem:[#allocation2] sm:$0xff]
      %v2032 = vld [vmem:[#allocation2 + $0x8] sm:$0xff]
      %v2033 = vld [vmem:[#allocation2 + $0x10] sm:$0xff]
      %v2034 = vld [vmem:[#allocation2 + $0x18] sm:$0xff]
      %v2035 = vld [vmem:[#allocation2 + $0x20] sm:$0xff]
      %v2036 = vld [vmem:[#allocation2 + $0x28] sm:$0xff]
      %v2037 = vld [vmem:[#allocation2 + $0x30] sm:$0xff]
      %v2038 = vld [vmem:[#allocation2 + $0x38] sm:$0xff]
      %v2039 = vld [vmem:[#allocation2 + $0x40] sm:$0xff]
      %v2040 = vld [vmem:[#allocation2 + $0x48] sm:$0xff]
      %v2041 = vld [vmem:[#allocation2 + $0x50] sm:$0xff]
      %v2042 = vld [vmem:[#allocation2 + $0x58] sm:$0xff]
      %v2043 = vld [vmem:[#allocation2 + $0x60] sm:$0xff]
      %v2044 = vld [vmem:[#allocation2 + $0x68] sm:$0xff]
      %v2045 = vld [vmem:[#allocation2 + $0x70] sm:$0xff]
      %v2046 = vld [vmem:[#allocation2 + $0x78] sm:$0xff]
      %v2047 = vld [vmem:[#allocation2 + $0x80] sm:$0x1]
      %v2048 = vld [vmem:[#allocation2] sm:$0xfe]
      %v2049 = vld [vmem:[#allocation2 + $0x80] sm:$0x3]
      %vm2050 = vsmask.f32 7424
      %v2052 = vshrl.u32 %v2031, 16
      %v2054 = vshll.u32 %v2031, 16
      %v2056 = vrot.slane %v2054, 1
      %v2057 = vor.u32 %v2052, %v2056
      %v2059 = vshll.u32 %v2032, 16
      %v2061 = vrot.slane %v2059, 1
      %v2062 = vsel %vm2050, %v2057, %v2061
      %v2063 = vshrl.u32 %v2032, 16
      %v2065 = vor.u32 %v2063, %v2061
      %v2067 = vshll.u32 %v2033, 16
      %v2069 = vrot.slane %v2067, 1
      %v2070 = vsel %vm2050, %v2065, %v2069
      %v2071 = vshrl.u32 %v2033, 16
      %v2073 = vor.u32 %v2071, %v2069
      %v2075 = vshll.u32 %v2034, 16
      %v2077 = vrot.slane %v2075, 1
      %v2078 = vsel %vm2050, %v2073, %v2077
      %v2079 = vshrl.u32 %v2034, 16
      %v2081 = vor.u32 %v2079, %v2077
      %v2083 = vshll.u32 %v2035, 16
      %v2085 = vrot.slane %v2083, 1
      %v2086 = vsel %vm2050, %v2081, %v2085
      %v2087 = vshrl.u32 %v2035, 16
      %v2089 = vor.u32 %v2087, %v2085
      %v2091 = vshll.u32 %v2036, 16
      %v2093 = vrot.slane %v2091, 1
      %v2094 = vsel %vm2050, %v2089, %v2093
      %v2095 = vshrl.u32 %v2036, 16
      %v2097 = vor.u32 %v2095, %v2093
      %v2099 = vshll.u32 %v2037, 16
      %v2101 = vrot.slane %v2099, 1
      %v2102 = vsel %vm2050, %v2097, %v2101
      %v2103 = vshrl.u32 %v2037, 16
      %v2105 = vor.u32 %v2103, %v2101
      %v2107 = vshll.u32 %v2038, 16
      %v2109 = vrot.slane %v2107, 1
      %v2110 = vsel %vm2050, %v2105, %v2109
      %v2111 = vshrl.u32 %v2038, 16
      %v2113 = vor.u32 %v2111, %v2109
      %v2115 = vshll.u32 %v2039, 16
      %v2117 = vrot.slane %v2115, 1
      %v2118 = vsel %vm2050, %v2113, %v2117
      %v2119 = vshrl.u32 %v2039, 16
      %v2121 = vor.u32 %v2119, %v2117
      %v2123 = vshll.u32 %v2040, 16
      %v2125 = vrot.slane %v2123, 1
      %v2126 = vsel %vm2050, %v2121, %v2125
      %v2127 = vshrl.u32 %v2040, 16
      %v2129 = vor.u32 %v2127, %v2125
      %v2131 = vshll.u32 %v2041, 16
      %v2133 = vrot.slane %v2131, 1
      %v2134 = vsel %vm2050, %v2129, %v2133
      %v2135 = vshrl.u32 %v2041, 16
      %v2137 = vor.u32 %v2135, %v2133
      %v2139 = vshll.u32 %v2042, 16
      %v2141 = vrot.slane %v2139, 1
      %v2142 = vsel %vm2050, %v2137, %v2141
      %v2143 = vshrl.u32 %v2042, 16
      %v2145 = vor.u32 %v2143, %v2141
      %v2147 = vshll.u32 %v2043, 16
      %v2149 = vrot.slane %v2147, 1
      %v2150 = vsel %vm2050, %v2145, %v2149
      %v2151 = vshrl.u32 %v2043, 16
      %v2153 = vor.u32 %v2151, %v2149
      %v2155 = vshll.u32 %v2044, 16
      %v2157 = vrot.slane %v2155, 1
      %v2158 = vsel %vm2050, %v2153, %v2157
      %v2159 = vshrl.u32 %v2044, 16
      %v2161 = vor.u32 %v2159, %v2157
      %v2163 = vshll.u32 %v2045, 16
      %v2165 = vrot.slane %v2163, 1
      %v2166 = vsel %vm2050, %v2161, %v2165
      %v2167 = vshrl.u32 %v2045, 16
      %v2169 = vor.u32 %v2167, %v2165
      %v2171 = vshll.u32 %v2046, 16
      %v2173 = vrot.slane %v2171, 1
      %v2174 = vsel %vm2050, %v2169, %v2173
      %v2175 = vshrl.u32 %v2046, 16
      %v2177 = vor.u32 %v2175, %v2173
      %v2179 = vshll.u32 %v2047, 16
      %v2181 = vrot.slane %v2179, 1
      %v2182 = vsel %vm2050, %v2177, %v2181
      %2183 = vrot.lane.b32.xlu0 %v2062, 64
      %v2184 = vpop.permute.xlu0 %2183
      %2185 = vrot.lane.b32.xlu0 %v2070, 64
      %v2186 = vpop.permute.xlu0 %2185
      %2187 = vrot.lane.b32.xlu0 %v2078, 64
      %v2188 = vpop.permute.xlu0 %2187
      %2189 = vrot.lane.b32.xlu0 %v2086, 64
      %v2190 = vpop.permute.xlu0 %2189
      %2191 = vrot.lane.b32.xlu0 %v2094, 64
      %v2192 = vpop.permute.xlu0 %2191
      %2193 = vrot.lane.b32.xlu0 %v2102, 64
      %v2194 = vpop.permute.xlu0 %2193
      %2195 = vrot.lane.b32.xlu0 %v2110, 64
      %v2196 = vpop.permute.xlu0 %2195
      %2197 = vrot.lane.b32.xlu0 %v2118, 64
      %v2198 = vpop.permute.xlu0 %2197
      %2199 = vrot.lane.b32.xlu0 %v2126, 64
      %v2200 = vpop.permute.xlu0 %2199
      %2201 = vrot.lane.b32.xlu0 %v2134, 64
      %v2202 = vpop.permute.xlu0 %2201
      %2203 = vrot.lane.b32.xlu0 %v2142, 64
      %v2204 = vpop.permute.xlu0 %2203
      %2205 = vrot.lane.b32.xlu0 %v2150, 64
      %v2206 = vpop.permute.xlu0 %2205
      %2207 = vrot.lane.b32.xlu0 %v2158, 64
      %v2208 = vpop.permute.xlu0 %2207
      %2209 = vrot.lane.b32.xlu0 %v2166, 64
      %v2210 = vpop.permute.xlu0 %2209
      %2211 = vrot.lane.b32.xlu0 %v2174, 64
      %v2212 = vpop.permute.xlu0 %2211
      %2213 = vrot.lane.b32.xlu0 %v2182, 64
      %v2214 = vpop.permute.xlu0 %2213
      %vm2232 = vcmask 1046528
      %v2233 = vrot.slane %v2048, 1
      %v2234 = vrot.slane %v2032, 1
      %v2235 = vsel %vm2232, %v2233, %v2234
      %v2236 = vrot.slane %v2033, 1
      %v2237 = vsel %vm2232, %v2234, %v2236
      %v2238 = vrot.slane %v2034, 1
      %v2239 = vsel %vm2232, %v2236, %v2238
      %v2240 = vrot.slane %v2035, 1
      %v2241 = vsel %vm2232, %v2238, %v2240
      %v2242 = vrot.slane %v2036, 1
      %v2243 = vsel %vm2232, %v2240, %v2242
      %v2244 = vrot.slane %v2037, 1
      %v2245 = vsel %vm2232, %v2242, %v2244
      %v2246 = vrot.slane %v2038, 1
      %v2247 = vsel %vm2232, %v2244, %v2246
      %v2248 = vrot.slane %v2039, 1
      %v2249 = vsel %vm2232, %v2246, %v2248
      %v2250 = vrot.slane %v2040, 1
      %v2251 = vsel %vm2232, %v2248, %v2250
      %v2252 = vrot.slane %v2041, 1
      %v2253 = vsel %vm2232, %v2250, %v2252
      %v2254 = vrot.slane %v2042, 1
      %v2255 = vsel %vm2232, %v2252, %v2254
      %v2256 = vrot.slane %v2043, 1
      %v2257 = vsel %vm2232, %v2254, %v2256
      %v2258 = vrot.slane %v2044, 1
      %v2259 = vsel %vm2232, %v2256, %v2258
      %v2260 = vrot.slane %v2045, 1
      %v2261 = vsel %vm2232, %v2258, %v2260
      %v2262 = vrot.slane %v2046, 1
      %v2263 = vsel %vm2232, %v2260, %v2262
      %v2264 = vrot.slane %v2047, 1
      %v2265 = vsel %vm2232, %v2262, %v2264
      %vm2266 = vsmask.f32 6400
      %v2268 = vshrl.u32 %v2048, 16
      %v2270 = vrot.slane %v2268, 1
      %v2271 = vshll.u32 %v2048, 16
      %v2273 = vrot.slane %v2271, 2
      %v2274 = vor.u32 %v2270, %v2273
      %v2275 = vrot.slane %v2063, 1
      %v2276 = vrot.slane %v2059, 2
      %v2277 = vor.u32 %v2275, %v2276
      %v2278 = vsel %vm2266, %v2274, %v2277
      %v2279 = vrot.slane %v2071, 1
      %v2280 = vrot.slane %v2067, 2
      %v2281 = vor.u32 %v2279, %v2280
      %v2282 = vsel %vm2266, %v2277, %v2281
      %v2283 = vrot.slane %v2079, 1
      %v2284 = vrot.slane %v2075, 2
      %v2285 = vor.u32 %v2283, %v2284
      %v2286 = vsel %vm2266, %v2281, %v2285
      %v2287 = vrot.slane %v2087, 1
      %v2288 = vrot.slane %v2083, 2
      %v2289 = vor.u32 %v2287, %v2288
      %v2290 = vsel %vm2266, %v2285, %v2289
      %v2291 = vrot.slane %v2095, 1
      %v2292 = vrot.slane %v2091, 2
      %v2293 = vor.u32 %v2291, %v2292
      %v2294 = vsel %vm2266, %v2289, %v2293
      %v2295 = vrot.slane %v2103, 1
      %v2296 = vrot.slane %v2099, 2
      %v2297 = vor.u32 %v2295, %v2296
      %v2298 = vsel %vm2266, %v2293, %v2297
      %v2299 = vrot.slane %v2111, 1
      %v2300 = vrot.slane %v2107, 2
      %v2301 = vor.u32 %v2299, %v2300
      %v2302 = vsel %vm2266, %v2297, %v2301
      %v2303 = vrot.slane %v2119, 1
      %v2304 = vrot.slane %v2115, 2
      %v2305 = vor.u32 %v2303, %v2304
      %v2306 = vsel %vm2266, %v2301, %v2305
      %v2307 = vrot.slane %v2127, 1
      %v2308 = vrot.slane %v2123, 2
      %v2309 = vor.u32 %v2307, %v2308
      %v2310 = vsel %vm2266, %v2305, %v2309
      %v2311 = vrot.slane %v2135, 1
      %v2312 = vrot.slane %v2131, 2
      %v2313 = vor.u32 %v2311, %v2312
      %v2314 = vsel %vm2266, %v2309, %v2313
      %v2315 = vrot.slane %v2143, 1
      %v2316 = vrot.slane %v2139, 2
      %v2317 = vor.u32 %v2315, %v2316
      %v2318 = vsel %vm2266, %v2313, %v2317
      %v2319 = vrot.slane %v2151, 1
      %v2320 = vrot.slane %v2147, 2
      %v2321 = vor.u32 %v2319, %v2320
      %v2322 = vsel %vm2266, %v2317, %v2321
      %v2323 = vrot.slane %v2159, 1
      %v2324 = vrot.slane %v2155, 2
      %v2325 = vor.u32 %v2323, %v2324
      %v2326 = vsel %vm2266, %v2321, %v2325
      %v2327 = vrot.slane %v2167, 1
      %v2328 = vrot.slane %v2163, 2
      %v2329 = vor.u32 %v2327, %v2328
      %v2330 = vsel %vm2266, %v2325, %v2329
      %v2331 = vrot.slane %v2175, 1
      %v2332 = vrot.slane %v2171, 2
      %v2333 = vor.u32 %v2331, %v2332
      %v2334 = vsel %vm2266, %v2329, %v2333
      %v2336 = vshrl.u32 %v2049, 16
      %v2338 = vrot.slane %v2336, 1
      %v2339 = vshll.u32 %v2049, 16
      %v2341 = vrot.slane %v2339, 2
      %v2342 = vor.u32 %v2338, %v2341
      %v2343 = vsel %vm2266, %v2333, %v2342
      %2344 = vrot.lane.b32.xlu0 %v2278, 64
      %v2345 = vpop.permute.xlu0 %2344
      %2346 = vrot.lane.b32.xlu0 %v2282, 64
      %v2347 = vpop.permute.xlu0 %2346
      %2348 = vrot.lane.b32.xlu0 %v2286, 64
      %v2349 = vpop.permute.xlu0 %2348
      %2350 = vrot.lane.b32.xlu0 %v2290, 64
      %v2351 = vpop.permute.xlu0 %2350
      %2352 = vrot.lane.b32.xlu0 %v2294, 64
      %v2353 = vpop.permute.xlu0 %2352
      %2354 = vrot.lane.b32.xlu0 %v2298, 64
      %v2355 = vpop.permute.xlu0 %2354
      %2356 = vrot.lane.b32.xlu0 %v2302, 64
      %v2357 = vpop.permute.xlu0 %2356
      %2358 = vrot.lane.b32.xlu0 %v2306, 64
      %v2359 = vpop.permute.xlu0 %2358
      %2360 = vrot.lane.b32.xlu0 %v2310, 64
      %v2361 = vpop.permute.xlu0 %2360
      %2362 = vrot.lane.b32.xlu0 %v2314, 64
      %v2363 = vpop.permute.xlu0 %2362
      %2364 = vrot.lane.b32.xlu0 %v2318, 64
      %v2365 = vpop.permute.xlu0 %2364
      %2366 = vrot.lane.b32.xlu0 %v2322, 64
      %v2367 = vpop.permute.xlu0 %2366
      %2368 = vrot.lane.b32.xlu0 %v2326, 64
      %v2369 = vpop.permute.xlu0 %2368
      %2370 = vrot.lane.b32.xlu0 %v2330, 64
      %v2371 = vpop.permute.xlu0 %2370
      %2372 = vrot.lane.b32.xlu0 %v2334, 64
      %v2373 = vpop.permute.xlu0 %2372
      %2374 = vrot.lane.b32.xlu0 %v2343, 64
      %v2375 = vpop.permute.xlu0 %2374
      %v2377 = vsel %vm311, %v2031, %v2184
      %v2380 = vsel %vm311, %v2032, %v2186
      %v2383 = vsel %vm311, %v2033, %v2188
      %v2386 = vsel %vm311, %v2034, %v2190
      %v2389 = vsel %vm311, %v2035, %v2192
      %v2392 = vsel %vm311, %v2036, %v2194
      %v2395 = vsel %vm311, %v2037, %v2196
      %v2398 = vsel %vm311, %v2038, %v2198
      %v2401 = vsel %vm311, %v2039, %v2200
      %v2404 = vsel %vm311, %v2040, %v2202
      %v2407 = vsel %vm311, %v2041, %v2204
      %v2410 = vsel %vm311, %v2042, %v2206
      %v2413 = vsel %vm311, %v2043, %v2208
      %v2416 = vsel %vm311, %v2044, %v2210
      %v2419 = vsel %vm311, %v2045, %v2212
      %v2422 = vsel %vm311, %v2046, %v2214
      %v2426 = vsel %vm311, %v2235, %v2345
      %v2430 = vsel %vm311, %v2237, %v2347
      %v2434 = vsel %vm311, %v2239, %v2349
      %v2438 = vsel %vm311, %v2241, %v2351
      %v2442 = vsel %vm311, %v2243, %v2353
      %v2446 = vsel %vm311, %v2245, %v2355
      %v2450 = vsel %vm311, %v2247, %v2357
      %v2454 = vsel %vm311, %v2249, %v2359
      %v2458 = vsel %vm311, %v2251, %v2361
      %v2462 = vsel %vm311, %v2253, %v2363
      %v2466 = vsel %vm311, %v2255, %v2365
      %v2470 = vsel %vm311, %v2257, %v2367
      %v2474 = vsel %vm311, %v2259, %v2369
      %v2478 = vsel %vm311, %v2261, %v2371
      %v2482 = vsel %vm311, %v2263, %v2373
      %v2486 = vsel %vm311, %v2265, %v2375
      %v2488 = vld [vmem:[%s4] sm:$0xf]
      %v2489 = vld [vmem:[%s4 + $0x4] sm:$0xf]
      %v2490 = vld [vmem:[%s4 + $0x8] sm:$0xf]
      %v2491 = vld [vmem:[%s4 + $0xc] sm:$0xf]
      %v2492 = vld [vmem:[%s4 + $0x10] sm:$0xf]
      %v2493 = vld [vmem:[%s4 + $0x14] sm:$0xf]
      %v2494 = vld [vmem:[%s4 + $0x18] sm:$0xf]
      %v2495 = vld [vmem:[%s4 + $0x1c] sm:$0xf]
      %v2496 = vld [vmem:[%s4 + $0x20] sm:$0xf]
      %v2497 = vld [vmem:[%s4 + $0x24] sm:$0xf]
      %v2498 = vld [vmem:[%s4 + $0x28] sm:$0xf]
      %v2499 = vld [vmem:[%s4 + $0x2c] sm:$0xf]
      %v2500 = vld [vmem:[%s4 + $0x30] sm:$0xf]
      %v2501 = vld [vmem:[%s4 + $0x34] sm:$0xf]
      %v2502 = vld [vmem:[%s4 + $0x38] sm:$0xf]
      %v2503 = vld [vmem:[%s4 + $0x3c] sm:$0xf]
      %v2504 = vld [vmem:[%s4 + $0x40] sm:$0xf]
      %v2505 = vld [vmem:[%s4 + $0x44] sm:$0xf]
      %v2506 = vld [vmem:[%s4 + $0x48] sm:$0xf]
      %v2507 = vld [vmem:[%s4 + $0x4c] sm:$0xf]
      %v2508 = vld [vmem:[%s4 + $0x50] sm:$0xf]
      %v2509 = vld [vmem:[%s4 + $0x54] sm:$0xf]
      %v2510 = vld [vmem:[%s4 + $0x58] sm:$0xf]
      %v2511 = vld [vmem:[%s4 + $0x5c] sm:$0xf]
      %v2512 = vld [vmem:[%s4 + $0x60] sm:$0xf]
      %v2513 = vld [vmem:[%s4 + $0x64] sm:$0xf]
      %v2514 = vld [vmem:[%s4 + $0x68] sm:$0xf]
      %v2515 = vld [vmem:[%s4 + $0x6c] sm:$0xf]
      %v2516 = vld [vmem:[%s4 + $0x70] sm:$0xf]
      %v2517 = vld [vmem:[%s4 + $0x74] sm:$0xf]
      %v2518 = vld [vmem:[%s4 + $0x78] sm:$0xf]
      %v2519 = vld [vmem:[%s4 + $0x7c] sm:$0xf]
      %v2520 = vld [vmem:[#allocation2 + $0x80] sm:$0xff]
      %v2521 = vld [vmem:[#allocation2 + $0x88] sm:$0x1]
      %v2522 = vld [vmem:[#allocation2 + $0x8] sm:$0xfe]
      %v2523 = vld [vmem:[#allocation2 + $0x88] sm:$0x3]
      %v2525 = vshll.u32 %v2520, 16
      %v2527 = vrot.slane %v2525, 1
      %v2528 = vsel %vm2050, %v2177, %v2527
      %v2529 = vshrl.u32 %v2520, 16
      %v2531 = vor.u32 %v2529, %v2527
      %v2533 = vshll.u32 %v2521, 16
      %v2535 = vrot.slane %v2533, 1
      %v2536 = vsel %vm2050, %v2531, %v2535
      %2537 = vrot.lane.b32.xlu0 %v2528, 64
      %v2538 = vpop.permute.xlu0 %2537
      %2539 = vrot.lane.b32.xlu0 %v2536, 64
      %v2540 = vpop.permute.xlu0 %2539
      %v2544 = vrot.slane %v2522, 1
      %v2545 = vsel %vm2232, %v2544, %v2236
      %v2546 = vrot.slane %v2520, 1
      %v2547 = vsel %vm2232, %v2262, %v2546
      %v2548 = vrot.slane %v2521, 1
      %v2549 = vsel %vm2232, %v2546, %v2548
      %v2551 = vshrl.u32 %v2522, 16
      %v2553 = vrot.slane %v2551, 1
      %v2554 = vshll.u32 %v2522, 16
      %v2556 = vrot.slane %v2554, 2
      %v2557 = vor.u32 %v2553, %v2556
      %v2558 = vsel %vm2266, %v2557, %v2281
      %v2559 = vrot.slane %v2529, 1
      %v2560 = vrot.slane %v2525, 2
      %v2561 = vor.u32 %v2559, %v2560
      %v2562 = vsel %vm2266, %v2333, %v2561
      %v2564 = vshrl.u32 %v2523, 16
      %v2566 = vrot.slane %v2564, 1
      %v2567 = vshll.u32 %v2523, 16
      %v2569 = vrot.slane %v2567, 2
      %v2570 = vor.u32 %v2566, %v2569
      %v2571 = vsel %vm2266, %v2561, %v2570
      %2572 = vrot.lane.b32.xlu0 %v2558, 64
      %v2573 = vpop.permute.xlu0 %2572
      %2574 = vrot.lane.b32.xlu0 %v2562, 64
      %v2575 = vpop.permute.xlu0 %2574
      %2576 = vrot.lane.b32.xlu0 %v2571, 64
      %v2577 = vpop.permute.xlu0 %2576
      %v2579 = vsel %vm311, %v2046, %v2538
      %v2582 = vsel %vm311, %v2520, %v2540
      %v2586 = vsel %vm311, %v2545, %v2573
      %v2590 = vsel %vm311, %v2547, %v2575
      %v2594 = vsel %vm311, %v2549, %v2577
      %s2596 = scalar_lea.vmem %s4, 128
      %v2597 = vld [vmem:[%s2596] sm:$0xf]
      %v2598 = vld [vmem:[%s2596 + $0x4] sm:$0xf]
      %v2599 = vld [vmem:[%s2596 + $0x8] sm:$0xf]
      %v2600 = vld [vmem:[%s2596 + $0xc] sm:$0xf]
      %v2601 = vld [vmem:[%s2596 + $0x10] sm:$0xf]
      %v2602 = vld [vmem:[%s2596 + $0x14] sm:$0xf]
      %v2603 = vld [vmem:[%s2596 + $0x18] sm:$0xf]
      %v2604 = vld [vmem:[%s2596 + $0x1c] sm:$0xf]
      %v2605 = vld [vmem:[%s2596 + $0x20] sm:$0xf]
      %v2606 = vld [vmem:[%s2596 + $0x24] sm:$0xf]
      %v2607 = vld [vmem:[%s2596 + $0x28] sm:$0xf]
      %v2608 = vld [vmem:[%s2596 + $0x2c] sm:$0xf]
      %v2609 = vld [vmem:[%s2596 + $0x30] sm:$0xf]
      %v2610 = vld [vmem:[%s2596 + $0x34] sm:$0xf]
      %v2611 = vld [vmem:[%s2596 + $0x38] sm:$0xf]
      %v2612 = vld [vmem:[%s2596 + $0x3c] sm:$0xf]
      %v2613 = vld [vmem:[%s2596 + $0x40] sm:$0xf]
      %v2614 = vld [vmem:[%s2596 + $0x44] sm:$0xf]
      %v2615 = vld [vmem:[%s2596 + $0x48] sm:$0xf]
      %v2616 = vld [vmem:[%s2596 + $0x4c] sm:$0xf]
      %v2617 = vld [vmem:[%s2596 + $0x50] sm:$0xf]
      %v2618 = vld [vmem:[%s2596 + $0x54] sm:$0xf]
      %v2619 = vld [vmem:[%s2596 + $0x58] sm:$0xf]
      %v2620 = vld [vmem:[%s2596 + $0x5c] sm:$0xf]
      %v2621 = vld [vmem:[%s2596 + $0x60] sm:$0xf]
      %v2622 = vld [vmem:[%s2596 + $0x64] sm:$0xf]
      %v2623 = vld [vmem:[%s2596 + $0x68] sm:$0xf]
      %v2624 = vld [vmem:[%s2596 + $0x6c] sm:$0xf]
      %v2625 = vld [vmem:[%s2596 + $0x70] sm:$0xf]
      %v2626 = vld [vmem:[%s2596 + $0x74] sm:$0xf]
      %v2627 = vld [vmem:[%s2596 + $0x78] sm:$0xf]
      %v2628 = vld [vmem:[%s2596 + $0x7c] sm:$0xf]
      %v2661 = vunpack.c.l.b16 %v2597
      %v2662 = vunpack.c.l.b16 %v2598
      %v2663 = vunpack.c.l.b16 %v2599
      %v2664 = vunpack.c.l.b16 %v2600
      %v2665 = vunpack.c.l.b16 %v2601
      %v2666 = vunpack.c.l.b16 %v2602
      %v2667 = vunpack.c.l.b16 %v2603
      %v2668 = vunpack.c.l.b16 %v2604
      %v2669 = vunpack.c.l.b16 %v2605
      %v2670 = vunpack.c.l.b16 %v2606
      %v2671 = vunpack.c.l.b16 %v2607
      %v2672 = vunpack.c.l.b16 %v2608
      %v2673 = vunpack.c.l.b16 %v2609
      %v2674 = vunpack.c.l.b16 %v2610
      %v2675 = vunpack.c.l.b16 %v2611
      %v2676 = vunpack.c.l.b16 %v2612
      %v2677 = vunpack.c.l.b16 %v2613
      %v2678 = vunpack.c.l.b16 %v2614
      %v2679 = vunpack.c.l.b16 %v2615
      %v2680 = vunpack.c.l.b16 %v2616
      %v2681 = vunpack.c.l.b16 %v2617
      %v2682 = vunpack.c.l.b16 %v2618
      %v2683 = vunpack.c.l.b16 %v2619
      %v2684 = vunpack.c.l.b16 %v2620
      %v2685 = vunpack.c.l.b16 %v2621
      %v2686 = vunpack.c.l.b16 %v2622
      %v2687 = vunpack.c.l.b16 %v2623
      %v2688 = vunpack.c.l.b16 %v2624
      %v2689 = vunpack.c.l.b16 %v2625
      %v2690 = vunpack.c.l.b16 %v2626
      %v2691 = vunpack.c.l.b16 %v2627
      %v2692 = vunpack.c.l.b16 %v2628
      %v2693 = vpack.c.b16 %v2662, %v2661
      %v2694 = vpack.c.b16 %v2664, %v2663
      %v2695 = vpack.c.b16 %v2666, %v2665
      %v2696 = vpack.c.b16 %v2668, %v2667
      %v2697 = vpack.c.b16 %v2670, %v2669
      %v2698 = vpack.c.b16 %v2672, %v2671
      %v2699 = vpack.c.b16 %v2674, %v2673
      %v2700 = vpack.c.b16 %v2676, %v2675
      %v2701 = vpack.c.b16 %v2678, %v2677
      %v2702 = vpack.c.b16 %v2680, %v2679
      %v2703 = vpack.c.b16 %v2682, %v2681
      %v2704 = vpack.c.b16 %v2684, %v2683
      %v2705 = vpack.c.b16 %v2686, %v2685
      %v2706 = vpack.c.b16 %v2688, %v2687
      %v2707 = vpack.c.b16 %v2690, %v2689
      %v2708 = vpack.c.b16 %v2692, %v2691
      %2725 = vmatprep.subr.bf16.mxu0 0
      %2726 = vmatpush1.bf16.msra.mxu0 %v2693
      %2727 = vmatprep.subr.bf16.mxu0 0
      %2728 = vmatpush1.bf16.msra.mxu0 %v2694
      %2729 = vmatprep.subr.bf16.mxu0 0
      %2730 = vmatpush1.bf16.msra.mxu0 %v2695
      %2731 = vmatprep.subr.bf16.mxu0 0
      %2732 = vmatpush1.bf16.msra.mxu0 %v2696
      %2733 = vmatprep.subr.bf16.mxu0 0
      %2734 = vmatpush1.bf16.msra.mxu0 %v2697
      %2735 = vmatprep.subr.bf16.mxu0 0
      %2736 = vmatpush1.bf16.msra.mxu0 %v2698
      %2737 = vmatprep.subr.bf16.mxu0 0
      %2738 = vmatpush1.bf16.msra.mxu0 %v2699
      %2739 = vmatprep.subr.bf16.mxu0 0
      %2740 = vmatpush1.bf16.msra.mxu0 %v2700
      %2741 = vmatprep.subr.bf16.mxu0 0
      %2742 = vmatpush1.bf16.msra.mxu0 %v2701
      %2743 = vmatprep.subr.bf16.mxu0 0
      %2744 = vmatpush1.bf16.msra.mxu0 %v2702
      %2745 = vmatprep.subr.bf16.mxu0 0
      %2746 = vmatpush1.bf16.msra.mxu0 %v2703
      %2747 = vmatprep.subr.bf16.mxu0 0
      %2748 = vmatpush1.bf16.msra.mxu0 %v2704
      %2749 = vmatprep.subr.bf16.mxu0 0
      %2750 = vmatpush1.bf16.msra.mxu0 %v2705
      %2751 = vmatprep.subr.bf16.mxu0 0
      %2752 = vmatpush1.bf16.msra.mxu0 %v2706
      %2753 = vmatprep.subr.bf16.mxu0 0
      %2754 = vmatpush1.bf16.msra.mxu0 %v2707
      %2755 = vmatprep.subr.bf16.mxu0 0
      %2756 = vmatpush1.bf16.msra.mxu0 %v2708
      %2757 = vmatprep.mubr.bf16.mxu0 %v2586
      %2758 = vmatmul.mubr.bf16.gmra.mrb[0].mxu0 %v2380
      %v2759 = vpop.f32.mrb[0].mxu0
      %v2760 = vadd.f32 0.0, %v2759
      %v2761 = vpop.f32.mrb[0].mxu0
      %v2762 = vpop.f32.mrb[0].mxu0
      %v2763 = vadd.f32 0.0, %v2762
      %v2764 = vpop.f32.mrb[0].mxu0
      %2765 = vmatprep.mubr.bf16.mxu0 %v2434
      %2766 = vmatmul.mubr.bf16.gmra.mrb[0].mxu0 %v2383
      %v2767 = vpop.f32.mrb[0].mxu0
      %v2768 = vadd.f32 0.0, %v2767
      %v2769 = vpop.f32.mrb[0].mxu0
      %v2770 = vpop.f32.mrb[0].mxu0
      %v2771 = vadd.f32 0.0, %v2770
      %v2772 = vpop.f32.mrb[0].mxu0
      %2773 = vmatprep.mubr.bf16.mxu0 %v2438
      %2774 = vmatmul.mubr.bf16.gmra.mrb[0].mxu0 %v2386
      %v2775 = vpop.f32.mrb[0].mxu0
      %v2776 = vadd.f32 0.0, %v2775
      %v2777 = vpop.f32.mrb[0].mxu0
      %v2778 = vpop.f32.mrb[0].mxu0
      %v2779 = vadd.f32 0.0, %v2778
      %v2780 = vpop.f32.mrb[0].mxu0
      %2781 = vmatprep.mubr.bf16.mxu0 %v2442
      %2782 = vmatmul.mubr.bf16.gmra.mrb[0].mxu0 %v2389
      %v2783 = vpop.f32.mrb[0].mxu0
      %v2784 = vadd.f32 0.0, %v2783
      %v2785 = vpop.f32.mrb[0].mxu0
      %v2786 = vpop.f32.mrb[0].mxu0
      %v2787 = vadd.f32 0.0, %v2786
      %v2788 = vpop.f32.mrb[0].mxu0
      %2789 = vmatprep.mubr.bf16.mxu0 %v2446
      %2790 = vmatmul.mubr.bf16.gmra.mrb[0].mxu0 %v2392
      %v2791 = vpop.f32.mrb[0].mxu0
      %v2792 = vadd.f32 0.0, %v2791
      %v2793 = vpop.f32.mrb[0].mxu0
      %v2794 = vpop.f32.mrb[0].mxu0
      %v2795 = vadd.f32 0.0, %v2794
      %v2796 = vpop.f32.mrb[0].mxu0
      %2797 = vmatprep.mubr.bf16.mxu0 %v2450
      %2798 = vmatmul.mubr.bf16.gmra.mrb[0].mxu0 %v2395
      %v2799 = vpop.f32.mrb[0].mxu0
      %v2800 = vadd.f32 0.0, %v2799
      %v2801 = vpop.f32.mrb[0].mxu0
      %v2802 = vpop.f32.mrb[0].mxu0
      %v2803 = vadd.f32 0.0, %v2802
      %v2804 = vpop.f32.mrb[0].mxu0
      %2805 = vmatprep.mubr.bf16.mxu0 %v2454
      %2806 = vmatmul.mubr.bf16.gmra.mrb[0].mxu0 %v2398
      %v2807 = vpop.f32.mrb[0].mxu0
      %v2808 = vadd.f32 0.0, %v2807
      %v2809 = vpop.f32.mrb[0].mxu0
      %v2810 = vpop.f32.mrb[0].mxu0
      %v2811 = vadd.f32 0.0, %v2810
      %v2812 = vpop.f32.mrb[0].mxu0
      %2813 = vmatprep.mubr.bf16.mxu0 %v2458
      %2814 = vmatmul.mubr.bf16.gmra.mrb[0].mxu0 %v2401
      %v2815 = vpop.f32.mrb[0].mxu0
      %v2816 = vadd.f32 0.0, %v2815
      %v2817 = vpop.f32.mrb[0].mxu0
      %v2818 = vpop.f32.mrb[0].mxu0
      %v2819 = vadd.f32 0.0, %v2818
      %v2820 = vpop.f32.mrb[0].mxu0
      %2821 = vmatprep.mubr.bf16.mxu0 %v2462
      %2822 = vmatmul.mubr.bf16.gmra.mrb[0].mxu0 %v2404
      %v2823 = vpop.f32.mrb[0].mxu0
      %v2824 = vadd.f32 0.0, %v2823
      %v2825 = vpop.f32.mrb[0].mxu0
      %v2826 = vpop.f32.mrb[0].mxu0
      %v2827 = vadd.f32 0.0, %v2826
      %v2828 = vpop.f32.mrb[0].mxu0
      %2829 = vmatprep.mubr.bf16.mxu0 %v2466
      %2830 = vmatmul.mubr.bf16.gmra.mrb[0].mxu0 %v2407
      %v2831 = vpop.f32.mrb[0].mxu0
      %v2832 = vadd.f32 0.0, %v2831
      %v2833 = vpop.f32.mrb[0].mxu0
      %v2834 = vpop.f32.mrb[0].mxu0
      %v2835 = vadd.f32 0.0, %v2834
      %v2836 = vpop.f32.mrb[0].mxu0
      %2837 = vmatprep.mubr.bf16.mxu0 %v2470
      %2838 = vmatmul.mubr.bf16.gmra.mrb[0].mxu0 %v2410
      %v2839 = vpop.f32.mrb[0].mxu0
      %v2840 = vadd.f32 0.0, %v2839
      %v2841 = vpop.f32.mrb[0].mxu0
      %v2842 = vpop.f32.mrb[0].mxu0
      %v2843 = vadd.f32 0.0, %v2842
      %v2844 = vpop.f32.mrb[0].mxu0
      %2845 = vmatprep.mubr.bf16.mxu0 %v2474
      %2846 = vmatmul.mubr.bf16.gmra.mrb[0].mxu0 %v2413
      %v2847 = vpop.f32.mrb[0].mxu0
      %v2848 = vadd.f32 0.0, %v2847
      %v2849 = vpop.f32.mrb[0].mxu0
      %v2850 = vpop.f32.mrb[0].mxu0
      %v2851 = vadd.f32 0.0, %v2850
      %v2852 = vpop.f32.mrb[0].mxu0
      %2853 = vmatprep.mubr.bf16.mxu0 %v2478
      %2854 = vmatmul.mubr.bf16.gmra.mrb[0].mxu0 %v2416
      %v2855 = vpop.f32.mrb[0].mxu0
      %v2856 = vadd.f32 0.0, %v2855
      %v2857 = vpop.f32.mrb[0].mxu0
      %v2858 = vpop.f32.mrb[0].mxu0
      %v2859 = vadd.f32 0.0, %v2858
      %v2860 = vpop.f32.mrb[0].mxu0
      %2861 = vmatprep.mubr.bf16.mxu0 %v2482
      %2862 = vmatmul.mubr.bf16.gmra.mrb[0].mxu0 %v2419
      %v2863 = vpop.f32.mrb[0].mxu0
      %v2864 = vadd.f32 0.0, %v2863
      %v2865 = vpop.f32.mrb[0].mxu0
      %v2866 = vpop.f32.mrb[0].mxu0
      %v2867 = vadd.f32 0.0, %v2866
      %v2868 = vpop.f32.mrb[0].mxu0
      %2869 = vmatprep.mubr.bf16.mxu0 %v2590
      %2870 = vmatmul.mubr.bf16.gmra.mrb[0].mxu0 %v2579
      %v2871 = vpop.f32.mrb[0].mxu0
      %v2872 = vadd.f32 0.0, %v2871
      %v2873 = vpop.f32.mrb[0].mxu0
      %v2874 = vpop.f32.mrb[0].mxu0
      %v2875 = vadd.f32 0.0, %v2874
      %v2876 = vpop.f32.mrb[0].mxu0
      %2877 = vmatprep.mubr.bf16.mxu0 %v2594
      %2878 = vmatmul.mubr.bf16.gmra.mrb[0].mxu0 %v2582
      %v2879 = vpop.f32.mrb[0].mxu0
      %v2880 = vadd.f32 0.0, %v2879
      %v2881 = vpop.f32.mrb[0].mxu0
      %v2882 = vpop.f32.mrb[0].mxu0
      %v2883 = vadd.f32 0.0, %v2882
      %v2884 = vpop.f32.mrb[0].mxu0
      %2885 = vdwg.mxu0
      %v2918 = vunpack.c.l.b16 %v2488
      %v2919 = vunpack.c.l.b16 %v2489
      %v2920 = vunpack.c.l.b16 %v2490
      %v2921 = vunpack.c.l.b16 %v2491
      %v2922 = vunpack.c.l.b16 %v2492
      %v2923 = vunpack.c.l.b16 %v2493
      %v2924 = vunpack.c.l.b16 %v2494
      %v2925 = vunpack.c.l.b16 %v2495
      %v2926 = vunpack.c.l.b16 %v2496
      %v2927 = vunpack.c.l.b16 %v2497
      %v2928 = vunpack.c.l.b16 %v2498
      %v2929 = vunpack.c.l.b16 %v2499
      %v2930 = vunpack.c.l.b16 %v2500
      %v2931 = vunpack.c.l.b16 %v2501
      %v2932 = vunpack.c.l.b16 %v2502
      %v2933 = vunpack.c.l.b16 %v2503
      %v2934 = vunpack.c.l.b16 %v2504
      %v2935 = vunpack.c.l.b16 %v2505
      %v2936 = vunpack.c.l.b16 %v2506
      %v2937 = vunpack.c.l.b16 %v2507
      %v2938 = vunpack.c.l.b16 %v2508
      %v2939 = vunpack.c.l.b16 %v2509
      %v2940 = vunpack.c.l.b16 %v2510
      %v2941 = vunpack.c.l.b16 %v2511
      %v2942 = vunpack.c.l.b16 %v2512
      %v2943 = vunpack.c.l.b16 %v2513
      %v2944 = vunpack.c.l.b16 %v2514
      %v2945 = vunpack.c.l.b16 %v2515
      %v2946 = vunpack.c.l.b16 %v2516
      %v2947 = vunpack.c.l.b16 %v2517
      %v2948 = vunpack.c.l.b16 %v2518
      %v2949 = vunpack.c.l.b16 %v2519
      %v2950 = vpack.c.b16 %v2919, %v2918
      %v2951 = vpack.c.b16 %v2921, %v2920
      %v2952 = vpack.c.b16 %v2923, %v2922
      %v2953 = vpack.c.b16 %v2925, %v2924
      %v2954 = vpack.c.b16 %v2927, %v2926
      %v2955 = vpack.c.b16 %v2929, %v2928
      %v2956 = vpack.c.b16 %v2931, %v2930
      %v2957 = vpack.c.b16 %v2933, %v2932
      %v2958 = vpack.c.b16 %v2935, %v2934
      %v2959 = vpack.c.b16 %v2937, %v2936
      %v2960 = vpack.c.b16 %v2939, %v2938
      %v2961 = vpack.c.b16 %v2941, %v2940
      %v2962 = vpack.c.b16 %v2943, %v2942
      %v2963 = vpack.c.b16 %v2945, %v2944
      %v2964 = vpack.c.b16 %v2947, %v2946
      %v2965 = vpack.c.b16 %v2949, %v2948
      %2982 = vmatprep.subr.bf16.mxu0 0
      %2983 = vmatpush1.bf16.msra.mxu0 %v2950
      %2984 = vmatprep.subr.bf16.mxu0 0
      %2985 = vmatpush1.bf16.msra.mxu0 %v2951
      %2986 = vmatprep.subr.bf16.mxu0 0
      %2987 = vmatpush1.bf16.msra.mxu0 %v2952
      %2988 = vmatprep.subr.bf16.mxu0 0
      %2989 = vmatpush1.bf16.msra.mxu0 %v2953
      %2990 = vmatprep.subr.bf16.mxu0 0
      %2991 = vmatpush1.bf16.msra.mxu0 %v2954
      %2992 = vmatprep.subr.bf16.mxu0 0
      %2993 = vmatpush1.bf16.msra.mxu0 %v2955
      %2994 = vmatprep.subr.bf16.mxu0 0
      %2995 = vmatpush1.bf16.msra.mxu0 %v2956
      %2996 = vmatprep.subr.bf16.mxu0 0
      %2997 = vmatpush1.bf16.msra.mxu0 %v2957
      %2998 = vmatprep.subr.bf16.mxu0 0
      %2999 = vmatpush1.bf16.msra.mxu0 %v2958
      %3000 = vmatprep.subr.bf16.mxu0 0
      %3001 = vmatpush1.bf16.msra.mxu0 %v2959
      %3002 = vmatprep.subr.bf16.mxu0 0
      %3003 = vmatpush1.bf16.msra.mxu0 %v2960
      %3004 = vmatprep.subr.bf16.mxu0 0
      %3005 = vmatpush1.bf16.msra.mxu0 %v2961
      %3006 = vmatprep.subr.bf16.mxu0 0
      %3007 = vmatpush1.bf16.msra.mxu0 %v2962
      %3008 = vmatprep.subr.bf16.mxu0 0
      %3009 = vmatpush1.bf16.msra.mxu0 %v2963
      %3010 = vmatprep.subr.bf16.mxu0 0
      %3011 = vmatpush1.bf16.msra.mxu0 %v2964
      %3012 = vmatprep.subr.bf16.mxu0 0
      %3013 = vmatpush1.bf16.msra.mxu0 %v2965
      %3014 = vmatprep.mubr.bf16.mxu0 %v2426
      %3015 = vmatmul.mubr.bf16.gmra.mrb[0].mxu0 %v2377
      %v3016 = vpop.f32.mrb[0].mxu0
      %v3017 = vadd.f32 %v2760, %v3016
      %v3018 = vpop.f32.mrb[0].mxu0
      %v3019 = vpop.f32.mrb[0].mxu0
      %v3020 = vadd.f32 %v2763, %v3019
      %v3021 = vpop.f32.mrb[0].mxu0
      %3022 = vmatprep.mubr.bf16.mxu0 %v2430
      %3023 = vmatmul.mubr.bf16.gmra.mrb[0].mxu0 %v2380
      %v3024 = vpop.f32.mrb[0].mxu0
      %v3025 = vadd.f32 %v2768, %v3024
      %v3026 = vpop.f32.mrb[0].mxu0
      %v3027 = vpop.f32.mrb[0].mxu0
      %v3028 = vadd.f32 %v2771, %v3027
      %v3029 = vpop.f32.mrb[0].mxu0
      %3030 = vmatprep.mubr.bf16.mxu0 %v2434
      %3031 = vmatmul.mubr.bf16.gmra.mrb[0].mxu0 %v2383
      %v3032 = vpop.f32.mrb[0].mxu0
      %v3033 = vadd.f32 %v2776, %v3032
      %v3034 = vpop.f32.mrb[0].mxu0
      %v3035 = vpop.f32.mrb[0].mxu0
      %v3036 = vadd.f32 %v2779, %v3035
      %v3037 = vpop.f32.mrb[0].mxu0
      %3038 = vmatprep.mubr.bf16.mxu0 %v2438
      %3039 = vmatmul.mubr.bf16.gmra.mrb[0].mxu0 %v2386
      %v3040 = vpop.f32.mrb[0].mxu0
      %v3041 = vadd.f32 %v2784, %v3040
      %v3042 = vpop.f32.mrb[0].mxu0
      %v3043 = vpop.f32.mrb[0].mxu0
      %v3044 = vadd.f32 %v2787, %v3043
      %v3045 = vpop.f32.mrb[0].mxu0
      %3046 = vmatprep.mubr.bf16.mxu0 %v2442
      %3047 = vmatmul.mubr.bf16.gmra.mrb[0].mxu0 %v2389
      %v3048 = vpop.f32.mrb[0].mxu0
      %v3049 = vadd.f32 %v2792, %v3048
      %v3050 = vpop.f32.mrb[0].mxu0
      %v3051 = vpop.f32.mrb[0].mxu0
      %v3052 = vadd.f32 %v2795, %v3051
      %v3053 = vpop.f32.mrb[0].mxu0
      %3054 = vmatprep.mubr.bf16.mxu0 %v2446
      %3055 = vmatmul.mubr.bf16.gmra.mrb[0].mxu0 %v2392
      %v3056 = vpop.f32.mrb[0].mxu0
      %v3057 = vadd.f32 %v2800, %v3056
      %v3058 = vpop.f32.mrb[0].mxu0
      %v3059 = vpop.f32.mrb[0].mxu0
      %v3060 = vadd.f32 %v2803, %v3059
      %v3061 = vpop.f32.mrb[0].mxu0
      %3062 = vmatprep.mubr.bf16.mxu0 %v2450
      %3063 = vmatmul.mubr.bf16.gmra.mrb[0].mxu0 %v2395
      %v3064 = vpop.f32.mrb[0].mxu0
      %v3065 = vadd.f32 %v2808, %v3064
      %v3066 = vpop.f32.mrb[0].mxu0
      %v3067 = vpop.f32.mrb[0].mxu0
      %v3068 = vadd.f32 %v2811, %v3067
      %v3069 = vpop.f32.mrb[0].mxu0
      %3070 = vmatprep.mubr.bf16.mxu0 %v2454
      %3071 = vmatmul.mubr.bf16.gmra.mrb[0].mxu0 %v2398
      %v3072 = vpop.f32.mrb[0].mxu0
      %v3073 = vadd.f32 %v2816, %v3072
      %v3074 = vpop.f32.mrb[0].mxu0
      %v3075 = vpop.f32.mrb[0].mxu0
      %v3076 = vadd.f32 %v2819, %v3075
      %v3077 = vpop.f32.mrb[0].mxu0
      %3078 = vmatprep.mubr.bf16.mxu0 %v2458
      %3079 = vmatmul.mubr.bf16.gmra.mrb[0].mxu0 %v2401
      %v3080 = vpop.f32.mrb[0].mxu0
      %v3081 = vadd.f32 %v2824, %v3080
      %v3082 = vpop.f32.mrb[0].mxu0
      %v3083 = vpop.f32.mrb[0].mxu0
      %v3084 = vadd.f32 %v2827, %v3083
      %v3085 = vpop.f32.mrb[0].mxu0
      %3086 = vmatprep.mubr.bf16.mxu0 %v2462
      %3087 = vmatmul.mubr.bf16.gmra.mrb[0].mxu0 %v2404
      %v3088 = vpop.f32.mrb[0].mxu0
      %v3089 = vadd.f32 %v2832, %v3088
      %v3090 = vpop.f32.mrb[0].mxu0
      %v3091 = vpop.f32.mrb[0].mxu0
      %v3092 = vadd.f32 %v2835, %v3091
      %v3093 = vpop.f32.mrb[0].mxu0
      %3094 = vmatprep.mubr.bf16.mxu0 %v2466
      %3095 = vmatmul.mubr.bf16.gmra.mrb[0].mxu0 %v2407
      %v3096 = vpop.f32.mrb[0].mxu0
      %v3097 = vadd.f32 %v2840, %v3096
      %v3098 = vpop.f32.mrb[0].mxu0
      %v3099 = vpop.f32.mrb[0].mxu0
      %v3100 = vadd.f32 %v2843, %v3099
      %v3101 = vpop.f32.mrb[0].mxu0
      %3102 = vmatprep.mubr.bf16.mxu0 %v2470
      %3103 = vmatmul.mubr.bf16.gmra.mrb[0].mxu0 %v2410
      %v3104 = vpop.f32.mrb[0].mxu0
      %v3105 = vadd.f32 %v2848, %v3104
      %v3106 = vpop.f32.mrb[0].mxu0
      %v3107 = vpop.f32.mrb[0].mxu0
      %v3108 = vadd.f32 %v2851, %v3107
      %v3109 = vpop.f32.mrb[0].mxu0
      %3110 = vmatprep.mubr.bf16.mxu0 %v2474
      %3111 = vmatmul.mubr.bf16.gmra.mrb[0].mxu0 %v2413
      %v3112 = vpop.f32.mrb[0].mxu0
      %v3113 = vadd.f32 %v2856, %v3112
      %v3114 = vpop.f32.mrb[0].mxu0
      %v3115 = vpop.f32.mrb[0].mxu0
      %v3116 = vadd.f32 %v2859, %v3115
      %v3117 = vpop.f32.mrb[0].mxu0
      %3118 = vmatprep.mubr.bf16.mxu0 %v2478
      %3119 = vmatmul.mubr.bf16.gmra.mrb[0].mxu0 %v2416
      %v3120 = vpop.f32.mrb[0].mxu0
      %v3121 = vadd.f32 %v2864, %v3120
      %v3122 = vpop.f32.mrb[0].mxu0
      %v3123 = vpop.f32.mrb[0].mxu0
      %v3124 = vadd.f32 %v2867, %v3123
      %v3125 = vpop.f32.mrb[0].mxu0
      %3126 = vmatprep.mubr.bf16.mxu0 %v2482
      %3127 = vmatmul.mubr.bf16.gmra.mrb[0].mxu0 %v2419
      %v3128 = vpop.f32.mrb[0].mxu0
      %v3129 = vadd.f32 %v2872, %v3128
      %v3130 = vpop.f32.mrb[0].mxu0
      %v3131 = vpop.f32.mrb[0].mxu0
      %v3132 = vadd.f32 %v2875, %v3131
      %v3133 = vpop.f32.mrb[0].mxu0
      %3134 = vmatprep.mubr.bf16.mxu0 %v2486
      %3135 = vmatmul.mubr.bf16.gmra.mrb[0].mxu0 %v2422
      %v3136 = vpop.f32.mrb[0].mxu0
      %v3137 = vadd.f32 %v2880, %v3136
      %v3138 = vpop.f32.mrb[0].mxu0
      %v3139 = vpop.f32.mrb[0].mxu0
      %v3140 = vadd.f32 %v2883, %v3139
      %v3141 = vpop.f32.mrb[0].mxu0
      %3142 = vdwg.mxu0
      %v3143 = vld [vmem:[#allocation2 + $0x88] sm:$0xff]
      %v3144 = vld [vmem:[#allocation2 + $0x10] sm:$0xff]
      %v3145 = vld [vmem:[#allocation2 + $0x18] sm:$0xff]
      %v3146 = vld [vmem:[#allocation2 + $0x20] sm:$0xff]
      %v3147 = vld [vmem:[#allocation2 + $0x28] sm:$0xff]
      %v3148 = vld [vmem:[#allocation2 + $0x30] sm:$0xff]
      %v3149 = vld [vmem:[#allocation2 + $0x38] sm:$0xff]
      %v3150 = vld [vmem:[#allocation2 + $0x40] sm:$0xff]
      %v3151 = vld [vmem:[#allocation2 + $0x48] sm:$0xff]
      %v3152 = vld [vmem:[#allocation2 + $0x50] sm:$0xff]
      %v3153 = vld [vmem:[#allocation2 + $0x58] sm:$0xff]
      %v3154 = vld [vmem:[#allocation2 + $0x60] sm:$0xff]
      %v3155 = vld [vmem:[#allocation2 + $0x68] sm:$0xff]
      %v3156 = vld [vmem:[#allocation2 + $0x70] sm:$0xff]
      %v3157 = vld [vmem:[#allocation2 + $0x78] sm:$0xff]
      %v3158 = vld [vmem:[#allocation2 + $0x80] sm:$0xff]
      %v3159 = vld [vmem:[#allocation2 + $0x90] sm:$0x1]
      %v3160 = vld [vmem:[#allocation2 + $0x10] sm:$0xfe]
      %v3161 = vld [vmem:[#allocation2 + $0x90] sm:$0x3]
      %v3163 = vshrl.u32 %v3144, 16
      %v3165 = vshll.u32 %v3144, 16
      %v3167 = vrot.slane %v3165, 1
      %v3168 = vor.u32 %v3163, %v3167
      %v3170 = vshll.u32 %v3145, 16
      %v3172 = vrot.slane %v3170, 1
      %v3173 = vsel %vm2050, %v3168, %v3172
      %v3174 = vshrl.u32 %v3145, 16
      %v3176 = vor.u32 %v3174, %v3172
      %v3178 = vshll.u32 %v3146, 16
      %v3180 = vrot.slane %v3178, 1
      %v3181 = vsel %vm2050, %v3176, %v3180
      %v3182 = vshrl.u32 %v3146, 16
      %v3184 = vor.u32 %v3182, %v3180
      %v3186 = vshll.u32 %v3147, 16
      %v3188 = vrot.slane %v3186, 1
      %v3189 = vsel %vm2050, %v3184, %v3188
      %v3190 = vshrl.u32 %v3147, 16
      %v3192 = vor.u32 %v3190, %v3188
      %v3194 = vshll.u32 %v3148, 16
      %v3196 = vrot.slane %v3194, 1
      %v3197 = vsel %vm2050, %v3192, %v3196
      %v3198 = vshrl.u32 %v3148, 16
      %v3200 = vor.u32 %v3198, %v3196
      %v3202 = vshll.u32 %v3149, 16
      %v3204 = vrot.slane %v3202, 1
      %v3205 = vsel %vm2050, %v3200, %v3204
      %v3206 = vshrl.u32 %v3149, 16
      %v3208 = vor.u32 %v3206, %v3204
      %v3210 = vshll.u32 %v3150, 16
      %v3212 = vrot.slane %v3210, 1
      %v3213 = vsel %vm2050, %v3208, %v3212
      %v3214 = vshrl.u32 %v3150, 16
      %v3216 = vor.u32 %v3214, %v3212
      %v3218 = vshll.u32 %v3151, 16
      %v3220 = vrot.slane %v3218, 1
      %v3221 = vsel %vm2050, %v3216, %v3220
      %v3222 = vshrl.u32 %v3151, 16
      %v3224 = vor.u32 %v3222, %v3220
      %v3226 = vshll.u32 %v3152, 16
      %v3228 = vrot.slane %v3226, 1
      %v3229 = vsel %vm2050, %v3224, %v3228
      %v3230 = vshrl.u32 %v3152, 16
      %v3232 = vor.u32 %v3230, %v3228
      %v3234 = vshll.u32 %v3153, 16
      %v3236 = vrot.slane %v3234, 1
      %v3237 = vsel %vm2050, %v3232, %v3236
      %v3238 = vshrl.u32 %v3153, 16
      %v3240 = vor.u32 %v3238, %v3236
      %v3242 = vshll.u32 %v3154, 16
      %v3244 = vrot.slane %v3242, 1
      %v3245 = vsel %vm2050, %v3240, %v3244
      %v3246 = vshrl.u32 %v3154, 16
      %v3248 = vor.u32 %v3246, %v3244
      %v3250 = vshll.u32 %v3155, 16
      %v3252 = vrot.slane %v3250, 1
      %v3253 = vsel %vm2050, %v3248, %v3252
      %v3254 = vshrl.u32 %v3155, 16
      %v3256 = vor.u32 %v3254, %v3252
      %v3258 = vshll.u32 %v3156, 16
      %v3260 = vrot.slane %v3258, 1
      %v3261 = vsel %vm2050, %v3256, %v3260
      %v3262 = vshrl.u32 %v3156, 16
      %v3264 = vor.u32 %v3262, %v3260
      %v3266 = vshll.u32 %v3157, 16
      %v3268 = vrot.slane %v3266, 1
      %v3269 = vsel %vm2050, %v3264, %v3268
      %v3270 = vshrl.u32 %v3157, 16
      %v3272 = vor.u32 %v3270, %v3268
      %v3274 = vshll.u32 %v3158, 16
      %v3276 = vrot.slane %v3274, 1
      %v3277 = vsel %vm2050, %v3272, %v3276
      %v3278 = vshrl.u32 %v3158, 16
      %v3280 = vor.u32 %v3278, %v3276
      %v3282 = vshll.u32 %v3143, 16
      %v3284 = vrot.slane %v3282, 1
      %v3285 = vsel %vm2050, %v3280, %v3284
      %v3286 = vshrl.u32 %v3143, 16
      %v3288 = vor.u32 %v3286, %v3284
      %v3290 = vshll.u32 %v3159, 16
      %v3292 = vrot.slane %v3290, 1
      %v3293 = vsel %vm2050, %v3288, %v3292
      %3294 = vrot.lane.b32.xlu0 %v3173, 64
      %v3295 = vpop.permute.xlu0 %3294
      %3296 = vrot.lane.b32.xlu0 %v3181, 64
      %v3297 = vpop.permute.xlu0 %3296
      %3298 = vrot.lane.b32.xlu0 %v3189, 64
      %v3299 = vpop.permute.xlu0 %3298
      %3300 = vrot.lane.b32.xlu0 %v3197, 64
      %v3301 = vpop.permute.xlu0 %3300
      %3302 = vrot.lane.b32.xlu0 %v3205, 64
      %v3303 = vpop.permute.xlu0 %3302
      %3304 = vrot.lane.b32.xlu0 %v3213, 64
      %v3305 = vpop.permute.xlu0 %3304
      %3306 = vrot.lane.b32.xlu0 %v3221, 64
      %v3307 = vpop.permute.xlu0 %3306
      %3308 = vrot.lane.b32.xlu0 %v3229, 64
      %v3309 = vpop.permute.xlu0 %3308
      %3310 = vrot.lane.b32.xlu0 %v3237, 64
      %v3311 = vpop.permute.xlu0 %3310
      %3312 = vrot.lane.b32.xlu0 %v3245, 64
      %v3313 = vpop.permute.xlu0 %3312
      %3314 = vrot.lane.b32.xlu0 %v3253, 64
      %v3315 = vpop.permute.xlu0 %3314
      %3316 = vrot.lane.b32.xlu0 %v3261, 64
      %v3317 = vpop.permute.xlu0 %3316
      %3318 = vrot.lane.b32.xlu0 %v3269, 64
      %v3319 = vpop.permute.xlu0 %3318
      %3320 = vrot.lane.b32.xlu0 %v3277, 64
      %v3321 = vpop.permute.xlu0 %3320
      %3322 = vrot.lane.b32.xlu0 %v3285, 64
      %v3323 = vpop.permute.xlu0 %3322
      %3324 = vrot.lane.b32.xlu0 %v3293, 64
      %v3325 = vpop.permute.xlu0 %3324
      %v3343 = vrot.slane %v3160, 1
      %v3344 = vrot.slane %v3145, 1
      %v3345 = vsel %vm2232, %v3343, %v3344
      %v3346 = vrot.slane %v3146, 1
      %v3347 = vsel %vm2232, %v3344, %v3346
      %v3348 = vrot.slane %v3147, 1
      %v3349 = vsel %vm2232, %v3346, %v3348
      %v3350 = vrot.slane %v3148, 1
      %v3351 = vsel %vm2232, %v3348, %v3350
      %v3352 = vrot.slane %v3149, 1
      %v3353 = vsel %vm2232, %v3350, %v3352
      %v3354 = vrot.slane %v3150, 1
      %v3355 = vsel %vm2232, %v3352, %v3354
      %v3356 = vrot.slane %v3151, 1
      %v3357 = vsel %vm2232, %v3354, %v3356
      %v3358 = vrot.slane %v3152, 1
      %v3359 = vsel %vm2232, %v3356, %v3358
      %v3360 = vrot.slane %v3153, 1
      %v3361 = vsel %vm2232, %v3358, %v3360
      %v3362 = vrot.slane %v3154, 1
      %v3363 = vsel %vm2232, %v3360, %v3362
      %v3364 = vrot.slane %v3155, 1
      %v3365 = vsel %vm2232, %v3362, %v3364
      %v3366 = vrot.slane %v3156, 1
      %v3367 = vsel %vm2232, %v3364, %v3366
      %v3368 = vrot.slane %v3157, 1
      %v3369 = vsel %vm2232, %v3366, %v3368
      %v3370 = vrot.slane %v3158, 1
      %v3371 = vsel %vm2232, %v3368, %v3370
      %v3372 = vrot.slane %v3143, 1
      %v3373 = vsel %vm2232, %v3370, %v3372
      %v3374 = vrot.slane %v3159, 1
      %v3375 = vsel %vm2232, %v3372, %v3374
      %v3377 = vshrl.u32 %v3160, 16
      %v3379 = vrot.slane %v3377, 1
      %v3380 = vshll.u32 %v3160, 16
      %v3382 = vrot.slane %v3380, 2
      %v3383 = vor.u32 %v3379, %v3382
      %v3384 = vrot.slane %v3174, 1
      %v3385 = vrot.slane %v3170, 2
      %v3386 = vor.u32 %v3384, %v3385
      %v3387 = vsel %vm2266, %v3383, %v3386
      %v3388 = vrot.slane %v3182, 1
      %v3389 = vrot.slane %v3178, 2
      %v3390 = vor.u32 %v3388, %v3389
      %v3391 = vsel %vm2266, %v3386, %v3390
      %v3392 = vrot.slane %v3190, 1
      %v3393 = vrot.slane %v3186, 2
      %v3394 = vor.u32 %v3392, %v3393
      %v3395 = vsel %vm2266, %v3390, %v3394
      %v3396 = vrot.slane %v3198, 1
      %v3397 = vrot.slane %v3194, 2
      %v3398 = vor.u32 %v3396, %v3397
      %v3399 = vsel %vm2266, %v3394, %v3398
      %v3400 = vrot.slane %v3206, 1
      %v3401 = vrot.slane %v3202, 2
      %v3402 = vor.u32 %v3400, %v3401
      %v3403 = vsel %vm2266, %v3398, %v3402
      %v3404 = vrot.slane %v3214, 1
      %v3405 = vrot.slane %v3210, 2
      %v3406 = vor.u32 %v3404, %v3405
      %v3407 = vsel %vm2266, %v3402, %v3406
      %v3408 = vrot.slane %v3222, 1
      %v3409 = vrot.slane %v3218, 2
      %v3410 = vor.u32 %v3408, %v3409
      %v3411 = vsel %vm2266, %v3406, %v3410
      %v3412 = vrot.slane %v3230, 1
      %v3413 = vrot.slane %v3226, 2
      %v3414 = vor.u32 %v3412, %v3413
      %v3415 = vsel %vm2266, %v3410, %v3414
      %v3416 = vrot.slane %v3238, 1
      %v3417 = vrot.slane %v3234, 2
      %v3418 = vor.u32 %v3416, %v3417
      %v3419 = vsel %vm2266, %v3414, %v3418
      %v3420 = vrot.slane %v3246, 1
      %v3421 = vrot.slane %v3242, 2
      %v3422 = vor.u32 %v3420, %v3421
      %v3423 = vsel %vm2266, %v3418, %v3422
      %v3424 = vrot.slane %v3254, 1
      %v3425 = vrot.slane %v3250, 2
      %v3426 = vor.u32 %v3424, %v3425
      %v3427 = vsel %vm2266, %v3422, %v3426
      %v3428 = vrot.slane %v3262, 1
      %v3429 = vrot.slane %v3258, 2
      %v3430 = vor.u32 %v3428, %v3429
      %v3431 = vsel %vm2266, %v3426, %v3430
      %v3432 = vrot.slane %v3270, 1
      %v3433 = vrot.slane %v3266, 2
      %v3434 = vor.u32 %v3432, %v3433
      %v3435 = vsel %vm2266, %v3430, %v3434
      %v3436 = vrot.slane %v3278, 1
      %v3437 = vrot.slane %v3274, 2
      %v3438 = vor.u32 %v3436, %v3437
      %v3439 = vsel %vm2266, %v3434, %v3438
      %v3440 = vrot.slane %v3286, 1
      %v3441 = vrot.slane %v3282, 2
      %v3442 = vor.u32 %v3440, %v3441
      %v3443 = vsel %vm2266, %v3438, %v3442
      %v3445 = vshrl.u32 %v3161, 16
      %v3447 = vrot.slane %v3445, 1
      %v3448 = vshll.u32 %v3161, 16
      %v3450 = vrot.slane %v3448, 2
      %v3451 = vor.u32 %v3447, %v3450
      %v3452 = vsel %vm2266, %v3442, %v3451
      %3453 = vrot.lane.b32.xlu0 %v3387, 64
      %v3454 = vpop.permute.xlu0 %3453
      %3455 = vrot.lane.b32.xlu0 %v3391, 64
      %v3456 = vpop.permute.xlu0 %3455
      %3457 = vrot.lane.b32.xlu0 %v3395, 64
      %v3458 = vpop.permute.xlu0 %3457
      %3459 = vrot.lane.b32.xlu0 %v3399, 64
      %v3460 = vpop.permute.xlu0 %3459
      %3461 = vrot.lane.b32.xlu0 %v3403, 64
      %v3462 = vpop.permute.xlu0 %3461
      %3463 = vrot.lane.b32.xlu0 %v3407, 64
      %v3464 = vpop.permute.xlu0 %3463
      %3465 = vrot.lane.b32.xlu0 %v3411, 64
      %v3466 = vpop.permute.xlu0 %3465
      %3467 = vrot.lane.b32.xlu0 %v3415, 64
      %v3468 = vpop.permute.xlu0 %3467
      %3469 = vrot.lane.b32.xlu0 %v3419, 64
      %v3470 = vpop.permute.xlu0 %3469
      %3471 = vrot.lane.b32.xlu0 %v3423, 64
      %v3472 = vpop.permute.xlu0 %3471
      %3473 = vrot.lane.b32.xlu0 %v3427, 64
      %v3474 = vpop.permute.xlu0 %3473
      %3475 = vrot.lane.b32.xlu0 %v3431, 64
      %v3476 = vpop.permute.xlu0 %3475
      %3477 = vrot.lane.b32.xlu0 %v3435, 64
      %v3478 = vpop.permute.xlu0 %3477
      %3479 = vrot.lane.b32.xlu0 %v3439, 64
      %v3480 = vpop.permute.xlu0 %3479
      %3481 = vrot.lane.b32.xlu0 %v3443, 64
      %v3482 = vpop.permute.xlu0 %3481
      %3483 = vrot.lane.b32.xlu0 %v3452, 64
      %v3484 = vpop.permute.xlu0 %3483
      %v3486 = vsel %vm311, %v2033, %v3295
      %v3489 = vsel %vm311, %v2034, %v3297
      %v3492 = vsel %vm311, %v2035, %v3299
      %v3495 = vsel %vm311, %v2036, %v3301
      %v3498 = vsel %vm311, %v2037, %v3303
      %v3501 = vsel %vm311, %v2038, %v3305
      %v3504 = vsel %vm311, %v2039, %v3307
      %v3507 = vsel %vm311, %v2040, %v3309
      %v3510 = vsel %vm311, %v2041, %v3311
      %v3513 = vsel %vm311, %v2042, %v3313
      %v3516 = vsel %vm311, %v2043, %v3315
      %v3519 = vsel %vm311, %v2044, %v3317
      %v3522 = vsel %vm311, %v2045, %v3319
      %v3525 = vsel %vm311, %v2046, %v3321
      %v3528 = vsel %vm311, %v2520, %v3323
      %v3531 = vsel %vm311, %v3143, %v3325
      %v3535 = vsel %vm311, %v3345, %v3454
      %v3539 = vsel %vm311, %v3347, %v3456
      %v3543 = vsel %vm311, %v3349, %v3458
      %v3547 = vsel %vm311, %v3351, %v3460
      %v3551 = vsel %vm311, %v3353, %v3462
      %v3555 = vsel %vm311, %v3355, %v3464
      %v3559 = vsel %vm311, %v3357, %v3466
      %v3563 = vsel %vm311, %v3359, %v3468
      %v3567 = vsel %vm311, %v3361, %v3470
      %v3571 = vsel %vm311, %v3363, %v3472
      %v3575 = vsel %vm311, %v3365, %v3474
      %v3579 = vsel %vm311, %v3367, %v3476
      %v3583 = vsel %vm311, %v3369, %v3478
      %v3587 = vsel %vm311, %v3371, %v3480
      %v3591 = vsel %vm311, %v3373, %v3482
      %v3595 = vsel %vm311, %v3375, %v3484
      %s3597 = scalar_lea.vmem %s4, 256
      %v3598 = vld [vmem:[%s3597] sm:$0xf]
      %v3599 = vld [vmem:[%s3597 + $0x4] sm:$0xf]
      %v3600 = vld [vmem:[%s3597 + $0x8] sm:$0xf]
      %v3601 = vld [vmem:[%s3597 + $0xc] sm:$0xf]
      %v3602 = vld [vmem:[%s3597 + $0x10] sm:$0xf]
      %v3603 = vld [vmem:[%s3597 + $0x14] sm:$0xf]
      %v3604 = vld [vmem:[%s3597 + $0x18] sm:$0xf]
      %v3605 = vld [vmem:[%s3597 + $0x1c] sm:$0xf]
      %v3606 = vld [vmem:[%s3597 + $0x20] sm:$0xf]
      %v3607 = vld [vmem:[%s3597 + $0x24] sm:$0xf]
      %v3608 = vld [vmem:[%s3597 + $0x28] sm:$0xf]
      %v3609 = vld [vmem:[%s3597 + $0x2c] sm:$0xf]
      %v3610 = vld [vmem:[%s3597 + $0x30] sm:$0xf]
      %v3611 = vld [vmem:[%s3597 + $0x34] sm:$0xf]
      %v3612 = vld [vmem:[%s3597 + $0x38] sm:$0xf]
      %v3613 = vld [vmem:[%s3597 + $0x3c] sm:$0xf]
      %v3614 = vld [vmem:[%s3597 + $0x40] sm:$0xf]
      %v3615 = vld [vmem:[%s3597 + $0x44] sm:$0xf]
      %v3616 = vld [vmem:[%s3597 + $0x48] sm:$0xf]
      %v3617 = vld [vmem:[%s3597 + $0x4c] sm:$0xf]
      %v3618 = vld [vmem:[%s3597 + $0x50] sm:$0xf]
      %v3619 = vld [vmem:[%s3597 + $0x54] sm:$0xf]
      %v3620 = vld [vmem:[%s3597 + $0x58] sm:$0xf]
      %v3621 = vld [vmem:[%s3597 + $0x5c] sm:$0xf]
      %v3622 = vld [vmem:[%s3597 + $0x60] sm:$0xf]
      %v3623 = vld [vmem:[%s3597 + $0x64] sm:$0xf]
      %v3624 = vld [vmem:[%s3597 + $0x68] sm:$0xf]
      %v3625 = vld [vmem:[%s3597 + $0x6c] sm:$0xf]
      %v3626 = vld [vmem:[%s3597 + $0x70] sm:$0xf]
      %v3627 = vld [vmem:[%s3597 + $0x74] sm:$0xf]
      %v3628 = vld [vmem:[%s3597 + $0x78] sm:$0xf]
      %v3629 = vld [vmem:[%s3597 + $0x7c] sm:$0xf]
      %v3662 = vunpack.c.l.b16 %v3598
      %v3663 = vunpack.c.l.b16 %v3599
      %v3664 = vunpack.c.l.b16 %v3600
      %v3665 = vunpack.c.l.b16 %v3601
      %v3666 = vunpack.c.l.b16 %v3602
      %v3667 = vunpack.c.l.b16 %v3603
      %v3668 = vunpack.c.l.b16 %v3604
      %v3669 = vunpack.c.l.b16 %v3605
      %v3670 = vunpack.c.l.b16 %v3606
      %v3671 = vunpack.c.l.b16 %v3607
      %v3672 = vunpack.c.l.b16 %v3608
      %v3673 = vunpack.c.l.b16 %v3609
      %v3674 = vunpack.c.l.b16 %v3610
      %v3675 = vunpack.c.l.b16 %v3611
      %v3676 = vunpack.c.l.b16 %v3612
      %v3677 = vunpack.c.l.b16 %v3613
      %v3678 = vunpack.c.l.b16 %v3614
      %v3679 = vunpack.c.l.b16 %v3615
      %v3680 = vunpack.c.l.b16 %v3616
      %v3681 = vunpack.c.l.b16 %v3617
      %v3682 = vunpack.c.l.b16 %v3618
      %v3683 = vunpack.c.l.b16 %v3619
      %v3684 = vunpack.c.l.b16 %v3620
      %v3685 = vunpack.c.l.b16 %v3621
      %v3686 = vunpack.c.l.b16 %v3622
      %v3687 = vunpack.c.l.b16 %v3623
      %v3688 = vunpack.c.l.b16 %v3624
      %v3689 = vunpack.c.l.b16 %v3625
      %v3690 = vunpack.c.l.b16 %v3626
      %v3691 = vunpack.c.l.b16 %v3627
      %v3692 = vunpack.c.l.b16 %v3628
      %v3693 = vunpack.c.l.b16 %v3629
      %v3694 = vpack.c.b16 %v3663, %v3662
      %v3695 = vpack.c.b16 %v3665, %v3664
      %v3696 = vpack.c.b16 %v3667, %v3666
      %v3697 = vpack.c.b16 %v3669, %v3668
      %v3698 = vpack.c.b16 %v3671, %v3670
      %v3699 = vpack.c.b16 %v3673, %v3672
      %v3700 = vpack.c.b16 %v3675, %v3674
      %v3701 = vpack.c.b16 %v3677, %v3676
      %v3702 = vpack.c.b16 %v3679, %v3678
      %v3703 = vpack.c.b16 %v3681, %v3680
      %v3704 = vpack.c.b16 %v3683, %v3682
      %v3705 = vpack.c.b16 %v3685, %v3684
      %v3706 = vpack.c.b16 %v3687, %v3686
      %v3707 = vpack.c.b16 %v3689, %v3688
      %v3708 = vpack.c.b16 %v3691, %v3690
      %v3709 = vpack.c.b16 %v3693, %v3692
      %3726 = vmatprep.subr.bf16.mxu0 0
      %3727 = vmatpush1.bf16.msra.mxu0 %v3694
      %3728 = vmatprep.subr.bf16.mxu0 0
      %3729 = vmatpush1.bf16.msra.mxu0 %v3695
      %3730 = vmatprep.subr.bf16.mxu0 0
      %3731 = vmatpush1.bf16.msra.mxu0 %v3696
      %3732 = vmatprep.subr.bf16.mxu0 0
      %3733 = vmatpush1.bf16.msra.mxu0 %v3697
      %3734 = vmatprep.subr.bf16.mxu0 0
      %3735 = vmatpush1.bf16.msra.mxu0 %v3698
      %3736 = vmatprep.subr.bf16.mxu0 0
      %3737 = vmatpush1.bf16.msra.mxu0 %v3699
      %3738 = vmatprep.subr.bf16.mxu0 0
      %3739 = vmatpush1.bf16.msra.mxu0 %v3700
      %3740 = vmatprep.subr.bf16.mxu0 0
      %3741 = vmatpush1.bf16.msra.mxu0 %v3701
      %3742 = vmatprep.subr.bf16.mxu0 0
      %3743 = vmatpush1.bf16.msra.mxu0 %v3702
      %3744 = vmatprep.subr.bf16.mxu0 0
      %3745 = vmatpush1.bf16.msra.mxu0 %v3703
      %3746 = vmatprep.subr.bf16.mxu0 0
      %3747 = vmatpush1.bf16.msra.mxu0 %v3704
      %3748 = vmatprep.subr.bf16.mxu0 0
      %3749 = vmatpush1.bf16.msra.mxu0 %v3705
      %3750 = vmatprep.subr.bf16.mxu0 0
      %3751 = vmatpush1.bf16.msra.mxu0 %v3706
      %3752 = vmatprep.subr.bf16.mxu0 0
      %3753 = vmatpush1.bf16.msra.mxu0 %v3707
      %3754 = vmatprep.subr.bf16.mxu0 0
      %3755 = vmatpush1.bf16.msra.mxu0 %v3708
      %3756 = vmatprep.subr.bf16.mxu0 0
      %3757 = vmatpush1.bf16.msra.mxu0 %v3709
      %3758 = vmatprep.mubr.bf16.mxu0 %v3535
      %3759 = vmatmul.mubr.bf16.gmra.mrb[0].mxu0 %v3486
      %v3760 = vpop.f32.mrb[0].mxu0
      %v3761 = vadd.f32 0.0, %v3760
      %v3762 = vpop.f32.mrb[0].mxu0
      %v3763 = vpop.f32.mrb[0].mxu0
      %v3764 = vadd.f32 0.0, %v3763
      %v3765 = vpop.f32.mrb[0].mxu0
      %3766 = vmatprep.mubr.bf16.mxu0 %v3539
      %3767 = vmatmul.mubr.bf16.gmra.mrb[0].mxu0 %v3489
      %v3768 = vpop.f32.mrb[0].mxu0
      %v3769 = vadd.f32 0.0, %v3768
      %v3770 = vpop.f32.mrb[0].mxu0
      %v3771 = vpop.f32.mrb[0].mxu0
      %v3772 = vadd.f32 0.0, %v3771
      %v3773 = vpop.f32.mrb[0].mxu0
      %3774 = vmatprep.mubr.bf16.mxu0 %v3543
      %3775 = vmatmul.mubr.bf16.gmra.mrb[0].mxu0 %v3492
      %v3776 = vpop.f32.mrb[0].mxu0
      %v3777 = vadd.f32 0.0, %v3776
      %v3778 = vpop.f32.mrb[0].mxu0
      %v3779 = vpop.f32.mrb[0].mxu0
      %v3780 = vadd.f32 0.0, %v3779
      %v3781 = vpop.f32.mrb[0].mxu0
      %3782 = vmatprep.mubr.bf16.mxu0 %v3547
      %3783 = vmatmul.mubr.bf16.gmra.mrb[0].mxu0 %v3495
      %v3784 = vpop.f32.mrb[0].mxu0
      %v3785 = vadd.f32 0.0, %v3784
      %v3786 = vpop.f32.mrb[0].mxu0
      %v3787 = vpop.f32.mrb[0].mxu0
      %v3788 = vadd.f32 0.0, %v3787
      %v3789 = vpop.f32.mrb[0].mxu0
      %3790 = vmatprep.mubr.bf16.mxu0 %v3551
      %3791 = vmatmul.mubr.bf16.gmra.mrb[0].mxu0 %v3498
      %v3792 = vpop.f32.mrb[0].mxu0
      %v3793 = vadd.f32 0.0, %v3792
      %v3794 = vpop.f32.mrb[0].mxu0
      %v3795 = vpop.f32.mrb[0].mxu0
      %v3796 = vadd.f32 0.0, %v3795
      %v3797 = vpop.f32.mrb[0].mxu0
      %3798 = vmatprep.mubr.bf16.mxu0 %v3555
      %3799 = vmatmul.mubr.bf16.gmra.mrb[0].mxu0 %v3501
      %v3800 = vpop.f32.mrb[0].mxu0
      %v3801 = vadd.f32 0.0, %v3800
      %v3802 = vpop.f32.mrb[0].mxu0
      %v3803 = vpop.f32.mrb[0].mxu0
      %v3804 = vadd.f32 0.0, %v3803
      %v3805 = vpop.f32.mrb[0].mxu0
      %3806 = vmatprep.mubr.bf16.mxu0 %v3559
      %3807 = vmatmul.mubr.bf16.gmra.mrb[0].mxu0 %v3504
      %v3808 = vpop.f32.mrb[0].mxu0
      %v3809 = vadd.f32 0.0, %v3808
      %v3810 = vpop.f32.mrb[0].mxu0
      %v3811 = vpop.f32.mrb[0].mxu0
      %v3812 = vadd.f32 0.0, %v3811
      %v3813 = vpop.f32.mrb[0].mxu0
      %3814 = vmatprep.mubr.bf16.mxu0 %v3563
      %3815 = vmatmul.mubr.bf16.gmra.mrb[0].mxu0 %v3507
      %v3816 = vpop.f32.mrb[0].mxu0
      %v3817 = vadd.f32 0.0, %v3816
      %v3818 = vpop.f32.mrb[0].mxu0
      %v3819 = vpop.f32.mrb[0].mxu0
      %v3820 = vadd.f32 0.0, %v3819
      %v3821 = vpop.f32.mrb[0].mxu0
      %3822 = vmatprep.mubr.bf16.mxu0 %v3567
      %3823 = vmatmul.mubr.bf16.gmra.mrb[0].mxu0 %v3510
      %v3824 = vpop.f32.mrb[0].mxu0
      %v3825 = vadd.f32 0.0, %v3824
      %v3826 = vpop.f32.mrb[0].mxu0
      %v3827 = vpop.f32.mrb[0].mxu0
      %v3828 = vadd.f32 0.0, %v3827
      %v3829 = vpop.f32.mrb[0].mxu0
      %3830 = vmatprep.mubr.bf16.mxu0 %v3571
      %3831 = vmatmul.mubr.bf16.gmra.mrb[0].mxu0 %v3513
      %v3832 = vpop.f32.mrb[0].mxu0
      %v3833 = vadd.f32 0.0, %v3832
      %v3834 = vpop.f32.mrb[0].mxu0
      %v3835 = vpop.f32.mrb[0].mxu0
      %v3836 = vadd.f32 0.0, %v3835
      %v3837 = vpop.f32.mrb[0].mxu0
      %3838 = vmatprep.mubr.bf16.mxu0 %v3575
      %3839 = vmatmul.mubr.bf16.gmra.mrb[0].mxu0 %v3516
      %v3840 = vpop.f32.mrb[0].mxu0
      %v3841 = vadd.f32 0.0, %v3840
      %v3842 = vpop.f32.mrb[0].mxu0
      %v3843 = vpop.f32.mrb[0].mxu0
      %v3844 = vadd.f32 0.0, %v3843
      %v3845 = vpop.f32.mrb[0].mxu0
      %3846 = vmatprep.mubr.bf16.mxu0 %v3579
      %3847 = vmatmul.mubr.bf16.gmra.mrb[0].mxu0 %v3519
      %v3848 = vpop.f32.mrb[0].mxu0
      %v3849 = vadd.f32 0.0, %v3848
      %v3850 = vpop.f32.mrb[0].mxu0
      %v3851 = vpop.f32.mrb[0].mxu0
      %v3852 = vadd.f32 0.0, %v3851
      %v3853 = vpop.f32.mrb[0].mxu0
      %3854 = vmatprep.mubr.bf16.mxu0 %v3583
      %3855 = vmatmul.mubr.bf16.gmra.mrb[0].mxu0 %v3522
      %v3856 = vpop.f32.mrb[0].mxu0
      %v3857 = vadd.f32 0.0, %v3856
      %v3858 = vpop.f32.mrb[0].mxu0
      %v3859 = vpop.f32.mrb[0].mxu0
      %v3860 = vadd.f32 0.0, %v3859
      %v3861 = vpop.f32.mrb[0].mxu0
      %3862 = vmatprep.mubr.bf16.mxu0 %v3587
      %3863 = vmatmul.mubr.bf16.gmra.mrb[0].mxu0 %v3525
      %v3864 = vpop.f32.mrb[0].mxu0
      %v3865 = vadd.f32 0.0, %v3864
      %v3866 = vpop.f32.mrb[0].mxu0
      %v3867 = vpop.f32.mrb[0].mxu0
      %v3868 = vadd.f32 0.0, %v3867
      %v3869 = vpop.f32.mrb[0].mxu0
      %3870 = vmatprep.mubr.bf16.mxu0 %v3591
      %3871 = vmatmul.mubr.bf16.gmra.mrb[0].mxu0 %v3528
      %v3872 = vpop.f32.mrb[0].mxu0
      %v3873 = vadd.f32 0.0, %v3872
      %v3874 = vpop.f32.mrb[0].mxu0
      %v3875 = vpop.f32.mrb[0].mxu0
      %v3876 = vadd.f32 0.0, %v3875
      %v3877 = vpop.f32.mrb[0].mxu0
      %3878 = vmatprep.mubr.bf16.mxu0 %v3595
      %3879 = vmatmul.mubr.bf16.gmra.mrb[0].mxu0 %v3531
      %v3880 = vpop.f32.mrb[0].mxu0
      %v3881 = vadd.f32 0.0, %v3880
      %v3882 = vpop.f32.mrb[0].mxu0
      %v3883 = vpop.f32.mrb[0].mxu0
      %v3884 = vadd.f32 0.0, %v3883
      %v3885 = vpop.f32.mrb[0].mxu0
      %3886 = vdwg.mxu0
      %v3887 = vadd.f32 %v3017, %v3761
      %v3888 = vadd.f32 %v3020, %v3764
      %v3889 = vadd.f32 %v3025, %v3769
      %v3890 = vadd.f32 %v3028, %v3772
      %v3891 = vadd.f32 %v3033, %v3777
      %v3892 = vadd.f32 %v3036, %v3780
      %v3893 = vadd.f32 %v3041, %v3785
      %v3894 = vadd.f32 %v3044, %v3788
      %v3895 = vadd.f32 %v3049, %v3793
      %v3896 = vadd.f32 %v3052, %v3796
      %v3897 = vadd.f32 %v3057, %v3801
      %v3898 = vadd.f32 %v3060, %v3804
      %v3899 = vadd.f32 %v3065, %v3809
      %v3900 = vadd.f32 %v3068, %v3812
      %v3901 = vadd.f32 %v3073, %v3817
      %v3902 = vadd.f32 %v3076, %v3820
      %v3903 = vadd.f32 %v3081, %v3825
      %v3904 = vadd.f32 %v3084, %v3828
      %v3905 = vadd.f32 %v3089, %v3833
      %v3906 = vadd.f32 %v3092, %v3836
      %v3907 = vadd.f32 %v3097, %v3841
      %v3908 = vadd.f32 %v3100, %v3844
      %v3909 = vadd.f32 %v3105, %v3849
      %v3910 = vadd.f32 %v3108, %v3852
      %v3911 = vadd.f32 %v3113, %v3857
      %v3912 = vadd.f32 %v3116, %v3860
      %v3913 = vadd.f32 %v3121, %v3865
      %v3914 = vadd.f32 %v3124, %v3868
      %v3915 = vadd.f32 %v3129, %v3873
      %v3916 = vadd.f32 %v3132, %v3876
      %v3917 = vadd.f32 %v3137, %v3881
      %v3918 = vadd.f32 %v3140, %v3884
      %v3919 = vld [vmem:[#allocation2 + $0x90] sm:$0xff]
      %v3920 = vld [vmem:[#allocation2 + $0x18] sm:$0xff]
      %v3921 = vld [vmem:[#allocation2 + $0x20] sm:$0xff]
      %v3922 = vld [vmem:[#allocation2 + $0x28] sm:$0xff]
      %v3923 = vld [vmem:[#allocation2 + $0x30] sm:$0xff]
      %v3924 = vld [vmem:[#allocation2 + $0x38] sm:$0xff]
      %v3925 = vld [vmem:[#allocation2 + $0x40] sm:$0xff]
      %v3926 = vld [vmem:[#allocation2 + $0x48] sm:$0xff]
      %v3927 = vld [vmem:[#allocation2 + $0x50] sm:$0xff]
      %v3928 = vld [vmem:[#allocation2 + $0x58] sm:$0xff]
      %v3929 = vld [vmem:[#allocation2 + $0x60] sm:$0xff]
      %v3930 = vld [vmem:[#allocation2 + $0x68] sm:$0xff]
      %v3931 = vld [vmem:[#allocation2 + $0x70] sm:$0xff]
      %v3932 = vld [vmem:[#allocation2 + $0x78] sm:$0xff]
      %v3933 = vld [vmem:[#allocation2 + $0x80] sm:$0xff]
      %v3934 = vld [vmem:[#allocation2 + $0x88] sm:$0xff]
      %v3935 = vld [vmem:[#allocation2 + $0x98] sm:$0x1]
      %v3936 = vld [vmem:[#allocation2 + $0x18] sm:$0xfe]
      %v3937 = vld [vmem:[#allocation2 + $0x98] sm:$0x3]
      %v3939 = vshrl.u32 %v3920, 16
      %v3941 = vshll.u32 %v3920, 16
      %v3943 = vrot.slane %v3941, 1
      %v3944 = vor.u32 %v3939, %v3943
      %v3946 = vshll.u32 %v3921, 16
      %v3948 = vrot.slane %v3946, 1
      %v3949 = vsel %vm2050, %v3944, %v3948
      %v3950 = vshrl.u32 %v3921, 16
      %v3952 = vor.u32 %v3950, %v3948
      %v3954 = vshll.u32 %v3922, 16
      %v3956 = vrot.slane %v3954, 1
      %v3957 = vsel %vm2050, %v3952, %v3956
      %v3958 = vshrl.u32 %v3922, 16
      %v3960 = vor.u32 %v3958, %v3956
      %v3962 = vshll.u32 %v3923, 16
      %v3964 = vrot.slane %v3962, 1
      %v3965 = vsel %vm2050, %v3960, %v3964
      %v3966 = vshrl.u32 %v3923, 16
      %v3968 = vor.u32 %v3966, %v3964
      %v3970 = vshll.u32 %v3924, 16
      %v3972 = vrot.slane %v3970, 1
      %v3973 = vsel %vm2050, %v3968, %v3972
      %v3974 = vshrl.u32 %v3924, 16
      %v3976 = vor.u32 %v3974, %v3972
      %v3978 = vshll.u32 %v3925, 16
      %v3980 = vrot.slane %v3978, 1
      %v3981 = vsel %vm2050, %v3976, %v3980
      %v3982 = vshrl.u32 %v3925, 16
      %v3984 = vor.u32 %v3982, %v3980
      %v3986 = vshll.u32 %v3926, 16
      %v3988 = vrot.slane %v3986, 1
      %v3989 = vsel %vm2050, %v3984, %v3988
      %v3990 = vshrl.u32 %v3926, 16
      %v3992 = vor.u32 %v3990, %v3988
      %v3994 = vshll.u32 %v3927, 16
      %v3996 = vrot.slane %v3994, 1
      %v3997 = vsel %vm2050, %v3992, %v3996
      %v3998 = vshrl.u32 %v3927, 16
      %v4000 = vor.u32 %v3998, %v3996
      %v4002 = vshll.u32 %v3928, 16
      %v4004 = vrot.slane %v4002, 1
      %v4005 = vsel %vm2050, %v4000, %v4004
      %v4006 = vshrl.u32 %v3928, 16
      %v4008 = vor.u32 %v4006, %v4004
      %v4010 = vshll.u32 %v3929, 16
      %v4012 = vrot.slane %v4010, 1
      %v4013 = vsel %vm2050, %v4008, %v4012
      %v4014 = vshrl.u32 %v3929, 16
      %v4016 = vor.u32 %v4014, %v4012
      %v4018 = vshll.u32 %v3930, 16
      %v4020 = vrot.slane %v4018, 1
      %v4021 = vsel %vm2050, %v4016, %v4020
      %v4022 = vshrl.u32 %v3930, 16
      %v4024 = vor.u32 %v4022, %v4020
      %v4026 = vshll.u32 %v3931, 16
      %v4028 = vrot.slane %v4026, 1
      %v4029 = vsel %vm2050, %v4024, %v4028
      %v4030 = vshrl.u32 %v3931, 16
      %v4032 = vor.u32 %v4030, %v4028
      %v4034 = vshll.u32 %v3932, 16
      %v4036 = vrot.slane %v4034, 1
      %v4037 = vsel %vm2050, %v4032, %v4036
      %v4038 = vshrl.u32 %v3932, 16
      %v4040 = vor.u32 %v4038, %v4036
      %v4042 = vshll.u32 %v3933, 16
      %v4044 = vrot.slane %v4042, 1
      %v4045 = vsel %vm2050, %v4040, %v4044
      %v4046 = vshrl.u32 %v3933, 16
      %v4048 = vor.u32 %v4046, %v4044
      %v4050 = vshll.u32 %v3934, 16
      %v4052 = vrot.slane %v4050, 1
      %v4053 = vsel %vm2050, %v4048, %v4052
      %v4054 = vshrl.u32 %v3934, 16
      %v4056 = vor.u32 %v4054, %v4052
      %v4058 = vshll.u32 %v3919, 16
      %v4060 = vrot.slane %v4058, 1
      %v4061 = vsel %vm2050, %v4056, %v4060
      %v4062 = vshrl.u32 %v3919, 16
      %v4064 = vor.u32 %v4062, %v4060
      %v4066 = vshll.u32 %v3935, 16
      %v4068 = vrot.slane %v4066, 1
      %v4069 = vsel %vm2050, %v4064, %v4068
      %4070 = vrot.lane.b32.xlu0 %v3949, 64
      %v4071 = vpop.permute.xlu0 %4070
      %4072 = vrot.lane.b32.xlu0 %v3957, 64
      %v4073 = vpop.permute.xlu0 %4072
      %4074 = vrot.lane.b32.xlu0 %v3965, 64
      %v4075 = vpop.permute.xlu0 %4074
      %4076 = vrot.lane.b32.xlu0 %v3973, 64
      %v4077 = vpop.permute.xlu0 %4076
      %4078 = vrot.lane.b32.xlu0 %v3981, 64
      %v4079 = vpop.permute.xlu0 %4078
      %4080 = vrot.lane.b32.xlu0 %v3989, 64
      %v4081 = vpop.permute.xlu0 %4080
      %4082 = vrot.lane.b32.xlu0 %v3997, 64
      %v4083 = vpop.permute.xlu0 %4082
      %4084 = vrot.lane.b32.xlu0 %v4005, 64
      %v4085 = vpop.permute.xlu0 %4084
      %4086 = vrot.lane.b32.xlu0 %v4013, 64
      %v4087 = vpop.permute.xlu0 %4086
      %4088 = vrot.lane.b32.xlu0 %v4021, 64
      %v4089 = vpop.permute.xlu0 %4088
      %4090 = vrot.lane.b32.xlu0 %v4029, 64
      %v4091 = vpop.permute.xlu0 %4090
      %4092 = vrot.lane.b32.xlu0 %v4037, 64
      %v4093 = vpop.permute.xlu0 %4092
      %4094 = vrot.lane.b32.xlu0 %v4045, 64
      %v4095 = vpop.permute.xlu0 %4094
      %4096 = vrot.lane.b32.xlu0 %v4053, 64
      %v4097 = vpop.permute.xlu0 %4096
      %4098 = vrot.lane.b32.xlu0 %v4061, 64
      %v4099 = vpop.permute.xlu0 %4098
      %4100 = vrot.lane.b32.xlu0 %v4069, 64
      %v4101 = vpop.permute.xlu0 %4100
      %v4119 = vrot.slane %v3936, 1
      %v4120 = vrot.slane %v3921, 1
      %v4121 = vsel %vm2232, %v4119, %v4120
      %v4122 = vrot.slane %v3922, 1
      %v4123 = vsel %vm2232, %v4120, %v4122
      %v4124 = vrot.slane %v3923, 1
      %v4125 = vsel %vm2232, %v4122, %v4124
      %v4126 = vrot.slane %v3924, 1
      %v4127 = vsel %vm2232, %v4124, %v4126
      %v4128 = vrot.slane %v3925, 1
      %v4129 = vsel %vm2232, %v4126, %v4128
      %v4130 = vrot.slane %v3926, 1
      %v4131 = vsel %vm2232, %v4128, %v4130
      %v4132 = vrot.slane %v3927, 1
      %v4133 = vsel %vm2232, %v4130, %v4132
      %v4134 = vrot.slane %v3928, 1
      %v4135 = vsel %vm2232, %v4132, %v4134
      %v4136 = vrot.slane %v3929, 1
      %v4137 = vsel %vm2232, %v4134, %v4136
      %v4138 = vrot.slane %v3930, 1
      %v4139 = vsel %vm2232, %v4136, %v4138
      %v4140 = vrot.slane %v3931, 1
      %v4141 = vsel %vm2232, %v4138, %v4140
      %v4142 = vrot.slane %v3932, 1
      %v4143 = vsel %vm2232, %v4140, %v4142
      %v4144 = vrot.slane %v3933, 1
      %v4145 = vsel %vm2232, %v4142, %v4144
      %v4146 = vrot.slane %v3934, 1
      %v4147 = vsel %vm2232, %v4144, %v4146
      %v4148 = vrot.slane %v3919, 1
      %v4149 = vsel %vm2232, %v4146, %v4148
      %v4150 = vrot.slane %v3935, 1
      %v4151 = vsel %vm2232, %v4148, %v4150
      %v4153 = vshrl.u32 %v3936, 16
      %v4155 = vrot.slane %v4153, 1
      %v4156 = vshll.u32 %v3936, 16
      %v4158 = vrot.slane %v4156, 2
      %v4159 = vor.u32 %v4155, %v4158
      %v4160 = vrot.slane %v3950, 1
      %v4161 = vrot.slane %v3946, 2
      %v4162 = vor.u32 %v4160, %v4161
      %v4163 = vsel %vm2266, %v4159, %v4162
      %v4164 = vrot.slane %v3958, 1
      %v4165 = vrot.slane %v3954, 2
      %v4166 = vor.u32 %v4164, %v4165
      %v4167 = vsel %vm2266, %v4162, %v4166
      %v4168 = vrot.slane %v3966, 1
      %v4169 = vrot.slane %v3962, 2
      %v4170 = vor.u32 %v4168, %v4169
      %v4171 = vsel %vm2266, %v4166, %v4170
      %v4172 = vrot.slane %v3974, 1
      %v4173 = vrot.slane %v3970, 2
      %v4174 = vor.u32 %v4172, %v4173
      %v4175 = vsel %vm2266, %v4170, %v4174
      %v4176 = vrot.slane %v3982, 1
      %v4177 = vrot.slane %v3978, 2
      %v4178 = vor.u32 %v4176, %v4177
      %v4179 = vsel %vm2266, %v4174, %v4178
      %v4180 = vrot.slane %v3990, 1
      %v4181 = vrot.slane %v3986, 2
      %v4182 = vor.u32 %v4180, %v4181
      %v4183 = vsel %vm2266, %v4178, %v4182
      %v4184 = vrot.slane %v3998, 1
      %v4185 = vrot.slane %v3994, 2
      %v4186 = vor.u32 %v4184, %v4185
      %v4187 = vsel %vm2266, %v4182, %v4186
      %v4188 = vrot.slane %v4006, 1
      %v4189 = vrot.slane %v4002, 2
      %v4190 = vor.u32 %v4188, %v4189
      %v4191 = vsel %vm2266, %v4186, %v4190
      %v4192 = vrot.slane %v4014, 1
      %v4193 = vrot.slane %v4010, 2
      %v4194 = vor.u32 %v4192, %v4193
      %v4195 = vsel %vm2266, %v4190, %v4194
      %v4196 = vrot.slane %v4022, 1
      %v4197 = vrot.slane %v4018, 2
      %v4198 = vor.u32 %v4196, %v4197
      %v4199 = vsel %vm2266, %v4194, %v4198
      %v4200 = vrot.slane %v4030, 1
      %v4201 = vrot.slane %v4026, 2
      %v4202 = vor.u32 %v4200, %v4201
      %v4203 = vsel %vm2266, %v4198, %v4202
      %v4204 = vrot.slane %v4038, 1
      %v4205 = vrot.slane %v4034, 2
      %v4206 = vor.u32 %v4204, %v4205
      %v4207 = vsel %vm2266, %v4202, %v4206
      %v4208 = vrot.slane %v4046, 1
      %v4209 = vrot.slane %v4042, 2
      %v4210 = vor.u32 %v4208, %v4209
      %v4211 = vsel %vm2266, %v4206, %v4210
      %v4212 = vrot.slane %v4054, 1
      %v4213 = vrot.slane %v4050, 2
      %v4214 = vor.u32 %v4212, %v4213
      %v4215 = vsel %vm2266, %v4210, %v4214
      %v4216 = vrot.slane %v4062, 1
      %v4217 = vrot.slane %v4058, 2
      %v4218 = vor.u32 %v4216, %v4217
      %v4219 = vsel %vm2266, %v4214, %v4218
      %v4221 = vshrl.u32 %v3937, 16
      %v4223 = vrot.slane %v4221, 1
      %v4224 = vshll.u32 %v3937, 16
      %v4226 = vrot.slane %v4224, 2
      %v4227 = vor.u32 %v4223, %v4226
      %v4228 = vsel %vm2266, %v4218, %v4227
      %4229 = vrot.lane.b32.xlu0 %v4163, 64
      %v4230 = vpop.permute.xlu0 %4229
      %4231 = vrot.lane.b32.xlu0 %v4167, 64
      %v4232 = vpop.permute.xlu0 %4231
      %4233 = vrot.lane.b32.xlu0 %v4171, 64
      %v4234 = vpop.permute.xlu0 %4233
      %4235 = vrot.lane.b32.xlu0 %v4175, 64
      %v4236 = vpop.permute.xlu0 %4235
      %4237 = vrot.lane.b32.xlu0 %v4179, 64
      %v4238 = vpop.permute.xlu0 %4237
      %4239 = vrot.lane.b32.xlu0 %v4183, 64
      %v4240 = vpop.permute.xlu0 %4239
      %4241 = vrot.lane.b32.xlu0 %v4187, 64
      %v4242 = vpop.permute.xlu0 %4241
      %4243 = vrot.lane.b32.xlu0 %v4191, 64
      %v4244 = vpop.permute.xlu0 %4243
      %4245 = vrot.lane.b32.xlu0 %v4195, 64
      %v4246 = vpop.permute.xlu0 %4245
      %4247 = vrot.lane.b32.xlu0 %v4199, 64
      %v4248 = vpop.permute.xlu0 %4247
      %4249 = vrot.lane.b32.xlu0 %v4203, 64
      %v4250 = vpop.permute.xlu0 %4249
      %4251 = vrot.lane.b32.xlu0 %v4207, 64
      %v4252 = vpop.permute.xlu0 %4251
      %4253 = vrot.lane.b32.xlu0 %v4211, 64
      %v4254 = vpop.permute.xlu0 %4253
      %4255 = vrot.lane.b32.xlu0 %v4215, 64
      %v4256 = vpop.permute.xlu0 %4255
      %4257 = vrot.lane.b32.xlu0 %v4219, 64
      %v4258 = vpop.permute.xlu0 %4257
      %4259 = vrot.lane.b32.xlu0 %v4228, 64
      %v4260 = vpop.permute.xlu0 %4259
      %v4262 = vsel %vm311, %v3145, %v4071
      %v4265 = vsel %vm311, %v3146, %v4073
      %v4268 = vsel %vm311, %v3147, %v4075
      %v4271 = vsel %vm311, %v3148, %v4077
      %v4274 = vsel %vm311, %v3149, %v4079
      %v4277 = vsel %vm311, %v3150, %v4081
      %v4280 = vsel %vm311, %v3151, %v4083
      %v4283 = vsel %vm311, %v3152, %v4085
      %v4286 = vsel %vm311, %v3153, %v4087
      %v4289 = vsel %vm311, %v3154, %v4089
      %v4292 = vsel %vm311, %v3155, %v4091
      %v4295 = vsel %vm311, %v3156, %v4093
      %v4298 = vsel %vm311, %v3157, %v4095
      %v4301 = vsel %vm311, %v3158, %v4097
      %v4304 = vsel %vm311, %v3143, %v4099
      %v4307 = vsel %vm311, %v3919, %v4101
      %v4311 = vsel %vm311, %v4121, %v4230
      %v4315 = vsel %vm311, %v4123, %v4232
      %v4319 = vsel %vm311, %v4125, %v4234
      %v4323 = vsel %vm311, %v4127, %v4236
      %v4327 = vsel %vm311, %v4129, %v4238
      %v4331 = vsel %vm311, %v4131, %v4240
      %v4335 = vsel %vm311, %v4133, %v4242
      %v4339 = vsel %vm311, %v4135, %v4244
      %v4343 = vsel %vm311, %v4137, %v4246
      %v4347 = vsel %vm311, %v4139, %v4248
      %v4351 = vsel %vm311, %v4141, %v4250
      %v4355 = vsel %vm311, %v4143, %v4252
      %v4359 = vsel %vm311, %v4145, %v4254
      %v4363 = vsel %vm311, %v4147, %v4256
      %v4367 = vsel %vm311, %v4149, %v4258
      %v4371 = vsel %vm311, %v4151, %v4260
      %s4373 = scalar_lea.vmem %s4, 384
      %v4374 = vld [vmem:[%s4373] sm:$0xf]
      %v4375 = vld [vmem:[%s4373 + $0x4] sm:$0xf]
      %v4376 = vld [vmem:[%s4373 + $0x8] sm:$0xf]
      %v4377 = vld [vmem:[%s4373 + $0xc] sm:$0xf]
      %v4378 = vld [vmem:[%s4373 + $0x10] sm:$0xf]
      %v4379 = vld [vmem:[%s4373 + $0x14] sm:$0xf]
      %v4380 = vld [vmem:[%s4373 + $0x18] sm:$0xf]
      %v4381 = vld [vmem:[%s4373 + $0x1c] sm:$0xf]
      %v4382 = vld [vmem:[%s4373 + $0x20] sm:$0xf]
      %v4383 = vld [vmem:[%s4373 + $0x24] sm:$0xf]
      %v4384 = vld [vmem:[%s4373 + $0x28] sm:$0xf]
      %v4385 = vld [vmem:[%s4373 + $0x2c] sm:$0xf]
      %v4386 = vld [vmem:[%s4373 + $0x30] sm:$0xf]
      %v4387 = vld [vmem:[%s4373 + $0x34] sm:$0xf]
      %v4388 = vld [vmem:[%s4373 + $0x38] sm:$0xf]
      %v4389 = vld [vmem:[%s4373 + $0x3c] sm:$0xf]
      %v4390 = vld [vmem:[%s4373 + $0x40] sm:$0xf]
      %v4391 = vld [vmem:[%s4373 + $0x44] sm:$0xf]
      %v4392 = vld [vmem:[%s4373 + $0x48] sm:$0xf]
      %v4393 = vld [vmem:[%s4373 + $0x4c] sm:$0xf]
      %v4394 = vld [vmem:[%s4373 + $0x50] sm:$0xf]
      %v4395 = vld [vmem:[%s4373 + $0x54] sm:$0xf]
      %v4396 = vld [vmem:[%s4373 + $0x58] sm:$0xf]
      %v4397 = vld [vmem:[%s4373 + $0x5c] sm:$0xf]
      %v4398 = vld [vmem:[%s4373 + $0x60] sm:$0xf]
      %v4399 = vld [vmem:[%s4373 + $0x64] sm:$0xf]
      %v4400 = vld [vmem:[%s4373 + $0x68] sm:$0xf]
      %v4401 = vld [vmem:[%s4373 + $0x6c] sm:$0xf]
      %v4402 = vld [vmem:[%s4373 + $0x70] sm:$0xf]
      %v4403 = vld [vmem:[%s4373 + $0x74] sm:$0xf]
      %v4404 = vld [vmem:[%s4373 + $0x78] sm:$0xf]
      %v4405 = vld [vmem:[%s4373 + $0x7c] sm:$0xf]
      %v4438 = vunpack.c.l.b16 %v4374
      %v4439 = vunpack.c.l.b16 %v4375
      %v4440 = vunpack.c.l.b16 %v4376
      %v4441 = vunpack.c.l.b16 %v4377
      %v4442 = vunpack.c.l.b16 %v4378
      %v4443 = vunpack.c.l.b16 %v4379
      %v4444 = vunpack.c.l.b16 %v4380
      %v4445 = vunpack.c.l.b16 %v4381
      %v4446 = vunpack.c.l.b16 %v4382
      %v4447 = vunpack.c.l.b16 %v4383
      %v4448 = vunpack.c.l.b16 %v4384
      %v4449 = vunpack.c.l.b16 %v4385
      %v4450 = vunpack.c.l.b16 %v4386
      %v4451 = vunpack.c.l.b16 %v4387
      %v4452 = vunpack.c.l.b16 %v4388
      %v4453 = vunpack.c.l.b16 %v4389
      %v4454 = vunpack.c.l.b16 %v4390
      %v4455 = vunpack.c.l.b16 %v4391
      %v4456 = vunpack.c.l.b16 %v4392
      %v4457 = vunpack.c.l.b16 %v4393
      %v4458 = vunpack.c.l.b16 %v4394
      %v4459 = vunpack.c.l.b16 %v4395
      %v4460 = vunpack.c.l.b16 %v4396
      %v4461 = vunpack.c.l.b16 %v4397
      %v4462 = vunpack.c.l.b16 %v4398
      %v4463 = vunpack.c.l.b16 %v4399
      %v4464 = vunpack.c.l.b16 %v4400
      %v4465 = vunpack.c.l.b16 %v4401
      %v4466 = vunpack.c.l.b16 %v4402
      %v4467 = vunpack.c.l.b16 %v4403
      %v4468 = vunpack.c.l.b16 %v4404
      %v4469 = vunpack.c.l.b16 %v4405
      %v4470 = vpack.c.b16 %v4439, %v4438
      %v4471 = vpack.c.b16 %v4441, %v4440
      %v4472 = vpack.c.b16 %v4443, %v4442
      %v4473 = vpack.c.b16 %v4445, %v4444
      %v4474 = vpack.c.b16 %v4447, %v4446
      %v4475 = vpack.c.b16 %v4449, %v4448
      %v4476 = vpack.c.b16 %v4451, %v4450
      %v4477 = vpack.c.b16 %v4453, %v4452
      %v4478 = vpack.c.b16 %v4455, %v4454
      %v4479 = vpack.c.b16 %v4457, %v4456
      %v4480 = vpack.c.b16 %v4459, %v4458
      %v4481 = vpack.c.b16 %v4461, %v4460
      %v4482 = vpack.c.b16 %v4463, %v4462
      %v4483 = vpack.c.b16 %v4465, %v4464
      %v4484 = vpack.c.b16 %v4467, %v4466
      %v4485 = vpack.c.b16 %v4469, %v4468
      %4502 = vmatprep.subr.bf16.mxu0 0
      %4503 = vmatpush1.bf16.msra.mxu0 %v4470
      %4504 = vmatprep.subr.bf16.mxu0 0
      %4505 = vmatpush1.bf16.msra.mxu0 %v4471
      %4506 = vmatprep.subr.bf16.mxu0 0
      %4507 = vmatpush1.bf16.msra.mxu0 %v4472
      %4508 = vmatprep.subr.bf16.mxu0 0
      %4509 = vmatpush1.bf16.msra.mxu0 %v4473
      %4510 = vmatprep.subr.bf16.mxu0 0
      %4511 = vmatpush1.bf16.msra.mxu0 %v4474
      %4512 = vmatprep.subr.bf16.mxu0 0
      %4513 = vmatpush1.bf16.msra.mxu0 %v4475
      %4514 = vmatprep.subr.bf16.mxu0 0
      %4515 = vmatpush1.bf16.msra.mxu0 %v4476
      %4516 = vmatprep.subr.bf16.mxu0 0
      %4517 = vmatpush1.bf16.msra.mxu0 %v4477
      %4518 = vmatprep.subr.bf16.mxu0 0
      %4519 = vmatpush1.bf16.msra.mxu0 %v4478
      %4520 = vmatprep.subr.bf16.mxu0 0
      %4521 = vmatpush1.bf16.msra.mxu0 %v4479
      %4522 = vmatprep.subr.bf16.mxu0 0
      %4523 = vmatpush1.bf16.msra.mxu0 %v4480
      %4524 = vmatprep.subr.bf16.mxu0 0
      %4525 = vmatpush1.bf16.msra.mxu0 %v4481
      %4526 = vmatprep.subr.bf16.mxu0 0
      %4527 = vmatpush1.bf16.msra.mxu0 %v4482
      %4528 = vmatprep.subr.bf16.mxu0 0
      %4529 = vmatpush1.bf16.msra.mxu0 %v4483
      %4530 = vmatprep.subr.bf16.mxu0 0
      %4531 = vmatpush1.bf16.msra.mxu0 %v4484
      %4532 = vmatprep.subr.bf16.mxu0 0
      %4533 = vmatpush1.bf16.msra.mxu0 %v4485
      %4534 = vmatprep.mubr.bf16.mxu0 %v4311
      %4535 = vmatmul.mubr.bf16.gmra.mrb[0].mxu0 %v4262
      %v4536 = vpop.f32.mrb[0].mxu0
      %v4537 = vadd.f32 0.0, %v4536
      %v4538 = vpop.f32.mrb[0].mxu0
      %v4539 = vpop.f32.mrb[0].mxu0
      %v4540 = vadd.f32 0.0, %v4539
      %v4541 = vpop.f32.mrb[0].mxu0
      %4542 = vmatprep.mubr.bf16.mxu0 %v4315
      %4543 = vmatmul.mubr.bf16.gmra.mrb[0].mxu0 %v4265
      %v4544 = vpop.f32.mrb[0].mxu0
      %v4545 = vadd.f32 0.0, %v4544
      %v4546 = vpop.f32.mrb[0].mxu0
      %v4547 = vpop.f32.mrb[0].mxu0
      %v4548 = vadd.f32 0.0, %v4547
      %v4549 = vpop.f32.mrb[0].mxu0
      %4550 = vmatprep.mubr.bf16.mxu0 %v4319
      %4551 = vmatmul.mubr.bf16.gmra.mrb[0].mxu0 %v4268
      %v4552 = vpop.f32.mrb[0].mxu0
      %v4553 = vadd.f32 0.0, %v4552
      %v4554 = vpop.f32.mrb[0].mxu0
      %v4555 = vpop.f32.mrb[0].mxu0
      %v4556 = vadd.f32 0.0, %v4555
      %v4557 = vpop.f32.mrb[0].mxu0
      %4558 = vmatprep.mubr.bf16.mxu0 %v4323
      %4559 = vmatmul.mubr.bf16.gmra.mrb[0].mxu0 %v4271
      %v4560 = vpop.f32.mrb[0].mxu0
      %v4561 = vadd.f32 0.0, %v4560
      %v4562 = vpop.f32.mrb[0].mxu0
      %v4563 = vpop.f32.mrb[0].mxu0
      %v4564 = vadd.f32 0.0, %v4563
      %v4565 = vpop.f32.mrb[0].mxu0
      %4566 = vmatprep.mubr.bf16.mxu0 %v4327
      %4567 = vmatmul.mubr.bf16.gmra.mrb[0].mxu0 %v4274
      %v4568 = vpop.f32.mrb[0].mxu0
      %v4569 = vadd.f32 0.0, %v4568
      %v4570 = vpop.f32.mrb[0].mxu0
      %v4571 = vpop.f32.mrb[0].mxu0
      %v4572 = vadd.f32 0.0, %v4571
      %v4573 = vpop.f32.mrb[0].mxu0
      %4574 = vmatprep.mubr.bf16.mxu0 %v4331
      %4575 = vmatmul.mubr.bf16.gmra.mrb[0].mxu0 %v4277
      %v4576 = vpop.f32.mrb[0].mxu0
      %v4577 = vadd.f32 0.0, %v4576
      %v4578 = vpop.f32.mrb[0].mxu0
      %v4579 = vpop.f32.mrb[0].mxu0
      %v4580 = vadd.f32 0.0, %v4579
      %v4581 = vpop.f32.mrb[0].mxu0
      %4582 = vmatprep.mubr.bf16.mxu0 %v4335
      %4583 = vmatmul.mubr.bf16.gmra.mrb[0].mxu0 %v4280
      %v4584 = vpop.f32.mrb[0].mxu0
      %v4585 = vadd.f32 0.0, %v4584
      %v4586 = vpop.f32.mrb[0].mxu0
      %v4587 = vpop.f32.mrb[0].mxu0
      %v4588 = vadd.f32 0.0, %v4587
      %v4589 = vpop.f32.mrb[0].mxu0
      %4590 = vmatprep.mubr.bf16.mxu0 %v4339
      %4591 = vmatmul.mubr.bf16.gmra.mrb[0].mxu0 %v4283
      %v4592 = vpop.f32.mrb[0].mxu0
      %v4593 = vadd.f32 0.0, %v4592
      %v4594 = vpop.f32.mrb[0].mxu0
      %v4595 = vpop.f32.mrb[0].mxu0
      %v4596 = vadd.f32 0.0, %v4595
      %v4597 = vpop.f32.mrb[0].mxu0
      %4598 = vmatprep.mubr.bf16.mxu0 %v4343
      %4599 = vmatmul.mubr.bf16.gmra.mrb[0].mxu0 %v4286
      %v4600 = vpop.f32.mrb[0].mxu0
      %v4601 = vadd.f32 0.0, %v4600
      %v4602 = vpop.f32.mrb[0].mxu0
      %v4603 = vpop.f32.mrb[0].mxu0
      %v4604 = vadd.f32 0.0, %v4603
      %v4605 = vpop.f32.mrb[0].mxu0
      %4606 = vmatprep.mubr.bf16.mxu0 %v4347
      %4607 = vmatmul.mubr.bf16.gmra.mrb[0].mxu0 %v4289
      %v4608 = vpop.f32.mrb[0].mxu0
      %v4609 = vadd.f32 0.0, %v4608
      %v4610 = vpop.f32.mrb[0].mxu0
      %v4611 = vpop.f32.mrb[0].mxu0
      %v4612 = vadd.f32 0.0, %v4611
      %v4613 = vpop.f32.mrb[0].mxu0
      %4614 = vmatprep.mubr.bf16.mxu0 %v4351
      %4615 = vmatmul.mubr.bf16.gmra.mrb[0].mxu0 %v4292
      %v4616 = vpop.f32.mrb[0].mxu0
      %v4617 = vadd.f32 0.0, %v4616
      %v4618 = vpop.f32.mrb[0].mxu0
      %v4619 = vpop.f32.mrb[0].mxu0
      %v4620 = vadd.f32 0.0, %v4619
      %v4621 = vpop.f32.mrb[0].mxu0
      %4622 = vmatprep.mubr.bf16.mxu0 %v4355
      %4623 = vmatmul.mubr.bf16.gmra.mrb[0].mxu0 %v4295
      %v4624 = vpop.f32.mrb[0].mxu0
      %v4625 = vadd.f32 0.0, %v4624
      %v4626 = vpop.f32.mrb[0].mxu0
      %v4627 = vpop.f32.mrb[0].mxu0
      %v4628 = vadd.f32 0.0, %v4627
      %v4629 = vpop.f32.mrb[0].mxu0
      %4630 = vmatprep.mubr.bf16.mxu0 %v4359
      %4631 = vmatmul.mubr.bf16.gmra.mrb[0].mxu0 %v4298
      %v4632 = vpop.f32.mrb[0].mxu0
      %v4633 = vadd.f32 0.0, %v4632
      %v4634 = vpop.f32.mrb[0].mxu0
      %v4635 = vpop.f32.mrb[0].mxu0
      %v4636 = vadd.f32 0.0, %v4635
      %v4637 = vpop.f32.mrb[0].mxu0
      %4638 = vmatprep.mubr.bf16.mxu0 %v4363
      %4639 = vmatmul.mubr.bf16.gmra.mrb[0].mxu0 %v4301
      %v4640 = vpop.f32.mrb[0].mxu0
      %v4641 = vadd.f32 0.0, %v4640
      %v4642 = vpop.f32.mrb[0].mxu0
      %v4643 = vpop.f32.mrb[0].mxu0
      %v4644 = vadd.f32 0.0, %v4643
      %v4645 = vpop.f32.mrb[0].mxu0
      %4646 = vmatprep.mubr.bf16.mxu0 %v4367
      %4647 = vmatmul.mubr.bf16.gmra.mrb[0].mxu0 %v4304
      %v4648 = vpop.f32.mrb[0].mxu0
      %v4649 = vadd.f32 0.0, %v4648
      %v4650 = vpop.f32.mrb[0].mxu0
      %v4651 = vpop.f32.mrb[0].mxu0
      %v4652 = vadd.f32 0.0, %v4651
      %v4653 = vpop.f32.mrb[0].mxu0
      %4654 = vmatprep.mubr.bf16.mxu0 %v4371
      %4655 = vmatmul.mubr.bf16.gmra.mrb[0].mxu0 %v4307
      %v4656 = vpop.f32.mrb[0].mxu0
      %v4657 = vadd.f32 0.0, %v4656
      %v4658 = vpop.f32.mrb[0].mxu0
      %v4659 = vpop.f32.mrb[0].mxu0
      %v4660 = vadd.f32 0.0, %v4659
      %v4661 = vpop.f32.mrb[0].mxu0
      %4662 = vdwg.mxu0
      %v4663 = vadd.f32 %v3887, %v4537
      %v4664 = vadd.f32 %v3888, %v4540
      %v4665 = vadd.f32 %v3889, %v4545
      %v4666 = vadd.f32 %v3890, %v4548
      %v4667 = vadd.f32 %v3891, %v4553
      %v4668 = vadd.f32 %v3892, %v4556
      %v4669 = vadd.f32 %v3893, %v4561
      %v4670 = vadd.f32 %v3894, %v4564
      %v4671 = vadd.f32 %v3895, %v4569
      %v4672 = vadd.f32 %v3896, %v4572
      %v4673 = vadd.f32 %v3897, %v4577
      %v4674 = vadd.f32 %v3898, %v4580
      %v4675 = vadd.f32 %v3899, %v4585
      %v4676 = vadd.f32 %v3900, %v4588
      %v4677 = vadd.f32 %v3901, %v4593
      %v4678 = vadd.f32 %v3902, %v4596
      %v4679 = vadd.f32 %v3903, %v4601
      %v4680 = vadd.f32 %v3904, %v4604
      %v4681 = vadd.f32 %v3905, %v4609
      %v4682 = vadd.f32 %v3906, %v4612
      %v4683 = vadd.f32 %v3907, %v4617
      %v4684 = vadd.f32 %v3908, %v4620
      %v4685 = vadd.f32 %v3909, %v4625
      %v4686 = vadd.f32 %v3910, %v4628
      %v4687 = vadd.f32 %v3911, %v4633
      %v4688 = vadd.f32 %v3912, %v4636
      %v4689 = vadd.f32 %v3913, %v4641
      %v4690 = vadd.f32 %v3914, %v4644
      %v4691 = vadd.f32 %v3915, %v4649
      %v4692 = vadd.f32 %v3916, %v4652
      %v4693 = vadd.f32 %v3917, %v4657
      %v4694 = vadd.f32 %v3918, %v4660
      %v4695 = vld [vmem:[%s5] sm:$0x1]
      %v4697 = vlaneseq
      %v4698 = vshrl.u32 %v4697, 7
      %v4699 = vsub.s32 0, %v4698
      %v4700 = vrot.slane %v4695, %v4699
      %v4702 = vadd.f32 %v4663, %v4700
      %v4703 = vadd.f32 %v4664, %v4700
      %v4704 = vadd.f32 %v4665, %v4700
      %v4705 = vadd.f32 %v4666, %v4700
      %v4706 = vadd.f32 %v4667, %v4700
      %v4707 = vadd.f32 %v4668, %v4700
      %v4708 = vadd.f32 %v4669, %v4700
      %v4709 = vadd.f32 %v4670, %v4700
      %v4710 = vadd.f32 %v4671, %v4700
      %v4711 = vadd.f32 %v4672, %v4700
      %v4712 = vadd.f32 %v4673, %v4700
      %v4713 = vadd.f32 %v4674, %v4700
      %v4714 = vadd.f32 %v4675, %v4700
      %v4715 = vadd.f32 %v4676, %v4700
      %v4716 = vadd.f32 %v4677, %v4700
      %v4717 = vadd.f32 %v4678, %v4700
      %v4718 = vadd.f32 %v4679, %v4700
      %v4719 = vadd.f32 %v4680, %v4700
      %v4720 = vadd.f32 %v4681, %v4700
      %v4721 = vadd.f32 %v4682, %v4700
      %v4722 = vadd.f32 %v4683, %v4700
      %v4723 = vadd.f32 %v4684, %v4700
      %v4724 = vadd.f32 %v4685, %v4700
      %v4725 = vadd.f32 %v4686, %v4700
      %v4726 = vadd.f32 %v4687, %v4700
      %v4727 = vadd.f32 %v4688, %v4700
      %v4728 = vadd.f32 %v4689, %v4700
      %v4729 = vadd.f32 %v4690, %v4700
      %v4730 = vadd.f32 %v4691, %v4700
      %v4731 = vadd.f32 %v4692, %v4700
      %v4732 = vadd.f32 %v4693, %v4700
      %v4733 = vadd.f32 %v4694, %v4700
      %vm4734 = vcmp.ge.f32.partialorder %v4702, 0.0
      %vm4735 = vcmp.ge.f32.partialorder %v4703, 0.0
      %vm4736 = vcmp.ge.f32.partialorder %v4704, 0.0
      %vm4737 = vcmp.ge.f32.partialorder %v4705, 0.0
      %vm4738 = vcmp.ge.f32.partialorder %v4706, 0.0
      %vm4739 = vcmp.ge.f32.partialorder %v4707, 0.0
      %vm4740 = vcmp.ge.f32.partialorder %v4708, 0.0
      %vm4741 = vcmp.ge.f32.partialorder %v4709, 0.0
      %vm4742 = vcmp.ge.f32.partialorder %v4710, 0.0
      %vm4743 = vcmp.ge.f32.partialorder %v4711, 0.0
      %vm4744 = vcmp.ge.f32.partialorder %v4712, 0.0
      %vm4745 = vcmp.ge.f32.partialorder %v4713, 0.0
      %vm4746 = vcmp.ge.f32.partialorder %v4714, 0.0
      %vm4747 = vcmp.ge.f32.partialorder %v4715, 0.0
      %vm4748 = vcmp.ge.f32.partialorder %v4716, 0.0
      %vm4749 = vcmp.ge.f32.partialorder %v4717, 0.0
      %vm4750 = vcmp.ge.f32.partialorder %v4718, 0.0
      %vm4751 = vcmp.ge.f32.partialorder %v4719, 0.0
      %vm4752 = vcmp.ge.f32.partialorder %v4720, 0.0
      %vm4753 = vcmp.ge.f32.partialorder %v4721, 0.0
      %vm4754 = vcmp.ge.f32.partialorder %v4722, 0.0
      %vm4755 = vcmp.ge.f32.partialorder %v4723, 0.0
      %vm4756 = vcmp.ge.f32.partialorder %v4724, 0.0
      %vm4757 = vcmp.ge.f32.partialorder %v4725, 0.0
      %vm4758 = vcmp.ge.f32.partialorder %v4726, 0.0
      %vm4759 = vcmp.ge.f32.partialorder %v4727, 0.0
      %vm4760 = vcmp.ge.f32.partialorder %v4728, 0.0
      %vm4761 = vcmp.ge.f32.partialorder %v4729, 0.0
      %vm4762 = vcmp.ge.f32.partialorder %v4730, 0.0
      %vm4763 = vcmp.ge.f32.partialorder %v4731, 0.0
      %vm4764 = vcmp.ge.f32.partialorder %v4732, 0.0
      %vm4765 = vcmp.ge.f32.partialorder %v4733, 0.0
      %v4766 = vld [vmem:[#allocation4] sm:$0x1]
      %v4768 = vlaneseq
      %v4769 = vshrl.u32 %v4768, 7
      %v4770 = vsub.s32 0, %v4769
      %v4771 = vrot.slane %v4766, %v4770
      %4772 = vset.pattern.permute.xlu0 0
      %4773 = vperm.xlu0 %4772, %v4771
      %v4774 = vpop.permute.xlu0 %4773
      %v4776 = vmul.f32 %v4774, %v4702
      %v4777 = vmul.f32 %v4774, %v4703
      %v4778 = vmul.f32 %v4774, %v4704
      %v4779 = vmul.f32 %v4774, %v4705
      %v4780 = vmul.f32 %v4774, %v4706
      %v4781 = vmul.f32 %v4774, %v4707
      %v4782 = vmul.f32 %v4774, %v4708
      %v4783 = vmul.f32 %v4774, %v4709
      %v4784 = vmul.f32 %v4774, %v4710
      %v4785 = vmul.f32 %v4774, %v4711
      %v4786 = vmul.f32 %v4774, %v4712
      %v4787 = vmul.f32 %v4774, %v4713
      %v4788 = vmul.f32 %v4774, %v4714
      %v4789 = vmul.f32 %v4774, %v4715
      %v4790 = vmul.f32 %v4774, %v4716
      %v4791 = vmul.f32 %v4774, %v4717
      %v4792 = vmul.f32 %v4774, %v4718
      %v4793 = vmul.f32 %v4774, %v4719
      %v4794 = vmul.f32 %v4774, %v4720
      %v4795 = vmul.f32 %v4774, %v4721
      %v4796 = vmul.f32 %v4774, %v4722
      %v4797 = vmul.f32 %v4774, %v4723
      %v4798 = vmul.f32 %v4774, %v4724
      %v4799 = vmul.f32 %v4774, %v4725
      %v4800 = vmul.f32 %v4774, %v4726
      %v4801 = vmul.f32 %v4774, %v4727
      %v4802 = vmul.f32 %v4774, %v4728
      %v4803 = vmul.f32 %v4774, %v4729
      %v4804 = vmul.f32 %v4774, %v4730
      %v4805 = vmul.f32 %v4774, %v4731
      %v4806 = vmul.f32 %v4774, %v4732
      %v4807 = vmul.f32 %v4774, %v4733
      %v4808 = vsel %vm4734, %v4702, %v4776
      %v4809 = vsel %vm4735, %v4703, %v4777
      %v4810 = vsel %vm4736, %v4704, %v4778
      %v4811 = vsel %vm4737, %v4705, %v4779
      %v4812 = vsel %vm4738, %v4706, %v4780
      %v4813 = vsel %vm4739, %v4707, %v4781
      %v4814 = vsel %vm4740, %v4708, %v4782
      %v4815 = vsel %vm4741, %v4709, %v4783
      %v4816 = vsel %vm4742, %v4710, %v4784
      %v4817 = vsel %vm4743, %v4711, %v4785
      %v4818 = vsel %vm4744, %v4712, %v4786
      %v4819 = vsel %vm4745, %v4713, %v4787
      %v4820 = vsel %vm4746, %v4714, %v4788
      %v4821 = vsel %vm4747, %v4715, %v4789
      %v4822 = vsel %vm4748, %v4716, %v4790
      %v4823 = vsel %vm4749, %v4717, %v4791
      %v4824 = vsel %vm4750, %v4718, %v4792
      %v4825 = vsel %vm4751, %v4719, %v4793
      %v4826 = vsel %vm4752, %v4720, %v4794
      %v4827 = vsel %vm4753, %v4721, %v4795
      %v4828 = vsel %vm4754, %v4722, %v4796
      %v4829 = vsel %vm4755, %v4723, %v4797
      %v4830 = vsel %vm4756, %v4724, %v4798
      %v4831 = vsel %vm4757, %v4725, %v4799
      %v4832 = vsel %vm4758, %v4726, %v4800
      %v4833 = vsel %vm4759, %v4727, %v4801
      %v4834 = vsel %vm4760, %v4728, %v4802
      %v4835 = vsel %vm4761, %v4729, %v4803
      %v4836 = vsel %vm4762, %v4730, %v4804
      %v4837 = vsel %vm4763, %v4731, %v4805
      %v4838 = vsel %vm4764, %v4732, %v4806
      %v4839 = vsel %vm4765, %v4733, %v4807
      %v4840 = vpack.c.bf16 %v4809, %v4808
      %v4841 = vpack.c.bf16 %v4811, %v4810
      %v4842 = vpack.c.bf16 %v4813, %v4812
      %v4843 = vpack.c.bf16 %v4815, %v4814
      %v4844 = vpack.c.bf16 %v4817, %v4816
      %v4845 = vpack.c.bf16 %v4819, %v4818
      %v4846 = vpack.c.bf16 %v4821, %v4820
      %v4847 = vpack.c.bf16 %v4823, %v4822
      %v4848 = vpack.c.bf16 %v4825, %v4824
      %v4849 = vpack.c.bf16 %v4827, %v4826
      %v4850 = vpack.c.bf16 %v4829, %v4828
      %v4851 = vpack.c.bf16 %v4831, %v4830
      %v4852 = vpack.c.bf16 %v4833, %v4832
      %v4853 = vpack.c.bf16 %v4835, %v4834
      %v4854 = vpack.c.bf16 %v4837, %v4836
      %v4855 = vpack.c.bf16 %v4839, %v4838
      %v4856 = vld [vmem:[%s7] sm:$0xff]
      %v4857 = vld [vmem:[%s7 + $0x8] sm:$0xff]
      %v4858 = vld [vmem:[%s7 + $0x10] sm:$0xff]
      %v4859 = vld [vmem:[%s7 + $0x18] sm:$0xff]
      %v4860 = vld [vmem:[%s7 + $0x20] sm:$0xff]
      %v4861 = vld [vmem:[%s7 + $0x28] sm:$0xff]
      %v4862 = vld [vmem:[%s7 + $0x30] sm:$0xff]
      %v4863 = vld [vmem:[%s7 + $0x38] sm:$0xff]
      %v4864 = vld [vmem:[%s7 + $0x40] sm:$0xff]
      %v4865 = vld [vmem:[%s7 + $0x48] sm:$0xff]
      %v4866 = vld [vmem:[%s7 + $0x50] sm:$0xff]
      %v4867 = vld [vmem:[%s7 + $0x58] sm:$0xff]
      %v4868 = vld [vmem:[%s7 + $0x60] sm:$0xff]
      %v4869 = vld [vmem:[%s7 + $0x68] sm:$0xff]
      %v4870 = vld [vmem:[%s7 + $0x70] sm:$0xff]
      %v4871 = vld [vmem:[%s7 + $0x78] sm:$0xff]
      %v4872 = vld [vmem:[%s7 + $0x80] sm:$0xff]
      %v4873 = vld [vmem:[%s7 + $0x88] sm:$0xff]
      %v4892 = vunpack.c.l.b16 %v4856
      %v4893 = vunpack.c.h.b16 %v4856
      %v4894 = vunpack.c.l.b16 %v4857
      %v4895 = vunpack.c.h.b16 %v4857
      %v4896 = vunpack.c.l.b16 %v4858
      %v4897 = vunpack.c.h.b16 %v4858
      %v4898 = vunpack.c.l.b16 %v4859
      %v4899 = vunpack.c.h.b16 %v4859
      %v4900 = vunpack.c.l.b16 %v4860
      %v4901 = vunpack.c.h.b16 %v4860
      %v4902 = vunpack.c.l.b16 %v4861
      %v4903 = vunpack.c.h.b16 %v4861
      %v4904 = vunpack.c.l.b16 %v4862
      %v4905 = vunpack.c.h.b16 %v4862
      %v4906 = vunpack.c.l.b16 %v4863
      %v4907 = vunpack.c.h.b16 %v4863
      %v4908 = vunpack.c.l.b16 %v4864
      %v4909 = vunpack.c.h.b16 %v4864
      %v4910 = vunpack.c.l.b16 %v4865
      %v4911 = vunpack.c.h.b16 %v4865
      %v4912 = vunpack.c.l.b16 %v4866
      %v4913 = vunpack.c.h.b16 %v4866
      %v4914 = vunpack.c.l.b16 %v4867
      %v4915 = vunpack.c.h.b16 %v4867
      %v4916 = vunpack.c.l.b16 %v4868
      %v4917 = vunpack.c.h.b16 %v4868
      %v4918 = vunpack.c.l.b16 %v4869
      %v4919 = vunpack.c.h.b16 %v4869
      %v4920 = vunpack.c.l.b16 %v4870
      %v4921 = vunpack.c.h.b16 %v4870
      %v4922 = vunpack.c.l.b16 %v4871
      %v4923 = vunpack.c.h.b16 %v4871
      %v4924 = vunpack.c.l.b16 %v4872
      %v4925 = vunpack.c.h.b16 %v4872
      %v4926 = vunpack.c.l.b16 %v4873
      %v4927 = vunpack.c.h.b16 %v4873
      %v4928 = vpack.c.b16 %v4894, %v4892
      %v4929 = vpack.c.b16 %v4895, %v4893
      %v4930 = vpack.c.b16 %v4898, %v4896
      %v4931 = vpack.c.b16 %v4899, %v4897
      %v4932 = vpack.c.b16 %v4902, %v4900
      %v4933 = vpack.c.b16 %v4903, %v4901
      %v4934 = vpack.c.b16 %v4906, %v4904
      %v4935 = vpack.c.b16 %v4907, %v4905
      %v4936 = vpack.c.b16 %v4910, %v4908
      %v4937 = vpack.c.b16 %v4911, %v4909
      %v4938 = vpack.c.b16 %v4914, %v4912
      %v4939 = vpack.c.b16 %v4915, %v4913
      %v4940 = vpack.c.b16 %v4918, %v4916
      %v4941 = vpack.c.b16 %v4919, %v4917
      %v4942 = vpack.c.b16 %v4922, %v4920
      %v4943 = vpack.c.b16 %v4923, %v4921
      %v4944 = vpack.c.b16 %v4926, %v4924
      %v4945 = vpack.c.b16 %v4927, %v4925
      %4964 = vmatprep.subr.bf16.mxu0 0
      %4965 = vmatpush1.bf16.msra.mxu0 %v4840
      %4966 = vmatprep.subr.bf16.mxu0 0
      %4967 = vmatpush1.bf16.msra.mxu0 %v4841
      %4968 = vmatprep.subr.bf16.mxu0 0
      %4969 = vmatpush1.bf16.msra.mxu0 %v4842
      %4970 = vmatprep.subr.bf16.mxu0 0
      %4971 = vmatpush1.bf16.msra.mxu0 %v4843
      %4972 = vmatprep.subr.bf16.mxu0 0
      %4973 = vmatpush1.bf16.msra.mxu0 %v4844
      %4974 = vmatprep.subr.bf16.mxu0 0
      %4975 = vmatpush1.bf16.msra.mxu0 %v4845
      %4976 = vmatprep.subr.bf16.mxu0 0
      %4977 = vmatpush1.bf16.msra.mxu0 %v4846
      %4978 = vmatprep.subr.bf16.mxu0 0
      %4979 = vmatpush1.bf16.msra.mxu0 %v4847
      %4980 = vmatprep.subr.bf16.mxu0 0
      %4981 = vmatpush1.bf16.msra.mxu0 %v4848
      %4982 = vmatprep.subr.bf16.mxu0 0
      %4983 = vmatpush1.bf16.msra.mxu0 %v4849
      %4984 = vmatprep.subr.bf16.mxu0 0
      %4985 = vmatpush1.bf16.msra.mxu0 %v4850
      %4986 = vmatprep.subr.bf16.mxu0 0
      %4987 = vmatpush1.bf16.msra.mxu0 %v4851
      %4988 = vmatprep.subr.bf16.mxu0 0
      %4989 = vmatpush1.bf16.msra.mxu0 %v4852
      %4990 = vmatprep.subr.bf16.mxu0 0
      %4991 = vmatpush1.bf16.msra.mxu0 %v4853
      %4992 = vmatprep.subr.bf16.mxu0 0
      %4993 = vmatpush1.bf16.msra.mxu0 %v4854
      %4994 = vmatprep.subr.bf16.mxu0 0
      %4995 = vmatpush1.bf16.msra.mxu0 %v4855
      %4996 = vmatprep.mubr.bf16.mxu0 %v4929
      %4997 = vmatmul.mubr.bf16.gmra.mrb[0].mxu0 %v4928
      %v4998 = vpop.f32.mrb[0].mxu0
      %v4999 = vadd.f32 0.0, %v4998
      %v5000 = vpop.f32.mrb[0].mxu0
      %v5001 = vpop.f32.mrb[0].mxu0
      %v5002 = vadd.f32 0.0, %v5001
      %v5003 = vpop.f32.mrb[0].mxu0
      %5004 = vmatprep.mubr.bf16.mxu0 %v4931
      %5005 = vmatmul.mubr.bf16.gmra.mrb[0].mxu0 %v4930
      %v5006 = vpop.f32.mrb[0].mxu0
      %v5007 = vadd.f32 0.0, %v5006
      %v5008 = vpop.f32.mrb[0].mxu0
      %v5009 = vpop.f32.mrb[0].mxu0
      %v5010 = vadd.f32 0.0, %v5009
      %v5011 = vpop.f32.mrb[0].mxu0
      %5012 = vmatprep.mubr.bf16.mxu0 %v4933
      %5013 = vmatmul.mubr.bf16.gmra.mrb[0].mxu0 %v4932
      %v5014 = vpop.f32.mrb[0].mxu0
      %v5015 = vadd.f32 0.0, %v5014
      %v5016 = vpop.f32.mrb[0].mxu0
      %v5017 = vpop.f32.mrb[0].mxu0
      %v5018 = vadd.f32 0.0, %v5017
      %v5019 = vpop.f32.mrb[0].mxu0
      %5020 = vmatprep.mubr.bf16.mxu0 %v4935
      %5021 = vmatmul.mubr.bf16.gmra.mrb[0].mxu0 %v4934
      %v5022 = vpop.f32.mrb[0].mxu0
      %v5023 = vadd.f32 0.0, %v5022
      %v5024 = vpop.f32.mrb[0].mxu0
      %v5025 = vpop.f32.mrb[0].mxu0
      %v5026 = vadd.f32 0.0, %v5025
      %v5027 = vpop.f32.mrb[0].mxu0
      %5028 = vmatprep.mubr.bf16.mxu0 %v4937
      %5029 = vmatmul.mubr.bf16.gmra.mrb[0].mxu0 %v4936
      %v5030 = vpop.f32.mrb[0].mxu0
      %v5031 = vadd.f32 0.0, %v5030
      %v5032 = vpop.f32.mrb[0].mxu0
      %v5033 = vpop.f32.mrb[0].mxu0
      %v5034 = vadd.f32 0.0, %v5033
      %v5035 = vpop.f32.mrb[0].mxu0
      %5036 = vmatprep.mubr.bf16.mxu0 %v4939
      %5037 = vmatmul.mubr.bf16.gmra.mrb[0].mxu0 %v4938
      %v5038 = vpop.f32.mrb[0].mxu0
      %v5039 = vadd.f32 0.0, %v5038
      %v5040 = vpop.f32.mrb[0].mxu0
      %v5041 = vpop.f32.mrb[0].mxu0
      %v5042 = vadd.f32 0.0, %v5041
      %v5043 = vpop.f32.mrb[0].mxu0
      %5044 = vmatprep.mubr.bf16.mxu0 %v4941
      %5045 = vmatmul.mubr.bf16.gmra.mrb[0].mxu0 %v4940
      %v5046 = vpop.f32.mrb[0].mxu0
      %v5047 = vadd.f32 0.0, %v5046
      %v5048 = vpop.f32.mrb[0].mxu0
      %v5049 = vpop.f32.mrb[0].mxu0
      %v5050 = vadd.f32 0.0, %v5049
      %v5051 = vpop.f32.mrb[0].mxu0
      %5052 = vmatprep.mubr.bf16.mxu0 %v4943
      %5053 = vmatmul.mubr.bf16.gmra.mrb[0].mxu0 %v4942
      %v5054 = vpop.f32.mrb[0].mxu0
      %v5055 = vadd.f32 0.0, %v5054
      %v5056 = vpop.f32.mrb[0].mxu0
      %v5057 = vpop.f32.mrb[0].mxu0
      %v5058 = vadd.f32 0.0, %v5057
      %v5059 = vpop.f32.mrb[0].mxu0
      %5060 = vmatprep.mubr.bf16.mxu0 %v4945
      %5061 = vmatmul.mubr.bf16.gmra.mrb[0].mxu0 %v4944
      %v5062 = vpop.f32.mrb[0].mxu0
      %v5063 = vadd.f32 0.0, %v5062
      %v5064 = vpop.f32.mrb[0].mxu0
      %v5065 = vpop.f32.mrb[0].mxu0
      %v5066 = vadd.f32 0.0, %v5065
      %v5067 = vpop.f32.mrb[0].mxu0
      %5068 = vdwg.mxu0
      %vm5072 = vcmask 1045504
      %v5073 = vrot.slane %v5007, 2
      %v5074 = vrot.slane %v5010, 2
      %v5075 = vsel %vm5072, %v5073, %v5074
      %v5076 = vrot.slane %v5015, 2
      %v5077 = vsel %vm5072, %v5074, %v5076
      %v5081 = vmax.f32 %v4999, %v5075
      %v5082 = vmax.f32 %v5002, %v5077
      %v5083 = vmax.f32 %v5007, %v5076
      %v5087 = vrot.slane %v5023, 2
      %v5088 = vrot.slane %v5026, 2
      %v5089 = vsel %vm5072, %v5087, %v5088
      %v5090 = vrot.slane %v5031, 2
      %v5091 = vsel %vm5072, %v5088, %v5090
      %v5095 = vmax.f32 %v5015, %v5089
      %v5096 = vmax.f32 %v5018, %v5091
      %v5097 = vmax.f32 %v5023, %v5090
      %vm5101 = vcmask 1043456
      %v5102 = vrot.slane %v5095, 4
      %v5103 = vrot.slane %v5096, 4
      %v5104 = vsel %vm5101, %v5102, %v5103
      %v5105 = vrot.slane %v5097, 4
      %v5106 = vsel %vm5101, %v5103, %v5105
      %v5110 = vmax.f32 %v5081, %v5104
      %v5111 = vmax.f32 %v5082, %v5106
      %v5112 = vmax.f32 %v5083, %v5105
      %v5116 = vrot.slane %v5042, 2
      %v5117 = vrot.slane %v5047, 2
      %v5118 = vsel %vm5072, %v5116, %v5117
      %v5119 = vrot.slane %v5050, 2
      %v5120 = vsel %vm5072, %v5117, %v5119
      %v5124 = vmax.f32 %v5034, %v5118
      %v5125 = vmax.f32 %v5039, %v5120
      %v5126 = vmax.f32 %v5042, %v5119
      %v5130 = vrot.slane %v5058, 2
      %v5131 = vrot.slane %v5063, 2
      %v5132 = vsel %vm5072, %v5130, %v5131
      %v5133 = vrot.slane %v5066, 2
      %v5134 = vsel %vm5072, %v5131, %v5133
      %v5138 = vmax.f32 %v5050, %v5132
      %v5139 = vmax.f32 %v5055, %v5134
      %v5140 = vmax.f32 %v5058, %v5133
      %v5144 = vrot.slane %v5138, 4
      %v5145 = vrot.slane %v5139, 4
      %v5146 = vsel %vm5101, %v5144, %v5145
      %v5147 = vrot.slane %v5140, 4
      %v5148 = vsel %vm5101, %v5145, %v5147
      %v5152 = vmax.f32 %v5124, %v5146
      %v5153 = vmax.f32 %v5125, %v5148
      %v5154 = vmax.f32 %v5126, %v5147
      %5158 = vrot.lane.b32.xlu0 %v5152, 64
      %v5159 = vpop.permute.xlu0 %5158
      %5160 = vrot.lane.b32.xlu0 %v5153, 64
      %v5161 = vpop.permute.xlu0 %5160
      %5162 = vrot.lane.b32.xlu0 %v5154, 64
      %v5163 = vpop.permute.xlu0 %5162
      %v5167 = vsel %vm311, %v5110, %v5159
      %v5168 = vsel %vm311, %v5111, %v5161
      %v5169 = vsel %vm311, %v5112, %v5163
      %v5170 = vpack.c.bf16 %v5168, %v5167
      %v5171 = vpack.c.bf16 %v5169, %v5169
      %v5174 = vunpack.c.l.b16 %v5170
      %v5175 = vunpack.c.h.b16 %v5170
      %v5176 = vunpack.c.l.b16 %v5171
      %v5177 = vpack.c.b16 %v5174, %v5174
      %v5178 = vpack.c.b16 %v5175, %v5175
      %v5179 = vpack.c.b16 %v5176, %v5176
      %5183 = vst [vmem:[%s309] sm:$0xf] %v5177
      %5184 = vst [vmem:[%s309 + $0x4] sm:$0xf] %v5178
      %5185 = vst [vmem:[%s309 + $0x8] sm:$0x1] %v5179
      %p5186 = scmp.lt.s32.totalorder %s23, 1
      %s5187 = scalar_select %p5186, %s23, 1
      %s5188 = smul.addr %s5187, 3
      %s5189 = smul.addr %s5188, 4
      %s5190 = scalar_lea.vmem %s8, %s5189
      // Predicated region
      $region53: #{mynet3_forward.2} parent=51 // pred_check
        %p5191 = pneg %p214
      $region54: #{mynet3_forward.2} parent=51 // pred_check_branch
        %5193 = sbr.rel (%p5191) target = $region56
      $region55: #{mynet3_forward.2} parent=51 // pred_region
        _
      $region56: #{mynet3_forward.2} parent=51 // pred_fallthru
        _
    $region52: #{mynet3_forward.2} parent=5 // pred_fallthru
      _
    %p5194 = scmp.le.s32.totalorder 2, %s18
    // Predicated region
    $region57: #{mynet3_forward.2} parent=5 // pred_check
      %p5195 = pneg %p5194
    $region58: #{mynet3_forward.2} parent=5 // pred_check_branch
      %5197 = sbr.rel (%p5195) target = $region60
    $region59: #{mynet3_forward.2} parent=5 // pred_region
      %s5198 = ssub.s32 %s18, 2
      // Predicated region
      $region61: #{mynet3_forward.2} parent=59 // pred_check
        %p5199 = pneg %p220
      $region62: #{mynet3_forward.2} parent=59 // pred_check_branch
        %5201 = sbr.rel (%p5199) target = $region64
      $region63: #{mynet3_forward.2} parent=59 // pred_region
        %p5202 = scmp.lt.s32.totalorder %s24, 1
        %s5203 = scalar_select %p5202, %s24, 1
        %s5204 = smul.addr %s5203, 3
        %s5205 = smul.addr %s5204, 4
        %s5206 = scalar_lea.vmem %s8, %s5205
      $region64: #{mynet3_forward.2} parent=59 // pred_fallthru
        _
    $region60: #{mynet3_forward.2} parent=5 // pred_fallthru
      _
  $region6: #{mynet3_forward.2} parent=0 // loop_footer
    %s22 = sadd.s32 1, %s18
  $region7: #{mynet3_forward.2} parent=0 // loop_footer_branch
    %17 = sbr.rel target = $region3
  $region8: #{mynet3_forward.2} parent=0 // loop_exit
    _

// kernel: mynet3_forward.3
$region0: #{mynet3_forward.3}
  #allocation0 [shape = 'u32[]', space=smem, size = 0x4, offset = 0x4, fixed_abs, tag = 'smem constant byte address 0x4 - core index']
  #allocation1 [shape = 'u32[144,128]{1,0:T(1,128)}', space=vmem, size = 0x12000, scoped, tag = 'internal scratch']
  #allocation2 [shape = 'f32[1,1]{1,0:T(1,128)S(1)}', space=vmem, size = 0x200, scoped, tag = 'scoped memory for mynet3_forward.3']
  #allocation3 [shape = 'f32[1,1]{1,0:T(1,128)S(1)}', space=vmem, size = 0x200, scoped, tag = 'scoped memory for mynet3_forward.3']
  %s0 = inlined_call_operand.vmem [shape: bf16[8,2304], index: 0, kind: input, shape index: {}]
  %s1 = inlined_call_operand.vmem [shape: bf16[2304,512], index: 1, kind: input, shape index: {}]
  %s2 = inlined_call_operand.vmem [shape: f32[1,512], index: 2, kind: input, shape index: {}]
  %s3 = inlined_call_operand.<no memory space> [shape: f32[1,1], index: 3, kind: input, shape index: {}]
  %s4 = inlined_call_operand.vmem [shape: bf16[512,64], index: 4, kind: input, shape index: {}]
  %s5 = inlined_call_operand.vmem [shape: f32[1,64], index: 5, kind: input, shape index: {}]
  %s6 = inlined_call_operand.<no memory space> [shape: f32[1,1], index: 6, kind: input, shape index: {}]
  %s7 = inlined_call_operand.vmem [shape: bf16[64,10], index: 7, kind: input, shape index: {}]
  %s8 = inlined_call_operand.vmem [shape: f32[1,10], index: 8, kind: input, shape index: {}]
  %s9 = inlined_call_operand.vmem [shape: f32[8,10], index: 9, kind: output, shape index: {}]
  %s10 = sld [smem:[#allocation0]]
  $region46: #{mynet3_forward.3} parent=0
    _
  %s12 = ssub.s32 1, %s10
  %s13 = scalar_select 0, %s12, %s10
  %v14 = vstv %s3
  %15 = vst [vmem:[#allocation2] sm:$0x1] %v14
  %v16 = vstv %s6
  %17 = vst [vmem:[#allocation3] sm:$0x1] %v16
  // Predicated region
  $region2: #{mynet3_forward.3} parent=0 // pred_check
    _
  $region3: #{mynet3_forward.3} parent=0 // pred_check_branch
    %19 = sbr.rel (0) target = $region5
  $region4: #{mynet3_forward.3} parent=0 // pred_region
    _
  $region5: #{mynet3_forward.3} parent=0 // pred_fallthru
    _
  // Predicated region
  $region6: #{mynet3_forward.3} parent=0 // pred_check
    _
  $region7: #{mynet3_forward.3} parent=0 // pred_check_branch
    %21 = sbr.rel (0) target = $region9
  $region8: #{mynet3_forward.3} parent=0 // pred_region
    _
  $region9: #{mynet3_forward.3} parent=0 // pred_fallthru
    _
  // Predicated region
  $region10: #{mynet3_forward.3} parent=0 // pred_check
    _
  $region11: #{mynet3_forward.3} parent=0 // pred_check_branch
    %23 = sbr.rel (0) target = $region13
  $region12: #{mynet3_forward.3} parent=0 // pred_region
    _
  $region13: #{mynet3_forward.3} parent=0 // pred_fallthru
    _
  // Predicated region
  $region14: #{mynet3_forward.3} parent=0 // pred_check
    _
  $region15: #{mynet3_forward.3} parent=0 // pred_check_branch
    %25 = sbr.rel (0) target = $region17
  $region16: #{mynet3_forward.3} parent=0 // pred_region
    _
  $region17: #{mynet3_forward.3} parent=0 // pred_fallthru
    _
  // Predicated region
  $region18: #{mynet3_forward.3} parent=0 // pred_check
    _
  $region19: #{mynet3_forward.3} parent=0 // pred_check_branch
    %27 = sbr.rel (0) target = $region21
  $region20: #{mynet3_forward.3} parent=0 // pred_region
    _
  $region21: #{mynet3_forward.3} parent=0 // pred_fallthru
    _
  // Predicated region
  $region22: #{mynet3_forward.3} parent=0 // pred_check
    _
  $region23: #{mynet3_forward.3} parent=0 // pred_check_branch
    %29 = sbr.rel (0) target = $region25
  $region24: #{mynet3_forward.3} parent=0 // pred_region
    _
  $region25: #{mynet3_forward.3} parent=0 // pred_fallthru
    _
  // Predicated region
  $region26: #{mynet3_forward.3} parent=0 // pred_check
    _
  $region27: #{mynet3_forward.3} parent=0 // pred_check_branch
    %31 = sbr.rel (0) target = $region29
  $region28: #{mynet3_forward.3} parent=0 // pred_region
    _
  $region29: #{mynet3_forward.3} parent=0 // pred_fallthru
    _
  // Predicated region
  $region30: #{mynet3_forward.3} parent=0 // pred_check
    _
  $region31: #{mynet3_forward.3} parent=0 // pred_check_branch
    %33 = sbr.rel (0) target = $region33
  $region32: #{mynet3_forward.3} parent=0 // pred_region
    _
  $region33: #{mynet3_forward.3} parent=0 // pred_fallthru
    _
  // Predicated region
  $region34: #{mynet3_forward.3} parent=0 // pred_check
    _
  $region35: #{mynet3_forward.3} parent=0 // pred_check_branch
    %35 = sbr.rel (0) target = $region37
  $region36: #{mynet3_forward.3} parent=0 // pred_region
    _
  $region37: #{mynet3_forward.3} parent=0 // pred_fallthru
    _
  %v37 = vld [vmem:[%s0] sm:$0xff]
  %v38 = vld [vmem:[%s0 + $0x8] sm:$0xff]
  %v39 = vld [vmem:[%s0 + $0x10] sm:$0xff]
  %v40 = vld [vmem:[%s0 + $0x18] sm:$0xff]
  %v41 = vld [vmem:[%s0 + $0x20] sm:$0xff]
  %v42 = vld [vmem:[%s0 + $0x28] sm:$0xff]
  %v43 = vld [vmem:[%s0 + $0x30] sm:$0xff]
  %v44 = vld [vmem:[%s0 + $0x38] sm:$0xff]
  %v45 = vld [vmem:[%s0 + $0x40] sm:$0xff]
  %v46 = vmax.bf16 %v37, 0
  %v47 = vmax.bf16 %v38, 0
  %v48 = vmax.bf16 %v39, 0
  %v49 = vmax.bf16 %v40, 0
  %v50 = vmax.bf16 %v41, 0
  %v51 = vmax.bf16 %v42, 0
  %v52 = vmax.bf16 %v43, 0
  %v53 = vmax.bf16 %v44, 0
  %v54 = vmax.bf16 %v45, 0
  %v55 = vld [vmem:[%s1] sm:$0xff]
  %v56 = vld [vmem:[%s1 + $0x8] sm:$0xff]
  %v57 = vld [vmem:[%s1 + $0x10] sm:$0xff]
  %v58 = vld [vmem:[%s1 + $0x18] sm:$0xff]
  %v59 = vld [vmem:[%s1 + $0x20] sm:$0xff]
  %v60 = vld [vmem:[%s1 + $0x28] sm:$0xff]
  %v61 = vld [vmem:[%s1 + $0x30] sm:$0xff]
  %v62 = vld [vmem:[%s1 + $0x38] sm:$0xff]
  %v63 = vld [vmem:[%s1 + $0x40] sm:$0xff]
  %v64 = vld [vmem:[%s1 + $0x48] sm:$0xff]
  %v65 = vld [vmem:[%s1 + $0x50] sm:$0xff]
  %v66 = vld [vmem:[%s1 + $0x58] sm:$0xff]
  %v67 = vld [vmem:[%s1 + $0x60] sm:$0xff]
  %v68 = vld [vmem:[%s1 + $0x68] sm:$0xff]
  %v69 = vld [vmem:[%s1 + $0x70] sm:$0xff]
  %v70 = vld [vmem:[%s1 + $0x78] sm:$0xff]
  %v71 = vld [vmem:[%s1 + $0x80] sm:$0xff]
  %v72 = vld [vmem:[%s1 + $0x88] sm:$0xff]
  %v73 = vld [vmem:[%s1 + $0x90] sm:$0xff]
  %v74 = vld [vmem:[%s1 + $0x98] sm:$0xff]
  %v75 = vld [vmem:[%s1 + $0xa0] sm:$0xff]
  %v76 = vld [vmem:[%s1 + $0xa8] sm:$0xff]
  %v77 = vld [vmem:[%s1 + $0xb0] sm:$0xff]
  %v78 = vld [vmem:[%s1 + $0xb8] sm:$0xff]
  %v79 = vld [vmem:[%s1 + $0xc0] sm:$0xff]
  %v80 = vld [vmem:[%s1 + $0xc8] sm:$0xff]
  %v81 = vld [vmem:[%s1 + $0xd0] sm:$0xff]
  %v82 = vld [vmem:[%s1 + $0xd8] sm:$0xff]
  %v83 = vld [vmem:[%s1 + $0xe0] sm:$0xff]
  %v84 = vld [vmem:[%s1 + $0xe8] sm:$0xff]
  %v85 = vld [vmem:[%s1 + $0xf0] sm:$0xff]
  %v86 = vld [vmem:[%s1 + $0xf8] sm:$0xff]
  %v87 = vld [vmem:[%s1 + $0x100] sm:$0xff]
  %v88 = vld [vmem:[%s1 + $0x108] sm:$0xff]
  %v89 = vld [vmem:[%s1 + $0x110] sm:$0xff]
  %v90 = vld [vmem:[%s1 + $0x118] sm:$0xff]
  %v91 = vld [vmem:[%s1 + $0x120] sm:$0xff]
  %v92 = vld [vmem:[%s1 + $0x128] sm:$0xff]
  %v93 = vld [vmem:[%s1 + $0x130] sm:$0xff]
  %v94 = vld [vmem:[%s1 + $0x138] sm:$0xff]
  %v95 = vld [vmem:[%s1 + $0x140] sm:$0xff]
  %v96 = vld [vmem:[%s1 + $0x148] sm:$0xff]
  %v97 = vld [vmem:[%s1 + $0x150] sm:$0xff]
  %v98 = vld [vmem:[%s1 + $0x158] sm:$0xff]
  %v99 = vld [vmem:[%s1 + $0x160] sm:$0xff]
  %v100 = vld [vmem:[%s1 + $0x168] sm:$0xff]
  %v101 = vld [vmem:[%s1 + $0x170] sm:$0xff]
  %v102 = vld [vmem:[%s1 + $0x178] sm:$0xff]
  %v103 = vld [vmem:[%s1 + $0x180] sm:$0xff]
  %v104 = vld [vmem:[%s1 + $0x188] sm:$0xff]
  %v105 = vld [vmem:[%s1 + $0x190] sm:$0xff]
  %v106 = vld [vmem:[%s1 + $0x198] sm:$0xff]
  %v107 = vld [vmem:[%s1 + $0x1a0] sm:$0xff]
  %v108 = vld [vmem:[%s1 + $0x1a8] sm:$0xff]
  %v109 = vld [vmem:[%s1 + $0x1b0] sm:$0xff]
  %v110 = vld [vmem:[%s1 + $0x1b8] sm:$0xff]
  %v111 = vld [vmem:[%s1 + $0x1c0] sm:$0xff]
  %v112 = vld [vmem:[%s1 + $0x1c8] sm:$0xff]
  %v113 = vld [vmem:[%s1 + $0x1d0] sm:$0xff]
  %v114 = vld [vmem:[%s1 + $0x1d8] sm:$0xff]
  %v115 = vld [vmem:[%s1 + $0x1e0] sm:$0xff]
  %v116 = vld [vmem:[%s1 + $0x1e8] sm:$0xff]
  %v117 = vld [vmem:[%s1 + $0x1f0] sm:$0xff]
  %v118 = vld [vmem:[%s1 + $0x1f8] sm:$0xff]
  %v119 = vld [vmem:[%s1 + $0x200] sm:$0xff]
  %v120 = vld [vmem:[%s1 + $0x208] sm:$0xff]
  %v121 = vld [vmem:[%s1 + $0x210] sm:$0xff]
  %v122 = vld [vmem:[%s1 + $0x218] sm:$0xff]
  %v123 = vld [vmem:[%s1 + $0x220] sm:$0xff]
  %v124 = vld [vmem:[%s1 + $0x228] sm:$0xff]
  %v125 = vld [vmem:[%s1 + $0x230] sm:$0xff]
  %v126 = vld [vmem:[%s1 + $0x238] sm:$0xff]
  %v127 = vld [vmem:[%s1 + $0x240] sm:$0xff]
  %v128 = vld [vmem:[%s1 + $0x248] sm:$0xff]
  %v129 = vld [vmem:[%s1 + $0x250] sm:$0xff]
  %v130 = vld [vmem:[%s1 + $0x258] sm:$0xff]
  %v131 = vld [vmem:[%s1 + $0x260] sm:$0xff]
  %v132 = vld [vmem:[%s1 + $0x268] sm:$0xff]
  %v133 = vld [vmem:[%s1 + $0x270] sm:$0xff]
  %v134 = vld [vmem:[%s1 + $0x278] sm:$0xff]
  %v135 = vld [vmem:[%s1 + $0x280] sm:$0xff]
  %v136 = vld [vmem:[%s1 + $0x288] sm:$0xff]
  %v137 = vld [vmem:[%s1 + $0x290] sm:$0xff]
  %v138 = vld [vmem:[%s1 + $0x298] sm:$0xff]
  %v139 = vld [vmem:[%s1 + $0x2a0] sm:$0xff]
  %v140 = vld [vmem:[%s1 + $0x2a8] sm:$0xff]
  %v141 = vld [vmem:[%s1 + $0x2b0] sm:$0xff]
  %v142 = vld [vmem:[%s1 + $0x2b8] sm:$0xff]
  %v143 = vld [vmem:[%s1 + $0x2c0] sm:$0xff]
  %v144 = vld [vmem:[%s1 + $0x2c8] sm:$0xff]
  %v145 = vld [vmem:[%s1 + $0x2d0] sm:$0xff]
  %v146 = vld [vmem:[%s1 + $0x2d8] sm:$0xff]
  %v147 = vld [vmem:[%s1 + $0x2e0] sm:$0xff]
  %v148 = vld [vmem:[%s1 + $0x2e8] sm:$0xff]
  %v149 = vld [vmem:[%s1 + $0x2f0] sm:$0xff]
  %v150 = vld [vmem:[%s1 + $0x2f8] sm:$0xff]
  %v151 = vld [vmem:[%s1 + $0x300] sm:$0xff]
  %v152 = vld [vmem:[%s1 + $0x308] sm:$0xff]
  %v153 = vld [vmem:[%s1 + $0x310] sm:$0xff]
  %v154 = vld [vmem:[%s1 + $0x318] sm:$0xff]
  %v155 = vld [vmem:[%s1 + $0x320] sm:$0xff]
  %v156 = vld [vmem:[%s1 + $0x328] sm:$0xff]
  %v157 = vld [vmem:[%s1 + $0x330] sm:$0xff]
  %v158 = vld [vmem:[%s1 + $0x338] sm:$0xff]
  %v159 = vld [vmem:[%s1 + $0x340] sm:$0xff]
  %v160 = vld [vmem:[%s1 + $0x348] sm:$0xff]
  %v161 = vld [vmem:[%s1 + $0x350] sm:$0xff]
  %v162 = vld [vmem:[%s1 + $0x358] sm:$0xff]
  %v163 = vld [vmem:[%s1 + $0x360] sm:$0xff]
  %v164 = vld [vmem:[%s1 + $0x368] sm:$0xff]
  %v165 = vld [vmem:[%s1 + $0x370] sm:$0xff]
  %v166 = vld [vmem:[%s1 + $0x378] sm:$0xff]
  %v167 = vld [vmem:[%s1 + $0x380] sm:$0xff]
  %v168 = vld [vmem:[%s1 + $0x388] sm:$0xff]
  %v169 = vld [vmem:[%s1 + $0x390] sm:$0xff]
  %v170 = vld [vmem:[%s1 + $0x398] sm:$0xff]
  %v171 = vld [vmem:[%s1 + $0x3a0] sm:$0xff]
  %v172 = vld [vmem:[%s1 + $0x3a8] sm:$0xff]
  %v173 = vld [vmem:[%s1 + $0x3b0] sm:$0xff]
  %v174 = vld [vmem:[%s1 + $0x3b8] sm:$0xff]
  %v175 = vld [vmem:[%s1 + $0x3c0] sm:$0xff]
  %v176 = vld [vmem:[%s1 + $0x3c8] sm:$0xff]
  %v177 = vld [vmem:[%s1 + $0x3d0] sm:$0xff]
  %v178 = vld [vmem:[%s1 + $0x3d8] sm:$0xff]
  %v179 = vld [vmem:[%s1 + $0x3e0] sm:$0xff]
  %v180 = vld [vmem:[%s1 + $0x3e8] sm:$0xff]
  %v181 = vld [vmem:[%s1 + $0x3f0] sm:$0xff]
  %v182 = vld [vmem:[%s1 + $0x3f8] sm:$0xff]
  %v183 = vld [vmem:[%s1 + $0x400] sm:$0xff]
  %v184 = vld [vmem:[%s1 + $0x408] sm:$0xff]
  %v185 = vld [vmem:[%s1 + $0x410] sm:$0xff]
  %v186 = vld [vmem:[%s1 + $0x418] sm:$0xff]
  %v187 = vld [vmem:[%s1 + $0x420] sm:$0xff]
  %v188 = vld [vmem:[%s1 + $0x428] sm:$0xff]
  %v189 = vld [vmem:[%s1 + $0x430] sm:$0xff]
  %v190 = vld [vmem:[%s1 + $0x438] sm:$0xff]
  %v191 = vld [vmem:[%s1 + $0x440] sm:$0xff]
  %v192 = vld [vmem:[%s1 + $0x448] sm:$0xff]
  %v193 = vld [vmem:[%s1 + $0x450] sm:$0xff]
  %v194 = vld [vmem:[%s1 + $0x458] sm:$0xff]
  %v195 = vld [vmem:[%s1 + $0x460] sm:$0xff]
  %v196 = vld [vmem:[%s1 + $0x468] sm:$0xff]
  %v197 = vld [vmem:[%s1 + $0x470] sm:$0xff]
  %v198 = vld [vmem:[%s1 + $0x478] sm:$0xff]
  %v199 = vld [vmem:[%s1 + $0x480] sm:$0xff]
  %v200 = vld [vmem:[%s1 + $0x488] sm:$0xff]
  %v201 = vld [vmem:[%s1 + $0x490] sm:$0xff]
  %v202 = vld [vmem:[%s1 + $0x498] sm:$0xff]
  %v203 = vld [vmem:[%s1 + $0x4a0] sm:$0xff]
  %v204 = vld [vmem:[%s1 + $0x4a8] sm:$0xff]
  %v205 = vld [vmem:[%s1 + $0x4b0] sm:$0xff]
  %v206 = vld [vmem:[%s1 + $0x4b8] sm:$0xff]
  %v207 = vld [vmem:[%s1 + $0x4c0] sm:$0xff]
  %v208 = vld [vmem:[%s1 + $0x4c8] sm:$0xff]
  %v209 = vld [vmem:[%s1 + $0x4d0] sm:$0xff]
  %v210 = vld [vmem:[%s1 + $0x4d8] sm:$0xff]
  %v211 = vld [vmem:[%s1 + $0x4e0] sm:$0xff]
  %v212 = vld [vmem:[%s1 + $0x4e8] sm:$0xff]
  %v213 = vld [vmem:[%s1 + $0x4f0] sm:$0xff]
  %v214 = vld [vmem:[%s1 + $0x4f8] sm:$0xff]
  %v215 = vld [vmem:[%s1 + $0x500] sm:$0xff]
  %v216 = vld [vmem:[%s1 + $0x508] sm:$0xff]
  %v217 = vld [vmem:[%s1 + $0x510] sm:$0xff]
  %v218 = vld [vmem:[%s1 + $0x518] sm:$0xff]
  %v219 = vld [vmem:[%s1 + $0x520] sm:$0xff]
  %v220 = vld [vmem:[%s1 + $0x528] sm:$0xff]
  %v221 = vld [vmem:[%s1 + $0x530] sm:$0xff]
  %v222 = vld [vmem:[%s1 + $0x538] sm:$0xff]
  %v223 = vld [vmem:[%s1 + $0x540] sm:$0xff]
  %v224 = vld [vmem:[%s1 + $0x548] sm:$0xff]
  %v225 = vld [vmem:[%s1 + $0x550] sm:$0xff]
  %v226 = vld [vmem:[%s1 + $0x558] sm:$0xff]
  %v227 = vld [vmem:[%s1 + $0x560] sm:$0xff]
  %v228 = vld [vmem:[%s1 + $0x568] sm:$0xff]
  %v229 = vld [vmem:[%s1 + $0x570] sm:$0xff]
  %v230 = vld [vmem:[%s1 + $0x578] sm:$0xff]
  %v231 = vld [vmem:[%s1 + $0x580] sm:$0xff]
  %v232 = vld [vmem:[%s1 + $0x588] sm:$0xff]
  %v233 = vld [vmem:[%s1 + $0x590] sm:$0xff]
  %v234 = vld [vmem:[%s1 + $0x598] sm:$0xff]
  %v235 = vld [vmem:[%s1 + $0x5a0] sm:$0xff]
  %v236 = vld [vmem:[%s1 + $0x5a8] sm:$0xff]
  %v237 = vld [vmem:[%s1 + $0x5b0] sm:$0xff]
  %v238 = vld [vmem:[%s1 + $0x5b8] sm:$0xff]
  %v239 = vld [vmem:[%s1 + $0x5c0] sm:$0xff]
  %v240 = vld [vmem:[%s1 + $0x5c8] sm:$0xff]
  %v241 = vld [vmem:[%s1 + $0x5d0] sm:$0xff]
  %v242 = vld [vmem:[%s1 + $0x5d8] sm:$0xff]
  %v243 = vld [vmem:[%s1 + $0x5e0] sm:$0xff]
  %v244 = vld [vmem:[%s1 + $0x5e8] sm:$0xff]
  %v245 = vld [vmem:[%s1 + $0x5f0] sm:$0xff]
  %v246 = vld [vmem:[%s1 + $0x5f8] sm:$0xff]
  %v247 = vld [vmem:[%s1 + $0x600] sm:$0xff]
  %v248 = vld [vmem:[%s1 + $0x608] sm:$0xff]
  %v249 = vld [vmem:[%s1 + $0x610] sm:$0xff]
  %v250 = vld [vmem:[%s1 + $0x618] sm:$0xff]
  %v251 = vld [vmem:[%s1 + $0x620] sm:$0xff]
  %v252 = vld [vmem:[%s1 + $0x628] sm:$0xff]
  %v253 = vld [vmem:[%s1 + $0x630] sm:$0xff]
  %v254 = vld [vmem:[%s1 + $0x638] sm:$0xff]
  %v255 = vld [vmem:[%s1 + $0x640] sm:$0xff]
  %v256 = vld [vmem:[%s1 + $0x648] sm:$0xff]
  %v257 = vld [vmem:[%s1 + $0x650] sm:$0xff]
  %v258 = vld [vmem:[%s1 + $0x658] sm:$0xff]
  %v259 = vld [vmem:[%s1 + $0x660] sm:$0xff]
  %v260 = vld [vmem:[%s1 + $0x668] sm:$0xff]
  %v261 = vld [vmem:[%s1 + $0x670] sm:$0xff]
  %v262 = vld [vmem:[%s1 + $0x678] sm:$0xff]
  %v263 = vld [vmem:[%s1 + $0x680] sm:$0xff]
  %v264 = vld [vmem:[%s1 + $0x688] sm:$0xff]
  %v265 = vld [vmem:[%s1 + $0x690] sm:$0xff]
  %v266 = vld [vmem:[%s1 + $0x698] sm:$0xff]
  %v267 = vld [vmem:[%s1 + $0x6a0] sm:$0xff]
  %v268 = vld [vmem:[%s1 + $0x6a8] sm:$0xff]
  %v269 = vld [vmem:[%s1 + $0x6b0] sm:$0xff]
  %v270 = vld [vmem:[%s1 + $0x6b8] sm:$0xff]
  %v271 = vld [vmem:[%s1 + $0x6c0] sm:$0xff]
  %v272 = vld [vmem:[%s1 + $0x6c8] sm:$0xff]
  %v273 = vld [vmem:[%s1 + $0x6d0] sm:$0xff]
  %v274 = vld [vmem:[%s1 + $0x6d8] sm:$0xff]
  %v275 = vld [vmem:[%s1 + $0x6e0] sm:$0xff]
  %v276 = vld [vmem:[%s1 + $0x6e8] sm:$0xff]
  %v277 = vld [vmem:[%s1 + $0x6f0] sm:$0xff]
  %v278 = vld [vmem:[%s1 + $0x6f8] sm:$0xff]
  %v279 = vld [vmem:[%s1 + $0x700] sm:$0xff]
  %v280 = vld [vmem:[%s1 + $0x708] sm:$0xff]
  %v281 = vld [vmem:[%s1 + $0x710] sm:$0xff]
  %v282 = vld [vmem:[%s1 + $0x718] sm:$0xff]
  %v283 = vld [vmem:[%s1 + $0x720] sm:$0xff]
  %v284 = vld [vmem:[%s1 + $0x728] sm:$0xff]
  %v285 = vld [vmem:[%s1 + $0x730] sm:$0xff]
  %v286 = vld [vmem:[%s1 + $0x738] sm:$0xff]
  %v287 = vld [vmem:[%s1 + $0x740] sm:$0xff]
  %v288 = vld [vmem:[%s1 + $0x748] sm:$0xff]
  %v289 = vld [vmem:[%s1 + $0x750] sm:$0xff]
  %v290 = vld [vmem:[%s1 + $0x758] sm:$0xff]
  %v291 = vld [vmem:[%s1 + $0x760] sm:$0xff]
  %v292 = vld [vmem:[%s1 + $0x768] sm:$0xff]
  %v293 = vld [vmem:[%s1 + $0x770] sm:$0xff]
  %v294 = vld [vmem:[%s1 + $0x778] sm:$0xff]
  %v295 = vld [vmem:[%s1 + $0x780] sm:$0xff]
  %v296 = vld [vmem:[%s1 + $0x788] sm:$0xff]
  %v297 = vld [vmem:[%s1 + $0x790] sm:$0xff]
  %v298 = vld [vmem:[%s1 + $0x798] sm:$0xff]
  %v299 = vld [vmem:[%s1 + $0x7a0] sm:$0xff]
  %v300 = vld [vmem:[%s1 + $0x7a8] sm:$0xff]
  %v301 = vld [vmem:[%s1 + $0x7b0] sm:$0xff]
  %v302 = vld [vmem:[%s1 + $0x7b8] sm:$0xff]
  %v303 = vld [vmem:[%s1 + $0x7c0] sm:$0xff]
  %v304 = vld [vmem:[%s1 + $0x7c8] sm:$0xff]
  %v305 = vld [vmem:[%s1 + $0x7d0] sm:$0xff]
  %v306 = vld [vmem:[%s1 + $0x7d8] sm:$0xff]
  %v307 = vld [vmem:[%s1 + $0x7e0] sm:$0xff]
  %v308 = vld [vmem:[%s1 + $0x7e8] sm:$0xff]
  %v309 = vld [vmem:[%s1 + $0x7f0] sm:$0xff]
  %v310 = vld [vmem:[%s1 + $0x7f8] sm:$0xff]
  %v311 = vld [vmem:[%s1 + $0x800] sm:$0xff]
  %v312 = vld [vmem:[%s1 + $0x808] sm:$0xff]
  %v313 = vld [vmem:[%s1 + $0x810] sm:$0xff]
  %v314 = vld [vmem:[%s1 + $0x818] sm:$0xff]
  %v315 = vld [vmem:[%s1 + $0x820] sm:$0xff]
  %v316 = vld [vmem:[%s1 + $0x828] sm:$0xff]
  %v317 = vld [vmem:[%s1 + $0x830] sm:$0xff]
  %v318 = vld [vmem:[%s1 + $0x838] sm:$0xff]
  %v319 = vld [vmem:[%s1 + $0x840] sm:$0xff]
  %v320 = vld [vmem:[%s1 + $0x848] sm:$0xff]
  %v321 = vld [vmem:[%s1 + $0x850] sm:$0xff]
  %v322 = vld [vmem:[%s1 + $0x858] sm:$0xff]
  %v323 = vld [vmem:[%s1 + $0x860] sm:$0xff]
  %v324 = vld [vmem:[%s1 + $0x868] sm:$0xff]
  %v325 = vld [vmem:[%s1 + $0x870] sm:$0xff]
  %v326 = vld [vmem:[%s1 + $0x878] sm:$0xff]
  %v327 = vld [vmem:[%s1 + $0x880] sm:$0xff]
  %v328 = vld [vmem:[%s1 + $0x888] sm:$0xff]
  %v329 = vld [vmem:[%s1 + $0x890] sm:$0xff]
  %v330 = vld [vmem:[%s1 + $0x898] sm:$0xff]
  %v331 = vld [vmem:[%s1 + $0x8a0] sm:$0xff]
  %v332 = vld [vmem:[%s1 + $0x8a8] sm:$0xff]
  %v333 = vld [vmem:[%s1 + $0x8b0] sm:$0xff]
  %v334 = vld [vmem:[%s1 + $0x8b8] sm:$0xff]
  %v335 = vld [vmem:[%s1 + $0x8c0] sm:$0xff]
  %v336 = vld [vmem:[%s1 + $0x8c8] sm:$0xff]
  %v337 = vld [vmem:[%s1 + $0x8d0] sm:$0xff]
  %v338 = vld [vmem:[%s1 + $0x8d8] sm:$0xff]
  %v339 = vld [vmem:[%s1 + $0x8e0] sm:$0xff]
  %v340 = vld [vmem:[%s1 + $0x8e8] sm:$0xff]
  %v341 = vld [vmem:[%s1 + $0x8f0] sm:$0xff]
  %v342 = vld [vmem:[%s1 + $0x8f8] sm:$0xff]
  %v343 = vld [vmem:[%s1 + $0x900] sm:$0xff]
  %v344 = vld [vmem:[%s1 + $0x908] sm:$0xff]
  %v345 = vld [vmem:[%s1 + $0x910] sm:$0xff]
  %v346 = vld [vmem:[%s1 + $0x918] sm:$0xff]
  %v347 = vld [vmem:[%s1 + $0x920] sm:$0xff]
  %v348 = vld [vmem:[%s1 + $0x928] sm:$0xff]
  %v349 = vld [vmem:[%s1 + $0x930] sm:$0xff]
  %v350 = vld [vmem:[%s1 + $0x938] sm:$0xff]
  %v351 = vld [vmem:[%s1 + $0x940] sm:$0xff]
  %v352 = vld [vmem:[%s1 + $0x948] sm:$0xff]
  %v353 = vld [vmem:[%s1 + $0x950] sm:$0xff]
  %v354 = vld [vmem:[%s1 + $0x958] sm:$0xff]
  %v355 = vld [vmem:[%s1 + $0x960] sm:$0xff]
  %v356 = vld [vmem:[%s1 + $0x968] sm:$0xff]
  %v357 = vld [vmem:[%s1 + $0x970] sm:$0xff]
  %v358 = vld [vmem:[%s1 + $0x978] sm:$0xff]
  %v359 = vld [vmem:[%s1 + $0x980] sm:$0xff]
  %v360 = vld [vmem:[%s1 + $0x988] sm:$0xff]
  %v361 = vld [vmem:[%s1 + $0x990] sm:$0xff]
  %v362 = vld [vmem:[%s1 + $0x998] sm:$0xff]
  %v363 = vld [vmem:[%s1 + $0x9a0] sm:$0xff]
  %v364 = vld [vmem:[%s1 + $0x9a8] sm:$0xff]
  %v365 = vld [vmem:[%s1 + $0x9b0] sm:$0xff]
  %v366 = vld [vmem:[%s1 + $0x9b8] sm:$0xff]
  %v367 = vld [vmem:[%s1 + $0x9c0] sm:$0xff]
  %v368 = vld [vmem:[%s1 + $0x9c8] sm:$0xff]
  %v369 = vld [vmem:[%s1 + $0x9d0] sm:$0xff]
  %v370 = vld [vmem:[%s1 + $0x9d8] sm:$0xff]
  %v371 = vld [vmem:[%s1 + $0x9e0] sm:$0xff]
  %v372 = vld [vmem:[%s1 + $0x9e8] sm:$0xff]
  %v373 = vld [vmem:[%s1 + $0x9f0] sm:$0xff]
  %v374 = vld [vmem:[%s1 + $0x9f8] sm:$0xff]
  %v375 = vld [vmem:[%s1 + $0xa00] sm:$0xff]
  %v376 = vld [vmem:[%s1 + $0xa08] sm:$0xff]
  %v377 = vld [vmem:[%s1 + $0xa10] sm:$0xff]
  %v378 = vld [vmem:[%s1 + $0xa18] sm:$0xff]
  %v379 = vld [vmem:[%s1 + $0xa20] sm:$0xff]
  %v380 = vld [vmem:[%s1 + $0xa28] sm:$0xff]
  %v381 = vld [vmem:[%s1 + $0xa30] sm:$0xff]
  %v382 = vld [vmem:[%s1 + $0xa38] sm:$0xff]
  %v383 = vld [vmem:[%s1 + $0xa40] sm:$0xff]
  %v384 = vld [vmem:[%s1 + $0xa48] sm:$0xff]
  %v385 = vld [vmem:[%s1 + $0xa50] sm:$0xff]
  %v386 = vld [vmem:[%s1 + $0xa58] sm:$0xff]
  %v387 = vld [vmem:[%s1 + $0xa60] sm:$0xff]
  %v388 = vld [vmem:[%s1 + $0xa68] sm:$0xff]
  %v389 = vld [vmem:[%s1 + $0xa70] sm:$0xff]
  %v390 = vld [vmem:[%s1 + $0xa78] sm:$0xff]
  %v391 = vld [vmem:[%s1 + $0xa80] sm:$0xff]
  %v392 = vld [vmem:[%s1 + $0xa88] sm:$0xff]
  %v393 = vld [vmem:[%s1 + $0xa90] sm:$0xff]
  %v394 = vld [vmem:[%s1 + $0xa98] sm:$0xff]
  %v395 = vld [vmem:[%s1 + $0xaa0] sm:$0xff]
  %v396 = vld [vmem:[%s1 + $0xaa8] sm:$0xff]
  %v397 = vld [vmem:[%s1 + $0xab0] sm:$0xff]
  %v398 = vld [vmem:[%s1 + $0xab8] sm:$0xff]
  %v399 = vld [vmem:[%s1 + $0xac0] sm:$0xff]
  %v400 = vld [vmem:[%s1 + $0xac8] sm:$0xff]
  %v401 = vld [vmem:[%s1 + $0xad0] sm:$0xff]
  %v402 = vld [vmem:[%s1 + $0xad8] sm:$0xff]
  %v403 = vld [vmem:[%s1 + $0xae0] sm:$0xff]
  %v404 = vld [vmem:[%s1 + $0xae8] sm:$0xff]
  %v405 = vld [vmem:[%s1 + $0xaf0] sm:$0xff]
  %v406 = vld [vmem:[%s1 + $0xaf8] sm:$0xff]
  %v407 = vld [vmem:[%s1 + $0xb00] sm:$0xff]
  %v408 = vld [vmem:[%s1 + $0xb08] sm:$0xff]
  %v409 = vld [vmem:[%s1 + $0xb10] sm:$0xff]
  %v410 = vld [vmem:[%s1 + $0xb18] sm:$0xff]
  %v411 = vld [vmem:[%s1 + $0xb20] sm:$0xff]
  %v412 = vld [vmem:[%s1 + $0xb28] sm:$0xff]
  %v413 = vld [vmem:[%s1 + $0xb30] sm:$0xff]
  %v414 = vld [vmem:[%s1 + $0xb38] sm:$0xff]
  %v415 = vld [vmem:[%s1 + $0xb40] sm:$0xff]
  %v416 = vld [vmem:[%s1 + $0xb48] sm:$0xff]
  %v417 = vld [vmem:[%s1 + $0xb50] sm:$0xff]
  %v418 = vld [vmem:[%s1 + $0xb58] sm:$0xff]
  %v419 = vld [vmem:[%s1 + $0xb60] sm:$0xff]
  %v420 = vld [vmem:[%s1 + $0xb68] sm:$0xff]
  %v421 = vld [vmem:[%s1 + $0xb70] sm:$0xff]
  %v422 = vld [vmem:[%s1 + $0xb78] sm:$0xff]
  %v423 = vld [vmem:[%s1 + $0xb80] sm:$0xff]
  %v424 = vld [vmem:[%s1 + $0xb88] sm:$0xff]
  %v425 = vld [vmem:[%s1 + $0xb90] sm:$0xff]
  %v426 = vld [vmem:[%s1 + $0xb98] sm:$0xff]
  %v427 = vld [vmem:[%s1 + $0xba0] sm:$0xff]
  %v428 = vld [vmem:[%s1 + $0xba8] sm:$0xff]
  %v429 = vld [vmem:[%s1 + $0xbb0] sm:$0xff]
  %v430 = vld [vmem:[%s1 + $0xbb8] sm:$0xff]
  %v431 = vld [vmem:[%s1 + $0xbc0] sm:$0xff]
  %v432 = vld [vmem:[%s1 + $0xbc8] sm:$0xff]
  %v433 = vld [vmem:[%s1 + $0xbd0] sm:$0xff]
  %v434 = vld [vmem:[%s1 + $0xbd8] sm:$0xff]
  %v435 = vld [vmem:[%s1 + $0xbe0] sm:$0xff]
  %v436 = vld [vmem:[%s1 + $0xbe8] sm:$0xff]
  %v437 = vld [vmem:[%s1 + $0xbf0] sm:$0xff]
  %v438 = vld [vmem:[%s1 + $0xbf8] sm:$0xff]
  %v439 = vld [vmem:[%s1 + $0xc00] sm:$0xff]
  %v440 = vld [vmem:[%s1 + $0xc08] sm:$0xff]
  %v441 = vld [vmem:[%s1 + $0xc10] sm:$0xff]
  %v442 = vld [vmem:[%s1 + $0xc18] sm:$0xff]
  %v443 = vld [vmem:[%s1 + $0xc20] sm:$0xff]
  %v444 = vld [vmem:[%s1 + $0xc28] sm:$0xff]
  %v445 = vld [vmem:[%s1 + $0xc30] sm:$0xff]
  %v446 = vld [vmem:[%s1 + $0xc38] sm:$0xff]
  %v447 = vld [vmem:[%s1 + $0xc40] sm:$0xff]
  %v448 = vld [vmem:[%s1 + $0xc48] sm:$0xff]
  %v449 = vld [vmem:[%s1 + $0xc50] sm:$0xff]
  %v450 = vld [vmem:[%s1 + $0xc58] sm:$0xff]
  %v451 = vld [vmem:[%s1 + $0xc60] sm:$0xff]
  %v452 = vld [vmem:[%s1 + $0xc68] sm:$0xff]
  %v453 = vld [vmem:[%s1 + $0xc70] sm:$0xff]
  %v454 = vld [vmem:[%s1 + $0xc78] sm:$0xff]
  %v455 = vld [vmem:[%s1 + $0xc80] sm:$0xff]
  %v456 = vld [vmem:[%s1 + $0xc88] sm:$0xff]
  %v457 = vld [vmem:[%s1 + $0xc90] sm:$0xff]
  %v458 = vld [vmem:[%s1 + $0xc98] sm:$0xff]
  %v459 = vld [vmem:[%s1 + $0xca0] sm:$0xff]
  %v460 = vld [vmem:[%s1 + $0xca8] sm:$0xff]
  %v461 = vld [vmem:[%s1 + $0xcb0] sm:$0xff]
  %v462 = vld [vmem:[%s1 + $0xcb8] sm:$0xff]
  %v463 = vld [vmem:[%s1 + $0xcc0] sm:$0xff]
  %v464 = vld [vmem:[%s1 + $0xcc8] sm:$0xff]
  %v465 = vld [vmem:[%s1 + $0xcd0] sm:$0xff]
  %v466 = vld [vmem:[%s1 + $0xcd8] sm:$0xff]
  %v467 = vld [vmem:[%s1 + $0xce0] sm:$0xff]
  %v468 = vld [vmem:[%s1 + $0xce8] sm:$0xff]
  %v469 = vld [vmem:[%s1 + $0xcf0] sm:$0xff]
  %v470 = vld [vmem:[%s1 + $0xcf8] sm:$0xff]
  %v471 = vld [vmem:[%s1 + $0xd00] sm:$0xff]
  %v472 = vld [vmem:[%s1 + $0xd08] sm:$0xff]
  %v473 = vld [vmem:[%s1 + $0xd10] sm:$0xff]
  %v474 = vld [vmem:[%s1 + $0xd18] sm:$0xff]
  %v475 = vld [vmem:[%s1 + $0xd20] sm:$0xff]
  %v476 = vld [vmem:[%s1 + $0xd28] sm:$0xff]
  %v477 = vld [vmem:[%s1 + $0xd30] sm:$0xff]
  %v478 = vld [vmem:[%s1 + $0xd38] sm:$0xff]
  %v479 = vld [vmem:[%s1 + $0xd40] sm:$0xff]
  %v480 = vld [vmem:[%s1 + $0xd48] sm:$0xff]
  %v481 = vld [vmem:[%s1 + $0xd50] sm:$0xff]
  %v482 = vld [vmem:[%s1 + $0xd58] sm:$0xff]
  %v483 = vld [vmem:[%s1 + $0xd60] sm:$0xff]
  %v484 = vld [vmem:[%s1 + $0xd68] sm:$0xff]
  %v485 = vld [vmem:[%s1 + $0xd70] sm:$0xff]
  %v486 = vld [vmem:[%s1 + $0xd78] sm:$0xff]
  %v487 = vld [vmem:[%s1 + $0xd80] sm:$0xff]
  %v488 = vld [vmem:[%s1 + $0xd88] sm:$0xff]
  %v489 = vld [vmem:[%s1 + $0xd90] sm:$0xff]
  %v490 = vld [vmem:[%s1 + $0xd98] sm:$0xff]
  %v491 = vld [vmem:[%s1 + $0xda0] sm:$0xff]
  %v492 = vld [vmem:[%s1 + $0xda8] sm:$0xff]
  %v493 = vld [vmem:[%s1 + $0xdb0] sm:$0xff]
  %v494 = vld [vmem:[%s1 + $0xdb8] sm:$0xff]
  %v495 = vld [vmem:[%s1 + $0xdc0] sm:$0xff]
  %v496 = vld [vmem:[%s1 + $0xdc8] sm:$0xff]
  %v497 = vld [vmem:[%s1 + $0xdd0] sm:$0xff]
  %v498 = vld [vmem:[%s1 + $0xdd8] sm:$0xff]
  %v499 = vld [vmem:[%s1 + $0xde0] sm:$0xff]
  %v500 = vld [vmem:[%s1 + $0xde8] sm:$0xff]
  %v501 = vld [vmem:[%s1 + $0xdf0] sm:$0xff]
  %v502 = vld [vmem:[%s1 + $0xdf8] sm:$0xff]
  %v503 = vld [vmem:[%s1 + $0xe00] sm:$0xff]
  %v504 = vld [vmem:[%s1 + $0xe08] sm:$0xff]
  %v505 = vld [vmem:[%s1 + $0xe10] sm:$0xff]
  %v506 = vld [vmem:[%s1 + $0xe18] sm:$0xff]
  %v507 = vld [vmem:[%s1 + $0xe20] sm:$0xff]
  %v508 = vld [vmem:[%s1 + $0xe28] sm:$0xff]
  %v509 = vld [vmem:[%s1 + $0xe30] sm:$0xff]
  %v510 = vld [vmem:[%s1 + $0xe38] sm:$0xff]
  %v511 = vld [vmem:[%s1 + $0xe40] sm:$0xff]
  %v512 = vld [vmem:[%s1 + $0xe48] sm:$0xff]
  %v513 = vld [vmem:[%s1 + $0xe50] sm:$0xff]
  %v514 = vld [vmem:[%s1 + $0xe58] sm:$0xff]
  %v515 = vld [vmem:[%s1 + $0xe60] sm:$0xff]
  %v516 = vld [vmem:[%s1 + $0xe68] sm:$0xff]
  %v517 = vld [vmem:[%s1 + $0xe70] sm:$0xff]
  %v518 = vld [vmem:[%s1 + $0xe78] sm:$0xff]
  %v519 = vld [vmem:[%s1 + $0xe80] sm:$0xff]
  %v520 = vld [vmem:[%s1 + $0xe88] sm:$0xff]
  %v521 = vld [vmem:[%s1 + $0xe90] sm:$0xff]
  %v522 = vld [vmem:[%s1 + $0xe98] sm:$0xff]
  %v523 = vld [vmem:[%s1 + $0xea0] sm:$0xff]
  %v524 = vld [vmem:[%s1 + $0xea8] sm:$0xff]
  %v525 = vld [vmem:[%s1 + $0xeb0] sm:$0xff]
  %v526 = vld [vmem:[%s1 + $0xeb8] sm:$0xff]
  %v527 = vld [vmem:[%s1 + $0xec0] sm:$0xff]
  %v528 = vld [vmem:[%s1 + $0xec8] sm:$0xff]
  %v529 = vld [vmem:[%s1 + $0xed0] sm:$0xff]
  %v530 = vld [vmem:[%s1 + $0xed8] sm:$0xff]
  %v531 = vld [vmem:[%s1 + $0xee0] sm:$0xff]
  %v532 = vld [vmem:[%s1 + $0xee8] sm:$0xff]
  %v533 = vld [vmem:[%s1 + $0xef0] sm:$0xff]
  %v534 = vld [vmem:[%s1 + $0xef8] sm:$0xff]
  %v535 = vld [vmem:[%s1 + $0xf00] sm:$0xff]
  %v536 = vld [vmem:[%s1 + $0xf08] sm:$0xff]
  %v537 = vld [vmem:[%s1 + $0xf10] sm:$0xff]
  %v538 = vld [vmem:[%s1 + $0xf18] sm:$0xff]
  %v539 = vld [vmem:[%s1 + $0xf20] sm:$0xff]
  %v540 = vld [vmem:[%s1 + $0xf28] sm:$0xff]
  %v541 = vld [vmem:[%s1 + $0xf30] sm:$0xff]
  %v542 = vld [vmem:[%s1 + $0xf38] sm:$0xff]
  %v543 = vld [vmem:[%s1 + $0xf40] sm:$0xff]
  %v544 = vld [vmem:[%s1 + $0xf48] sm:$0xff]
  %v545 = vld [vmem:[%s1 + $0xf50] sm:$0xff]
  %v546 = vld [vmem:[%s1 + $0xf58] sm:$0xff]
  %v547 = vld [vmem:[%s1 + $0xf60] sm:$0xff]
  %v548 = vld [vmem:[%s1 + $0xf68] sm:$0xff]
  %v549 = vld [vmem:[%s1 + $0xf70] sm:$0xff]
  %v550 = vld [vmem:[%s1 + $0xf78] sm:$0xff]
  %v551 = vld [vmem:[%s1 + $0xf80] sm:$0xff]
  %v552 = vld [vmem:[%s1 + $0xf88] sm:$0xff]
  %v553 = vld [vmem:[%s1 + $0xf90] sm:$0xff]
  %v554 = vld [vmem:[%s1 + $0xf98] sm:$0xff]
  %v555 = vld [vmem:[%s1 + $0xfa0] sm:$0xff]
  %v556 = vld [vmem:[%s1 + $0xfa8] sm:$0xff]
  %v557 = vld [vmem:[%s1 + $0xfb0] sm:$0xff]
  %v558 = vld [vmem:[%s1 + $0xfb8] sm:$0xff]
  %v559 = vld [vmem:[%s1 + $0xfc0] sm:$0xff]
  %v560 = vld [vmem:[%s1 + $0xfc8] sm:$0xff]
  %v561 = vld [vmem:[%s1 + $0xfd0] sm:$0xff]
  %v562 = vld [vmem:[%s1 + $0xfd8] sm:$0xff]
  %v563 = vld [vmem:[%s1 + $0xfe0] sm:$0xff]
  %v564 = vld [vmem:[%s1 + $0xfe8] sm:$0xff]
  %v565 = vld [vmem:[%s1 + $0xff0] sm:$0xff]
  %v566 = vld [vmem:[%s1 + $0xff8] sm:$0xff]
  %v567 = vld [vmem:[%s1 + $0x1000] sm:$0xff]
  %v568 = vld [vmem:[%s1 + $0x1008] sm:$0xff]
  %v569 = vld [vmem:[%s1 + $0x1010] sm:$0xff]
  %v570 = vld [vmem:[%s1 + $0x1018] sm:$0xff]
  %v571 = vld [vmem:[%s1 + $0x1020] sm:$0xff]
  %v572 = vld [vmem:[%s1 + $0x1028] sm:$0xff]
  %v573 = vld [vmem:[%s1 + $0x1030] sm:$0xff]
  %v574 = vld [vmem:[%s1 + $0x1038] sm:$0xff]
  %v575 = vld [vmem:[%s1 + $0x1040] sm:$0xff]
  %v576 = vld [vmem:[%s1 + $0x1048] sm:$0xff]
  %v577 = vld [vmem:[%s1 + $0x1050] sm:$0xff]
  %v578 = vld [vmem:[%s1 + $0x1058] sm:$0xff]
  %v579 = vld [vmem:[%s1 + $0x1060] sm:$0xff]
  %v580 = vld [vmem:[%s1 + $0x1068] sm:$0xff]
  %v581 = vld [vmem:[%s1 + $0x1070] sm:$0xff]
  %v582 = vld [vmem:[%s1 + $0x1078] sm:$0xff]
  %v583 = vld [vmem:[%s1 + $0x1080] sm:$0xff]
  %v584 = vld [vmem:[%s1 + $0x1088] sm:$0xff]
  %v585 = vld [vmem:[%s1 + $0x1090] sm:$0xff]
  %v586 = vld [vmem:[%s1 + $0x1098] sm:$0xff]
  %v587 = vld [vmem:[%s1 + $0x10a0] sm:$0xff]
  %v588 = vld [vmem:[%s1 + $0x10a8] sm:$0xff]
  %v589 = vld [vmem:[%s1 + $0x10b0] sm:$0xff]
  %v590 = vld [vmem:[%s1 + $0x10b8] sm:$0xff]
  %v591 = vld [vmem:[%s1 + $0x10c0] sm:$0xff]
  %v592 = vld [vmem:[%s1 + $0x10c8] sm:$0xff]
  %v593 = vld [vmem:[%s1 + $0x10d0] sm:$0xff]
  %v594 = vld [vmem:[%s1 + $0x10d8] sm:$0xff]
  %v595 = vld [vmem:[%s1 + $0x10e0] sm:$0xff]
  %v596 = vld [vmem:[%s1 + $0x10e8] sm:$0xff]
  %v597 = vld [vmem:[%s1 + $0x10f0] sm:$0xff]
  %v598 = vld [vmem:[%s1 + $0x10f8] sm:$0xff]
  %v599 = vld [vmem:[%s1 + $0x1100] sm:$0xff]
  %v600 = vld [vmem:[%s1 + $0x1108] sm:$0xff]
  %v601 = vld [vmem:[%s1 + $0x1110] sm:$0xff]
  %v602 = vld [vmem:[%s1 + $0x1118] sm:$0xff]
  %v603 = vld [vmem:[%s1 + $0x1120] sm:$0xff]
  %v604 = vld [vmem:[%s1 + $0x1128] sm:$0xff]
  %v605 = vld [vmem:[%s1 + $0x1130] sm:$0xff]
  %v606 = vld [vmem:[%s1 + $0x1138] sm:$0xff]
  %v607 = vld [vmem:[%s1 + $0x1140] sm:$0xff]
  %v608 = vld [vmem:[%s1 + $0x1148] sm:$0xff]
  %v609 = vld [vmem:[%s1 + $0x1150] sm:$0xff]
  %v610 = vld [vmem:[%s1 + $0x1158] sm:$0xff]
  %v611 = vld [vmem:[%s1 + $0x1160] sm:$0xff]
  %v612 = vld [vmem:[%s1 + $0x1168] sm:$0xff]
  %v613 = vld [vmem:[%s1 + $0x1170] sm:$0xff]
  %v614 = vld [vmem:[%s1 + $0x1178] sm:$0xff]
  %v615 = vld [vmem:[%s1 + $0x1180] sm:$0xff]
  %v616 = vld [vmem:[%s1 + $0x1188] sm:$0xff]
  %v617 = vld [vmem:[%s1 + $0x1190] sm:$0xff]
  %v618 = vld [vmem:[%s1 + $0x1198] sm:$0xff]
  %v619 = vld [vmem:[%s1 + $0x11a0] sm:$0xff]
  %v620 = vld [vmem:[%s1 + $0x11a8] sm:$0xff]
  %v621 = vld [vmem:[%s1 + $0x11b0] sm:$0xff]
  %v622 = vld [vmem:[%s1 + $0x11b8] sm:$0xff]
  %v623 = vld [vmem:[%s1 + $0x11c0] sm:$0xff]
  %v624 = vld [vmem:[%s1 + $0x11c8] sm:$0xff]
  %v625 = vld [vmem:[%s1 + $0x11d0] sm:$0xff]
  %v626 = vld [vmem:[%s1 + $0x11d8] sm:$0xff]
  %v627 = vld [vmem:[%s1 + $0x11e0] sm:$0xff]
  %v628 = vld [vmem:[%s1 + $0x11e8] sm:$0xff]
  %v629 = vld [vmem:[%s1 + $0x11f0] sm:$0xff]
  %v630 = vld [vmem:[%s1 + $0x11f8] sm:$0xff]
  %v631 = vld [vmem:[%s2] sm:$0xf]
  %v633 = vlaneseq
  %v634 = vshrl.u32 %v633, 7
  %v635 = vsub.s32 0, %v634
  %v636 = vrot.slane %v631, %v635
  %v637 = vlaneseq
  %v638 = vshrl.u32 %v637, 7
  %v639 = vsub.s32 1, %v638
  %v640 = vrot.slane %v631, %v639
  %v641 = vlaneseq
  %v642 = vshrl.u32 %v641, 7
  %v643 = vsub.s32 2, %v642
  %v644 = vrot.slane %v631, %v643
  %v645 = vlaneseq
  %v646 = vshrl.u32 %v645, 7
  %v647 = vsub.s32 3, %v646
  %v648 = vrot.slane %v631, %v647
  %v662 = vunpack.c.l.b16 %v46
  %v663 = vunpack.c.h.b16 %v46
  %v664 = vunpack.c.l.b16 %v47
  %v665 = vunpack.c.h.b16 %v47
  %v666 = vunpack.c.l.b16 %v48
  %v667 = vunpack.c.h.b16 %v48
  %v668 = vunpack.c.l.b16 %v49
  %v669 = vunpack.c.h.b16 %v49
  %v670 = vunpack.c.l.b16 %v50
  %v671 = vunpack.c.h.b16 %v50
  %v672 = vunpack.c.l.b16 %v51
  %v673 = vunpack.c.h.b16 %v51
  %v674 = vunpack.c.l.b16 %v52
  %v675 = vunpack.c.h.b16 %v52
  %v676 = vunpack.c.l.b16 %v53
  %v677 = vunpack.c.h.b16 %v53
  %v678 = vunpack.c.l.b16 %v54
  %v679 = vunpack.c.h.b16 %v54
  %v680 = vpack.c.b16 %v662, %v662
  %v681 = vpack.c.b16 %v663, %v663
  %v682 = vpack.c.b16 %v664, %v664
  %v683 = vpack.c.b16 %v665, %v665
  %v684 = vpack.c.b16 %v666, %v666
  %v685 = vpack.c.b16 %v667, %v667
  %v686 = vpack.c.b16 %v668, %v668
  %v687 = vpack.c.b16 %v669, %v669
  %v688 = vpack.c.b16 %v670, %v670
  %v689 = vpack.c.b16 %v671, %v671
  %v690 = vpack.c.b16 %v672, %v672
  %v691 = vpack.c.b16 %v673, %v673
  %v692 = vpack.c.b16 %v674, %v674
  %v693 = vpack.c.b16 %v675, %v675
  %v694 = vpack.c.b16 %v676, %v676
  %v695 = vpack.c.b16 %v677, %v677
  %v696 = vpack.c.b16 %v678, %v678
  %v697 = vpack.c.b16 %v679, %v679
  %v1292 = vunpack.c.l.b16 %v55
  %v1293 = vunpack.c.h.b16 %v55
  %v1294 = vunpack.c.l.b16 %v56
  %v1295 = vunpack.c.h.b16 %v56
  %v1296 = vunpack.c.l.b16 %v57
  %v1297 = vunpack.c.h.b16 %v57
  %v1298 = vunpack.c.l.b16 %v58
  %v1299 = vunpack.c.h.b16 %v58
  %v1300 = vunpack.c.l.b16 %v59
  %v1301 = vunpack.c.h.b16 %v59
  %v1302 = vunpack.c.l.b16 %v60
  %v1303 = vunpack.c.h.b16 %v60
  %v1304 = vunpack.c.l.b16 %v61
  %v1305 = vunpack.c.h.b16 %v61
  %v1306 = vunpack.c.l.b16 %v62
  %v1307 = vunpack.c.h.b16 %v62
  %v1308 = vunpack.c.l.b16 %v63
  %v1309 = vunpack.c.h.b16 %v63
  %v1310 = vunpack.c.l.b16 %v64
  %v1311 = vunpack.c.h.b16 %v64
  %v1312 = vunpack.c.l.b16 %v65
  %v1313 = vunpack.c.h.b16 %v65
  %v1314 = vunpack.c.l.b16 %v66
  %v1315 = vunpack.c.h.b16 %v66
  %v1316 = vunpack.c.l.b16 %v67
  %v1317 = vunpack.c.h.b16 %v67
  %v1318 = vunpack.c.l.b16 %v68
  %v1319 = vunpack.c.h.b16 %v68
  %v1320 = vunpack.c.l.b16 %v69
  %v1321 = vunpack.c.h.b16 %v69
  %v1322 = vunpack.c.l.b16 %v70
  %v1323 = vunpack.c.h.b16 %v70
  %v1324 = vunpack.c.l.b16 %v71
  %v1325 = vunpack.c.h.b16 %v71
  %v1326 = vunpack.c.l.b16 %v72
  %v1327 = vunpack.c.h.b16 %v72
  %v1328 = vunpack.c.l.b16 %v73
  %v1329 = vunpack.c.h.b16 %v73
  %v1330 = vunpack.c.l.b16 %v74
  %v1331 = vunpack.c.h.b16 %v74
  %v1332 = vunpack.c.l.b16 %v75
  %v1333 = vunpack.c.h.b16 %v75
  %v1334 = vunpack.c.l.b16 %v76
  %v1335 = vunpack.c.h.b16 %v76
  %v1336 = vunpack.c.l.b16 %v77
  %v1337 = vunpack.c.h.b16 %v77
  %v1338 = vunpack.c.l.b16 %v78
  %v1339 = vunpack.c.h.b16 %v78
  %v1340 = vunpack.c.l.b16 %v79
  %v1341 = vunpack.c.h.b16 %v79
  %v1342 = vunpack.c.l.b16 %v80
  %v1343 = vunpack.c.h.b16 %v80
  %v1344 = vunpack.c.l.b16 %v81
  %v1345 = vunpack.c.h.b16 %v81
  %v1346 = vunpack.c.l.b16 %v82
  %v1347 = vunpack.c.h.b16 %v82
  %v1348 = vunpack.c.l.b16 %v83
  %v1349 = vunpack.c.h.b16 %v83
  %v1350 = vunpack.c.l.b16 %v84
  %v1351 = vunpack.c.h.b16 %v84
  %v1352 = vunpack.c.l.b16 %v85
  %v1353 = vunpack.c.h.b16 %v85
  %v1354 = vunpack.c.l.b16 %v86
  %v1355 = vunpack.c.h.b16 %v86
  %v1356 = vunpack.c.l.b16 %v87
  %v1357 = vunpack.c.h.b16 %v87
  %v1358 = vunpack.c.l.b16 %v88
  %v1359 = vunpack.c.h.b16 %v88
  %v1360 = vunpack.c.l.b16 %v89
  %v1361 = vunpack.c.h.b16 %v89
  %v1362 = vunpack.c.l.b16 %v90
  %v1363 = vunpack.c.h.b16 %v90
  %v1364 = vunpack.c.l.b16 %v91
  %v1365 = vunpack.c.h.b16 %v91
  %v1366 = vunpack.c.l.b16 %v92
  %v1367 = vunpack.c.h.b16 %v92
  %v1368 = vunpack.c.l.b16 %v93
  %v1369 = vunpack.c.h.b16 %v93
  %v1370 = vunpack.c.l.b16 %v94
  %v1371 = vunpack.c.h.b16 %v94
  %v1372 = vunpack.c.l.b16 %v95
  %v1373 = vunpack.c.h.b16 %v95
  %v1374 = vunpack.c.l.b16 %v96
  %v1375 = vunpack.c.h.b16 %v96
  %v1376 = vunpack.c.l.b16 %v97
  %v1377 = vunpack.c.h.b16 %v97
  %v1378 = vunpack.c.l.b16 %v98
  %v1379 = vunpack.c.h.b16 %v98
  %v1380 = vunpack.c.l.b16 %v99
  %v1381 = vunpack.c.h.b16 %v99
  %v1382 = vunpack.c.l.b16 %v100
  %v1383 = vunpack.c.h.b16 %v100
  %v1384 = vunpack.c.l.b16 %v101
  %v1385 = vunpack.c.h.b16 %v101
  %v1386 = vunpack.c.l.b16 %v102
  %v1387 = vunpack.c.h.b16 %v102
  %v1388 = vunpack.c.l.b16 %v103
  %v1389 = vunpack.c.h.b16 %v103
  %v1390 = vunpack.c.l.b16 %v104
  %v1391 = vunpack.c.h.b16 %v104
  %v1392 = vunpack.c.l.b16 %v105
  %v1393 = vunpack.c.h.b16 %v105
  %v1394 = vunpack.c.l.b16 %v106
  %v1395 = vunpack.c.h.b16 %v106
  %v1396 = vunpack.c.l.b16 %v107
  %v1397 = vunpack.c.h.b16 %v107
  %v1398 = vunpack.c.l.b16 %v108
  %v1399 = vunpack.c.h.b16 %v108
  %v1400 = vunpack.c.l.b16 %v109
  %v1401 = vunpack.c.h.b16 %v109
  %v1402 = vunpack.c.l.b16 %v110
  %v1403 = vunpack.c.h.b16 %v110
  %v1404 = vunpack.c.l.b16 %v111
  %v1405 = vunpack.c.h.b16 %v111
  %v1406 = vunpack.c.l.b16 %v112
  %v1407 = vunpack.c.h.b16 %v112
  %v1408 = vunpack.c.l.b16 %v113
  %v1409 = vunpack.c.h.b16 %v113
  %v1410 = vunpack.c.l.b16 %v114
  %v1411 = vunpack.c.h.b16 %v114
  %v1412 = vunpack.c.l.b16 %v115
  %v1413 = vunpack.c.h.b16 %v115
  %v1414 = vunpack.c.l.b16 %v116
  %v1415 = vunpack.c.h.b16 %v116
  %v1416 = vunpack.c.l.b16 %v117
  %v1417 = vunpack.c.h.b16 %v117
  %v1418 = vunpack.c.l.b16 %v118
  %v1419 = vunpack.c.h.b16 %v118
  %v1420 = vunpack.c.l.b16 %v119
  %v1421 = vunpack.c.h.b16 %v119
  %v1422 = vunpack.c.l.b16 %v120
  %v1423 = vunpack.c.h.b16 %v120
  %v1424 = vunpack.c.l.b16 %v121
  %v1425 = vunpack.c.h.b16 %v121
  %v1426 = vunpack.c.l.b16 %v122
  %v1427 = vunpack.c.h.b16 %v122
  %v1428 = vunpack.c.l.b16 %v123
  %v1429 = vunpack.c.h.b16 %v123
  %v1430 = vunpack.c.l.b16 %v124
  %v1431 = vunpack.c.h.b16 %v124
  %v1432 = vunpack.c.l.b16 %v125
  %v1433 = vunpack.c.h.b16 %v125
  %v1434 = vunpack.c.l.b16 %v126
  %v1435 = vunpack.c.h.b16 %v126
  %v1436 = vunpack.c.l.b16 %v127
  %v1437 = vunpack.c.h.b16 %v127
  %v1438 = vunpack.c.l.b16 %v128
  %v1439 = vunpack.c.h.b16 %v128
  %v1440 = vunpack.c.l.b16 %v129
  %v1441 = vunpack.c.h.b16 %v129
  %v1442 = vunpack.c.l.b16 %v130
  %v1443 = vunpack.c.h.b16 %v130
  %v1444 = vunpack.c.l.b16 %v131
  %v1445 = vunpack.c.h.b16 %v131
  %v1446 = vunpack.c.l.b16 %v132
  %v1447 = vunpack.c.h.b16 %v132
  %v1448 = vunpack.c.l.b16 %v133
  %v1449 = vunpack.c.h.b16 %v133
  %v1450 = vunpack.c.l.b16 %v134
  %v1451 = vunpack.c.h.b16 %v134
  %v1452 = vunpack.c.l.b16 %v135
  %v1453 = vunpack.c.h.b16 %v135
  %v1454 = vunpack.c.l.b16 %v136
  %v1455 = vunpack.c.h.b16 %v136
  %v1456 = vunpack.c.l.b16 %v137
  %v1457 = vunpack.c.h.b16 %v137
  %v1458 = vunpack.c.l.b16 %v138
  %v1459 = vunpack.c.h.b16 %v138
  %v1460 = vunpack.c.l.b16 %v139
  %v1461 = vunpack.c.h.b16 %v139
  %v1462 = vunpack.c.l.b16 %v140
  %v1463 = vunpack.c.h.b16 %v140
  %v1464 = vunpack.c.l.b16 %v141
  %v1465 = vunpack.c.h.b16 %v141
  %v1466 = vunpack.c.l.b16 %v142
  %v1467 = vunpack.c.h.b16 %v142
  %v1468 = vunpack.c.l.b16 %v143
  %v1469 = vunpack.c.h.b16 %v143
  %v1470 = vunpack.c.l.b16 %v144
  %v1471 = vunpack.c.h.b16 %v144
  %v1472 = vunpack.c.l.b16 %v145
  %v1473 = vunpack.c.h.b16 %v145
  %v1474 = vunpack.c.l.b16 %v146
  %v1475 = vunpack.c.h.b16 %v146
  %v1476 = vunpack.c.l.b16 %v147
  %v1477 = vunpack.c.h.b16 %v147
  %v1478 = vunpack.c.l.b16 %v148
  %v1479 = vunpack.c.h.b16 %v148
  %v1480 = vunpack.c.l.b16 %v149
  %v1481 = vunpack.c.h.b16 %v149
  %v1482 = vunpack.c.l.b16 %v150
  %v1483 = vunpack.c.h.b16 %v150
  %v1484 = vunpack.c.l.b16 %v151
  %v1485 = vunpack.c.h.b16 %v151
  %v1486 = vunpack.c.l.b16 %v152
  %v1487 = vunpack.c.h.b16 %v152
  %v1488 = vunpack.c.l.b16 %v153
  %v1489 = vunpack.c.h.b16 %v153
  %v1490 = vunpack.c.l.b16 %v154
  %v1491 = vunpack.c.h.b16 %v154
  %v1492 = vunpack.c.l.b16 %v155
  %v1493 = vunpack.c.h.b16 %v155
  %v1494 = vunpack.c.l.b16 %v156
  %v1495 = vunpack.c.h.b16 %v156
  %v1496 = vunpack.c.l.b16 %v157
  %v1497 = vunpack.c.h.b16 %v157
  %v1498 = vunpack.c.l.b16 %v158
  %v1499 = vunpack.c.h.b16 %v158
  %v1500 = vunpack.c.l.b16 %v159
  %v1501 = vunpack.c.h.b16 %v159
  %v1502 = vunpack.c.l.b16 %v160
  %v1503 = vunpack.c.h.b16 %v160
  %v1504 = vunpack.c.l.b16 %v161
  %v1505 = vunpack.c.h.b16 %v161
  %v1506 = vunpack.c.l.b16 %v162
  %v1507 = vunpack.c.h.b16 %v162
  %v1508 = vunpack.c.l.b16 %v163
  %v1509 = vunpack.c.h.b16 %v163
  %v1510 = vunpack.c.l.b16 %v164
  %v1511 = vunpack.c.h.b16 %v164
  %v1512 = vunpack.c.l.b16 %v165
  %v1513 = vunpack.c.h.b16 %v165
  %v1514 = vunpack.c.l.b16 %v166
  %v1515 = vunpack.c.h.b16 %v166
  %v1516 = vunpack.c.l.b16 %v167
  %v1517 = vunpack.c.h.b16 %v167
  %v1518 = vunpack.c.l.b16 %v168
  %v1519 = vunpack.c.h.b16 %v168
  %v1520 = vunpack.c.l.b16 %v169
  %v1521 = vunpack.c.h.b16 %v169
  %v1522 = vunpack.c.l.b16 %v170
  %v1523 = vunpack.c.h.b16 %v170
  %v1524 = vunpack.c.l.b16 %v171
  %v1525 = vunpack.c.h.b16 %v171
  %v1526 = vunpack.c.l.b16 %v172
  %v1527 = vunpack.c.h.b16 %v172
  %v1528 = vunpack.c.l.b16 %v173
  %v1529 = vunpack.c.h.b16 %v173
  %v1530 = vunpack.c.l.b16 %v174
  %v1531 = vunpack.c.h.b16 %v174
  %v1532 = vunpack.c.l.b16 %v175
  %v1533 = vunpack.c.h.b16 %v175
  %v1534 = vunpack.c.l.b16 %v176
  %v1535 = vunpack.c.h.b16 %v176
  %v1536 = vunpack.c.l.b16 %v177
  %v1537 = vunpack.c.h.b16 %v177
  %v1538 = vunpack.c.l.b16 %v178
  %v1539 = vunpack.c.h.b16 %v178
  %v1540 = vunpack.c.l.b16 %v179
  %v1541 = vunpack.c.h.b16 %v179
  %v1542 = vunpack.c.l.b16 %v180
  %v1543 = vunpack.c.h.b16 %v180
  %v1544 = vunpack.c.l.b16 %v181
  %v1545 = vunpack.c.h.b16 %v181
  %v1546 = vunpack.c.l.b16 %v182
  %v1547 = vunpack.c.h.b16 %v182
  %v1548 = vunpack.c.l.b16 %v183
  %v1549 = vunpack.c.h.b16 %v183
  %v1550 = vunpack.c.l.b16 %v184
  %v1551 = vunpack.c.h.b16 %v184
  %v1552 = vunpack.c.l.b16 %v185
  %v1553 = vunpack.c.h.b16 %v185
  %v1554 = vunpack.c.l.b16 %v186
  %v1555 = vunpack.c.h.b16 %v186
  %v1556 = vunpack.c.l.b16 %v187
  %v1557 = vunpack.c.h.b16 %v187
  %v1558 = vunpack.c.l.b16 %v188
  %v1559 = vunpack.c.h.b16 %v188
  %v1560 = vunpack.c.l.b16 %v189
  %v1561 = vunpack.c.h.b16 %v189
  %v1562 = vunpack.c.l.b16 %v190
  %v1563 = vunpack.c.h.b16 %v190
  %v1564 = vunpack.c.l.b16 %v191
  %v1565 = vunpack.c.h.b16 %v191
  %v1566 = vunpack.c.l.b16 %v192
  %v1567 = vunpack.c.h.b16 %v192
  %v1568 = vunpack.c.l.b16 %v193
  %v1569 = vunpack.c.h.b16 %v193
  %v1570 = vunpack.c.l.b16 %v194
  %v1571 = vunpack.c.h.b16 %v194
  %v1572 = vunpack.c.l.b16 %v195
  %v1573 = vunpack.c.h.b16 %v195
  %v1574 = vunpack.c.l.b16 %v196
  %v1575 = vunpack.c.h.b16 %v196
  %v1576 = vunpack.c.l.b16 %v197
  %v1577 = vunpack.c.h.b16 %v197
  %v1578 = vunpack.c.l.b16 %v198
  %v1579 = vunpack.c.h.b16 %v198
  %v1580 = vunpack.c.l.b16 %v199
  %v1581 = vunpack.c.h.b16 %v199
  %v1582 = vunpack.c.l.b16 %v200
  %v1583 = vunpack.c.h.b16 %v200
  %v1584 = vunpack.c.l.b16 %v201
  %v1585 = vunpack.c.h.b16 %v201
  %v1586 = vunpack.c.l.b16 %v202
  %v1587 = vunpack.c.h.b16 %v202
  %v1588 = vunpack.c.l.b16 %v203
  %v1589 = vunpack.c.h.b16 %v203
  %v1590 = vunpack.c.l.b16 %v204
  %v1591 = vunpack.c.h.b16 %v204
  %v1592 = vunpack.c.l.b16 %v205
  %v1593 = vunpack.c.h.b16 %v205
  %v1594 = vunpack.c.l.b16 %v206
  %v1595 = vunpack.c.h.b16 %v206
  %v1596 = vunpack.c.l.b16 %v207
  %v1597 = vunpack.c.h.b16 %v207
  %v1598 = vunpack.c.l.b16 %v208
  %v1599 = vunpack.c.h.b16 %v208
  %v1600 = vunpack.c.l.b16 %v209
  %v1601 = vunpack.c.h.b16 %v209
  %v1602 = vunpack.c.l.b16 %v210
  %v1603 = vunpack.c.h.b16 %v210
  %v1604 = vunpack.c.l.b16 %v211
  %v1605 = vunpack.c.h.b16 %v211
  %v1606 = vunpack.c.l.b16 %v212
  %v1607 = vunpack.c.h.b16 %v212
  %v1608 = vunpack.c.l.b16 %v213
  %v1609 = vunpack.c.h.b16 %v213
  %v1610 = vunpack.c.l.b16 %v214
  %v1611 = vunpack.c.h.b16 %v214
  %v1612 = vunpack.c.l.b16 %v215
  %v1613 = vunpack.c.h.b16 %v215
  %v1614 = vunpack.c.l.b16 %v216
  %v1615 = vunpack.c.h.b16 %v216
  %v1616 = vunpack.c.l.b16 %v217
  %v1617 = vunpack.c.h.b16 %v217
  %v1618 = vunpack.c.l.b16 %v218
  %v1619 = vunpack.c.h.b16 %v218
  %v1620 = vunpack.c.l.b16 %v219
  %v1621 = vunpack.c.h.b16 %v219
  %v1622 = vunpack.c.l.b16 %v220
  %v1623 = vunpack.c.h.b16 %v220
  %v1624 = vunpack.c.l.b16 %v221
  %v1625 = vunpack.c.h.b16 %v221
  %v1626 = vunpack.c.l.b16 %v222
  %v1627 = vunpack.c.h.b16 %v222
  %v1628 = vunpack.c.l.b16 %v223
  %v1629 = vunpack.c.h.b16 %v223
  %v1630 = vunpack.c.l.b16 %v224
  %v1631 = vunpack.c.h.b16 %v224
  %v1632 = vunpack.c.l.b16 %v225
  %v1633 = vunpack.c.h.b16 %v225
  %v1634 = vunpack.c.l.b16 %v226
  %v1635 = vunpack.c.h.b16 %v226
  %v1636 = vunpack.c.l.b16 %v227
  %v1637 = vunpack.c.h.b16 %v227
  %v1638 = vunpack.c.l.b16 %v228
  %v1639 = vunpack.c.h.b16 %v228
  %v1640 = vunpack.c.l.b16 %v229
  %v1641 = vunpack.c.h.b16 %v229
  %v1642 = vunpack.c.l.b16 %v230
  %v1643 = vunpack.c.h.b16 %v230
  %v1644 = vunpack.c.l.b16 %v231
  %v1645 = vunpack.c.h.b16 %v231
  %v1646 = vunpack.c.l.b16 %v232
  %v1647 = vunpack.c.h.b16 %v232
  %v1648 = vunpack.c.l.b16 %v233
  %v1649 = vunpack.c.h.b16 %v233
  %v1650 = vunpack.c.l.b16 %v234
  %v1651 = vunpack.c.h.b16 %v234
  %v1652 = vunpack.c.l.b16 %v235
  %v1653 = vunpack.c.h.b16 %v235
  %v1654 = vunpack.c.l.b16 %v236
  %v1655 = vunpack.c.h.b16 %v236
  %v1656 = vunpack.c.l.b16 %v237
  %v1657 = vunpack.c.h.b16 %v237
  %v1658 = vunpack.c.l.b16 %v238
  %v1659 = vunpack.c.h.b16 %v238
  %v1660 = vunpack.c.l.b16 %v239
  %v1661 = vunpack.c.h.b16 %v239
  %v1662 = vunpack.c.l.b16 %v240
  %v1663 = vunpack.c.h.b16 %v240
  %v1664 = vunpack.c.l.b16 %v241
  %v1665 = vunpack.c.h.b16 %v241
  %v1666 = vunpack.c.l.b16 %v242
  %v1667 = vunpack.c.h.b16 %v242
  %v1668 = vunpack.c.l.b16 %v243
  %v1669 = vunpack.c.h.b16 %v243
  %v1670 = vunpack.c.l.b16 %v244
  %v1671 = vunpack.c.h.b16 %v244
  %v1672 = vunpack.c.l.b16 %v245
  %v1673 = vunpack.c.h.b16 %v245
  %v1674 = vunpack.c.l.b16 %v246
  %v1675 = vunpack.c.h.b16 %v246
  %v1676 = vunpack.c.l.b16 %v247
  %v1677 = vunpack.c.h.b16 %v247
  %v1678 = vunpack.c.l.b16 %v248
  %v1679 = vunpack.c.h.b16 %v248
  %v1680 = vunpack.c.l.b16 %v249
  %v1681 = vunpack.c.h.b16 %v249
  %v1682 = vunpack.c.l.b16 %v250
  %v1683 = vunpack.c.h.b16 %v250
  %v1684 = vunpack.c.l.b16 %v251
  %v1685 = vunpack.c.h.b16 %v251
  %v1686 = vunpack.c.l.b16 %v252
  %v1687 = vunpack.c.h.b16 %v252
  %v1688 = vunpack.c.l.b16 %v253
  %v1689 = vunpack.c.h.b16 %v253
  %v1690 = vunpack.c.l.b16 %v254
  %v1691 = vunpack.c.h.b16 %v254
  %v1692 = vunpack.c.l.b16 %v255
  %v1693 = vunpack.c.h.b16 %v255
  %v1694 = vunpack.c.l.b16 %v256
  %v1695 = vunpack.c.h.b16 %v256
  %v1696 = vunpack.c.l.b16 %v257
  %v1697 = vunpack.c.h.b16 %v257
  %v1698 = vunpack.c.l.b16 %v258
  %v1699 = vunpack.c.h.b16 %v258
  %v1700 = vunpack.c.l.b16 %v259
  %v1701 = vunpack.c.h.b16 %v259
  %v1702 = vunpack.c.l.b16 %v260
  %v1703 = vunpack.c.h.b16 %v260
  %v1704 = vunpack.c.l.b16 %v261
  %v1705 = vunpack.c.h.b16 %v261
  %v1706 = vunpack.c.l.b16 %v262
  %v1707 = vunpack.c.h.b16 %v262
  %v1708 = vunpack.c.l.b16 %v263
  %v1709 = vunpack.c.h.b16 %v263
  %v1710 = vunpack.c.l.b16 %v264
  %v1711 = vunpack.c.h.b16 %v264
  %v1712 = vunpack.c.l.b16 %v265
  %v1713 = vunpack.c.h.b16 %v265
  %v1714 = vunpack.c.l.b16 %v266
  %v1715 = vunpack.c.h.b16 %v266
  %v1716 = vunpack.c.l.b16 %v267
  %v1717 = vunpack.c.h.b16 %v267
  %v1718 = vunpack.c.l.b16 %v268
  %v1719 = vunpack.c.h.b16 %v268
  %v1720 = vunpack.c.l.b16 %v269
  %v1721 = vunpack.c.h.b16 %v269
  %v1722 = vunpack.c.l.b16 %v270
  %v1723 = vunpack.c.h.b16 %v270
  %v1724 = vunpack.c.l.b16 %v271
  %v1725 = vunpack.c.h.b16 %v271
  %v1726 = vunpack.c.l.b16 %v272
  %v1727 = vunpack.c.h.b16 %v272
  %v1728 = vunpack.c.l.b16 %v273
  %v1729 = vunpack.c.h.b16 %v273
  %v1730 = vunpack.c.l.b16 %v274
  %v1731 = vunpack.c.h.b16 %v274
  %v1732 = vunpack.c.l.b16 %v275
  %v1733 = vunpack.c.h.b16 %v275
  %v1734 = vunpack.c.l.b16 %v276
  %v1735 = vunpack.c.h.b16 %v276
  %v1736 = vunpack.c.l.b16 %v277
  %v1737 = vunpack.c.h.b16 %v277
  %v1738 = vunpack.c.l.b16 %v278
  %v1739 = vunpack.c.h.b16 %v278
  %v1740 = vunpack.c.l.b16 %v279
  %v1741 = vunpack.c.h.b16 %v279
  %v1742 = vunpack.c.l.b16 %v280
  %v1743 = vunpack.c.h.b16 %v280
  %v1744 = vunpack.c.l.b16 %v281
  %v1745 = vunpack.c.h.b16 %v281
  %v1746 = vunpack.c.l.b16 %v282
  %v1747 = vunpack.c.h.b16 %v282
  %v1748 = vunpack.c.l.b16 %v283
  %v1749 = vunpack.c.h.b16 %v283
  %v1750 = vunpack.c.l.b16 %v284
  %v1751 = vunpack.c.h.b16 %v284
  %v1752 = vunpack.c.l.b16 %v285
  %v1753 = vunpack.c.h.b16 %v285
  %v1754 = vunpack.c.l.b16 %v286
  %v1755 = vunpack.c.h.b16 %v286
  %v1756 = vunpack.c.l.b16 %v287
  %v1757 = vunpack.c.h.b16 %v287
  %v1758 = vunpack.c.l.b16 %v288
  %v1759 = vunpack.c.h.b16 %v288
  %v1760 = vunpack.c.l.b16 %v289
  %v1761 = vunpack.c.h.b16 %v289
  %v1762 = vunpack.c.l.b16 %v290
  %v1763 = vunpack.c.h.b16 %v290
  %v1764 = vunpack.c.l.b16 %v291
  %v1765 = vunpack.c.h.b16 %v291
  %v1766 = vunpack.c.l.b16 %v292
  %v1767 = vunpack.c.h.b16 %v292
  %v1768 = vunpack.c.l.b16 %v293
  %v1769 = vunpack.c.h.b16 %v293
  %v1770 = vunpack.c.l.b16 %v294
  %v1771 = vunpack.c.h.b16 %v294
  %v1772 = vunpack.c.l.b16 %v295
  %v1773 = vunpack.c.h.b16 %v295
  %v1774 = vunpack.c.l.b16 %v296
  %v1775 = vunpack.c.h.b16 %v296
  %v1776 = vunpack.c.l.b16 %v297
  %v1777 = vunpack.c.h.b16 %v297
  %v1778 = vunpack.c.l.b16 %v298
  %v1779 = vunpack.c.h.b16 %v298
  %v1780 = vunpack.c.l.b16 %v299
  %v1781 = vunpack.c.h.b16 %v299
  %v1782 = vunpack.c.l.b16 %v300
  %v1783 = vunpack.c.h.b16 %v300
  %v1784 = vunpack.c.l.b16 %v301
  %v1785 = vunpack.c.h.b16 %v301
  %v1786 = vunpack.c.l.b16 %v302
  %v1787 = vunpack.c.h.b16 %v302
  %v1788 = vunpack.c.l.b16 %v303
  %v1789 = vunpack.c.h.b16 %v303
  %v1790 = vunpack.c.l.b16 %v304
  %v1791 = vunpack.c.h.b16 %v304
  %v1792 = vunpack.c.l.b16 %v305
  %v1793 = vunpack.c.h.b16 %v305
  %v1794 = vunpack.c.l.b16 %v306
  %v1795 = vunpack.c.h.b16 %v306
  %v1796 = vunpack.c.l.b16 %v307
  %v1797 = vunpack.c.h.b16 %v307
  %v1798 = vunpack.c.l.b16 %v308
  %v1799 = vunpack.c.h.b16 %v308
  %v1800 = vunpack.c.l.b16 %v309
  %v1801 = vunpack.c.h.b16 %v309
  %v1802 = vunpack.c.l.b16 %v310
  %v1803 = vunpack.c.h.b16 %v310
  %v1804 = vunpack.c.l.b16 %v311
  %v1805 = vunpack.c.h.b16 %v311
  %v1806 = vunpack.c.l.b16 %v312
  %v1807 = vunpack.c.h.b16 %v312
  %v1808 = vunpack.c.l.b16 %v313
  %v1809 = vunpack.c.h.b16 %v313
  %v1810 = vunpack.c.l.b16 %v314
  %v1811 = vunpack.c.h.b16 %v314
  %v1812 = vunpack.c.l.b16 %v315
  %v1813 = vunpack.c.h.b16 %v315
  %v1814 = vunpack.c.l.b16 %v316
  %v1815 = vunpack.c.h.b16 %v316
  %v1816 = vunpack.c.l.b16 %v317
  %v1817 = vunpack.c.h.b16 %v317
  %v1818 = vunpack.c.l.b16 %v318
  %v1819 = vunpack.c.h.b16 %v318
  %v1820 = vunpack.c.l.b16 %v319
  %v1821 = vunpack.c.h.b16 %v319
  %v1822 = vunpack.c.l.b16 %v320
  %v1823 = vunpack.c.h.b16 %v320
  %v1824 = vunpack.c.l.b16 %v321
  %v1825 = vunpack.c.h.b16 %v321
  %v1826 = vunpack.c.l.b16 %v322
  %v1827 = vunpack.c.h.b16 %v322
  %v1828 = vunpack.c.l.b16 %v323
  %v1829 = vunpack.c.h.b16 %v323
  %v1830 = vunpack.c.l.b16 %v324
  %v1831 = vunpack.c.h.b16 %v324
  %v1832 = vunpack.c.l.b16 %v325
  %v1833 = vunpack.c.h.b16 %v325
  %v1834 = vunpack.c.l.b16 %v326
  %v1835 = vunpack.c.h.b16 %v326
  %v1836 = vunpack.c.l.b16 %v327
  %v1837 = vunpack.c.h.b16 %v327
  %v1838 = vunpack.c.l.b16 %v328
  %v1839 = vunpack.c.h.b16 %v328
  %v1840 = vunpack.c.l.b16 %v329
  %v1841 = vunpack.c.h.b16 %v329
  %v1842 = vunpack.c.l.b16 %v330
  %v1843 = vunpack.c.h.b16 %v330
  %v1844 = vunpack.c.l.b16 %v331
  %v1845 = vunpack.c.h.b16 %v331
  %v1846 = vunpack.c.l.b16 %v332
  %v1847 = vunpack.c.h.b16 %v332
  %v1848 = vunpack.c.l.b16 %v333
  %v1849 = vunpack.c.h.b16 %v333
  %v1850 = vunpack.c.l.b16 %v334
  %v1851 = vunpack.c.h.b16 %v334
  %v1852 = vunpack.c.l.b16 %v335
  %v1853 = vunpack.c.h.b16 %v335
  %v1854 = vunpack.c.l.b16 %v336
  %v1855 = vunpack.c.h.b16 %v336
  %v1856 = vunpack.c.l.b16 %v337
  %v1857 = vunpack.c.h.b16 %v337
  %v1858 = vunpack.c.l.b16 %v338
  %v1859 = vunpack.c.h.b16 %v338
  %v1860 = vunpack.c.l.b16 %v339
  %v1861 = vunpack.c.h.b16 %v339
  %v1862 = vunpack.c.l.b16 %v340
  %v1863 = vunpack.c.h.b16 %v340
  %v1864 = vunpack.c.l.b16 %v341
  %v1865 = vunpack.c.h.b16 %v341
  %v1866 = vunpack.c.l.b16 %v342
  %v1867 = vunpack.c.h.b16 %v342
  %v1868 = vunpack.c.l.b16 %v343
  %v1869 = vunpack.c.h.b16 %v343
  %v1870 = vunpack.c.l.b16 %v344
  %v1871 = vunpack.c.h.b16 %v344
  %v1872 = vunpack.c.l.b16 %v345
  %v1873 = vunpack.c.h.b16 %v345
  %v1874 = vunpack.c.l.b16 %v346
  %v1875 = vunpack.c.h.b16 %v346
  %v1876 = vunpack.c.l.b16 %v347
  %v1877 = vunpack.c.h.b16 %v347
  %v1878 = vunpack.c.l.b16 %v348
  %v1879 = vunpack.c.h.b16 %v348
  %v1880 = vunpack.c.l.b16 %v349
  %v1881 = vunpack.c.h.b16 %v349
  %v1882 = vunpack.c.l.b16 %v350
  %v1883 = vunpack.c.h.b16 %v350
  %v1884 = vunpack.c.l.b16 %v351
  %v1885 = vunpack.c.h.b16 %v351
  %v1886 = vunpack.c.l.b16 %v352
  %v1887 = vunpack.c.h.b16 %v352
  %v1888 = vunpack.c.l.b16 %v353
  %v1889 = vunpack.c.h.b16 %v353
  %v1890 = vunpack.c.l.b16 %v354
  %v1891 = vunpack.c.h.b16 %v354
  %v1892 = vunpack.c.l.b16 %v355
  %v1893 = vunpack.c.h.b16 %v355
  %v1894 = vunpack.c.l.b16 %v356
  %v1895 = vunpack.c.h.b16 %v356
  %v1896 = vunpack.c.l.b16 %v357
  %v1897 = vunpack.c.h.b16 %v357
  %v1898 = vunpack.c.l.b16 %v358
  %v1899 = vunpack.c.h.b16 %v358
  %v1900 = vunpack.c.l.b16 %v359
  %v1901 = vunpack.c.h.b16 %v359
  %v1902 = vunpack.c.l.b16 %v360
  %v1903 = vunpack.c.h.b16 %v360
  %v1904 = vunpack.c.l.b16 %v361
  %v1905 = vunpack.c.h.b16 %v361
  %v1906 = vunpack.c.l.b16 %v362
  %v1907 = vunpack.c.h.b16 %v362
  %v1908 = vunpack.c.l.b16 %v363
  %v1909 = vunpack.c.h.b16 %v363
  %v1910 = vunpack.c.l.b16 %v364
  %v1911 = vunpack.c.h.b16 %v364
  %v1912 = vunpack.c.l.b16 %v365
  %v1913 = vunpack.c.h.b16 %v365
  %v1914 = vunpack.c.l.b16 %v366
  %v1915 = vunpack.c.h.b16 %v366
  %v1916 = vunpack.c.l.b16 %v367
  %v1917 = vunpack.c.h.b16 %v367
  %v1918 = vunpack.c.l.b16 %v368
  %v1919 = vunpack.c.h.b16 %v368
  %v1920 = vunpack.c.l.b16 %v369
  %v1921 = vunpack.c.h.b16 %v369
  %v1922 = vunpack.c.l.b16 %v370
  %v1923 = vunpack.c.h.b16 %v370
  %v1924 = vunpack.c.l.b16 %v371
  %v1925 = vunpack.c.h.b16 %v371
  %v1926 = vunpack.c.l.b16 %v372
  %v1927 = vunpack.c.h.b16 %v372
  %v1928 = vunpack.c.l.b16 %v373
  %v1929 = vunpack.c.h.b16 %v373
  %v1930 = vunpack.c.l.b16 %v374
  %v1931 = vunpack.c.h.b16 %v374
  %v1932 = vunpack.c.l.b16 %v375
  %v1933 = vunpack.c.h.b16 %v375
  %v1934 = vunpack.c.l.b16 %v376
  %v1935 = vunpack.c.h.b16 %v376
  %v1936 = vunpack.c.l.b16 %v377
  %v1937 = vunpack.c.h.b16 %v377
  %v1938 = vunpack.c.l.b16 %v378
  %v1939 = vunpack.c.h.b16 %v378
  %v1940 = vunpack.c.l.b16 %v379
  %v1941 = vunpack.c.h.b16 %v379
  %v1942 = vunpack.c.l.b16 %v380
  %v1943 = vunpack.c.h.b16 %v380
  %v1944 = vunpack.c.l.b16 %v381
  %v1945 = vunpack.c.h.b16 %v381
  %v1946 = vunpack.c.l.b16 %v382
  %v1947 = vunpack.c.h.b16 %v382
  %v1948 = vunpack.c.l.b16 %v383
  %v1949 = vunpack.c.h.b16 %v383
  %v1950 = vunpack.c.l.b16 %v384
  %v1951 = vunpack.c.h.b16 %v384
  %v1952 = vunpack.c.l.b16 %v385
  %v1953 = vunpack.c.h.b16 %v385
  %v1954 = vunpack.c.l.b16 %v386
  %v1955 = vunpack.c.h.b16 %v386
  %v1956 = vunpack.c.l.b16 %v387
  %v1957 = vunpack.c.h.b16 %v387
  %v1958 = vunpack.c.l.b16 %v388
  %v1959 = vunpack.c.h.b16 %v388
  %v1960 = vunpack.c.l.b16 %v389
  %v1961 = vunpack.c.h.b16 %v389
  %v1962 = vunpack.c.l.b16 %v390
  %v1963 = vunpack.c.h.b16 %v390
  %v1964 = vunpack.c.l.b16 %v391
  %v1965 = vunpack.c.h.b16 %v391
  %v1966 = vunpack.c.l.b16 %v392
  %v1967 = vunpack.c.h.b16 %v392
  %v1968 = vunpack.c.l.b16 %v393
  %v1969 = vunpack.c.h.b16 %v393
  %v1970 = vunpack.c.l.b16 %v394
  %v1971 = vunpack.c.h.b16 %v394
  %v1972 = vunpack.c.l.b16 %v395
  %v1973 = vunpack.c.h.b16 %v395
  %v1974 = vunpack.c.l.b16 %v396
  %v1975 = vunpack.c.h.b16 %v396
  %v1976 = vunpack.c.l.b16 %v397
  %v1977 = vunpack.c.h.b16 %v397
  %v1978 = vunpack.c.l.b16 %v398
  %v1979 = vunpack.c.h.b16 %v398
  %v1980 = vunpack.c.l.b16 %v399
  %v1981 = vunpack.c.h.b16 %v399
  %v1982 = vunpack.c.l.b16 %v400
  %v1983 = vunpack.c.h.b16 %v400
  %v1984 = vunpack.c.l.b16 %v401
  %v1985 = vunpack.c.h.b16 %v401
  %v1986 = vunpack.c.l.b16 %v402
  %v1987 = vunpack.c.h.b16 %v402
  %v1988 = vunpack.c.l.b16 %v403
  %v1989 = vunpack.c.h.b16 %v403
  %v1990 = vunpack.c.l.b16 %v404
  %v1991 = vunpack.c.h.b16 %v404
  %v1992 = vunpack.c.l.b16 %v405
  %v1993 = vunpack.c.h.b16 %v405
  %v1994 = vunpack.c.l.b16 %v406
  %v1995 = vunpack.c.h.b16 %v406
  %v1996 = vunpack.c.l.b16 %v407
  %v1997 = vunpack.c.h.b16 %v407
  %v1998 = vunpack.c.l.b16 %v408
  %v1999 = vunpack.c.h.b16 %v408
  %v2000 = vunpack.c.l.b16 %v409
  %v2001 = vunpack.c.h.b16 %v409
  %v2002 = vunpack.c.l.b16 %v410
  %v2003 = vunpack.c.h.b16 %v410
  %v2004 = vunpack.c.l.b16 %v411
  %v2005 = vunpack.c.h.b16 %v411
  %v2006 = vunpack.c.l.b16 %v412
  %v2007 = vunpack.c.h.b16 %v412
  %v2008 = vunpack.c.l.b16 %v413
  %v2009 = vunpack.c.h.b16 %v413
  %v2010 = vunpack.c.l.b16 %v414
  %v2011 = vunpack.c.h.b16 %v414
  %v2012 = vunpack.c.l.b16 %v415
  %v2013 = vunpack.c.h.b16 %v415
  %v2014 = vunpack.c.l.b16 %v416
  %v2015 = vunpack.c.h.b16 %v416
  %v2016 = vunpack.c.l.b16 %v417
  %v2017 = vunpack.c.h.b16 %v417
  %v2018 = vunpack.c.l.b16 %v418
  %v2019 = vunpack.c.h.b16 %v418
  %v2020 = vunpack.c.l.b16 %v419
  %v2021 = vunpack.c.h.b16 %v419
  %v2022 = vunpack.c.l.b16 %v420
  %v2023 = vunpack.c.h.b16 %v420
  %v2024 = vunpack.c.l.b16 %v421
  %v2025 = vunpack.c.h.b16 %v421
  %v2026 = vunpack.c.l.b16 %v422
  %v2027 = vunpack.c.h.b16 %v422
  %v2028 = vunpack.c.l.b16 %v423
  %v2029 = vunpack.c.h.b16 %v423
  %v2030 = vunpack.c.l.b16 %v424
  %v2031 = vunpack.c.h.b16 %v424
  %v2032 = vunpack.c.l.b16 %v425
  %v2033 = vunpack.c.h.b16 %v425
  %v2034 = vunpack.c.l.b16 %v426
  %v2035 = vunpack.c.h.b16 %v426
  %v2036 = vunpack.c.l.b16 %v427
  %v2037 = vunpack.c.h.b16 %v427
  %v2038 = vunpack.c.l.b16 %v428
  %v2039 = vunpack.c.h.b16 %v428
  %v2040 = vunpack.c.l.b16 %v429
  %v2041 = vunpack.c.h.b16 %v429
  %v2042 = vunpack.c.l.b16 %v430
  %v2043 = vunpack.c.h.b16 %v430
  %v2044 = vunpack.c.l.b16 %v431
  %v2045 = vunpack.c.h.b16 %v431
  %v2046 = vunpack.c.l.b16 %v432
  %v2047 = vunpack.c.h.b16 %v432
  %v2048 = vunpack.c.l.b16 %v433
  %v2049 = vunpack.c.h.b16 %v433
  %v2050 = vunpack.c.l.b16 %v434
  %v2051 = vunpack.c.h.b16 %v434
  %v2052 = vunpack.c.l.b16 %v435
  %v2053 = vunpack.c.h.b16 %v435
  %v2054 = vunpack.c.l.b16 %v436
  %v2055 = vunpack.c.h.b16 %v436
  %v2056 = vunpack.c.l.b16 %v437
  %v2057 = vunpack.c.h.b16 %v437
  %v2058 = vunpack.c.l.b16 %v438
  %v2059 = vunpack.c.h.b16 %v438
  %v2060 = vunpack.c.l.b16 %v439
  %v2061 = vunpack.c.h.b16 %v439
  %v2062 = vunpack.c.l.b16 %v440
  %v2063 = vunpack.c.h.b16 %v440
  %v2064 = vunpack.c.l.b16 %v441
  %v2065 = vunpack.c.h.b16 %v441
  %v2066 = vunpack.c.l.b16 %v442
  %v2067 = vunpack.c.h.b16 %v442
  %v2068 = vunpack.c.l.b16 %v443
  %v2069 = vunpack.c.h.b16 %v443
  %v2070 = vunpack.c.l.b16 %v444
  %v2071 = vunpack.c.h.b16 %v444
  %v2072 = vunpack.c.l.b16 %v445
  %v2073 = vunpack.c.h.b16 %v445
  %v2074 = vunpack.c.l.b16 %v446
  %v2075 = vunpack.c.h.b16 %v446
  %v2076 = vunpack.c.l.b16 %v447
  %v2077 = vunpack.c.h.b16 %v447
  %v2078 = vunpack.c.l.b16 %v448
  %v2079 = vunpack.c.h.b16 %v448
  %v2080 = vunpack.c.l.b16 %v449
  %v2081 = vunpack.c.h.b16 %v449
  %v2082 = vunpack.c.l.b16 %v450
  %v2083 = vunpack.c.h.b16 %v450
  %v2084 = vunpack.c.l.b16 %v451
  %v2085 = vunpack.c.h.b16 %v451
  %v2086 = vunpack.c.l.b16 %v452
  %v2087 = vunpack.c.h.b16 %v452
  %v2088 = vunpack.c.l.b16 %v453
  %v2089 = vunpack.c.h.b16 %v453
  %v2090 = vunpack.c.l.b16 %v454
  %v2091 = vunpack.c.h.b16 %v454
  %v2092 = vunpack.c.l.b16 %v455
  %v2093 = vunpack.c.h.b16 %v455
  %v2094 = vunpack.c.l.b16 %v456
  %v2095 = vunpack.c.h.b16 %v456
  %v2096 = vunpack.c.l.b16 %v457
  %v2097 = vunpack.c.h.b16 %v457
  %v2098 = vunpack.c.l.b16 %v458
  %v2099 = vunpack.c.h.b16 %v458
  %v2100 = vunpack.c.l.b16 %v459
  %v2101 = vunpack.c.h.b16 %v459
  %v2102 = vunpack.c.l.b16 %v460
  %v2103 = vunpack.c.h.b16 %v460
  %v2104 = vunpack.c.l.b16 %v461
  %v2105 = vunpack.c.h.b16 %v461
  %v2106 = vunpack.c.l.b16 %v462
  %v2107 = vunpack.c.h.b16 %v462
  %v2108 = vunpack.c.l.b16 %v463
  %v2109 = vunpack.c.h.b16 %v463
  %v2110 = vunpack.c.l.b16 %v464
  %v2111 = vunpack.c.h.b16 %v464
  %v2112 = vunpack.c.l.b16 %v465
  %v2113 = vunpack.c.h.b16 %v465
  %v2114 = vunpack.c.l.b16 %v466
  %v2115 = vunpack.c.h.b16 %v466
  %v2116 = vunpack.c.l.b16 %v467
  %v2117 = vunpack.c.h.b16 %v467
  %v2118 = vunpack.c.l.b16 %v468
  %v2119 = vunpack.c.h.b16 %v468
  %v2120 = vunpack.c.l.b16 %v469
  %v2121 = vunpack.c.h.b16 %v469
  %v2122 = vunpack.c.l.b16 %v470
  %v2123 = vunpack.c.h.b16 %v470
  %v2124 = vunpack.c.l.b16 %v471
  %v2125 = vunpack.c.h.b16 %v471
  %v2126 = vunpack.c.l.b16 %v472
  %v2127 = vunpack.c.h.b16 %v472
  %v2128 = vunpack.c.l.b16 %v473
  %v2129 = vunpack.c.h.b16 %v473
  %v2130 = vunpack.c.l.b16 %v474
  %v2131 = vunpack.c.h.b16 %v474
  %v2132 = vunpack.c.l.b16 %v475
  %v2133 = vunpack.c.h.b16 %v475
  %v2134 = vunpack.c.l.b16 %v476
  %v2135 = vunpack.c.h.b16 %v476
  %v2136 = vunpack.c.l.b16 %v477
  %v2137 = vunpack.c.h.b16 %v477
  %v2138 = vunpack.c.l.b16 %v478
  %v2139 = vunpack.c.h.b16 %v478
  %v2140 = vunpack.c.l.b16 %v479
  %v2141 = vunpack.c.h.b16 %v479
  %v2142 = vunpack.c.l.b16 %v480
  %v2143 = vunpack.c.h.b16 %v480
  %v2144 = vunpack.c.l.b16 %v481
  %v2145 = vunpack.c.h.b16 %v481
  %v2146 = vunpack.c.l.b16 %v482
  %v2147 = vunpack.c.h.b16 %v482
  %v2148 = vunpack.c.l.b16 %v483
  %v2149 = vunpack.c.h.b16 %v483
  %v2150 = vunpack.c.l.b16 %v484
  %v2151 = vunpack.c.h.b16 %v484
  %v2152 = vunpack.c.l.b16 %v485
  %v2153 = vunpack.c.h.b16 %v485
  %v2154 = vunpack.c.l.b16 %v486
  %v2155 = vunpack.c.h.b16 %v486
  %v2156 = vunpack.c.l.b16 %v487
  %v2157 = vunpack.c.h.b16 %v487
  %v2158 = vunpack.c.l.b16 %v488
  %v2159 = vunpack.c.h.b16 %v488
  %v2160 = vunpack.c.l.b16 %v489
  %v2161 = vunpack.c.h.b16 %v489
  %v2162 = vunpack.c.l.b16 %v490
  %v2163 = vunpack.c.h.b16 %v490
  %v2164 = vunpack.c.l.b16 %v491
  %v2165 = vunpack.c.h.b16 %v491
  %v2166 = vunpack.c.l.b16 %v492
  %v2167 = vunpack.c.h.b16 %v492
  %v2168 = vunpack.c.l.b16 %v493
  %v2169 = vunpack.c.h.b16 %v493
  %v2170 = vunpack.c.l.b16 %v494
  %v2171 = vunpack.c.h.b16 %v494
  %v2172 = vunpack.c.l.b16 %v495
  %v2173 = vunpack.c.h.b16 %v495
  %v2174 = vunpack.c.l.b16 %v496
  %v2175 = vunpack.c.h.b16 %v496
  %v2176 = vunpack.c.l.b16 %v497
  %v2177 = vunpack.c.h.b16 %v497
  %v2178 = vunpack.c.l.b16 %v498
  %v2179 = vunpack.c.h.b16 %v498
  %v2180 = vunpack.c.l.b16 %v499
  %v2181 = vunpack.c.h.b16 %v499
  %v2182 = vunpack.c.l.b16 %v500
  %v2183 = vunpack.c.h.b16 %v500
  %v2184 = vunpack.c.l.b16 %v501
  %v2185 = vunpack.c.h.b16 %v501
  %v2186 = vunpack.c.l.b16 %v502
  %v2187 = vunpack.c.h.b16 %v502
  %v2188 = vunpack.c.l.b16 %v503
  %v2189 = vunpack.c.h.b16 %v503
  %v2190 = vunpack.c.l.b16 %v504
  %v2191 = vunpack.c.h.b16 %v504
  %v2192 = vunpack.c.l.b16 %v505
  %v2193 = vunpack.c.h.b16 %v505
  %v2194 = vunpack.c.l.b16 %v506
  %v2195 = vunpack.c.h.b16 %v506
  %v2196 = vunpack.c.l.b16 %v507
  %v2197 = vunpack.c.h.b16 %v507
  %v2198 = vunpack.c.l.b16 %v508
  %v2199 = vunpack.c.h.b16 %v508
  %v2200 = vunpack.c.l.b16 %v509
  %v2201 = vunpack.c.h.b16 %v509
  %v2202 = vunpack.c.l.b16 %v510
  %v2203 = vunpack.c.h.b16 %v510
  %v2204 = vunpack.c.l.b16 %v511
  %v2205 = vunpack.c.h.b16 %v511
  %v2206 = vunpack.c.l.b16 %v512
  %v2207 = vunpack.c.h.b16 %v512
  %v2208 = vunpack.c.l.b16 %v513
  %v2209 = vunpack.c.h.b16 %v513
  %v2210 = vunpack.c.l.b16 %v514
  %v2211 = vunpack.c.h.b16 %v514
  %v2212 = vunpack.c.l.b16 %v515
  %v2213 = vunpack.c.h.b16 %v515
  %v2214 = vunpack.c.l.b16 %v516
  %v2215 = vunpack.c.h.b16 %v516
  %v2216 = vunpack.c.l.b16 %v517
  %v2217 = vunpack.c.h.b16 %v517
  %v2218 = vunpack.c.l.b16 %v518
  %v2219 = vunpack.c.h.b16 %v518
  %v2220 = vunpack.c.l.b16 %v519
  %v2221 = vunpack.c.h.b16 %v519
  %v2222 = vunpack.c.l.b16 %v520
  %v2223 = vunpack.c.h.b16 %v520
  %v2224 = vunpack.c.l.b16 %v521
  %v2225 = vunpack.c.h.b16 %v521
  %v2226 = vunpack.c.l.b16 %v522
  %v2227 = vunpack.c.h.b16 %v522
  %v2228 = vunpack.c.l.b16 %v523
  %v2229 = vunpack.c.h.b16 %v523
  %v2230 = vunpack.c.l.b16 %v524
  %v2231 = vunpack.c.h.b16 %v524
  %v2232 = vunpack.c.l.b16 %v525
  %v2233 = vunpack.c.h.b16 %v525
  %v2234 = vunpack.c.l.b16 %v526
  %v2235 = vunpack.c.h.b16 %v526
  %v2236 = vunpack.c.l.b16 %v527
  %v2237 = vunpack.c.h.b16 %v527
  %v2238 = vunpack.c.l.b16 %v528
  %v2239 = vunpack.c.h.b16 %v528
  %v2240 = vunpack.c.l.b16 %v529
  %v2241 = vunpack.c.h.b16 %v529
  %v2242 = vunpack.c.l.b16 %v530
  %v2243 = vunpack.c.h.b16 %v530
  %v2244 = vunpack.c.l.b16 %v531
  %v2245 = vunpack.c.h.b16 %v531
  %v2246 = vunpack.c.l.b16 %v532
  %v2247 = vunpack.c.h.b16 %v532
  %v2248 = vunpack.c.l.b16 %v533
  %v2249 = vunpack.c.h.b16 %v533
  %v2250 = vunpack.c.l.b16 %v534
  %v2251 = vunpack.c.h.b16 %v534
  %v2252 = vunpack.c.l.b16 %v535
  %v2253 = vunpack.c.h.b16 %v535
  %v2254 = vunpack.c.l.b16 %v536
  %v2255 = vunpack.c.h.b16 %v536
  %v2256 = vunpack.c.l.b16 %v537
  %v2257 = vunpack.c.h.b16 %v537
  %v2258 = vunpack.c.l.b16 %v538
  %v2259 = vunpack.c.h.b16 %v538
  %v2260 = vunpack.c.l.b16 %v539
  %v2261 = vunpack.c.h.b16 %v539
  %v2262 = vunpack.c.l.b16 %v540
  %v2263 = vunpack.c.h.b16 %v540
  %v2264 = vunpack.c.l.b16 %v541
  %v2265 = vunpack.c.h.b16 %v541
  %v2266 = vunpack.c.l.b16 %v542
  %v2267 = vunpack.c.h.b16 %v542
  %v2268 = vunpack.c.l.b16 %v543
  %v2269 = vunpack.c.h.b16 %v543
  %v2270 = vunpack.c.l.b16 %v544
  %v2271 = vunpack.c.h.b16 %v544
  %v2272 = vunpack.c.l.b16 %v545
  %v2273 = vunpack.c.h.b16 %v545
  %v2274 = vunpack.c.l.b16 %v546
  %v2275 = vunpack.c.h.b16 %v546
  %v2276 = vunpack.c.l.b16 %v547
  %v2277 = vunpack.c.h.b16 %v547
  %v2278 = vunpack.c.l.b16 %v548
  %v2279 = vunpack.c.h.b16 %v548
  %v2280 = vunpack.c.l.b16 %v549
  %v2281 = vunpack.c.h.b16 %v549
  %v2282 = vunpack.c.l.b16 %v550
  %v2283 = vunpack.c.h.b16 %v550
  %v2284 = vunpack.c.l.b16 %v551
  %v2285 = vunpack.c.h.b16 %v551
  %v2286 = vunpack.c.l.b16 %v552
  %v2287 = vunpack.c.h.b16 %v552
  %v2288 = vunpack.c.l.b16 %v553
  %v2289 = vunpack.c.h.b16 %v553
  %v2290 = vunpack.c.l.b16 %v554
  %v2291 = vunpack.c.h.b16 %v554
  %v2292 = vunpack.c.l.b16 %v555
  %v2293 = vunpack.c.h.b16 %v555
  %v2294 = vunpack.c.l.b16 %v556
  %v2295 = vunpack.c.h.b16 %v556
  %v2296 = vunpack.c.l.b16 %v557
  %v2297 = vunpack.c.h.b16 %v557
  %v2298 = vunpack.c.l.b16 %v558
  %v2299 = vunpack.c.h.b16 %v558
  %v2300 = vunpack.c.l.b16 %v559
  %v2301 = vunpack.c.h.b16 %v559
  %v2302 = vunpack.c.l.b16 %v560
  %v2303 = vunpack.c.h.b16 %v560
  %v2304 = vunpack.c.l.b16 %v561
  %v2305 = vunpack.c.h.b16 %v561
  %v2306 = vunpack.c.l.b16 %v562
  %v2307 = vunpack.c.h.b16 %v562
  %v2308 = vunpack.c.l.b16 %v563
  %v2309 = vunpack.c.h.b16 %v563
  %v2310 = vunpack.c.l.b16 %v564
  %v2311 = vunpack.c.h.b16 %v564
  %v2312 = vunpack.c.l.b16 %v565
  %v2313 = vunpack.c.h.b16 %v565
  %v2314 = vunpack.c.l.b16 %v566
  %v2315 = vunpack.c.h.b16 %v566
  %v2316 = vunpack.c.l.b16 %v567
  %v2317 = vunpack.c.h.b16 %v567
  %v2318 = vunpack.c.l.b16 %v568
  %v2319 = vunpack.c.h.b16 %v568
  %v2320 = vunpack.c.l.b16 %v569
  %v2321 = vunpack.c.h.b16 %v569
  %v2322 = vunpack.c.l.b16 %v570
  %v2323 = vunpack.c.h.b16 %v570
  %v2324 = vunpack.c.l.b16 %v571
  %v2325 = vunpack.c.h.b16 %v571
  %v2326 = vunpack.c.l.b16 %v572
  %v2327 = vunpack.c.h.b16 %v572
  %v2328 = vunpack.c.l.b16 %v573
  %v2329 = vunpack.c.h.b16 %v573
  %v2330 = vunpack.c.l.b16 %v574
  %v2331 = vunpack.c.h.b16 %v574
  %v2332 = vunpack.c.l.b16 %v575
  %v2333 = vunpack.c.h.b16 %v575
  %v2334 = vunpack.c.l.b16 %v576
  %v2335 = vunpack.c.h.b16 %v576
  %v2336 = vunpack.c.l.b16 %v577
  %v2337 = vunpack.c.h.b16 %v577
  %v2338 = vunpack.c.l.b16 %v578
  %v2339 = vunpack.c.h.b16 %v578
  %v2340 = vunpack.c.l.b16 %v579
  %v2341 = vunpack.c.h.b16 %v579
  %v2342 = vunpack.c.l.b16 %v580
  %v2343 = vunpack.c.h.b16 %v580
  %v2344 = vunpack.c.l.b16 %v581
  %v2345 = vunpack.c.h.b16 %v581
  %v2346 = vunpack.c.l.b16 %v582
  %v2347 = vunpack.c.h.b16 %v582
  %v2348 = vunpack.c.l.b16 %v583
  %v2349 = vunpack.c.h.b16 %v583
  %v2350 = vunpack.c.l.b16 %v584
  %v2351 = vunpack.c.h.b16 %v584
  %v2352 = vunpack.c.l.b16 %v585
  %v2353 = vunpack.c.h.b16 %v585
  %v2354 = vunpack.c.l.b16 %v586
  %v2355 = vunpack.c.h.b16 %v586
  %v2356 = vunpack.c.l.b16 %v587
  %v2357 = vunpack.c.h.b16 %v587
  %v2358 = vunpack.c.l.b16 %v588
  %v2359 = vunpack.c.h.b16 %v588
  %v2360 = vunpack.c.l.b16 %v589
  %v2361 = vunpack.c.h.b16 %v589
  %v2362 = vunpack.c.l.b16 %v590
  %v2363 = vunpack.c.h.b16 %v590
  %v2364 = vunpack.c.l.b16 %v591
  %v2365 = vunpack.c.h.b16 %v591
  %v2366 = vunpack.c.l.b16 %v592
  %v2367 = vunpack.c.h.b16 %v592
  %v2368 = vunpack.c.l.b16 %v593
  %v2369 = vunpack.c.h.b16 %v593
  %v2370 = vunpack.c.l.b16 %v594
  %v2371 = vunpack.c.h.b16 %v594
  %v2372 = vunpack.c.l.b16 %v595
  %v2373 = vunpack.c.h.b16 %v595
  %v2374 = vunpack.c.l.b16 %v596
  %v2375 = vunpack.c.h.b16 %v596
  %v2376 = vunpack.c.l.b16 %v597
  %v2377 = vunpack.c.h.b16 %v597
  %v2378 = vunpack.c.l.b16 %v598
  %v2379 = vunpack.c.h.b16 %v598
  %v2380 = vunpack.c.l.b16 %v599
  %v2381 = vunpack.c.h.b16 %v599
  %v2382 = vunpack.c.l.b16 %v600
  %v2383 = vunpack.c.h.b16 %v600
  %v2384 = vunpack.c.l.b16 %v601
  %v2385 = vunpack.c.h.b16 %v601
  %v2386 = vunpack.c.l.b16 %v602
  %v2387 = vunpack.c.h.b16 %v602
  %v2388 = vunpack.c.l.b16 %v603
  %v2389 = vunpack.c.h.b16 %v603
  %v2390 = vunpack.c.l.b16 %v604
  %v2391 = vunpack.c.h.b16 %v604
  %v2392 = vunpack.c.l.b16 %v605
  %v2393 = vunpack.c.h.b16 %v605
  %v2394 = vunpack.c.l.b16 %v606
  %v2395 = vunpack.c.h.b16 %v606
  %v2396 = vunpack.c.l.b16 %v607
  %v2397 = vunpack.c.h.b16 %v607
  %v2398 = vunpack.c.l.b16 %v608
  %v2399 = vunpack.c.h.b16 %v608
  %v2400 = vunpack.c.l.b16 %v609
  %v2401 = vunpack.c.h.b16 %v609
  %v2402 = vunpack.c.l.b16 %v610
  %v2403 = vunpack.c.h.b16 %v610
  %v2404 = vunpack.c.l.b16 %v611
  %v2405 = vunpack.c.h.b16 %v611
  %v2406 = vunpack.c.l.b16 %v612
  %v2407 = vunpack.c.h.b16 %v612
  %v2408 = vunpack.c.l.b16 %v613
  %v2409 = vunpack.c.h.b16 %v613
  %v2410 = vunpack.c.l.b16 %v614
  %v2411 = vunpack.c.h.b16 %v614
  %v2412 = vunpack.c.l.b16 %v615
  %v2413 = vunpack.c.h.b16 %v615
  %v2414 = vunpack.c.l.b16 %v616
  %v2415 = vunpack.c.h.b16 %v616
  %v2416 = vunpack.c.l.b16 %v617
  %v2417 = vunpack.c.h.b16 %v617
  %v2418 = vunpack.c.l.b16 %v618
  %v2419 = vunpack.c.h.b16 %v618
  %v2420 = vunpack.c.l.b16 %v619
  %v2421 = vunpack.c.h.b16 %v619
  %v2422 = vunpack.c.l.b16 %v620
  %v2423 = vunpack.c.h.b16 %v620
  %v2424 = vunpack.c.l.b16 %v621
  %v2425 = vunpack.c.h.b16 %v621
  %v2426 = vunpack.c.l.b16 %v622
  %v2427 = vunpack.c.h.b16 %v622
  %v2428 = vunpack.c.l.b16 %v623
  %v2429 = vunpack.c.h.b16 %v623
  %v2430 = vunpack.c.l.b16 %v624
  %v2431 = vunpack.c.h.b16 %v624
  %v2432 = vunpack.c.l.b16 %v625
  %v2433 = vunpack.c.h.b16 %v625
  %v2434 = vunpack.c.l.b16 %v626
  %v2435 = vunpack.c.h.b16 %v626
  %v2436 = vunpack.c.l.b16 %v627
  %v2437 = vunpack.c.h.b16 %v627
  %v2438 = vunpack.c.l.b16 %v628
  %v2439 = vunpack.c.h.b16 %v628
  %v2440 = vunpack.c.l.b16 %v629
  %v2441 = vunpack.c.h.b16 %v629
  %v2442 = vunpack.c.l.b16 %v630
  %v2443 = vunpack.c.h.b16 %v630
  %v2444 = vpack.c.b16 %v1296, %v1292
  %v2445 = vpack.c.b16 %v1297, %v1293
  %v2446 = vpack.c.b16 %v1298, %v1294
  %v2447 = vpack.c.b16 %v1299, %v1295
  %v2448 = vpack.c.b16 %v1304, %v1300
  %v2449 = vpack.c.b16 %v1305, %v1301
  %v2450 = vpack.c.b16 %v1306, %v1302
  %v2451 = vpack.c.b16 %v1307, %v1303
  %v2452 = vpack.c.b16 %v1312, %v1308
  %v2453 = vpack.c.b16 %v1313, %v1309
  %v2454 = vpack.c.b16 %v1314, %v1310
  %v2455 = vpack.c.b16 %v1315, %v1311
  %v2456 = vpack.c.b16 %v1320, %v1316
  %v2457 = vpack.c.b16 %v1321, %v1317
  %v2458 = vpack.c.b16 %v1322, %v1318
  %v2459 = vpack.c.b16 %v1323, %v1319
  %v2460 = vpack.c.b16 %v1328, %v1324
  %v2461 = vpack.c.b16 %v1329, %v1325
  %v2462 = vpack.c.b16 %v1330, %v1326
  %v2463 = vpack.c.b16 %v1331, %v1327
  %v2464 = vpack.c.b16 %v1336, %v1332
  %v2465 = vpack.c.b16 %v1337, %v1333
  %v2466 = vpack.c.b16 %v1338, %v1334
  %v2467 = vpack.c.b16 %v1339, %v1335
  %v2468 = vpack.c.b16 %v1344, %v1340
  %v2469 = vpack.c.b16 %v1345, %v1341
  %v2470 = vpack.c.b16 %v1346, %v1342
  %v2471 = vpack.c.b16 %v1347, %v1343
  %v2472 = vpack.c.b16 %v1352, %v1348
  %v2473 = vpack.c.b16 %v1353, %v1349
  %v2474 = vpack.c.b16 %v1354, %v1350
  %v2475 = vpack.c.b16 %v1355, %v1351
  %v2476 = vpack.c.b16 %v1360, %v1356
  %v2477 = vpack.c.b16 %v1361, %v1357
  %v2478 = vpack.c.b16 %v1362, %v1358
  %v2479 = vpack.c.b16 %v1363, %v1359
  %v2480 = vpack.c.b16 %v1368, %v1364
  %v2481 = vpack.c.b16 %v1369, %v1365
  %v2482 = vpack.c.b16 %v1370, %v1366
  %v2483 = vpack.c.b16 %v1371, %v1367
  %v2484 = vpack.c.b16 %v1376, %v1372
  %v2485 = vpack.c.b16 %v1377, %v1373
  %v2486 = vpack.c.b16 %v1378, %v1374
  %v2487 = vpack.c.b16 %v1379, %v1375
  %v2488 = vpack.c.b16 %v1384, %v1380
  %v2489 = vpack.c.b16 %v1385, %v1381
  %v2490 = vpack.c.b16 %v1386, %v1382
  %v2491 = vpack.c.b16 %v1387, %v1383
  %v2492 = vpack.c.b16 %v1392, %v1388
  %v2493 = vpack.c.b16 %v1393, %v1389
  %v2494 = vpack.c.b16 %v1394, %v1390
  %v2495 = vpack.c.b16 %v1395, %v1391
  %v2496 = vpack.c.b16 %v1400, %v1396
  %v2497 = vpack.c.b16 %v1401, %v1397
  %v2498 = vpack.c.b16 %v1402, %v1398
  %v2499 = vpack.c.b16 %v1403, %v1399
  %v2500 = vpack.c.b16 %v1408, %v1404
  %v2501 = vpack.c.b16 %v1409, %v1405
  %v2502 = vpack.c.b16 %v1410, %v1406
  %v2503 = vpack.c.b16 %v1411, %v1407
  %v2504 = vpack.c.b16 %v1416, %v1412
  %v2505 = vpack.c.b16 %v1417, %v1413
  %v2506 = vpack.c.b16 %v1418, %v1414
  %v2507 = vpack.c.b16 %v1419, %v1415
  %v2508 = vpack.c.b16 %v1424, %v1420
  %v2509 = vpack.c.b16 %v1425, %v1421
  %v2510 = vpack.c.b16 %v1426, %v1422
  %v2511 = vpack.c.b16 %v1427, %v1423
  %v2512 = vpack.c.b16 %v1432, %v1428
  %v2513 = vpack.c.b16 %v1433, %v1429
  %v2514 = vpack.c.b16 %v1434, %v1430
  %v2515 = vpack.c.b16 %v1435, %v1431
  %v2516 = vpack.c.b16 %v1440, %v1436
  %v2517 = vpack.c.b16 %v1441, %v1437
  %v2518 = vpack.c.b16 %v1442, %v1438
  %v2519 = vpack.c.b16 %v1443, %v1439
  %v2520 = vpack.c.b16 %v1448, %v1444
  %v2521 = vpack.c.b16 %v1449, %v1445
  %v2522 = vpack.c.b16 %v1450, %v1446
  %v2523 = vpack.c.b16 %v1451, %v1447
  %v2524 = vpack.c.b16 %v1456, %v1452
  %v2525 = vpack.c.b16 %v1457, %v1453
  %v2526 = vpack.c.b16 %v1458, %v1454
  %v2527 = vpack.c.b16 %v1459, %v1455
  %v2528 = vpack.c.b16 %v1464, %v1460
  %v2529 = vpack.c.b16 %v1465, %v1461
  %v2530 = vpack.c.b16 %v1466, %v1462
  %v2531 = vpack.c.b16 %v1467, %v1463
  %v2532 = vpack.c.b16 %v1472, %v1468
  %v2533 = vpack.c.b16 %v1473, %v1469
  %v2534 = vpack.c.b16 %v1474, %v1470
  %v2535 = vpack.c.b16 %v1475, %v1471
  %v2536 = vpack.c.b16 %v1480, %v1476
  %v2537 = vpack.c.b16 %v1481, %v1477
  %v2538 = vpack.c.b16 %v1482, %v1478
  %v2539 = vpack.c.b16 %v1483, %v1479
  %v2540 = vpack.c.b16 %v1488, %v1484
  %v2541 = vpack.c.b16 %v1489, %v1485
  %v2542 = vpack.c.b16 %v1490, %v1486
  %v2543 = vpack.c.b16 %v1491, %v1487
  %v2544 = vpack.c.b16 %v1496, %v1492
  %v2545 = vpack.c.b16 %v1497, %v1493
  %v2546 = vpack.c.b16 %v1498, %v1494
  %v2547 = vpack.c.b16 %v1499, %v1495
  %v2548 = vpack.c.b16 %v1504, %v1500
  %v2549 = vpack.c.b16 %v1505, %v1501
  %v2550 = vpack.c.b16 %v1506, %v1502
  %v2551 = vpack.c.b16 %v1507, %v1503
  %v2552 = vpack.c.b16 %v1512, %v1508
  %v2553 = vpack.c.b16 %v1513, %v1509
  %v2554 = vpack.c.b16 %v1514, %v1510
  %v2555 = vpack.c.b16 %v1515, %v1511
  %v2556 = vpack.c.b16 %v1520, %v1516
  %v2557 = vpack.c.b16 %v1521, %v1517
  %v2558 = vpack.c.b16 %v1522, %v1518
  %v2559 = vpack.c.b16 %v1523, %v1519
  %v2560 = vpack.c.b16 %v1528, %v1524
  %v2561 = vpack.c.b16 %v1529, %v1525
  %v2562 = vpack.c.b16 %v1530, %v1526
  %v2563 = vpack.c.b16 %v1531, %v1527
  %v2564 = vpack.c.b16 %v1536, %v1532
  %v2565 = vpack.c.b16 %v1537, %v1533
  %v2566 = vpack.c.b16 %v1538, %v1534
  %v2567 = vpack.c.b16 %v1539, %v1535
  %v2568 = vpack.c.b16 %v1544, %v1540
  %v2569 = vpack.c.b16 %v1545, %v1541
  %v2570 = vpack.c.b16 %v1546, %v1542
  %v2571 = vpack.c.b16 %v1547, %v1543
  %v2572 = vpack.c.b16 %v1552, %v1548
  %v2573 = vpack.c.b16 %v1553, %v1549
  %v2574 = vpack.c.b16 %v1554, %v1550
  %v2575 = vpack.c.b16 %v1555, %v1551
  %v2576 = vpack.c.b16 %v1560, %v1556
  %v2577 = vpack.c.b16 %v1561, %v1557
  %v2578 = vpack.c.b16 %v1562, %v1558
  %v2579 = vpack.c.b16 %v1563, %v1559
  %v2580 = vpack.c.b16 %v1568, %v1564
  %v2581 = vpack.c.b16 %v1569, %v1565
  %v2582 = vpack.c.b16 %v1570, %v1566
  %v2583 = vpack.c.b16 %v1571, %v1567
  %v2584 = vpack.c.b16 %v1576, %v1572
  %v2585 = vpack.c.b16 %v1577, %v1573
  %v2586 = vpack.c.b16 %v1578, %v1574
  %v2587 = vpack.c.b16 %v1579, %v1575
  %v2588 = vpack.c.b16 %v1584, %v1580
  %v2589 = vpack.c.b16 %v1585, %v1581
  %v2590 = vpack.c.b16 %v1586, %v1582
  %v2591 = vpack.c.b16 %v1587, %v1583
  %v2592 = vpack.c.b16 %v1592, %v1588
  %v2593 = vpack.c.b16 %v1593, %v1589
  %v2594 = vpack.c.b16 %v1594, %v1590
  %v2595 = vpack.c.b16 %v1595, %v1591
  %v2596 = vpack.c.b16 %v1600, %v1596
  %v2597 = vpack.c.b16 %v1601, %v1597
  %v2598 = vpack.c.b16 %v1602, %v1598
  %v2599 = vpack.c.b16 %v1603, %v1599
  %v2600 = vpack.c.b16 %v1608, %v1604
  %v2601 = vpack.c.b16 %v1609, %v1605
  %v2602 = vpack.c.b16 %v1610, %v1606
  %v2603 = vpack.c.b16 %v1611, %v1607
  %v2604 = vpack.c.b16 %v1616, %v1612
  %v2605 = vpack.c.b16 %v1617, %v1613
  %v2606 = vpack.c.b16 %v1618, %v1614
  %v2607 = vpack.c.b16 %v1619, %v1615
  %v2608 = vpack.c.b16 %v1624, %v1620
  %v2609 = vpack.c.b16 %v1625, %v1621
  %v2610 = vpack.c.b16 %v1626, %v1622
  %v2611 = vpack.c.b16 %v1627, %v1623
  %v2612 = vpack.c.b16 %v1632, %v1628
  %v2613 = vpack.c.b16 %v1633, %v1629
  %v2614 = vpack.c.b16 %v1634, %v1630
  %v2615 = vpack.c.b16 %v1635, %v1631
  %v2616 = vpack.c.b16 %v1640, %v1636
  %v2617 = vpack.c.b16 %v1641, %v1637
  %v2618 = vpack.c.b16 %v1642, %v1638
  %v2619 = vpack.c.b16 %v1643, %v1639
  %v2620 = vpack.c.b16 %v1648, %v1644
  %v2621 = vpack.c.b16 %v1649, %v1645
  %v2622 = vpack.c.b16 %v1650, %v1646
  %v2623 = vpack.c.b16 %v1651, %v1647
  %v2624 = vpack.c.b16 %v1656, %v1652
  %v2625 = vpack.c.b16 %v1657, %v1653
  %v2626 = vpack.c.b16 %v1658, %v1654
  %v2627 = vpack.c.b16 %v1659, %v1655
  %v2628 = vpack.c.b16 %v1664, %v1660
  %v2629 = vpack.c.b16 %v1665, %v1661
  %v2630 = vpack.c.b16 %v1666, %v1662
  %v2631 = vpack.c.b16 %v1667, %v1663
  %v2632 = vpack.c.b16 %v1672, %v1668
  %v2633 = vpack.c.b16 %v1673, %v1669
  %v2634 = vpack.c.b16 %v1674, %v1670
  %v2635 = vpack.c.b16 %v1675, %v1671
  %v2636 = vpack.c.b16 %v1680, %v1676
  %v2637 = vpack.c.b16 %v1681, %v1677
  %v2638 = vpack.c.b16 %v1682, %v1678
  %v2639 = vpack.c.b16 %v1683, %v1679
  %v2640 = vpack.c.b16 %v1688, %v1684
  %v2641 = vpack.c.b16 %v1689, %v1685
  %v2642 = vpack.c.b16 %v1690, %v1686
  %v2643 = vpack.c.b16 %v1691, %v1687
  %v2644 = vpack.c.b16 %v1696, %v1692
  %v2645 = vpack.c.b16 %v1697, %v1693
  %v2646 = vpack.c.b16 %v1698, %v1694
  %v2647 = vpack.c.b16 %v1699, %v1695
  %v2648 = vpack.c.b16 %v1704, %v1700
  %v2649 = vpack.c.b16 %v1705, %v1701
  %v2650 = vpack.c.b16 %v1706, %v1702
  %v2651 = vpack.c.b16 %v1707, %v1703
  %v2652 = vpack.c.b16 %v1712, %v1708
  %v2653 = vpack.c.b16 %v1713, %v1709
  %v2654 = vpack.c.b16 %v1714, %v1710
  %v2655 = vpack.c.b16 %v1715, %v1711
  %v2656 = vpack.c.b16 %v1720, %v1716
  %v2657 = vpack.c.b16 %v1721, %v1717
  %v2658 = vpack.c.b16 %v1722, %v1718
  %v2659 = vpack.c.b16 %v1723, %v1719
  %v2660 = vpack.c.b16 %v1728, %v1724
  %v2661 = vpack.c.b16 %v1729, %v1725
  %v2662 = vpack.c.b16 %v1730, %v1726
  %v2663 = vpack.c.b16 %v1731, %v1727
  %v2664 = vpack.c.b16 %v1736, %v1732
  %v2665 = vpack.c.b16 %v1737, %v1733
  %v2666 = vpack.c.b16 %v1738, %v1734
  %v2667 = vpack.c.b16 %v1739, %v1735
  %v2668 = vpack.c.b16 %v1744, %v1740
  %v2669 = vpack.c.b16 %v1745, %v1741
  %v2670 = vpack.c.b16 %v1746, %v1742
  %v2671 = vpack.c.b16 %v1747, %v1743
  %v2672 = vpack.c.b16 %v1752, %v1748
  %v2673 = vpack.c.b16 %v1753, %v1749
  %v2674 = vpack.c.b16 %v1754, %v1750
  %v2675 = vpack.c.b16 %v1755, %v1751
  %v2676 = vpack.c.b16 %v1760, %v1756
  %v2677 = vpack.c.b16 %v1761, %v1757
  %v2678 = vpack.c.b16 %v1762, %v1758
  %v2679 = vpack.c.b16 %v1763, %v1759
  %v2680 = vpack.c.b16 %v1768, %v1764
  %v2681 = vpack.c.b16 %v1769, %v1765
  %v2682 = vpack.c.b16 %v1770, %v1766
  %v2683 = vpack.c.b16 %v1771, %v1767
  %v2684 = vpack.c.b16 %v1776, %v1772
  %v2685 = vpack.c.b16 %v1777, %v1773
  %v2686 = vpack.c.b16 %v1778, %v1774
  %v2687 = vpack.c.b16 %v1779, %v1775
  %v2688 = vpack.c.b16 %v1784, %v1780
  %v2689 = vpack.c.b16 %v1785, %v1781
  %v2690 = vpack.c.b16 %v1786, %v1782
  %v2691 = vpack.c.b16 %v1787, %v1783
  %v2692 = vpack.c.b16 %v1792, %v1788
  %v2693 = vpack.c.b16 %v1793, %v1789
  %v2694 = vpack.c.b16 %v1794, %v1790
  %v2695 = vpack.c.b16 %v1795, %v1791
  %v2696 = vpack.c.b16 %v1800, %v1796
  %v2697 = vpack.c.b16 %v1801, %v1797
  %v2698 = vpack.c.b16 %v1802, %v1798
  %v2699 = vpack.c.b16 %v1803, %v1799
  %v2700 = vpack.c.b16 %v1808, %v1804
  %v2701 = vpack.c.b16 %v1809, %v1805
  %v2702 = vpack.c.b16 %v1810, %v1806
  %v2703 = vpack.c.b16 %v1811, %v1807
  %v2704 = vpack.c.b16 %v1816, %v1812
  %v2705 = vpack.c.b16 %v1817, %v1813
  %v2706 = vpack.c.b16 %v1818, %v1814
  %v2707 = vpack.c.b16 %v1819, %v1815
  %v2708 = vpack.c.b16 %v1824, %v1820
  %v2709 = vpack.c.b16 %v1825, %v1821
  %v2710 = vpack.c.b16 %v1826, %v1822
  %v2711 = vpack.c.b16 %v1827, %v1823
  %v2712 = vpack.c.b16 %v1832, %v1828
  %v2713 = vpack.c.b16 %v1833, %v1829
  %v2714 = vpack.c.b16 %v1834, %v1830
  %v2715 = vpack.c.b16 %v1835, %v1831
  %v2716 = vpack.c.b16 %v1840, %v1836
  %v2717 = vpack.c.b16 %v1841, %v1837
  %v2718 = vpack.c.b16 %v1842, %v1838
  %v2719 = vpack.c.b16 %v1843, %v1839
  %v2720 = vpack.c.b16 %v1848, %v1844
  %v2721 = vpack.c.b16 %v1849, %v1845
  %v2722 = vpack.c.b16 %v1850, %v1846
  %v2723 = vpack.c.b16 %v1851, %v1847
  %v2724 = vpack.c.b16 %v1856, %v1852
  %v2725 = vpack.c.b16 %v1857, %v1853
  %v2726 = vpack.c.b16 %v1858, %v1854
  %v2727 = vpack.c.b16 %v1859, %v1855
  %v2728 = vpack.c.b16 %v1864, %v1860
  %v2729 = vpack.c.b16 %v1865, %v1861
  %v2730 = vpack.c.b16 %v1866, %v1862
  %v2731 = vpack.c.b16 %v1867, %v1863
  %v2732 = vpack.c.b16 %v1872, %v1868
  %v2733 = vpack.c.b16 %v1873, %v1869
  %v2734 = vpack.c.b16 %v1874, %v1870
  %v2735 = vpack.c.b16 %v1875, %v1871
  %v2736 = vpack.c.b16 %v1880, %v1876
  %v2737 = vpack.c.b16 %v1881, %v1877
  %v2738 = vpack.c.b16 %v1882, %v1878
  %v2739 = vpack.c.b16 %v1883, %v1879
  %v2740 = vpack.c.b16 %v1888, %v1884
  %v2741 = vpack.c.b16 %v1889, %v1885
  %v2742 = vpack.c.b16 %v1890, %v1886
  %v2743 = vpack.c.b16 %v1891, %v1887
  %v2744 = vpack.c.b16 %v1896, %v1892
  %v2745 = vpack.c.b16 %v1897, %v1893
  %v2746 = vpack.c.b16 %v1898, %v1894
  %v2747 = vpack.c.b16 %v1899, %v1895
  %v2748 = vpack.c.b16 %v1904, %v1900
  %v2749 = vpack.c.b16 %v1905, %v1901
  %v2750 = vpack.c.b16 %v1906, %v1902
  %v2751 = vpack.c.b16 %v1907, %v1903
  %v2752 = vpack.c.b16 %v1912, %v1908
  %v2753 = vpack.c.b16 %v1913, %v1909
  %v2754 = vpack.c.b16 %v1914, %v1910
  %v2755 = vpack.c.b16 %v1915, %v1911
  %v2756 = vpack.c.b16 %v1920, %v1916
  %v2757 = vpack.c.b16 %v1921, %v1917
  %v2758 = vpack.c.b16 %v1922, %v1918
  %v2759 = vpack.c.b16 %v1923, %v1919
  %v2760 = vpack.c.b16 %v1928, %v1924
  %v2761 = vpack.c.b16 %v1929, %v1925
  %v2762 = vpack.c.b16 %v1930, %v1926
  %v2763 = vpack.c.b16 %v1931, %v1927
  %v2764 = vpack.c.b16 %v1936, %v1932
  %v2765 = vpack.c.b16 %v1937, %v1933
  %v2766 = vpack.c.b16 %v1938, %v1934
  %v2767 = vpack.c.b16 %v1939, %v1935
  %v2768 = vpack.c.b16 %v1944, %v1940
  %v2769 = vpack.c.b16 %v1945, %v1941
  %v2770 = vpack.c.b16 %v1946, %v1942
  %v2771 = vpack.c.b16 %v1947, %v1943
  %v2772 = vpack.c.b16 %v1952, %v1948
  %v2773 = vpack.c.b16 %v1953, %v1949
  %v2774 = vpack.c.b16 %v1954, %v1950
  %v2775 = vpack.c.b16 %v1955, %v1951
  %v2776 = vpack.c.b16 %v1960, %v1956
  %v2777 = vpack.c.b16 %v1961, %v1957
  %v2778 = vpack.c.b16 %v1962, %v1958
  %v2779 = vpack.c.b16 %v1963, %v1959
  %v2780 = vpack.c.b16 %v1968, %v1964
  %v2781 = vpack.c.b16 %v1969, %v1965
  %v2782 = vpack.c.b16 %v1970, %v1966
  %v2783 = vpack.c.b16 %v1971, %v1967
  %v2784 = vpack.c.b16 %v1976, %v1972
  %v2785 = vpack.c.b16 %v1977, %v1973
  %v2786 = vpack.c.b16 %v1978, %v1974
  %v2787 = vpack.c.b16 %v1979, %v1975
  %v2788 = vpack.c.b16 %v1984, %v1980
  %v2789 = vpack.c.b16 %v1985, %v1981
  %v2790 = vpack.c.b16 %v1986, %v1982
  %v2791 = vpack.c.b16 %v1987, %v1983
  %v2792 = vpack.c.b16 %v1992, %v1988
  %v2793 = vpack.c.b16 %v1993, %v1989
  %v2794 = vpack.c.b16 %v1994, %v1990
  %v2795 = vpack.c.b16 %v1995, %v1991
  %v2796 = vpack.c.b16 %v2000, %v1996
  %v2797 = vpack.c.b16 %v2001, %v1997
  %v2798 = vpack.c.b16 %v2002, %v1998
  %v2799 = vpack.c.b16 %v2003, %v1999
  %v2800 = vpack.c.b16 %v2008, %v2004
  %v2801 = vpack.c.b16 %v2009, %v2005
  %v2802 = vpack.c.b16 %v2010, %v2006
  %v2803 = vpack.c.b16 %v2011, %v2007
  %v2804 = vpack.c.b16 %v2016, %v2012
  %v2805 = vpack.c.b16 %v2017, %v2013
  %v2806 = vpack.c.b16 %v2018, %v2014
  %v2807 = vpack.c.b16 %v2019, %v2015
  %v2808 = vpack.c.b16 %v2024, %v2020
  %v2809 = vpack.c.b16 %v2025, %v2021
  %v2810 = vpack.c.b16 %v2026, %v2022
  %v2811 = vpack.c.b16 %v2027, %v2023
  %v2812 = vpack.c.b16 %v2032, %v2028
  %v2813 = vpack.c.b16 %v2033, %v2029
  %v2814 = vpack.c.b16 %v2034, %v2030
  %v2815 = vpack.c.b16 %v2035, %v2031
  %v2816 = vpack.c.b16 %v2040, %v2036
  %v2817 = vpack.c.b16 %v2041, %v2037
  %v2818 = vpack.c.b16 %v2042, %v2038
  %v2819 = vpack.c.b16 %v2043, %v2039
  %v2820 = vpack.c.b16 %v2048, %v2044
  %v2821 = vpack.c.b16 %v2049, %v2045
  %v2822 = vpack.c.b16 %v2050, %v2046
  %v2823 = vpack.c.b16 %v2051, %v2047
  %v2824 = vpack.c.b16 %v2056, %v2052
  %v2825 = vpack.c.b16 %v2057, %v2053
  %v2826 = vpack.c.b16 %v2058, %v2054
  %v2827 = vpack.c.b16 %v2059, %v2055
  %v2828 = vpack.c.b16 %v2064, %v2060
  %v2829 = vpack.c.b16 %v2065, %v2061
  %v2830 = vpack.c.b16 %v2066, %v2062
  %v2831 = vpack.c.b16 %v2067, %v2063
  %v2832 = vpack.c.b16 %v2072, %v2068
  %v2833 = vpack.c.b16 %v2073, %v2069
  %v2834 = vpack.c.b16 %v2074, %v2070
  %v2835 = vpack.c.b16 %v2075, %v2071
  %v2836 = vpack.c.b16 %v2080, %v2076
  %v2837 = vpack.c.b16 %v2081, %v2077
  %v2838 = vpack.c.b16 %v2082, %v2078
  %v2839 = vpack.c.b16 %v2083, %v2079
  %v2840 = vpack.c.b16 %v2088, %v2084
  %v2841 = vpack.c.b16 %v2089, %v2085
  %v2842 = vpack.c.b16 %v2090, %v2086
  %v2843 = vpack.c.b16 %v2091, %v2087
  %v2844 = vpack.c.b16 %v2096, %v2092
  %v2845 = vpack.c.b16 %v2097, %v2093
  %v2846 = vpack.c.b16 %v2098, %v2094
  %v2847 = vpack.c.b16 %v2099, %v2095
  %v2848 = vpack.c.b16 %v2104, %v2100
  %v2849 = vpack.c.b16 %v2105, %v2101
  %v2850 = vpack.c.b16 %v2106, %v2102
  %v2851 = vpack.c.b16 %v2107, %v2103
  %v2852 = vpack.c.b16 %v2112, %v2108
  %v2853 = vpack.c.b16 %v2113, %v2109
  %v2854 = vpack.c.b16 %v2114, %v2110
  %v2855 = vpack.c.b16 %v2115, %v2111
  %v2856 = vpack.c.b16 %v2120, %v2116
  %v2857 = vpack.c.b16 %v2121, %v2117
  %v2858 = vpack.c.b16 %v2122, %v2118
  %v2859 = vpack.c.b16 %v2123, %v2119
  %v2860 = vpack.c.b16 %v2128, %v2124
  %v2861 = vpack.c.b16 %v2129, %v2125
  %v2862 = vpack.c.b16 %v2130, %v2126
  %v2863 = vpack.c.b16 %v2131, %v2127
  %v2864 = vpack.c.b16 %v2136, %v2132
  %v2865 = vpack.c.b16 %v2137, %v2133
  %v2866 = vpack.c.b16 %v2138, %v2134
  %v2867 = vpack.c.b16 %v2139, %v2135
  %v2868 = vpack.c.b16 %v2144, %v2140
  %v2869 = vpack.c.b16 %v2145, %v2141
  %v2870 = vpack.c.b16 %v2146, %v2142
  %v2871 = vpack.c.b16 %v2147, %v2143
  %v2872 = vpack.c.b16 %v2152, %v2148
  %v2873 = vpack.c.b16 %v2153, %v2149
  %v2874 = vpack.c.b16 %v2154, %v2150
  %v2875 = vpack.c.b16 %v2155, %v2151
  %v2876 = vpack.c.b16 %v2160, %v2156
  %v2877 = vpack.c.b16 %v2161, %v2157
  %v2878 = vpack.c.b16 %v2162, %v2158
  %v2879 = vpack.c.b16 %v2163, %v2159
  %v2880 = vpack.c.b16 %v2168, %v2164
  %v2881 = vpack.c.b16 %v2169, %v2165
  %v2882 = vpack.c.b16 %v2170, %v2166
  %v2883 = vpack.c.b16 %v2171, %v2167
  %v2884 = vpack.c.b16 %v2176, %v2172
  %v2885 = vpack.c.b16 %v2177, %v2173
  %v2886 = vpack.c.b16 %v2178, %v2174
  %v2887 = vpack.c.b16 %v2179, %v2175
  %v2888 = vpack.c.b16 %v2184, %v2180
  %v2889 = vpack.c.b16 %v2185, %v2181
  %v2890 = vpack.c.b16 %v2186, %v2182
  %v2891 = vpack.c.b16 %v2187, %v2183
  %v2892 = vpack.c.b16 %v2192, %v2188
  %v2893 = vpack.c.b16 %v2193, %v2189
  %v2894 = vpack.c.b16 %v2194, %v2190
  %v2895 = vpack.c.b16 %v2195, %v2191
  %v2896 = vpack.c.b16 %v2200, %v2196
  %v2897 = vpack.c.b16 %v2201, %v2197
  %v2898 = vpack.c.b16 %v2202, %v2198
  %v2899 = vpack.c.b16 %v2203, %v2199
  %v2900 = vpack.c.b16 %v2208, %v2204
  %v2901 = vpack.c.b16 %v2209, %v2205
  %v2902 = vpack.c.b16 %v2210, %v2206
  %v2903 = vpack.c.b16 %v2211, %v2207
  %v2904 = vpack.c.b16 %v2216, %v2212
  %v2905 = vpack.c.b16 %v2217, %v2213
  %v2906 = vpack.c.b16 %v2218, %v2214
  %v2907 = vpack.c.b16 %v2219, %v2215
  %v2908 = vpack.c.b16 %v2224, %v2220
  %v2909 = vpack.c.b16 %v2225, %v2221
  %v2910 = vpack.c.b16 %v2226, %v2222
  %v2911 = vpack.c.b16 %v2227, %v2223
  %v2912 = vpack.c.b16 %v2232, %v2228
  %v2913 = vpack.c.b16 %v2233, %v2229
  %v2914 = vpack.c.b16 %v2234, %v2230
  %v2915 = vpack.c.b16 %v2235, %v2231
  %v2916 = vpack.c.b16 %v2240, %v2236
  %v2917 = vpack.c.b16 %v2241, %v2237
  %v2918 = vpack.c.b16 %v2242, %v2238
  %v2919 = vpack.c.b16 %v2243, %v2239
  %v2920 = vpack.c.b16 %v2248, %v2244
  %v2921 = vpack.c.b16 %v2249, %v2245
  %v2922 = vpack.c.b16 %v2250, %v2246
  %v2923 = vpack.c.b16 %v2251, %v2247
  %v2924 = vpack.c.b16 %v2256, %v2252
  %v2925 = vpack.c.b16 %v2257, %v2253
  %v2926 = vpack.c.b16 %v2258, %v2254
  %v2927 = vpack.c.b16 %v2259, %v2255
  %v2928 = vpack.c.b16 %v2264, %v2260
  %v2929 = vpack.c.b16 %v2265, %v2261
  %v2930 = vpack.c.b16 %v2266, %v2262
  %v2931 = vpack.c.b16 %v2267, %v2263
  %v2932 = vpack.c.b16 %v2272, %v2268
  %v2933 = vpack.c.b16 %v2273, %v2269
  %v2934 = vpack.c.b16 %v2274, %v2270
  %v2935 = vpack.c.b16 %v2275, %v2271
  %v2936 = vpack.c.b16 %v2280, %v2276
  %v2937 = vpack.c.b16 %v2281, %v2277
  %v2938 = vpack.c.b16 %v2282, %v2278
  %v2939 = vpack.c.b16 %v2283, %v2279
  %v2940 = vpack.c.b16 %v2288, %v2284
  %v2941 = vpack.c.b16 %v2289, %v2285
  %v2942 = vpack.c.b16 %v2290, %v2286
  %v2943 = vpack.c.b16 %v2291, %v2287
  %v2944 = vpack.c.b16 %v2296, %v2292
  %v2945 = vpack.c.b16 %v2297, %v2293
  %v2946 = vpack.c.b16 %v2298, %v2294
  %v2947 = vpack.c.b16 %v2299, %v2295
  %v2948 = vpack.c.b16 %v2304, %v2300
  %v2949 = vpack.c.b16 %v2305, %v2301
  %v2950 = vpack.c.b16 %v2306, %v2302
  %v2951 = vpack.c.b16 %v2307, %v2303
  %v2952 = vpack.c.b16 %v2312, %v2308
  %v2953 = vpack.c.b16 %v2313, %v2309
  %v2954 = vpack.c.b16 %v2314, %v2310
  %v2955 = vpack.c.b16 %v2315, %v2311
  %v2956 = vpack.c.b16 %v2320, %v2316
  %v2957 = vpack.c.b16 %v2321, %v2317
  %v2958 = vpack.c.b16 %v2322, %v2318
  %v2959 = vpack.c.b16 %v2323, %v2319
  %v2960 = vpack.c.b16 %v2328, %v2324
  %v2961 = vpack.c.b16 %v2329, %v2325
  %v2962 = vpack.c.b16 %v2330, %v2326
  %v2963 = vpack.c.b16 %v2331, %v2327
  %v2964 = vpack.c.b16 %v2336, %v2332
  %v2965 = vpack.c.b16 %v2337, %v2333
  %v2966 = vpack.c.b16 %v2338, %v2334
  %v2967 = vpack.c.b16 %v2339, %v2335
  %v2968 = vpack.c.b16 %v2344, %v2340
  %v2969 = vpack.c.b16 %v2345, %v2341
  %v2970 = vpack.c.b16 %v2346, %v2342
  %v2971 = vpack.c.b16 %v2347, %v2343
  %v2972 = vpack.c.b16 %v2352, %v2348
  %v2973 = vpack.c.b16 %v2353, %v2349
  %v2974 = vpack.c.b16 %v2354, %v2350
  %v2975 = vpack.c.b16 %v2355, %v2351
  %v2976 = vpack.c.b16 %v2360, %v2356
  %v2977 = vpack.c.b16 %v2361, %v2357
  %v2978 = vpack.c.b16 %v2362, %v2358
  %v2979 = vpack.c.b16 %v2363, %v2359
  %v2980 = vpack.c.b16 %v2368, %v2364
  %v2981 = vpack.c.b16 %v2369, %v2365
  %v2982 = vpack.c.b16 %v2370, %v2366
  %v2983 = vpack.c.b16 %v2371, %v2367
  %v2984 = vpack.c.b16 %v2376, %v2372
  %v2985 = vpack.c.b16 %v2377, %v2373
  %v2986 = vpack.c.b16 %v2378, %v2374
  %v2987 = vpack.c.b16 %v2379, %v2375
  %v2988 = vpack.c.b16 %v2384, %v2380
  %v2989 = vpack.c.b16 %v2385, %v2381
  %v2990 = vpack.c.b16 %v2386, %v2382
  %v2991 = vpack.c.b16 %v2387, %v2383
  %v2992 = vpack.c.b16 %v2392, %v2388
  %v2993 = vpack.c.b16 %v2393, %v2389
  %v2994 = vpack.c.b16 %v2394, %v2390
  %v2995 = vpack.c.b16 %v2395, %v2391
  %v2996 = vpack.c.b16 %v2400, %v2396
  %v2997 = vpack.c.b16 %v2401, %v2397
  %v2998 = vpack.c.b16 %v2402, %v2398
  %v2999 = vpack.c.b16 %v2403, %v2399
  %v3000 = vpack.c.b16 %v2408, %v2404
  %v3001 = vpack.c.b16 %v2409, %v2405
  %v3002 = vpack.c.b16 %v2410, %v2406
  %v3003 = vpack.c.b16 %v2411, %v2407
  %v3004 = vpack.c.b16 %v2416, %v2412
  %v3005 = vpack.c.b16 %v2417, %v2413
  %v3006 = vpack.c.b16 %v2418, %v2414
  %v3007 = vpack.c.b16 %v2419, %v2415
  %v3008 = vpack.c.b16 %v2424, %v2420
  %v3009 = vpack.c.b16 %v2425, %v2421
  %v3010 = vpack.c.b16 %v2426, %v2422
  %v3011 = vpack.c.b16 %v2427, %v2423
  %v3012 = vpack.c.b16 %v2432, %v2428
  %v3013 = vpack.c.b16 %v2433, %v2429
  %v3014 = vpack.c.b16 %v2434, %v2430
  %v3015 = vpack.c.b16 %v2435, %v2431
  %v3016 = vpack.c.b16 %v2440, %v2436
  %v3017 = vpack.c.b16 %v2441, %v2437
  %v3018 = vpack.c.b16 %v2442, %v2438
  %v3019 = vpack.c.b16 %v2443, %v2439
  %3596 = vmatprep.subr.bf16.mxu0 %v2445
  %3597 = vmatpush1.bf16.msra.mxu0 %v2444
  %3598 = vmatprep.subr.bf16.mxu0 %v2449
  %3599 = vmatpush1.bf16.msra.mxu0 %v2448
  %3600 = vmatprep.subr.bf16.mxu0 %v2453
  %3601 = vmatpush1.bf16.msra.mxu0 %v2452
  %3602 = vmatprep.subr.bf16.mxu0 %v2457
  %3603 = vmatpush1.bf16.msra.mxu0 %v2456
  %3604 = vmatprep.subr.bf16.mxu0 %v2461
  %3605 = vmatpush1.bf16.msra.mxu0 %v2460
  %3606 = vmatprep.subr.bf16.mxu0 %v2465
  %3607 = vmatpush1.bf16.msra.mxu0 %v2464
  %3608 = vmatprep.subr.bf16.mxu0 %v2469
  %3609 = vmatpush1.bf16.msra.mxu0 %v2468
  %3610 = vmatprep.subr.bf16.mxu0 %v2473
  %3611 = vmatpush1.bf16.msra.mxu0 %v2472
  %3612 = vmatprep.subr.bf16.mxu0 %v2477
  %3613 = vmatpush1.bf16.msra.mxu0 %v2476
  %3614 = vmatprep.subr.bf16.mxu0 %v2481
  %3615 = vmatpush1.bf16.msra.mxu0 %v2480
  %3616 = vmatprep.subr.bf16.mxu0 %v2485
  %3617 = vmatpush1.bf16.msra.mxu0 %v2484
  %3618 = vmatprep.subr.bf16.mxu0 %v2489
  %3619 = vmatpush1.bf16.msra.mxu0 %v2488
  %3620 = vmatprep.subr.bf16.mxu0 %v2493
  %3621 = vmatpush1.bf16.msra.mxu0 %v2492
  %3622 = vmatprep.subr.bf16.mxu0 %v2497
  %3623 = vmatpush1.bf16.msra.mxu0 %v2496
  %3624 = vmatprep.subr.bf16.mxu0 %v2501
  %3625 = vmatpush1.bf16.msra.mxu0 %v2500
  %3626 = vmatprep.subr.bf16.mxu0 %v2505
  %3627 = vmatpush1.bf16.msra.mxu0 %v2504
  %3628 = vmatprep.mubr.bf16.mxu0 %v681
  %3629 = vmatmul.mubr.bf16.gmra.mrb[0].mxu0 %v680
  %v3630 = vpop.f32.mrb[0].mxu0
  %v3631 = vadd.f32 %v636, %v3630
  %v3632 = vpop.f32.mrb[0].mxu0
  %v3633 = vadd.f32 %v640, %v3632
  %v3634 = vpop.f32.mrb[0].mxu0
  %v3635 = vpop.f32.mrb[0].mxu0
  %3636 = vdwg.mxu0
  %3637 = vmatprep.subr.bf16.mxu0 %v2509
  %3638 = vmatpush1.bf16.msra.mxu0 %v2508
  %3639 = vmatprep.subr.bf16.mxu0 %v2513
  %3640 = vmatpush1.bf16.msra.mxu0 %v2512
  %3641 = vmatprep.subr.bf16.mxu0 %v2517
  %3642 = vmatpush1.bf16.msra.mxu0 %v2516
  %3643 = vmatprep.subr.bf16.mxu0 %v2521
  %3644 = vmatpush1.bf16.msra.mxu0 %v2520
  %3645 = vmatprep.subr.bf16.mxu0 %v2525
  %3646 = vmatpush1.bf16.msra.mxu0 %v2524
  %3647 = vmatprep.subr.bf16.mxu0 %v2529
  %3648 = vmatpush1.bf16.msra.mxu0 %v2528
  %3649 = vmatprep.subr.bf16.mxu0 %v2533
  %3650 = vmatpush1.bf16.msra.mxu0 %v2532
  %3651 = vmatprep.subr.bf16.mxu0 %v2537
  %3652 = vmatpush1.bf16.msra.mxu0 %v2536
  %3653 = vmatprep.subr.bf16.mxu0 %v2541
  %3654 = vmatpush1.bf16.msra.mxu0 %v2540
  %3655 = vmatprep.subr.bf16.mxu0 %v2545
  %3656 = vmatpush1.bf16.msra.mxu0 %v2544
  %3657 = vmatprep.subr.bf16.mxu0 %v2549
  %3658 = vmatpush1.bf16.msra.mxu0 %v2548
  %3659 = vmatprep.subr.bf16.mxu0 %v2553
  %3660 = vmatpush1.bf16.msra.mxu0 %v2552
  %3661 = vmatprep.subr.bf16.mxu0 %v2557
  %3662 = vmatpush1.bf16.msra.mxu0 %v2556
  %3663 = vmatprep.subr.bf16.mxu0 %v2561
  %3664 = vmatpush1.bf16.msra.mxu0 %v2560
  %3665 = vmatprep.subr.bf16.mxu0 %v2565
  %3666 = vmatpush1.bf16.msra.mxu0 %v2564
  %3667 = vmatprep.subr.bf16.mxu0 %v2569
  %3668 = vmatpush1.bf16.msra.mxu0 %v2568
  %3669 = vmatprep.mubr.bf16.mxu0 %v683
  %3670 = vmatmul.mubr.bf16.gmra.mrb[0].mxu0 %v682
  %v3671 = vpop.f32.mrb[0].mxu0
  %v3672 = vadd.f32 %v3631, %v3671
  %v3673 = vpop.f32.mrb[0].mxu0
  %v3674 = vadd.f32 %v3633, %v3673
  %v3675 = vpop.f32.mrb[0].mxu0
  %v3676 = vpop.f32.mrb[0].mxu0
  %3677 = vdwg.mxu0
  %3678 = vmatprep.subr.bf16.mxu0 %v2573
  %3679 = vmatpush1.bf16.msra.mxu0 %v2572
  %3680 = vmatprep.subr.bf16.mxu0 %v2577
  %3681 = vmatpush1.bf16.msra.mxu0 %v2576
  %3682 = vmatprep.subr.bf16.mxu0 %v2581
  %3683 = vmatpush1.bf16.msra.mxu0 %v2580
  %3684 = vmatprep.subr.bf16.mxu0 %v2585
  %3685 = vmatpush1.bf16.msra.mxu0 %v2584
  %3686 = vmatprep.subr.bf16.mxu0 %v2589
  %3687 = vmatpush1.bf16.msra.mxu0 %v2588
  %3688 = vmatprep.subr.bf16.mxu0 %v2593
  %3689 = vmatpush1.bf16.msra.mxu0 %v2592
  %3690 = vmatprep.subr.bf16.mxu0 %v2597
  %3691 = vmatpush1.bf16.msra.mxu0 %v2596
  %3692 = vmatprep.subr.bf16.mxu0 %v2601
  %3693 = vmatpush1.bf16.msra.mxu0 %v2600
  %3694 = vmatprep.subr.bf16.mxu0 %v2605
  %3695 = vmatpush1.bf16.msra.mxu0 %v2604
  %3696 = vmatprep.subr.bf16.mxu0 %v2609
  %3697 = vmatpush1.bf16.msra.mxu0 %v2608
  %3698 = vmatprep.subr.bf16.mxu0 %v2613
  %3699 = vmatpush1.bf16.msra.mxu0 %v2612
  %3700 = vmatprep.subr.bf16.mxu0 %v2617
  %3701 = vmatpush1.bf16.msra.mxu0 %v2616
  %3702 = vmatprep.subr.bf16.mxu0 %v2621
  %3703 = vmatpush1.bf16.msra.mxu0 %v2620
  %3704 = vmatprep.subr.bf16.mxu0 %v2625
  %3705 = vmatpush1.bf16.msra.mxu0 %v2624
  %3706 = vmatprep.subr.bf16.mxu0 %v2629
  %3707 = vmatpush1.bf16.msra.mxu0 %v2628
  %3708 = vmatprep.subr.bf16.mxu0 %v2633
  %3709 = vmatpush1.bf16.msra.mxu0 %v2632
  %3710 = vmatprep.mubr.bf16.mxu0 %v685
  %3711 = vmatmul.mubr.bf16.gmra.mrb[0].mxu0 %v684
  %v3712 = vpop.f32.mrb[0].mxu0
  %v3713 = vadd.f32 %v3672, %v3712
  %v3714 = vpop.f32.mrb[0].mxu0
  %v3715 = vadd.f32 %v3674, %v3714
  %v3716 = vpop.f32.mrb[0].mxu0
  %v3717 = vpop.f32.mrb[0].mxu0
  %3718 = vdwg.mxu0
  %3719 = vmatprep.subr.bf16.mxu0 %v2637
  %3720 = vmatpush1.bf16.msra.mxu0 %v2636
  %3721 = vmatprep.subr.bf16.mxu0 %v2641
  %3722 = vmatpush1.bf16.msra.mxu0 %v2640
  %3723 = vmatprep.subr.bf16.mxu0 %v2645
  %3724 = vmatpush1.bf16.msra.mxu0 %v2644
  %3725 = vmatprep.subr.bf16.mxu0 %v2649
  %3726 = vmatpush1.bf16.msra.mxu0 %v2648
  %3727 = vmatprep.subr.bf16.mxu0 %v2653
  %3728 = vmatpush1.bf16.msra.mxu0 %v2652
  %3729 = vmatprep.subr.bf16.mxu0 %v2657
  %3730 = vmatpush1.bf16.msra.mxu0 %v2656
  %3731 = vmatprep.subr.bf16.mxu0 %v2661
  %3732 = vmatpush1.bf16.msra.mxu0 %v2660
  %3733 = vmatprep.subr.bf16.mxu0 %v2665
  %3734 = vmatpush1.bf16.msra.mxu0 %v2664
  %3735 = vmatprep.subr.bf16.mxu0 %v2669
  %3736 = vmatpush1.bf16.msra.mxu0 %v2668
  %3737 = vmatprep.subr.bf16.mxu0 %v2673
  %3738 = vmatpush1.bf16.msra.mxu0 %v2672
  %3739 = vmatprep.subr.bf16.mxu0 %v2677
  %3740 = vmatpush1.bf16.msra.mxu0 %v2676
  %3741 = vmatprep.subr.bf16.mxu0 %v2681
  %3742 = vmatpush1.bf16.msra.mxu0 %v2680
  %3743 = vmatprep.subr.bf16.mxu0 %v2685
  %3744 = vmatpush1.bf16.msra.mxu0 %v2684
  %3745 = vmatprep.subr.bf16.mxu0 %v2689
  %3746 = vmatpush1.bf16.msra.mxu0 %v2688
  %3747 = vmatprep.subr.bf16.mxu0 %v2693
  %3748 = vmatpush1.bf16.msra.mxu0 %v2692
  %3749 = vmatprep.subr.bf16.mxu0 %v2697
  %3750 = vmatpush1.bf16.msra.mxu0 %v2696
  %3751 = vmatprep.mubr.bf16.mxu0 %v687
  %3752 = vmatmul.mubr.bf16.gmra.mrb[0].mxu0 %v686
  %v3753 = vpop.f32.mrb[0].mxu0
  %v3754 = vadd.f32 %v3713, %v3753
  %v3755 = vpop.f32.mrb[0].mxu0
  %v3756 = vadd.f32 %v3715, %v3755
  %v3757 = vpop.f32.mrb[0].mxu0
  %v3758 = vpop.f32.mrb[0].mxu0
  %3759 = vdwg.mxu0
  %3760 = vmatprep.subr.bf16.mxu0 %v2701
  %3761 = vmatpush1.bf16.msra.mxu0 %v2700
  %3762 = vmatprep.subr.bf16.mxu0 %v2705
  %3763 = vmatpush1.bf16.msra.mxu0 %v2704
  %3764 = vmatprep.subr.bf16.mxu0 %v2709
  %3765 = vmatpush1.bf16.msra.mxu0 %v2708
  %3766 = vmatprep.subr.bf16.mxu0 %v2713
  %3767 = vmatpush1.bf16.msra.mxu0 %v2712
  %3768 = vmatprep.subr.bf16.mxu0 %v2717
  %3769 = vmatpush1.bf16.msra.mxu0 %v2716
  %3770 = vmatprep.subr.bf16.mxu0 %v2721
  %3771 = vmatpush1.bf16.msra.mxu0 %v2720
  %3772 = vmatprep.subr.bf16.mxu0 %v2725
  %3773 = vmatpush1.bf16.msra.mxu0 %v2724
  %3774 = vmatprep.subr.bf16.mxu0 %v2729
  %3775 = vmatpush1.bf16.msra.mxu0 %v2728
  %3776 = vmatprep.subr.bf16.mxu0 %v2733
  %3777 = vmatpush1.bf16.msra.mxu0 %v2732
  %3778 = vmatprep.subr.bf16.mxu0 %v2737
  %3779 = vmatpush1.bf16.msra.mxu0 %v2736
  %3780 = vmatprep.subr.bf16.mxu0 %v2741
  %3781 = vmatpush1.bf16.msra.mxu0 %v2740
  %3782 = vmatprep.subr.bf16.mxu0 %v2745
  %3783 = vmatpush1.bf16.msra.mxu0 %v2744
  %3784 = vmatprep.subr.bf16.mxu0 %v2749
  %3785 = vmatpush1.bf16.msra.mxu0 %v2748
  %3786 = vmatprep.subr.bf16.mxu0 %v2753
  %3787 = vmatpush1.bf16.msra.mxu0 %v2752
  %3788 = vmatprep.subr.bf16.mxu0 %v2757
  %3789 = vmatpush1.bf16.msra.mxu0 %v2756
  %3790 = vmatprep.subr.bf16.mxu0 %v2761
  %3791 = vmatpush1.bf16.msra.mxu0 %v2760
  %3792 = vmatprep.mubr.bf16.mxu0 %v689
  %3793 = vmatmul.mubr.bf16.gmra.mrb[0].mxu0 %v688
  %v3794 = vpop.f32.mrb[0].mxu0
  %v3795 = vadd.f32 %v3754, %v3794
  %v3796 = vpop.f32.mrb[0].mxu0
  %v3797 = vadd.f32 %v3756, %v3796
  %v3798 = vpop.f32.mrb[0].mxu0
  %v3799 = vpop.f32.mrb[0].mxu0
  %3800 = vdwg.mxu0
  %3801 = vmatprep.subr.bf16.mxu0 %v2765
  %3802 = vmatpush1.bf16.msra.mxu0 %v2764
  %3803 = vmatprep.subr.bf16.mxu0 %v2769
  %3804 = vmatpush1.bf16.msra.mxu0 %v2768
  %3805 = vmatprep.subr.bf16.mxu0 %v2773
  %3806 = vmatpush1.bf16.msra.mxu0 %v2772
  %3807 = vmatprep.subr.bf16.mxu0 %v2777
  %3808 = vmatpush1.bf16.msra.mxu0 %v2776
  %3809 = vmatprep.subr.bf16.mxu0 %v2781
  %3810 = vmatpush1.bf16.msra.mxu0 %v2780
  %3811 = vmatprep.subr.bf16.mxu0 %v2785
  %3812 = vmatpush1.bf16.msra.mxu0 %v2784
  %3813 = vmatprep.subr.bf16.mxu0 %v2789
  %3814 = vmatpush1.bf16.msra.mxu0 %v2788
  %3815 = vmatprep.subr.bf16.mxu0 %v2793
  %3816 = vmatpush1.bf16.msra.mxu0 %v2792
  %3817 = vmatprep.subr.bf16.mxu0 %v2797
  %3818 = vmatpush1.bf16.msra.mxu0 %v2796
  %3819 = vmatprep.subr.bf16.mxu0 %v2801
  %3820 = vmatpush1.bf16.msra.mxu0 %v2800
  %3821 = vmatprep.subr.bf16.mxu0 %v2805
  %3822 = vmatpush1.bf16.msra.mxu0 %v2804
  %3823 = vmatprep.subr.bf16.mxu0 %v2809
  %3824 = vmatpush1.bf16.msra.mxu0 %v2808
  %3825 = vmatprep.subr.bf16.mxu0 %v2813
  %3826 = vmatpush1.bf16.msra.mxu0 %v2812
  %3827 = vmatprep.subr.bf16.mxu0 %v2817
  %3828 = vmatpush1.bf16.msra.mxu0 %v2816
  %3829 = vmatprep.subr.bf16.mxu0 %v2821
  %3830 = vmatpush1.bf16.msra.mxu0 %v2820
  %3831 = vmatprep.subr.bf16.mxu0 %v2825
  %3832 = vmatpush1.bf16.msra.mxu0 %v2824
  %3833 = vmatprep.mubr.bf16.mxu0 %v691
  %3834 = vmatmul.mubr.bf16.gmra.mrb[0].mxu0 %v690
  %v3835 = vpop.f32.mrb[0].mxu0
  %v3836 = vadd.f32 %v3795, %v3835
  %v3837 = vpop.f32.mrb[0].mxu0
  %v3838 = vadd.f32 %v3797, %v3837
  %v3839 = vpop.f32.mrb[0].mxu0
  %v3840 = vpop.f32.mrb[0].mxu0
  %3841 = vdwg.mxu0
  %3842 = vmatprep.subr.bf16.mxu0 %v2829
  %3843 = vmatpush1.bf16.msra.mxu0 %v2828
  %3844 = vmatprep.subr.bf16.mxu0 %v2833
  %3845 = vmatpush1.bf16.msra.mxu0 %v2832
  %3846 = vmatprep.subr.bf16.mxu0 %v2837
  %3847 = vmatpush1.bf16.msra.mxu0 %v2836
  %3848 = vmatprep.subr.bf16.mxu0 %v2841
  %3849 = vmatpush1.bf16.msra.mxu0 %v2840
  %3850 = vmatprep.subr.bf16.mxu0 %v2845
  %3851 = vmatpush1.bf16.msra.mxu0 %v2844
  %3852 = vmatprep.subr.bf16.mxu0 %v2849
  %3853 = vmatpush1.bf16.msra.mxu0 %v2848
  %3854 = vmatprep.subr.bf16.mxu0 %v2853
  %3855 = vmatpush1.bf16.msra.mxu0 %v2852
  %3856 = vmatprep.subr.bf16.mxu0 %v2857
  %3857 = vmatpush1.bf16.msra.mxu0 %v2856
  %3858 = vmatprep.subr.bf16.mxu0 %v2861
  %3859 = vmatpush1.bf16.msra.mxu0 %v2860
  %3860 = vmatprep.subr.bf16.mxu0 %v2865
  %3861 = vmatpush1.bf16.msra.mxu0 %v2864
  %3862 = vmatprep.subr.bf16.mxu0 %v2869
  %3863 = vmatpush1.bf16.msra.mxu0 %v2868
  %3864 = vmatprep.subr.bf16.mxu0 %v2873
  %3865 = vmatpush1.bf16.msra.mxu0 %v2872
  %3866 = vmatprep.subr.bf16.mxu0 %v2877
  %3867 = vmatpush1.bf16.msra.mxu0 %v2876
  %3868 = vmatprep.subr.bf16.mxu0 %v2881
  %3869 = vmatpush1.bf16.msra.mxu0 %v2880
  %3870 = vmatprep.subr.bf16.mxu0 %v2885
  %3871 = vmatpush1.bf16.msra.mxu0 %v2884
  %3872 = vmatprep.subr.bf16.mxu0 %v2889
  %3873 = vmatpush1.bf16.msra.mxu0 %v2888
  %3874 = vmatprep.mubr.bf16.mxu0 %v693
  %3875 = vmatmul.mubr.bf16.gmra.mrb[0].mxu0 %v692
  %v3876 = vpop.f32.mrb[0].mxu0
  %v3877 = vadd.f32 %v3836, %v3876
  %v3878 = vpop.f32.mrb[0].mxu0
  %v3879 = vadd.f32 %v3838, %v3878
  %v3880 = vpop.f32.mrb[0].mxu0
  %v3881 = vpop.f32.mrb[0].mxu0
  %3882 = vdwg.mxu0
  %3883 = vmatprep.subr.bf16.mxu0 %v2893
  %3884 = vmatpush1.bf16.msra.mxu0 %v2892
  %3885 = vmatprep.subr.bf16.mxu0 %v2897
  %3886 = vmatpush1.bf16.msra.mxu0 %v2896
  %3887 = vmatprep.subr.bf16.mxu0 %v2901
  %3888 = vmatpush1.bf16.msra.mxu0 %v2900
  %3889 = vmatprep.subr.bf16.mxu0 %v2905
  %3890 = vmatpush1.bf16.msra.mxu0 %v2904
  %3891 = vmatprep.subr.bf16.mxu0 %v2909
  %3892 = vmatpush1.bf16.msra.mxu0 %v2908
  %3893 = vmatprep.subr.bf16.mxu0 %v2913
  %3894 = vmatpush1.bf16.msra.mxu0 %v2912
  %3895 = vmatprep.subr.bf16.mxu0 %v2917
  %3896 = vmatpush1.bf16.msra.mxu0 %v2916
  %3897 = vmatprep.subr.bf16.mxu0 %v2921
  %3898 = vmatpush1.bf16.msra.mxu0 %v2920
  %3899 = vmatprep.subr.bf16.mxu0 %v2925
  %3900 = vmatpush1.bf16.msra.mxu0 %v2924
  %3901 = vmatprep.subr.bf16.mxu0 %v2929
  %3902 = vmatpush1.bf16.msra.mxu0 %v2928
  %3903 = vmatprep.subr.bf16.mxu0 %v2933
  %3904 = vmatpush1.bf16.msra.mxu0 %v2932
  %3905 = vmatprep.subr.bf16.mxu0 %v2937
  %3906 = vmatpush1.bf16.msra.mxu0 %v2936
  %3907 = vmatprep.subr.bf16.mxu0 %v2941
  %3908 = vmatpush1.bf16.msra.mxu0 %v2940
  %3909 = vmatprep.subr.bf16.mxu0 %v2945
  %3910 = vmatpush1.bf16.msra.mxu0 %v2944
  %3911 = vmatprep.subr.bf16.mxu0 %v2949
  %3912 = vmatpush1.bf16.msra.mxu0 %v2948
  %3913 = vmatprep.subr.bf16.mxu0 %v2953
  %3914 = vmatpush1.bf16.msra.mxu0 %v2952
  %3915 = vmatprep.mubr.bf16.mxu0 %v695
  %3916 = vmatmul.mubr.bf16.gmra.mrb[0].mxu0 %v694
  %v3917 = vpop.f32.mrb[0].mxu0
  %v3918 = vadd.f32 %v3877, %v3917
  %v3919 = vpop.f32.mrb[0].mxu0
  %v3920 = vadd.f32 %v3879, %v3919
  %v3921 = vpop.f32.mrb[0].mxu0
  %v3922 = vpop.f32.mrb[0].mxu0
  %3923 = vdwg.mxu0
  %3924 = vmatprep.subr.bf16.mxu0 %v2957
  %3925 = vmatpush1.bf16.msra.mxu0 %v2956
  %3926 = vmatprep.subr.bf16.mxu0 %v2961
  %3927 = vmatpush1.bf16.msra.mxu0 %v2960
  %3928 = vmatprep.subr.bf16.mxu0 %v2965
  %3929 = vmatpush1.bf16.msra.mxu0 %v2964
  %3930 = vmatprep.subr.bf16.mxu0 %v2969
  %3931 = vmatpush1.bf16.msra.mxu0 %v2968
  %3932 = vmatprep.subr.bf16.mxu0 %v2973
  %3933 = vmatpush1.bf16.msra.mxu0 %v2972
  %3934 = vmatprep.subr.bf16.mxu0 %v2977
  %3935 = vmatpush1.bf16.msra.mxu0 %v2976
  %3936 = vmatprep.subr.bf16.mxu0 %v2981
  %3937 = vmatpush1.bf16.msra.mxu0 %v2980
  %3938 = vmatprep.subr.bf16.mxu0 %v2985
  %3939 = vmatpush1.bf16.msra.mxu0 %v2984
  %3940 = vmatprep.subr.bf16.mxu0 %v2989
  %3941 = vmatpush1.bf16.msra.mxu0 %v2988
  %3942 = vmatprep.subr.bf16.mxu0 %v2993
  %3943 = vmatpush1.bf16.msra.mxu0 %v2992
  %3944 = vmatprep.subr.bf16.mxu0 %v2997
  %3945 = vmatpush1.bf16.msra.mxu0 %v2996
  %3946 = vmatprep.subr.bf16.mxu0 %v3001
  %3947 = vmatpush1.bf16.msra.mxu0 %v3000
  %3948 = vmatprep.subr.bf16.mxu0 %v3005
  %3949 = vmatpush1.bf16.msra.mxu0 %v3004
  %3950 = vmatprep.subr.bf16.mxu0 %v3009
  %3951 = vmatpush1.bf16.msra.mxu0 %v3008
  %3952 = vmatprep.subr.bf16.mxu0 %v3013
  %3953 = vmatpush1.bf16.msra.mxu0 %v3012
  %3954 = vmatprep.subr.bf16.mxu0 %v3017
  %3955 = vmatpush1.bf16.msra.mxu0 %v3016
  %3956 = vmatprep.mubr.bf16.mxu0 %v697
  %3957 = vmatmul.mubr.bf16.gmra.mrb[0].mxu0 %v696
  %v3958 = vpop.f32.mrb[0].mxu0
  %v3959 = vadd.f32 %v3918, %v3958
  %v3960 = vpop.f32.mrb[0].mxu0
  %v3961 = vadd.f32 %v3920, %v3960
  %v3962 = vpop.f32.mrb[0].mxu0
  %v3963 = vpop.f32.mrb[0].mxu0
  %3964 = vdwg.mxu0
  %3965 = vmatprep.subr.bf16.mxu0 %v2447
  %3966 = vmatpush1.bf16.msra.mxu0 %v2446
  %3967 = vmatprep.subr.bf16.mxu0 %v2451
  %3968 = vmatpush1.bf16.msra.mxu0 %v2450
  %3969 = vmatprep.subr.bf16.mxu0 %v2455
  %3970 = vmatpush1.bf16.msra.mxu0 %v2454
  %3971 = vmatprep.subr.bf16.mxu0 %v2459
  %3972 = vmatpush1.bf16.msra.mxu0 %v2458
  %3973 = vmatprep.subr.bf16.mxu0 %v2463
  %3974 = vmatpush1.bf16.msra.mxu0 %v2462
  %3975 = vmatprep.subr.bf16.mxu0 %v2467
  %3976 = vmatpush1.bf16.msra.mxu0 %v2466
  %3977 = vmatprep.subr.bf16.mxu0 %v2471
  %3978 = vmatpush1.bf16.msra.mxu0 %v2470
  %3979 = vmatprep.subr.bf16.mxu0 %v2475
  %3980 = vmatpush1.bf16.msra.mxu0 %v2474
  %3981 = vmatprep.subr.bf16.mxu0 %v2479
  %3982 = vmatpush1.bf16.msra.mxu0 %v2478
  %3983 = vmatprep.subr.bf16.mxu0 %v2483
  %3984 = vmatpush1.bf16.msra.mxu0 %v2482
  %3985 = vmatprep.subr.bf16.mxu0 %v2487
  %3986 = vmatpush1.bf16.msra.mxu0 %v2486
  %3987 = vmatprep.subr.bf16.mxu0 %v2491
  %3988 = vmatpush1.bf16.msra.mxu0 %v2490
  %3989 = vmatprep.subr.bf16.mxu0 %v2495
  %3990 = vmatpush1.bf16.msra.mxu0 %v2494
  %3991 = vmatprep.subr.bf16.mxu0 %v2499
  %3992 = vmatpush1.bf16.msra.mxu0 %v2498
  %3993 = vmatprep.subr.bf16.mxu0 %v2503
  %3994 = vmatpush1.bf16.msra.mxu0 %v2502
  %3995 = vmatprep.subr.bf16.mxu0 %v2507
  %3996 = vmatpush1.bf16.msra.mxu0 %v2506
  %3997 = vmatprep.mubr.bf16.mxu0 %v681
  %3998 = vmatmul.mubr.bf16.gmra.mrb[0].mxu0 %v680
  %v3999 = vpop.f32.mrb[0].mxu0
  %v4000 = vadd.f32 %v644, %v3999
  %v4001 = vpop.f32.mrb[0].mxu0
  %v4002 = vadd.f32 %v648, %v4001
  %v4003 = vpop.f32.mrb[0].mxu0
  %v4004 = vpop.f32.mrb[0].mxu0
  %4005 = vdwg.mxu0
  %4006 = vmatprep.subr.bf16.mxu0 %v2511
  %4007 = vmatpush1.bf16.msra.mxu0 %v2510
  %4008 = vmatprep.subr.bf16.mxu0 %v2515
  %4009 = vmatpush1.bf16.msra.mxu0 %v2514
  %4010 = vmatprep.subr.bf16.mxu0 %v2519
  %4011 = vmatpush1.bf16.msra.mxu0 %v2518
  %4012 = vmatprep.subr.bf16.mxu0 %v2523
  %4013 = vmatpush1.bf16.msra.mxu0 %v2522
  %4014 = vmatprep.subr.bf16.mxu0 %v2527
  %4015 = vmatpush1.bf16.msra.mxu0 %v2526
  %4016 = vmatprep.subr.bf16.mxu0 %v2531
  %4017 = vmatpush1.bf16.msra.mxu0 %v2530
  %4018 = vmatprep.subr.bf16.mxu0 %v2535
  %4019 = vmatpush1.bf16.msra.mxu0 %v2534
  %4020 = vmatprep.subr.bf16.mxu0 %v2539
  %4021 = vmatpush1.bf16.msra.mxu0 %v2538
  %4022 = vmatprep.subr.bf16.mxu0 %v2543
  %4023 = vmatpush1.bf16.msra.mxu0 %v2542
  %4024 = vmatprep.subr.bf16.mxu0 %v2547
  %4025 = vmatpush1.bf16.msra.mxu0 %v2546
  %4026 = vmatprep.subr.bf16.mxu0 %v2551
  %4027 = vmatpush1.bf16.msra.mxu0 %v2550
  %4028 = vmatprep.subr.bf16.mxu0 %v2555
  %4029 = vmatpush1.bf16.msra.mxu0 %v2554
  %4030 = vmatprep.subr.bf16.mxu0 %v2559
  %4031 = vmatpush1.bf16.msra.mxu0 %v2558
  %4032 = vmatprep.subr.bf16.mxu0 %v2563
  %4033 = vmatpush1.bf16.msra.mxu0 %v2562
  %4034 = vmatprep.subr.bf16.mxu0 %v2567
  %4035 = vmatpush1.bf16.msra.mxu0 %v2566
  %4036 = vmatprep.subr.bf16.mxu0 %v2571
  %4037 = vmatpush1.bf16.msra.mxu0 %v2570
  %4038 = vmatprep.mubr.bf16.mxu0 %v683
  %4039 = vmatmul.mubr.bf16.gmra.mrb[0].mxu0 %v682
  %v4040 = vpop.f32.mrb[0].mxu0
  %v4041 = vadd.f32 %v4000, %v4040
  %v4042 = vpop.f32.mrb[0].mxu0
  %v4043 = vadd.f32 %v4002, %v4042
  %v4044 = vpop.f32.mrb[0].mxu0
  %v4045 = vpop.f32.mrb[0].mxu0
  %4046 = vdwg.mxu0
  %4047 = vmatprep.subr.bf16.mxu0 %v2575
  %4048 = vmatpush1.bf16.msra.mxu0 %v2574
  %4049 = vmatprep.subr.bf16.mxu0 %v2579
  %4050 = vmatpush1.bf16.msra.mxu0 %v2578
  %4051 = vmatprep.subr.bf16.mxu0 %v2583
  %4052 = vmatpush1.bf16.msra.mxu0 %v2582
  %4053 = vmatprep.subr.bf16.mxu0 %v2587
  %4054 = vmatpush1.bf16.msra.mxu0 %v2586
  %4055 = vmatprep.subr.bf16.mxu0 %v2591
  %4056 = vmatpush1.bf16.msra.mxu0 %v2590
  %4057 = vmatprep.subr.bf16.mxu0 %v2595
  %4058 = vmatpush1.bf16.msra.mxu0 %v2594
  %4059 = vmatprep.subr.bf16.mxu0 %v2599
  %4060 = vmatpush1.bf16.msra.mxu0 %v2598
  %4061 = vmatprep.subr.bf16.mxu0 %v2603
  %4062 = vmatpush1.bf16.msra.mxu0 %v2602
  %4063 = vmatprep.subr.bf16.mxu0 %v2607
  %4064 = vmatpush1.bf16.msra.mxu0 %v2606
  %4065 = vmatprep.subr.bf16.mxu0 %v2611
  %4066 = vmatpush1.bf16.msra.mxu0 %v2610
  %4067 = vmatprep.subr.bf16.mxu0 %v2615
  %4068 = vmatpush1.bf16.msra.mxu0 %v2614
  %4069 = vmatprep.subr.bf16.mxu0 %v2619
  %4070 = vmatpush1.bf16.msra.mxu0 %v2618
  %4071 = vmatprep.subr.bf16.mxu0 %v2623
  %4072 = vmatpush1.bf16.msra.mxu0 %v2622
  %4073 = vmatprep.subr.bf16.mxu0 %v2627
  %4074 = vmatpush1.bf16.msra.mxu0 %v2626
  %4075 = vmatprep.subr.bf16.mxu0 %v2631
  %4076 = vmatpush1.bf16.msra.mxu0 %v2630
  %4077 = vmatprep.subr.bf16.mxu0 %v2635
  %4078 = vmatpush1.bf16.msra.mxu0 %v2634
  %4079 = vmatprep.mubr.bf16.mxu0 %v685
  %4080 = vmatmul.mubr.bf16.gmra.mrb[0].mxu0 %v684
  %v4081 = vpop.f32.mrb[0].mxu0
  %v4082 = vadd.f32 %v4041, %v4081
  %v4083 = vpop.f32.mrb[0].mxu0
  %v4084 = vadd.f32 %v4043, %v4083
  %v4085 = vpop.f32.mrb[0].mxu0
  %v4086 = vpop.f32.mrb[0].mxu0
  %4087 = vdwg.mxu0
  %4088 = vmatprep.subr.bf16.mxu0 %v2639
  %4089 = vmatpush1.bf16.msra.mxu0 %v2638
  %4090 = vmatprep.subr.bf16.mxu0 %v2643
  %4091 = vmatpush1.bf16.msra.mxu0 %v2642
  %4092 = vmatprep.subr.bf16.mxu0 %v2647
  %4093 = vmatpush1.bf16.msra.mxu0 %v2646
  %4094 = vmatprep.subr.bf16.mxu0 %v2651
  %4095 = vmatpush1.bf16.msra.mxu0 %v2650
  %4096 = vmatprep.subr.bf16.mxu0 %v2655
  %4097 = vmatpush1.bf16.msra.mxu0 %v2654
  %4098 = vmatprep.subr.bf16.mxu0 %v2659
  %4099 = vmatpush1.bf16.msra.mxu0 %v2658
  %4100 = vmatprep.subr.bf16.mxu0 %v2663
  %4101 = vmatpush1.bf16.msra.mxu0 %v2662
  %4102 = vmatprep.subr.bf16.mxu0 %v2667
  %4103 = vmatpush1.bf16.msra.mxu0 %v2666
  %4104 = vmatprep.subr.bf16.mxu0 %v2671
  %4105 = vmatpush1.bf16.msra.mxu0 %v2670
  %4106 = vmatprep.subr.bf16.mxu0 %v2675
  %4107 = vmatpush1.bf16.msra.mxu0 %v2674
  %4108 = vmatprep.subr.bf16.mxu0 %v2679
  %4109 = vmatpush1.bf16.msra.mxu0 %v2678
  %4110 = vmatprep.subr.bf16.mxu0 %v2683
  %4111 = vmatpush1.bf16.msra.mxu0 %v2682
  %4112 = vmatprep.subr.bf16.mxu0 %v2687
  %4113 = vmatpush1.bf16.msra.mxu0 %v2686
  %4114 = vmatprep.subr.bf16.mxu0 %v2691
  %4115 = vmatpush1.bf16.msra.mxu0 %v2690
  %4116 = vmatprep.subr.bf16.mxu0 %v2695
  %4117 = vmatpush1.bf16.msra.mxu0 %v2694
  %4118 = vmatprep.subr.bf16.mxu0 %v2699
  %4119 = vmatpush1.bf16.msra.mxu0 %v2698
  %4120 = vmatprep.mubr.bf16.mxu0 %v687
  %4121 = vmatmul.mubr.bf16.gmra.mrb[0].mxu0 %v686
  %v4122 = vpop.f32.mrb[0].mxu0
  %v4123 = vadd.f32 %v4082, %v4122
  %v4124 = vpop.f32.mrb[0].mxu0
  %v4125 = vadd.f32 %v4084, %v4124
  %v4126 = vpop.f32.mrb[0].mxu0
  %v4127 = vpop.f32.mrb[0].mxu0
  %4128 = vdwg.mxu0
  %4129 = vmatprep.subr.bf16.mxu0 %v2703
  %4130 = vmatpush1.bf16.msra.mxu0 %v2702
  %4131 = vmatprep.subr.bf16.mxu0 %v2707
  %4132 = vmatpush1.bf16.msra.mxu0 %v2706
  %4133 = vmatprep.subr.bf16.mxu0 %v2711
  %4134 = vmatpush1.bf16.msra.mxu0 %v2710
  %4135 = vmatprep.subr.bf16.mxu0 %v2715
  %4136 = vmatpush1.bf16.msra.mxu0 %v2714
  %4137 = vmatprep.subr.bf16.mxu0 %v2719
  %4138 = vmatpush1.bf16.msra.mxu0 %v2718
  %4139 = vmatprep.subr.bf16.mxu0 %v2723
  %4140 = vmatpush1.bf16.msra.mxu0 %v2722
  %4141 = vmatprep.subr.bf16.mxu0 %v2727
  %4142 = vmatpush1.bf16.msra.mxu0 %v2726
  %4143 = vmatprep.subr.bf16.mxu0 %v2731
  %4144 = vmatpush1.bf16.msra.mxu0 %v2730
  %4145 = vmatprep.subr.bf16.mxu0 %v2735
  %4146 = vmatpush1.bf16.msra.mxu0 %v2734
  %4147 = vmatprep.subr.bf16.mxu0 %v2739
  %4148 = vmatpush1.bf16.msra.mxu0 %v2738
  %4149 = vmatprep.subr.bf16.mxu0 %v2743
  %4150 = vmatpush1.bf16.msra.mxu0 %v2742
  %4151 = vmatprep.subr.bf16.mxu0 %v2747
  %4152 = vmatpush1.bf16.msra.mxu0 %v2746
  %4153 = vmatprep.subr.bf16.mxu0 %v2751
  %4154 = vmatpush1.bf16.msra.mxu0 %v2750
  %4155 = vmatprep.subr.bf16.mxu0 %v2755
  %4156 = vmatpush1.bf16.msra.mxu0 %v2754
  %4157 = vmatprep.subr.bf16.mxu0 %v2759
  %4158 = vmatpush1.bf16.msra.mxu0 %v2758
  %4159 = vmatprep.subr.bf16.mxu0 %v2763
  %4160 = vmatpush1.bf16.msra.mxu0 %v2762
  %4161 = vmatprep.mubr.bf16.mxu0 %v689
  %4162 = vmatmul.mubr.bf16.gmra.mrb[0].mxu0 %v688
  %v4163 = vpop.f32.mrb[0].mxu0
  %v4164 = vadd.f32 %v4123, %v4163
  %v4165 = vpop.f32.mrb[0].mxu0
  %v4166 = vadd.f32 %v4125, %v4165
  %v4167 = vpop.f32.mrb[0].mxu0
  %v4168 = vpop.f32.mrb[0].mxu0
  %4169 = vdwg.mxu0
  %4170 = vmatprep.subr.bf16.mxu0 %v2767
  %4171 = vmatpush1.bf16.msra.mxu0 %v2766
  %4172 = vmatprep.subr.bf16.mxu0 %v2771
  %4173 = vmatpush1.bf16.msra.mxu0 %v2770
  %4174 = vmatprep.subr.bf16.mxu0 %v2775
  %4175 = vmatpush1.bf16.msra.mxu0 %v2774
  %4176 = vmatprep.subr.bf16.mxu0 %v2779
  %4177 = vmatpush1.bf16.msra.mxu0 %v2778
  %4178 = vmatprep.subr.bf16.mxu0 %v2783
  %4179 = vmatpush1.bf16.msra.mxu0 %v2782
  %4180 = vmatprep.subr.bf16.mxu0 %v2787
  %4181 = vmatpush1.bf16.msra.mxu0 %v2786
  %4182 = vmatprep.subr.bf16.mxu0 %v2791
  %4183 = vmatpush1.bf16.msra.mxu0 %v2790
  %4184 = vmatprep.subr.bf16.mxu0 %v2795
  %4185 = vmatpush1.bf16.msra.mxu0 %v2794
  %4186 = vmatprep.subr.bf16.mxu0 %v2799
  %4187 = vmatpush1.bf16.msra.mxu0 %v2798
  %4188 = vmatprep.subr.bf16.mxu0 %v2803
  %4189 = vmatpush1.bf16.msra.mxu0 %v2802
  %4190 = vmatprep.subr.bf16.mxu0 %v2807
  %4191 = vmatpush1.bf16.msra.mxu0 %v2806
  %4192 = vmatprep.subr.bf16.mxu0 %v2811
  %4193 = vmatpush1.bf16.msra.mxu0 %v2810
  %4194 = vmatprep.subr.bf16.mxu0 %v2815
  %4195 = vmatpush1.bf16.msra.mxu0 %v2814
  %4196 = vmatprep.subr.bf16.mxu0 %v2819
  %4197 = vmatpush1.bf16.msra.mxu0 %v2818
  %4198 = vmatprep.subr.bf16.mxu0 %v2823
  %4199 = vmatpush1.bf16.msra.mxu0 %v2822
  %4200 = vmatprep.subr.bf16.mxu0 %v2827
  %4201 = vmatpush1.bf16.msra.mxu0 %v2826
  %4202 = vmatprep.mubr.bf16.mxu0 %v691
  %4203 = vmatmul.mubr.bf16.gmra.mrb[0].mxu0 %v690
  %v4204 = vpop.f32.mrb[0].mxu0
  %v4205 = vadd.f32 %v4164, %v4204
  %v4206 = vpop.f32.mrb[0].mxu0
  %v4207 = vadd.f32 %v4166, %v4206
  %v4208 = vpop.f32.mrb[0].mxu0
  %v4209 = vpop.f32.mrb[0].mxu0
  %4210 = vdwg.mxu0
  %4211 = vmatprep.subr.bf16.mxu0 %v2831
  %4212 = vmatpush1.bf16.msra.mxu0 %v2830
  %4213 = vmatprep.subr.bf16.mxu0 %v2835
  %4214 = vmatpush1.bf16.msra.mxu0 %v2834
  %4215 = vmatprep.subr.bf16.mxu0 %v2839
  %4216 = vmatpush1.bf16.msra.mxu0 %v2838
  %4217 = vmatprep.subr.bf16.mxu0 %v2843
  %4218 = vmatpush1.bf16.msra.mxu0 %v2842
  %4219 = vmatprep.subr.bf16.mxu0 %v2847
  %4220 = vmatpush1.bf16.msra.mxu0 %v2846
  %4221 = vmatprep.subr.bf16.mxu0 %v2851
  %4222 = vmatpush1.bf16.msra.mxu0 %v2850
  %4223 = vmatprep.subr.bf16.mxu0 %v2855
  %4224 = vmatpush1.bf16.msra.mxu0 %v2854
  %4225 = vmatprep.subr.bf16.mxu0 %v2859
  %4226 = vmatpush1.bf16.msra.mxu0 %v2858
  %4227 = vmatprep.subr.bf16.mxu0 %v2863
  %4228 = vmatpush1.bf16.msra.mxu0 %v2862
  %4229 = vmatprep.subr.bf16.mxu0 %v2867
  %4230 = vmatpush1.bf16.msra.mxu0 %v2866
  %4231 = vmatprep.subr.bf16.mxu0 %v2871
  %4232 = vmatpush1.bf16.msra.mxu0 %v2870
  %4233 = vmatprep.subr.bf16.mxu0 %v2875
  %4234 = vmatpush1.bf16.msra.mxu0 %v2874
  %4235 = vmatprep.subr.bf16.mxu0 %v2879
  %4236 = vmatpush1.bf16.msra.mxu0 %v2878
  %4237 = vmatprep.subr.bf16.mxu0 %v2883
  %4238 = vmatpush1.bf16.msra.mxu0 %v2882
  %4239 = vmatprep.subr.bf16.mxu0 %v2887
  %4240 = vmatpush1.bf16.msra.mxu0 %v2886
  %4241 = vmatprep.subr.bf16.mxu0 %v2891
  %4242 = vmatpush1.bf16.msra.mxu0 %v2890
  %4243 = vmatprep.mubr.bf16.mxu0 %v693
  %4244 = vmatmul.mubr.bf16.gmra.mrb[0].mxu0 %v692
  %v4245 = vpop.f32.mrb[0].mxu0
  %v4246 = vadd.f32 %v4205, %v4245
  %v4247 = vpop.f32.mrb[0].mxu0
  %v4248 = vadd.f32 %v4207, %v4247
  %v4249 = vpop.f32.mrb[0].mxu0
  %v4250 = vpop.f32.mrb[0].mxu0
  %4251 = vdwg.mxu0
  %4252 = vmatprep.subr.bf16.mxu0 %v2895
  %4253 = vmatpush1.bf16.msra.mxu0 %v2894
  %4254 = vmatprep.subr.bf16.mxu0 %v2899
  %4255 = vmatpush1.bf16.msra.mxu0 %v2898
  %4256 = vmatprep.subr.bf16.mxu0 %v2903
  %4257 = vmatpush1.bf16.msra.mxu0 %v2902
  %4258 = vmatprep.subr.bf16.mxu0 %v2907
  %4259 = vmatpush1.bf16.msra.mxu0 %v2906
  %4260 = vmatprep.subr.bf16.mxu0 %v2911
  %4261 = vmatpush1.bf16.msra.mxu0 %v2910
  %4262 = vmatprep.subr.bf16.mxu0 %v2915
  %4263 = vmatpush1.bf16.msra.mxu0 %v2914
  %4264 = vmatprep.subr.bf16.mxu0 %v2919
  %4265 = vmatpush1.bf16.msra.mxu0 %v2918
  %4266 = vmatprep.subr.bf16.mxu0 %v2923
  %4267 = vmatpush1.bf16.msra.mxu0 %v2922
  %4268 = vmatprep.subr.bf16.mxu0 %v2927
  %4269 = vmatpush1.bf16.msra.mxu0 %v2926
  %4270 = vmatprep.subr.bf16.mxu0 %v2931
  %4271 = vmatpush1.bf16.msra.mxu0 %v2930
  %4272 = vmatprep.subr.bf16.mxu0 %v2935
  %4273 = vmatpush1.bf16.msra.mxu0 %v2934
  %4274 = vmatprep.subr.bf16.mxu0 %v2939
  %4275 = vmatpush1.bf16.msra.mxu0 %v2938
  %4276 = vmatprep.subr.bf16.mxu0 %v2943
  %4277 = vmatpush1.bf16.msra.mxu0 %v2942
  %4278 = vmatprep.subr.bf16.mxu0 %v2947
  %4279 = vmatpush1.bf16.msra.mxu0 %v2946
  %4280 = vmatprep.subr.bf16.mxu0 %v2951
  %4281 = vmatpush1.bf16.msra.mxu0 %v2950
  %4282 = vmatprep.subr.bf16.mxu0 %v2955
  %4283 = vmatpush1.bf16.msra.mxu0 %v2954
  %4284 = vmatprep.mubr.bf16.mxu0 %v695
  %4285 = vmatmul.mubr.bf16.gmra.mrb[0].mxu0 %v694
  %v4286 = vpop.f32.mrb[0].mxu0
  %v4287 = vadd.f32 %v4246, %v4286
  %v4288 = vpop.f32.mrb[0].mxu0
  %v4289 = vadd.f32 %v4248, %v4288
  %v4290 = vpop.f32.mrb[0].mxu0
  %v4291 = vpop.f32.mrb[0].mxu0
  %4292 = vdwg.mxu0
  %4293 = vmatprep.subr.bf16.mxu0 %v2959
  %4294 = vmatpush1.bf16.msra.mxu0 %v2958
  %4295 = vmatprep.subr.bf16.mxu0 %v2963
  %4296 = vmatpush1.bf16.msra.mxu0 %v2962
  %4297 = vmatprep.subr.bf16.mxu0 %v2967
  %4298 = vmatpush1.bf16.msra.mxu0 %v2966
  %4299 = vmatprep.subr.bf16.mxu0 %v2971
  %4300 = vmatpush1.bf16.msra.mxu0 %v2970
  %4301 = vmatprep.subr.bf16.mxu0 %v2975
  %4302 = vmatpush1.bf16.msra.mxu0 %v2974
  %4303 = vmatprep.subr.bf16.mxu0 %v2979
  %4304 = vmatpush1.bf16.msra.mxu0 %v2978
  %4305 = vmatprep.subr.bf16.mxu0 %v2983
  %4306 = vmatpush1.bf16.msra.mxu0 %v2982
  %4307 = vmatprep.subr.bf16.mxu0 %v2987
  %4308 = vmatpush1.bf16.msra.mxu0 %v2986
  %4309 = vmatprep.subr.bf16.mxu0 %v2991
  %4310 = vmatpush1.bf16.msra.mxu0 %v2990
  %4311 = vmatprep.subr.bf16.mxu0 %v2995
  %4312 = vmatpush1.bf16.msra.mxu0 %v2994
  %4313 = vmatprep.subr.bf16.mxu0 %v2999
  %4314 = vmatpush1.bf16.msra.mxu0 %v2998
  %4315 = vmatprep.subr.bf16.mxu0 %v3003
  %4316 = vmatpush1.bf16.msra.mxu0 %v3002
  %4317 = vmatprep.subr.bf16.mxu0 %v3007
  %4318 = vmatpush1.bf16.msra.mxu0 %v3006
  %4319 = vmatprep.subr.bf16.mxu0 %v3011
  %4320 = vmatpush1.bf16.msra.mxu0 %v3010
  %4321 = vmatprep.subr.bf16.mxu0 %v3015
  %4322 = vmatpush1.bf16.msra.mxu0 %v3014
  %4323 = vmatprep.subr.bf16.mxu0 %v3019
  %4324 = vmatpush1.bf16.msra.mxu0 %v3018
  %4325 = vmatprep.mubr.bf16.mxu0 %v697
  %4326 = vmatmul.mubr.bf16.gmra.mrb[0].mxu0 %v696
  %v4327 = vpop.f32.mrb[0].mxu0
  %v4328 = vadd.f32 %v4287, %v4327
  %v4329 = vpop.f32.mrb[0].mxu0
  %v4330 = vadd.f32 %v4289, %v4329
  %v4331 = vpop.f32.mrb[0].mxu0
  %v4332 = vpop.f32.mrb[0].mxu0
  %4333 = vdwg.mxu0
  %vm4334 = vcmp.ge.f32.partialorder %v3959, 0.0
  %vm4335 = vcmp.ge.f32.partialorder %v3961, 0.0
  %vm4336 = vcmp.ge.f32.partialorder %v4328, 0.0
  %vm4337 = vcmp.ge.f32.partialorder %v4330, 0.0
  %v4338 = vld [vmem:[#allocation2] sm:$0x1]
  %v4340 = vlaneseq
  %v4341 = vshrl.u32 %v4340, 7
  %v4342 = vsub.s32 0, %v4341
  %v4343 = vrot.slane %v4338, %v4342
  %4344 = vset.pattern.permute.xlu0 0
  %4345 = vperm.xlu0 %4344, %v4343
  %v4346 = vpop.permute.xlu0 %4345
  %v4348 = vmul.f32 %v4346, %v3959
  %v4349 = vmul.f32 %v4346, %v3961
  %v4350 = vmul.f32 %v4346, %v4328
  %v4351 = vmul.f32 %v4346, %v4330
  %v4352 = vsel %vm4334, %v3959, %v4348
  %v4353 = vsel %vm4335, %v3961, %v4349
  %v4354 = vsel %vm4336, %v4328, %v4350
  %v4355 = vsel %vm4337, %v4330, %v4351
  %v4356 = vpack.c.bf16 %v4352, %v4352
  %v4357 = vpack.c.bf16 %v4353, %v4353
  %v4358 = vpack.c.bf16 %v4354, %v4354
  %v4359 = vpack.c.bf16 %v4355, %v4355
  %v4360 = vld [vmem:[%s4] sm:$0xf]
  %v4361 = vld [vmem:[%s4 + $0x4] sm:$0xf]
  %v4362 = vld [vmem:[%s4 + $0x8] sm:$0xf]
  %v4363 = vld [vmem:[%s4 + $0xc] sm:$0xf]
  %v4364 = vld [vmem:[%s4 + $0x10] sm:$0xf]
  %v4365 = vld [vmem:[%s4 + $0x14] sm:$0xf]
  %v4366 = vld [vmem:[%s4 + $0x18] sm:$0xf]
  %v4367 = vld [vmem:[%s4 + $0x1c] sm:$0xf]
  %v4368 = vld [vmem:[%s4 + $0x20] sm:$0xf]
  %v4369 = vld [vmem:[%s4 + $0x24] sm:$0xf]
  %v4370 = vld [vmem:[%s4 + $0x28] sm:$0xf]
  %v4371 = vld [vmem:[%s4 + $0x2c] sm:$0xf]
  %v4372 = vld [vmem:[%s4 + $0x30] sm:$0xf]
  %v4373 = vld [vmem:[%s4 + $0x34] sm:$0xf]
  %v4374 = vld [vmem:[%s4 + $0x38] sm:$0xf]
  %v4375 = vld [vmem:[%s4 + $0x3c] sm:$0xf]
  %v4376 = vld [vmem:[%s4 + $0x40] sm:$0xf]
  %v4377 = vld [vmem:[%s4 + $0x44] sm:$0xf]
  %v4378 = vld [vmem:[%s4 + $0x48] sm:$0xf]
  %v4379 = vld [vmem:[%s4 + $0x4c] sm:$0xf]
  %v4380 = vld [vmem:[%s4 + $0x50] sm:$0xf]
  %v4381 = vld [vmem:[%s4 + $0x54] sm:$0xf]
  %v4382 = vld [vmem:[%s4 + $0x58] sm:$0xf]
  %v4383 = vld [vmem:[%s4 + $0x5c] sm:$0xf]
  %v4384 = vld [vmem:[%s4 + $0x60] sm:$0xf]
  %v4385 = vld [vmem:[%s4 + $0x64] sm:$0xf]
  %v4386 = vld [vmem:[%s4 + $0x68] sm:$0xf]
  %v4387 = vld [vmem:[%s4 + $0x6c] sm:$0xf]
  %v4388 = vld [vmem:[%s4 + $0x70] sm:$0xf]
  %v4389 = vld [vmem:[%s4 + $0x74] sm:$0xf]
  %v4390 = vld [vmem:[%s4 + $0x78] sm:$0xf]
  %v4391 = vld [vmem:[%s4 + $0x7c] sm:$0xf]
  %v4392 = vld [vmem:[%s4 + $0x80] sm:$0xf]
  %v4393 = vld [vmem:[%s4 + $0x84] sm:$0xf]
  %v4394 = vld [vmem:[%s4 + $0x88] sm:$0xf]
  %v4395 = vld [vmem:[%s4 + $0x8c] sm:$0xf]
  %v4396 = vld [vmem:[%s4 + $0x90] sm:$0xf]
  %v4397 = vld [vmem:[%s4 + $0x94] sm:$0xf]
  %v4398 = vld [vmem:[%s4 + $0x98] sm:$0xf]
  %v4399 = vld [vmem:[%s4 + $0x9c] sm:$0xf]
  %v4400 = vld [vmem:[%s4 + $0xa0] sm:$0xf]
  %v4401 = vld [vmem:[%s4 + $0xa4] sm:$0xf]
  %v4402 = vld [vmem:[%s4 + $0xa8] sm:$0xf]
  %v4403 = vld [vmem:[%s4 + $0xac] sm:$0xf]
  %v4404 = vld [vmem:[%s4 + $0xb0] sm:$0xf]
  %v4405 = vld [vmem:[%s4 + $0xb4] sm:$0xf]
  %v4406 = vld [vmem:[%s4 + $0xb8] sm:$0xf]
  %v4407 = vld [vmem:[%s4 + $0xbc] sm:$0xf]
  %v4408 = vld [vmem:[%s4 + $0xc0] sm:$0xf]
  %v4409 = vld [vmem:[%s4 + $0xc4] sm:$0xf]
  %v4410 = vld [vmem:[%s4 + $0xc8] sm:$0xf]
  %v4411 = vld [vmem:[%s4 + $0xcc] sm:$0xf]
  %v4412 = vld [vmem:[%s4 + $0xd0] sm:$0xf]
  %v4413 = vld [vmem:[%s4 + $0xd4] sm:$0xf]
  %v4414 = vld [vmem:[%s4 + $0xd8] sm:$0xf]
  %v4415 = vld [vmem:[%s4 + $0xdc] sm:$0xf]
  %v4416 = vld [vmem:[%s4 + $0xe0] sm:$0xf]
  %v4417 = vld [vmem:[%s4 + $0xe4] sm:$0xf]
  %v4418 = vld [vmem:[%s4 + $0xe8] sm:$0xf]
  %v4419 = vld [vmem:[%s4 + $0xec] sm:$0xf]
  %v4420 = vld [vmem:[%s4 + $0xf0] sm:$0xf]
  %v4421 = vld [vmem:[%s4 + $0xf4] sm:$0xf]
  %v4422 = vld [vmem:[%s4 + $0xf8] sm:$0xf]
  %v4423 = vld [vmem:[%s4 + $0xfc] sm:$0xf]
  %v4424 = vld [vmem:[%s5] sm:$0x1]
  %v4426 = vlaneseq
  %v4427 = vshrl.u32 %v4426, 7
  %v4428 = vsub.s32 0, %v4427
  %v4429 = vrot.slane %v4424, %v4428
  %v4495 = vunpack.c.l.b16 %v4360
  %v4496 = vunpack.c.l.b16 %v4361
  %v4497 = vunpack.c.l.b16 %v4362
  %v4498 = vunpack.c.l.b16 %v4363
  %v4499 = vunpack.c.l.b16 %v4364
  %v4500 = vunpack.c.l.b16 %v4365
  %v4501 = vunpack.c.l.b16 %v4366
  %v4502 = vunpack.c.l.b16 %v4367
  %v4503 = vunpack.c.l.b16 %v4368
  %v4504 = vunpack.c.l.b16 %v4369
  %v4505 = vunpack.c.l.b16 %v4370
  %v4506 = vunpack.c.l.b16 %v4371
  %v4507 = vunpack.c.l.b16 %v4372
  %v4508 = vunpack.c.l.b16 %v4373
  %v4509 = vunpack.c.l.b16 %v4374
  %v4510 = vunpack.c.l.b16 %v4375
  %v4511 = vunpack.c.l.b16 %v4376
  %v4512 = vunpack.c.l.b16 %v4377
  %v4513 = vunpack.c.l.b16 %v4378
  %v4514 = vunpack.c.l.b16 %v4379
  %v4515 = vunpack.c.l.b16 %v4380
  %v4516 = vunpack.c.l.b16 %v4381
  %v4517 = vunpack.c.l.b16 %v4382
  %v4518 = vunpack.c.l.b16 %v4383
  %v4519 = vunpack.c.l.b16 %v4384
  %v4520 = vunpack.c.l.b16 %v4385
  %v4521 = vunpack.c.l.b16 %v4386
  %v4522 = vunpack.c.l.b16 %v4387
  %v4523 = vunpack.c.l.b16 %v4388
  %v4524 = vunpack.c.l.b16 %v4389
  %v4525 = vunpack.c.l.b16 %v4390
  %v4526 = vunpack.c.l.b16 %v4391
  %v4527 = vunpack.c.l.b16 %v4392
  %v4528 = vunpack.c.l.b16 %v4393
  %v4529 = vunpack.c.l.b16 %v4394
  %v4530 = vunpack.c.l.b16 %v4395
  %v4531 = vunpack.c.l.b16 %v4396
  %v4532 = vunpack.c.l.b16 %v4397
  %v4533 = vunpack.c.l.b16 %v4398
  %v4534 = vunpack.c.l.b16 %v4399
  %v4535 = vunpack.c.l.b16 %v4400
  %v4536 = vunpack.c.l.b16 %v4401
  %v4537 = vunpack.c.l.b16 %v4402
  %v4538 = vunpack.c.l.b16 %v4403
  %v4539 = vunpack.c.l.b16 %v4404
  %v4540 = vunpack.c.l.b16 %v4405
  %v4541 = vunpack.c.l.b16 %v4406
  %v4542 = vunpack.c.l.b16 %v4407
  %v4543 = vunpack.c.l.b16 %v4408
  %v4544 = vunpack.c.l.b16 %v4409
  %v4545 = vunpack.c.l.b16 %v4410
  %v4546 = vunpack.c.l.b16 %v4411
  %v4547 = vunpack.c.l.b16 %v4412
  %v4548 = vunpack.c.l.b16 %v4413
  %v4549 = vunpack.c.l.b16 %v4414
  %v4550 = vunpack.c.l.b16 %v4415
  %v4551 = vunpack.c.l.b16 %v4416
  %v4552 = vunpack.c.l.b16 %v4417
  %v4553 = vunpack.c.l.b16 %v4418
  %v4554 = vunpack.c.l.b16 %v4419
  %v4555 = vunpack.c.l.b16 %v4420
  %v4556 = vunpack.c.l.b16 %v4421
  %v4557 = vunpack.c.l.b16 %v4422
  %v4558 = vunpack.c.l.b16 %v4423
  %v4559 = vpack.c.b16 %v4496, %v4495
  %v4560 = vpack.c.b16 %v4498, %v4497
  %v4561 = vpack.c.b16 %v4500, %v4499
  %v4562 = vpack.c.b16 %v4502, %v4501
  %v4563 = vpack.c.b16 %v4504, %v4503
  %v4564 = vpack.c.b16 %v4506, %v4505
  %v4565 = vpack.c.b16 %v4508, %v4507
  %v4566 = vpack.c.b16 %v4510, %v4509
  %v4567 = vpack.c.b16 %v4512, %v4511
  %v4568 = vpack.c.b16 %v4514, %v4513
  %v4569 = vpack.c.b16 %v4516, %v4515
  %v4570 = vpack.c.b16 %v4518, %v4517
  %v4571 = vpack.c.b16 %v4520, %v4519
  %v4572 = vpack.c.b16 %v4522, %v4521
  %v4573 = vpack.c.b16 %v4524, %v4523
  %v4574 = vpack.c.b16 %v4526, %v4525
  %v4575 = vpack.c.b16 %v4528, %v4527
  %v4576 = vpack.c.b16 %v4530, %v4529
  %v4577 = vpack.c.b16 %v4532, %v4531
  %v4578 = vpack.c.b16 %v4534, %v4533
  %v4579 = vpack.c.b16 %v4536, %v4535
  %v4580 = vpack.c.b16 %v4538, %v4537
  %v4581 = vpack.c.b16 %v4540, %v4539
  %v4582 = vpack.c.b16 %v4542, %v4541
  %v4583 = vpack.c.b16 %v4544, %v4543
  %v4584 = vpack.c.b16 %v4546, %v4545
  %v4585 = vpack.c.b16 %v4548, %v4547
  %v4586 = vpack.c.b16 %v4550, %v4549
  %v4587 = vpack.c.b16 %v4552, %v4551
  %v4588 = vpack.c.b16 %v4554, %v4553
  %v4589 = vpack.c.b16 %v4556, %v4555
  %v4590 = vpack.c.b16 %v4558, %v4557
  %4623 = vmatprep.subr.bf16.mxu0 0
  %4624 = vmatpush1.bf16.msra.mxu0 %v4559
  %4625 = vmatprep.subr.bf16.mxu0 0
  %4626 = vmatpush1.bf16.msra.mxu0 %v4560
  %4627 = vmatprep.subr.bf16.mxu0 0
  %4628 = vmatpush1.bf16.msra.mxu0 %v4561
  %4629 = vmatprep.subr.bf16.mxu0 0
  %4630 = vmatpush1.bf16.msra.mxu0 %v4562
  %4631 = vmatprep.subr.bf16.mxu0 0
  %4632 = vmatpush1.bf16.msra.mxu0 %v4563
  %4633 = vmatprep.subr.bf16.mxu0 0
  %4634 = vmatpush1.bf16.msra.mxu0 %v4564
  %4635 = vmatprep.subr.bf16.mxu0 0
  %4636 = vmatpush1.bf16.msra.mxu0 %v4565
  %4637 = vmatprep.subr.bf16.mxu0 0
  %4638 = vmatpush1.bf16.msra.mxu0 %v4566
  %4639 = vmatprep.subr.bf16.mxu0 0
  %4640 = vmatpush1.bf16.msra.mxu0 %v4567
  %4641 = vmatprep.subr.bf16.mxu0 0
  %4642 = vmatpush1.bf16.msra.mxu0 %v4568
  %4643 = vmatprep.subr.bf16.mxu0 0
  %4644 = vmatpush1.bf16.msra.mxu0 %v4569
  %4645 = vmatprep.subr.bf16.mxu0 0
  %4646 = vmatpush1.bf16.msra.mxu0 %v4570
  %4647 = vmatprep.subr.bf16.mxu0 0
  %4648 = vmatpush1.bf16.msra.mxu0 %v4571
  %4649 = vmatprep.subr.bf16.mxu0 0
  %4650 = vmatpush1.bf16.msra.mxu0 %v4572
  %4651 = vmatprep.subr.bf16.mxu0 0
  %4652 = vmatpush1.bf16.msra.mxu0 %v4573
  %4653 = vmatprep.subr.bf16.mxu0 0
  %4654 = vmatpush1.bf16.msra.mxu0 %v4574
  %4655 = vmatprep.mubr.bf16.mxu0 %v4357
  %4656 = vmatmul.mubr.bf16.gmra.mrb[0].mxu0 %v4356
  %v4657 = vpop.f32.mrb[0].mxu0
  %v4658 = vadd.f32 %v4429, %v4657
  %v4659 = vpop.f32.mrb[0].mxu0
  %v4660 = vpop.f32.mrb[0].mxu0
  %v4661 = vpop.f32.mrb[0].mxu0
  %4662 = vdwg.mxu0
  %4663 = vmatprep.subr.bf16.mxu0 0
  %4664 = vmatpush1.bf16.msra.mxu0 %v4575
  %4665 = vmatprep.subr.bf16.mxu0 0
  %4666 = vmatpush1.bf16.msra.mxu0 %v4576
  %4667 = vmatprep.subr.bf16.mxu0 0
  %4668 = vmatpush1.bf16.msra.mxu0 %v4577
  %4669 = vmatprep.subr.bf16.mxu0 0
  %4670 = vmatpush1.bf16.msra.mxu0 %v4578
  %4671 = vmatprep.subr.bf16.mxu0 0
  %4672 = vmatpush1.bf16.msra.mxu0 %v4579
  %4673 = vmatprep.subr.bf16.mxu0 0
  %4674 = vmatpush1.bf16.msra.mxu0 %v4580
  %4675 = vmatprep.subr.bf16.mxu0 0
  %4676 = vmatpush1.bf16.msra.mxu0 %v4581
  %4677 = vmatprep.subr.bf16.mxu0 0
  %4678 = vmatpush1.bf16.msra.mxu0 %v4582
  %4679 = vmatprep.subr.bf16.mxu0 0
  %4680 = vmatpush1.bf16.msra.mxu0 %v4583
  %4681 = vmatprep.subr.bf16.mxu0 0
  %4682 = vmatpush1.bf16.msra.mxu0 %v4584
  %4683 = vmatprep.subr.bf16.mxu0 0
  %4684 = vmatpush1.bf16.msra.mxu0 %v4585
  %4685 = vmatprep.subr.bf16.mxu0 0
  %4686 = vmatpush1.bf16.msra.mxu0 %v4586
  %4687 = vmatprep.subr.bf16.mxu0 0
  %4688 = vmatpush1.bf16.msra.mxu0 %v4587
  %4689 = vmatprep.subr.bf16.mxu0 0
  %4690 = vmatpush1.bf16.msra.mxu0 %v4588
  %4691 = vmatprep.subr.bf16.mxu0 0
  %4692 = vmatpush1.bf16.msra.mxu0 %v4589
  %4693 = vmatprep.subr.bf16.mxu0 0
  %4694 = vmatpush1.bf16.msra.mxu0 %v4590
  %4695 = vmatprep.mubr.bf16.mxu0 %v4359
  %4696 = vmatmul.mubr.bf16.gmra.mrb[0].mxu0 %v4358
  %v4697 = vpop.f32.mrb[0].mxu0
  %v4698 = vadd.f32 %v4658, %v4697
  %v4699 = vpop.f32.mrb[0].mxu0
  %v4700 = vpop.f32.mrb[0].mxu0
  %v4701 = vpop.f32.mrb[0].mxu0
  %4702 = vdwg.mxu0
  %vm4703 = vcmp.ge.f32.partialorder %v4698, 0.0
  %v4704 = vld [vmem:[#allocation3] sm:$0x1]
  %v4706 = vlaneseq
  %v4707 = vshrl.u32 %v4706, 7
  %v4708 = vsub.s32 0, %v4707
  %v4709 = vrot.slane %v4704, %v4708
  %4710 = vset.pattern.permute.xlu0 0
  %4711 = vperm.xlu0 %4710, %v4709
  %v4712 = vpop.permute.xlu0 %4711
  %v4714 = vmul.f32 %v4712, %v4698
  %v4715 = vsel %vm4703, %v4698, %v4714
  %v4716 = vpack.c.bf16 %v4715, %v4715
  %v4717 = vld [vmem:[%s7] sm:$0xf]
  %v4718 = vld [vmem:[%s7 + $0x4] sm:$0xf]
  %v4719 = vld [vmem:[%s7 + $0x8] sm:$0xf]
  %v4720 = vld [vmem:[%s7 + $0xc] sm:$0xf]
  %v4721 = vld [vmem:[%s7 + $0x10] sm:$0xf]
  %v4722 = vld [vmem:[%s7 + $0x14] sm:$0xf]
  %v4723 = vld [vmem:[%s7 + $0x18] sm:$0xf]
  %v4724 = vld [vmem:[%s7 + $0x1c] sm:$0xf]
  %v4725 = vld [vmem:[%s8] sm:$0x1]
  %v4727 = vlaneseq
  %v4728 = vshrl.u32 %v4727, 7
  %v4729 = vsub.s32 0, %v4728
  %v4730 = vrot.slane %v4725, %v4729
  %v4740 = vunpack.c.l.b16 %v4717
  %v4741 = vunpack.c.l.b16 %v4718
  %v4742 = vunpack.c.l.b16 %v4719
  %v4743 = vunpack.c.l.b16 %v4720
  %v4744 = vunpack.c.l.b16 %v4721
  %v4745 = vunpack.c.l.b16 %v4722
  %v4746 = vunpack.c.l.b16 %v4723
  %v4747 = vunpack.c.l.b16 %v4724
  %v4748 = vpack.c.b16 %v4741, %v4740
  %v4749 = vpack.c.b16 %v4743, %v4742
  %v4750 = vpack.c.b16 %v4745, %v4744
  %v4751 = vpack.c.b16 %v4747, %v4746
  %vm4756 = vcmask 523264
  %v4758 = vsel %vm4756, %v4716, 0
  %4760 = vmatprep.subr.bf16.mxu0 0
  %4761 = vmatpush1.bf16.msra.mxu0 %v4748
  %4762 = vmatprep.subr.bf16.mxu0 0
  %4763 = vmatpush1.bf16.msra.mxu0 %v4749
  %4764 = vmatprep.subr.bf16.mxu0 0
  %4765 = vmatpush1.bf16.msra.mxu0 %v4750
  %4766 = vmatprep.subr.bf16.mxu0 0
  %4767 = vmatpush1.bf16.msra.mxu0 %v4751
  %4768 = vmatprep.subr.bf16.mxu0 0
  %4769 = vmatpush1.bf16.msra.mxu0 0
  %4770 = vmatprep.subr.bf16.mxu0 0
  %4771 = vmatpush1.bf16.msra.mxu0 0
  %4772 = vmatprep.subr.bf16.mxu0 0
  %4773 = vmatpush1.bf16.msra.mxu0 0
  %4774 = vmatprep.subr.bf16.mxu0 0
  %4775 = vmatpush1.bf16.msra.mxu0 0
  %4776 = vmatprep.subr.bf16.mxu0 0
  %4777 = vmatpush1.bf16.msra.mxu0 0
  %4778 = vmatprep.subr.bf16.mxu0 0
  %4779 = vmatpush1.bf16.msra.mxu0 0
  %4780 = vmatprep.subr.bf16.mxu0 0
  %4781 = vmatpush1.bf16.msra.mxu0 0
  %4782 = vmatprep.subr.bf16.mxu0 0
  %4783 = vmatpush1.bf16.msra.mxu0 0
  %4784 = vmatprep.subr.bf16.mxu0 0
  %4785 = vmatpush1.bf16.msra.mxu0 0
  %4786 = vmatprep.subr.bf16.mxu0 0
  %4787 = vmatpush1.bf16.msra.mxu0 0
  %4788 = vmatprep.subr.bf16.mxu0 0
  %4789 = vmatpush1.bf16.msra.mxu0 0
  %4790 = vmatprep.subr.bf16.mxu0 0
  %4791 = vmatpush1.bf16.msra.mxu0 0
  %4792 = vmatprep.mubr.bf16.mxu0 0
  %4793 = vmatmul.mubr.bf16.gmra.mrb[0].mxu0 %v4758
  %v4794 = vpop.f32.mrb[0].mxu0
  %v4795 = vadd.f32 %v4730, %v4794
  %v4796 = vpop.f32.mrb[0].mxu0
  %v4797 = vpop.f32.mrb[0].mxu0
  %v4798 = vpop.f32.mrb[0].mxu0
  %4799 = vdwg.mxu0
  %vm4800 = vcmask 80896
  %v4801 = vsel %vm4800, %v4795, -inf
  %4802 = vmax.xlane.f32.xlu0 %v4801
  %v4803 = vpop.xlane.xlu0 %4802
  %v4804 = vsub.f32 %v4795, %v4803
  %v4805 = vmul.f32 %v4804, 1.442695
  %v4806 = vpow.pop %v4805
  %v4807 = vsel %vm4800, %v4806, 0.0
  %4808 = vadd.xlane.f32.xlu0 %v4807
  %v4809 = vpop.xlane.xlu0 %4808
  %v4810 = vlog2.pop %v4809
  %v4811 = vmul.f32 %v4810, 0.6931472
  %v4812 = vsub.f32 %v4804, %v4811
  %4813 = vst.msk [vmem:[%s9] sm:$0xff] %vm4800, %v4812
  // Predicated region
  $region38: #{mynet3_forward.3} parent=0 // pred_check
    _
  $region39: #{mynet3_forward.3} parent=0 // pred_check_branch
    %4815 = sbr.rel (0) target = $region41
  $region40: #{mynet3_forward.3} parent=0 // pred_region
    _
  $region41: #{mynet3_forward.3} parent=0 // pred_fallthru
    _
  // Predicated region
  $region42: #{mynet3_forward.3} parent=0 // pred_check
    _
  $region43: #{mynet3_forward.3} parent=0 // pred_check_branch
    %4817 = sbr.rel (0) target = $region45
  $region44: #{mynet3_forward.3} parent=0 // pred_region
    _
  $region45: #{mynet3_forward.3} parent=0 // pred_fallthru
    _

</llo_original>
